<compile_context>
chip_gen: v7x
topology: tpu7x:2x2x1
jax: 0.10.0
libtpu: 0.0.40
codegen_flags: <defaults>
</compile_context>

<pallas_src>
import math
import functools
import numpy as np
import jax
import jax.numpy as jnp
from jax.experimental import pallas as pl
from jax.experimental.pallas import tpu as pltpu

LN_EPS = 1e-12
NEG_INF = -1e30

_P1 = pltpu.CompilerParams(dimension_semantics=("parallel",))
_P2 = pltpu.CompilerParams(dimension_semantics=("parallel", "parallel"))


# ----------------------------------------------------------------------------
# Tiling helpers
# ----------------------------------------------------------------------------

def _round_up(x, m):
    return (x + m - 1) // m * m


def _tile_m(M, cap=256):
    """Row tile (multiple of 8, capped) giving >=2 grid steps when possible."""
    if M <= 8:
        return M, M, 1
    tm = min(cap, _round_up(-(-M // 2), 8))
    M_pad = _round_up(M, tm)
    return tm, M_pad, M_pad // tm


def _pad_rows(x, M_pad):
    M = x.shape[0]
    if M == M_pad:
        return x
    return jnp.pad(x, ((0, M_pad - M), (0, 0)))


# ----------------------------------------------------------------------------
# Buffered(1) support probe (constant weight blocks -> single VMEM buffer)
# ----------------------------------------------------------------------------

def _probe_buffered():
    try:
        def k(x_ref, w_ref, o_ref):
            o_ref[...] = x_ref[...] + w_ref[...]
        w_spec = pl.BlockSpec((8, 128), lambda i: (0, 0),
                              pipeline_mode=pl.Buffered(1))
        f = pl.pallas_call(
            k, grid=(2,),
            in_specs=[pl.BlockSpec((8, 128), lambda i: (i, 0)), w_spec],
            out_specs=pl.BlockSpec((8, 128), lambda i: (i, 0)),
            out_shape=jax.ShapeDtypeStruct((16, 128), jnp.float32))
        x = jnp.arange(16 * 128, dtype=jnp.float32).reshape(16, 128)
        w = jnp.ones((8, 128), jnp.float32)
        out = jax.block_until_ready(f(x, w))
        return bool(np.allclose(np.asarray(out), np.asarray(x) + 1.0))
    except Exception:
        return False


_BUFFERED_OK = _probe_buffered()


def _spec(shape, index_map, constant=False):
    if constant and _BUFFERED_OK:
        return pl.BlockSpec(shape, index_map, pipeline_mode=pl.Buffered(1))
    return pl.BlockSpec(shape, index_map)


def _const_spec(shape):
    return _spec(shape, lambda *_: (0,) * len(shape), constant=True)


# ----------------------------------------------------------------------------
# Pallas kernels
# ----------------------------------------------------------------------------

def pallas_linear(x, w, b):
    """y = x @ w + b, tiled over rows.  x:(M,K) f32, w:(K,N) bf16, b:(1,N)."""
    M, K = x.shape
    N = w.shape[1]
    tm, M_pad, gm = _tile_m(M)
    xp = _pad_rows(x, M_pad)

    def kernel(x_ref, w_ref, b_ref, o_ref):
        xv = x_ref[...].astype(jnp.bfloat16)
        o_ref[...] = (jnp.dot(xv, w_ref[...],
                              preferred_element_type=jnp.float32)
                      + b_ref[...])

    out = pl.pallas_call(
        kernel,
        grid=(gm,),
        in_specs=[pl.BlockSpec((tm, K), lambda i: (i, 0)),
                  _const_spec((K, N)),
                  _const_spec((1, N))],
        out_specs=pl.BlockSpec((tm, N), lambda i: (i, 0)),
        out_shape=jax.ShapeDtypeStruct((M_pad, N), jnp.float32),
        compiler_params=_P1,
    )(xp, w, b)
    return out[:M]


def pallas_ln_linear(x, g, b_ln, w, b, tn=None, trim=True):
    """y = LayerNorm(x) @ w + b  (LN fused with the matmul), optionally
    N-tiled (2-D parallel grid) for wide outputs such as the vocab."""
    M, D = x.shape
    N = w.shape[1]
    tm, M_pad, gm = _tile_m(M)
    if tn is None or tn >= N or N % tn != 0:
        tn = N
    gn = N // tn
    xp = _pad_rows(x, M_pad)

    def kernel(x_ref, g_ref, bl_ref, w_ref, b_ref, o_ref):
        xv = x_ref[...]
        mu = jnp.mean(xv, axis=-1, keepdims=True)
        xc = xv - mu
        var = jnp.mean(xc * xc, axis=-1, keepdims=True)
        yn = xc * jax.lax.rsqrt(var + LN_EPS) * g_ref[...] + bl_ref[...]
        o_ref[...] = (jnp.dot(yn.astype(jnp.bfloat16), w_ref[...],
                              preferred_element_type=jnp.float32)
                      + b_ref[...])

    out = pl.pallas_call(
        kernel,
        grid=(gm, gn),
        in_specs=[pl.BlockSpec((tm, D), lambda i, j: (i, 0)),
                  _const_spec((1, D)),
                  _const_spec((1, D)),
                  _spec((D, tn), lambda i, j: (0, j), constant=(gn == 1)),
                  _spec((1, tn), lambda i, j: (0, j), constant=(gn == 1))],
        out_specs=pl.BlockSpec((tm, tn), lambda i, j: (i, j)),
        out_shape=jax.ShapeDtypeStruct((M_pad, N), jnp.float32),
        compiler_params=_P2,
    )(xp, g, b_ln, w, b)
    return out[:M] if trim else out


def pallas_linear_residual(x, res, w, b):
    """y = res + x @ w + b  (residual add fused into the projection)."""
    M, K = x.shape
    N = w.shape[1]
    tm, M_pad, gm = _tile_m(M, cap=512)     # narrow-N, HBM-bound -> bigger tile
    xp, rp = _pad_rows(x, M_pad), _pad_rows(res, M_pad)

    def kernel(x_ref, r_ref, w_ref, b_ref, o_ref):
        xv = x_ref[...].astype(jnp.bfloat16)
        o_ref[...] = (r_ref[...]
                      + jnp.dot(xv, w_ref[...],
                                preferred_element_type=jnp.float32)
                      + b_ref[...])

    out = pl.pallas_call(
        kernel,
        grid=(gm,),
        in_specs=[pl.BlockSpec((tm, K), lambda i: (i, 0)),
                  pl.BlockSpec((tm, N), lambda i: (i, 0)),
                  _const_spec((K, N)),
                  _const_spec((1, N))],
        out_specs=pl.BlockSpec((tm, N), lambda i: (i, 0)),
        out_shape=jax.ShapeDtypeStruct((M_pad, N), jnp.float32),
        compiler_params=_P1,
    )(xp, rp, w, b)
    return out[:M]


def pallas_ln_ffn_residual(x, g, b_ln, w1, b1, w2, b2):
    """y = x + relu(LayerNorm(x) @ w1 + b1) @ w2 + b2   (one fused kernel)."""
    M, D = x.shape
    F = w1.shape[1]
    tm, M_pad, gm = _tile_m(M)              # wide F -> keep tile <= 256
    xp = _pad_rows(x, M_pad)

    def kernel(x_ref, g_ref, bl_ref, w1_ref, b1_ref, w2_ref, b2_ref, o_ref):
        xv = x_ref[...]
        mu = jnp.mean(xv, axis=-1, keepdims=True)
        xc = xv - mu
        var = jnp.mean(xc * xc, axis=-1, keepdims=True)
        yn = xc * jax.lax.rsqrt(var + LN_EPS) * g_ref[...] + bl_ref[...]
        h = (jnp.dot(yn.astype(jnp.bfloat16), w1_ref[...],
                     preferred_element_type=jnp.float32) + b1_ref[...])
        h = jnp.maximum(h, 0.0).astype(jnp.bfloat16)
        o_ref[...] = (xv
                      + jnp.dot(h, w2_ref[...],
                                preferred_element_type=jnp.float32)
                      + b2_ref[...])

    out = pl.pallas_call(
        kernel,
        grid=(gm,),
        in_specs=[pl.BlockSpec((tm, D), lambda i: (i, 0)),
                  _const_spec((1, D)),
                  _const_spec((1, D)),
                  _const_spec((D, F)),
                  _const_spec((1, F)),
                  _const_spec((F, D)),
                  _const_spec((1, D))],
        out_specs=pl.BlockSpec((tm, D), lambda i: (i, 0)),
        out_shape=jax.ShapeDtypeStruct((M_pad, D), jnp.float32),
        compiler_params=_P1,
    )(xp, g, b_ln, w1, b1, w2, b2)
    return out[:M]


def pallas_layernorm(x, g, b):
    """Standalone row-wise LayerNorm (used only for the encoder after-norm)."""
    M, D = x.shape
    tm, M_pad, gm = _tile_m(M, cap=512)
    xp = _pad_rows(x, M_pad)

    def kernel(x_ref, g_ref, b_ref, o_ref):
        xv = x_ref[...]
        mu = jnp.mean(xv, axis=-1, keepdims=True)
        xc = xv - mu
        var = jnp.mean(xc * xc, axis=-1, keepdims=True)
        o_ref[...] = xc * jax.lax.rsqrt(var + LN_EPS) * g_ref[...] + b_ref[...]

    out = pl.pallas_call(
        kernel,
        grid=(gm,),
        in_specs=[pl.BlockSpec((tm, D), lambda i: (i, 0)),
                  _const_spec((1, D)),
                  _const_spec((1, D))],
        out_specs=pl.BlockSpec((tm, D), lambda i: (i, 0)),
        out_shape=jax.ShapeDtypeStruct((M_pad, D), jnp.float32),
        compiler_params=_P1,
    )(xp, g, b)
    return out[:M]


def pallas_embed(x, w, b, g, b_ln, pe, scale):
    """Speech 'linear' input layer, fused on a (B, T-tiles) grid:
       relu(LayerNorm(x @ w + b)) * sqrt(adim) + positional encoding.
       The (T,D) PE table is indexed directly via its BlockSpec (no (B*T,D)
       tile materialised in HBM)."""
    B, T, K = x.shape
    D = w.shape[1]
    tt, T_pad, gt = _tile_m(T, cap=512)
    xp = jnp.pad(x, ((0, 0), (0, T_pad - T), (0, 0))) if T_pad > T else x
    pe_t = pe[:T]
    pe_p = jnp.pad(pe_t, ((0, T_pad - T), (0, 0))) if T_pad > T else pe_t

    def kernel(x_ref, w_ref, b_ref, g_ref, bl_ref, pe_ref, o_ref):
        xv = x_ref[0].astype(jnp.bfloat16)      # bf16 operands, f32 accumulate
        y = (jnp.dot(xv, w_ref[...],
                     preferred_element_type=jnp.float32) + b_ref[...])
        mu = jnp.mean(y, axis=-1, keepdims=True)
        yc = y - mu
        var = jnp.mean(yc * yc, axis=-1, keepdims=True)
        y = yc * jax.lax.rsqrt(var + LN_EPS) * g_ref[...] + bl_ref[...]
        o_ref[0] = jnp.maximum(y, 0.0) * scale + pe_ref[...]

    out = pl.pallas_call(
        kernel,
        grid=(B, gt),
        in_specs=[pl.BlockSpec((1, tt, K), lambda bi, ti: (bi, ti, 0)),
                  _const_spec((K, D)),
                  _const_spec((1, D)),
                  _const_spec((1, D)),
                  _const_spec((1, D)),
                  pl.BlockSpec((tt, D), lambda bi, ti: (ti, 0))],
        out_specs=pl.BlockSpec((1, tt, D), lambda bi, ti: (bi, ti, 0)),
        out_shape=jax.ShapeDtypeStruct((B, T_pad, D), jnp.float32),
        compiler_params=_P2,
    )(xp, w, b, g, b_ln, pe_p)
    return out[:, :T]


def _mha_core(q, k, v, bias, maskf, heads, dk):
    """Shared multi-head attention math on in-VMEM arrays.
    q:(Tq,D) already scaled, k/v:(Tk,D), bias/maskf:(Tq,Tk)."""
    # TODO(synk): pack the head axis onto sublanes (batched dot_general /
    # heads-as-grid) to fill the MXU for large dk*heads; the per-head loop with
    # dk-wide contraction under-utilises the MXU but lowers robustly.
    outs = []
    for h in range(heads):
        sl = slice(h * dk, (h + 1) * dk)
        qh = q[:, sl].astype(jnp.bfloat16)
        kh = k[:, sl].astype(jnp.bfloat16)
        vh = v[:, sl].astype(jnp.bfloat16)
        s = jax.lax.dot_general(qh, kh, (((1,), (1,)), ((), ())),
                                preferred_element_type=jnp.float32) + bias
        m = jnp.max(s, axis=-1, keepdims=True)
        p = jnp.exp(s - m) * maskf
        denom = jnp.maximum(jnp.sum(p, axis=-1, keepdims=True), 1e-30)
        p = p * pl.reciprocal(denom, approx=True)
        outs.append(jnp.dot(p.astype(jnp.bfloat16), vh,
                            preferred_element_type=jnp.float32))
    # single lane-dense store of all heads (dk < 128)
    return jnp.concatenate(outs, axis=-1)


def pallas_self_attention(qkv, klens, heads, causal):
    """Self-attention taking the fused QKV tensor directly (sliced in-kernel).
    qkv:(B,T,3D), klens:(B,) int32 number of valid key positions."""
    B, T, D3 = qkv.shape
    D = D3 // 3
    dk = D // heads
    scale = 1.0 / math.sqrt(dk)

    def kernel(klen_ref, qkv_ref, o_ref):
        b = pl.program_id(0)
        klen = klen_ref[b]
        kidx = jax.lax.broadcasted_iota(jnp.int32, (T, T), 1)
        mask = kidx < klen
        if causal:
            qidx = jax.lax.broadcasted_iota(jnp.int32, (T, T), 0)
            mask = jnp.logical_and(mask, kidx <= qidx)
        bias = jnp.where(mask, 0.0, NEG_INF)        # hoisted out of head loop
        maskf = mask.astype(jnp.float32)
        blk = qkv_ref[0]
        q = blk[:, :D] * scale                      # fold 1/sqrt(dk) into q
        k = blk[:, D:2 * D]
        v = blk[:, 2 * D:]
        o_ref[0] = _mha_core(q, k, v, bias, maskf, heads, dk)

    # TODO(synk): add a Tq tile grid axis + flash-style Tk streaming for long
    # sequences (full (Tq,Tk) scores per head fit VMEM at these sizes).
    return pl.pallas_call(
        kernel,
        grid_spec=pltpu.PrefetchScalarGridSpec(
            num_scalar_prefetch=1,
            grid=(B,),
            in_specs=[pl.BlockSpec((1, T, 3 * D), lambda b, kl: (b, 0, 0))],
            out_specs=pl.BlockSpec((1, T, D), lambda b, kl: (b, 0, 0)),
        ),
        out_shape=jax.ShapeDtypeStruct((B, T, D), jnp.float32),
        compiler_params=_P1,
    )(klens, qkv)


def pallas_cross_attention(q, kv, klens, heads):
    """Cross-attention: q:(B,L,D), fused kv:(B,T,2D) sliced in-kernel."""
    B, L, D = q.shape
    T = kv.shape[1]
    dk = D // heads
    scale = 1.0 / math.sqrt(dk)

    def kernel(klen_ref, q_ref, kv_ref, o_ref):
        b = pl.program_id(0)
        klen = klen_ref[b]
        kidx = jax.lax.broadcasted_iota(jnp.int32, (L, T), 1)
        mask = kidx < klen
        bias = jnp.where(mask, 0.0, NEG_INF)
        maskf = mask.astype(jnp.float32)
        qv = q_ref[0] * scale
        kvb = kv_ref[0]
        k = kvb[:, :D]
        v = kvb[:, D:]
        o_ref[0] = _mha_core(qv, k, v, bias, maskf, heads, dk)

    return pl.pallas_call(
        kernel,
        grid_spec=pltpu.PrefetchScalarGridSpec(
            num_scalar_prefetch=1,
            grid=(B,),
            in_specs=[pl.BlockSpec((1, L, D), lambda b, kl: (b, 0, 0)),
                      pl.BlockSpec((1, T, 2 * D), lambda b, kl: (b, 0, 0))],
            out_specs=pl.BlockSpec((1, L, D), lambda b, kl: (b, 0, 0)),
        ),
        out_shape=jax.ShapeDtypeStruct((B, L, D), jnp.float32),
        compiler_params=_P1,
    )(klens, q, kv)


def pallas_st_loss_acc(logits, targets, odim, lsm_weight, ignore_id, batch):
    """Fused log_softmax + label-smoothing KL (closed form) + th_accuracy.
    logits:(Mr,Vp) f32 (Vp lane-padded >= odim, rows may exceed len(targets)
    with padding), targets:(Mt,) int32.  Returns (loss, accuracy)."""
    Mr, Vp = logits.shape
    Mt = targets.shape[0]
    tm, M_pad, gm = _tile_m(Mr, cap=512)
    lgp = _pad_rows(logits, M_pad)
    t2 = targets.astype(jnp.int32).reshape(Mt, 1)
    t2 = jnp.pad(t2, ((0, M_pad - Mt), (0, 0)), constant_values=ignore_id)

    confidence = 1.0 - lsm_weight
    smooth = lsm_weight / (odim - 1) if odim > 1 else 0.0
    const = confidence * math.log(confidence) if confidence > 0.0 else 0.0
    if smooth > 0.0:
        const += lsm_weight * math.log(smooth)

    def kernel(lg_ref, t_ref, o_ref):
        lg = lg_ref[...]
        t = t_ref[...]                                           # (tm,1) int32
        lane = jax.lax.broadcasted_iota(jnp.int32, (tm, Vp), 1)
        vmask = lane < odim
        lm = jnp.where(vmask, lg, NEG_INF)
        mx = jnp.max(lm, axis=-1, keepdims=True)
        lse = mx + jnp.log(jnp.sum(jnp.exp(lm - mx), axis=-1, keepdims=True))
        sum_logits = jnp.sum(jnp.where(vmask, lg, 0.0), axis=-1, keepdims=True)
        logit_t = jnp.sum(jnp.where(lane == t, lg, 0.0),
                          axis=-1, keepdims=True)
        logp_t = logit_t - lse
        sum_logp = sum_logits - odim * lse
        kl = const + (smooth - confidence) * logp_t - smooth * sum_logp
        ignore = t == ignore_id
        validf = jnp.where(ignore, 0.0, 1.0)
        kl = kl * validf
        pred = jnp.min(jnp.where(lm >= mx, lane, Vp),
                       axis=-1, keepdims=True)                   # first argmax
        correct = jnp.where(jnp.logical_and(pred == t,
                                            jnp.logical_not(ignore)),
                            1.0, 0.0)
        lane_o = jax.lax.broadcasted_iota(jnp.int32, (tm, 128), 1)
        o_ref[...] = (jnp.where(lane_o == 0, kl, 0.0)
                      + jnp.where(lane_o == 1, correct, 0.0)
                      + jnp.where(lane_o == 2, validf, 0.0))

    out = pl.pallas_call(
        kernel,
        grid=(gm,),
        in_specs=[pl.BlockSpec((tm, Vp), lambda i: (i, 0)),
                  pl.BlockSpec((tm, 1), lambda i: (i, 0))],
        out_specs=pl.BlockSpec((tm, 128), lambda i: (i, 0)),
        out_shape=jax.ShapeDtypeStruct((M_pad, 128), jnp.float32),
        compiler_params=_P1,
    )(lgp, t2)
    sums = jnp.sum(out, axis=0)
    loss = sums[0] / batch                     # normalize_length=False -> / B
    acc = sums[1] / jnp.maximum(sums[2], 1.0)
    return loss, acc


# ----------------------------------------------------------------------------
# Transformer blocks (thin JAX glue around the fused kernels)
# ----------------------------------------------------------------------------

def self_attention_block(x, klens, ln_p, att_p, heads, causal):
    B, T, D = x.shape
    x2 = x.reshape(B * T, D)
    qkv = pallas_ln_linear(x2, ln_p["g"], ln_p["b"],
                           att_p["wqkv"], att_p["bqkv"]).reshape(B, T, 3 * D)
    a = pallas_self_attention(qkv, klens, heads, causal)
    y = pallas_linear_residual(a.reshape(B * T, D), x2,
                               att_p["wo"], att_p["bo"])
    return y.reshape(B, T, D)


def cross_attention_block(z, memory, mem_lens, ln_p, att_p, heads):
    B, L, D = z.shape
    T = memory.shape[1]
    z2 = z.reshape(B * L, D)
    q = pallas_ln_linear(z2, ln_p["g"], ln_p["b"],
                         att_p["wq"], att_p["bq"]).reshape(B, L, D)
    kv = pallas_linear(memory.reshape(B * T, D),
                       att_p["wkv"], att_p["bkv"]).reshape(B, T, 2 * D)
    a = pallas_cross_attention(q, kv, mem_lens, heads)
    y = pallas_linear_residual(a.reshape(B * L, D), z2,
                               att_p["wo"], att_p["bo"])
    return y.reshape(B, L, D)


def ffn_block(x, ln_p, ff_p):
    B, T, D = x.shape
    y = pallas_ln_ffn_residual(x.reshape(B * T, D), ln_p["g"], ln_p["b"],
                               ff_p["w1"], ff_p["b1"],
                               ff_p["w2"], ff_p["b2"])
    return y.reshape(B, T, D)


def encoder_layer(x, src_lens, p, heads):
    x = self_attention_block(x, src_lens, p["ln1"], p["self_attn"],
                             heads, causal=False)
    x = ffn_block(x, p["ln2"], p["ff"])
    return x


def decoder_layer(z, tgt_lens, memory, mem_lens, p, heads):
    z = self_attention_block(z, tgt_lens, p["ln1"], p["self_attn"],
                             heads, causal=True)
    z = cross_attention_block(z, memory, mem_lens, p["ln2"], p["src_attn"],
                              heads)
    z = ffn_block(z, p["ln3"], p["ff"])
    return z


# ----------------------------------------------------------------------------
# Model forward (pure_st branch)
# ----------------------------------------------------------------------------

def sinusoidal_pe(T, D):
    pos = np.arange(T, dtype=np.float32)[:, None]
    div = np.exp(np.arange(0, D, 2, dtype=np.float32) * -(math.log(10000.0) / D))
    pe = np.zeros((T, D), dtype=np.float32)
    pe[:, 0::2] = np.sin(pos * div)
    pe[:, 1::2] = np.cos(pos * div)
    return jnp.asarray(pe)


def add_sos_eos(ys_pad, sos, eos, ignore_id):
    """Exact semantics of espnet add_sos_eos for right-padded ys_pad."""
    B, L = ys_pad.shape
    ylen = jnp.sum(ys_pad != ignore_id, axis=1)                   # (B,)
    ys_nopad = jnp.where(ys_pad == ignore_id, eos, ys_pad)
    ys_in = jnp.concatenate(
        [jnp.full((B, 1), sos, ys_pad.dtype), ys_nopad], axis=1)  # (B, L+1)
    idx = jnp.arange(L + 1)[None, :]
    ys_ext = jnp.concatenate(
        [ys_pad, jnp.full((B, 1), ignore_id, ys_pad.dtype)], axis=1)
    ys_out = jnp.where(idx < ylen[:, None], ys_ext,
                       jnp.where(idx == ylen[:, None], eos, ignore_id))
    return ys_in, ys_out


def e2e_forward(params, speech_pad, speech_ilens, ys_pad,
                *, adim, heads, odim, ignore_id=-1, lsm_weight=0.1):
    """pure_st forward: returns (loss, loss_st, loss_mt, loss_ae, st_acc)."""
    B, T, idim = speech_pad.shape
    sos = eos = odim - 1

    # ---- targets -----------------------------------------------------------
    ys_in, ys_out = add_sos_eos(ys_pad, sos, eos, ignore_id)
    L1 = ys_in.shape[1]
    pe = params["pe"]
    assert T <= pe.shape[0] and L1 <= pe.shape[0], \
        "positional-encoding table too short"

    # ---- speech_embed: Linear + LayerNorm + ReLU + scale + PE (one kernel) --
    # TODO(synk): custom `embed(..., 'linear')` definition unavailable; modeled
    # as the ESPnet transformer 'linear' input layer (dropout = identity).
    x = pallas_embed(speech_pad,
                     params["emb"]["w"], params["emb"]["b"],
                     params["emb"]["ln"]["g"], params["emb"]["ln"]["b"],
                     pe, math.sqrt(adim))

    # ---- speech encoder (key masks generated in-kernel from speech_ilens) ---
    # TODO(synk): dropdim / ctc_shrink / CTC branches disabled (flags False);
    #             hs_first (first encoder layer output) unused in pure_st.
    src_lens = speech_ilens.astype(jnp.int32)
    for lp in params["enc_layers"]:
        x = encoder_layer(x, src_lens, lp, heads)
    hs = pallas_layernorm(x.reshape(B * T, adim),
                          params["enc_after"]["g"],
                          params["enc_after"]["b"]).reshape(B, T, adim)

    # ---- decoder ------------------------------------------------------------
    tgt = (jnp.take(params["dec_embed"], ys_in, axis=0) * math.sqrt(adim)
           + pe[:L1][None])
    # ESPnet target_mask key-validity is all-ones (ys_in padded with eos), so
    # the decoder self-attention mask is purely causal.
    tgt_lens = jnp.full((B,), L1, jnp.int32)
    z = tgt
    for lp in params["dec_layers"]:
        z = decoder_layer(z, tgt_lens, hs, src_lens, lp, heads)

    # ---- decoder after-norm fused with the (lane-padded, N-tiled) vocab
    #      projection; rows kept padded and fed straight into the fused
    #      loss/accuracy kernel (no logits slice, no one_hot tensors) ---------
    w_out, b_out = params["out"]["w"], params["out"]["b"]
    vocab_tile = min(w_out.shape[1], 1024)
    st_logits = pallas_ln_linear(z.reshape(B * L1, adim),
                                 params["dec_after"]["g"],
                                 params["dec_after"]["b"],
                                 w_out, b_out, tn=vocab_tile, trim=False)
    loss_st, st_acc = pallas_st_loss_acc(st_logits, ys_out.reshape(-1),
                                         odim, lsm_weight, ignore_id, B)

    loss = loss_st
    return loss, loss_st, jnp.float32(0.0), jnp.float32(0.0), st_acc


# ----------------------------------------------------------------------------
# Deterministic parameter construction (matmul weights stored bf16 once;
# vocab projection lane-padded once)
# ----------------------------------------------------------------------------

def make_params(key, idim, odim, adim, heads, eunits, dunits, n_enc, n_dec,
                max_len=256):
    keys = iter(jax.random.split(key, 1024))

    def w32(shape, scale=0.02):
        return scale * jax.random.normal(next(keys), shape, jnp.float32)

    def wbf(shape, scale=0.02):
        return w32(shape, scale).astype(jnp.bfloat16)

    def zeros(shape):
        return jnp.zeros(shape, jnp.float32)

    def ones(shape):
        return jnp.ones(shape, jnp.float32)

    def ln_p(d):
        return {"g": ones((1, d)), "b": zeros((1, d))}

    def self_attn_p(d):
        return {"wqkv": wbf((d, 3 * d)), "bqkv": zeros((1, 3 * d)),
                "wo": wbf((d, d)), "bo": zeros((1, d))}

    def src_attn_p(d):
        return {"wq": wbf((d, d)), "bq": zeros((1, d)),
                "wkv": wbf((d, 2 * d)), "bkv": zeros((1, 2 * d)),
                "wo": wbf((d, d)), "bo": zeros((1, d))}

    def ff_p(d, f):
        return {"w1": wbf((d, f)), "b1": zeros((1, f)),
                "w2": wbf((f, d)), "b2": zeros((1, d))}

    enc_layers = [{"ln1": ln_p(adim), "self_attn": self_attn_p(adim),
                   "ln2": ln_p(adim), "ff": ff_p(adim, eunits)}
                  for _ in range(n_enc)]
    dec_layers = [{"ln1": ln_p(adim), "self_attn": self_attn_p(adim),
                   "ln2": ln_p(adim), "src_attn": src_attn_p(adim),
                   "ln3": ln_p(adim), "ff": ff_p(adim, dunits)}
                  for _ in range(n_dec)]

    # lane-pad the output vocab once (multiple of 128; multiple of 1024 when
    # large so the projection can be N-tiled with tn=1024)
    v_pad = _round_up(odim, 128)
    if v_pad > 1024:
        v_pad = _round_up(v_pad, 1024)
    w_out = jnp.zeros((adim, v_pad), jnp.bfloat16).at[:, :odim].set(
        wbf((adim, odim)))
    b_out = zeros((1, v_pad))

    return {
        "emb": {"w": wbf((idim, adim)), "b": zeros((1, adim)),
                "ln": ln_p(adim)},
        "enc_layers": enc_layers,
        "enc_after": ln_p(adim),
        "dec_embed": w32((odim, adim), scale=0.02),
        "dec_layers": dec_layers,
        "dec_after": ln_p(adim),
        "out": {"w": w_out, "b": b_out},
        "pe": sinusoidal_pe(max_len, adim),
    }


# ----------------------------------------------------------------------------
# Main
# ----------------------------------------------------------------------------

if __name__ == "__main__":
    B, T, IDIM = 2, 16, 20
    ODIM, ADIM, HEADS = 12, 32, 4
    EUNITS, DUNITS = 64, 64
    N_ENC, N_DEC = 2, 2
    LMAX = 6

    root = jax.random.PRNGKey(0)
    k_speech, k_tok = jax.random.split(root, 2)

    speech_pad = jax.random.normal(k_speech, (B, T, IDIM), jnp.float32)
    speech_ilens = jnp.array([16, 12], jnp.int32)
    toks = jax.random.randint(k_tok, (B, LMAX), 1, ODIM - 1, dtype=jnp.int32)
    ylens = jnp.array([6, 4], jnp.int32)
    ys_pad = jnp.where(jnp.arange(LMAX)[None, :] < ylens[:, None], toks, -1)

    # speech_pad = speech_pad[:, :max(speech_ilens)] — no-op here (max == T)
    max_ilen = int(jnp.max(speech_ilens))
    speech_pad = speech_pad[:, :max_ilen]

    params = make_params(jax.random.PRNGKey(42), IDIM, ODIM, ADIM, HEADS,
                         EUNITS, DUNITS, N_ENC, N_DEC)

    fwd = jax.jit(functools.partial(e2e_forward, adim=ADIM, heads=HEADS,
                                    odim=ODIM))
    loss, loss_st, loss_mt, loss_ae, st_acc = fwd(
        params, speech_pad, speech_ilens, ys_pad)
    jax.block_until_ready((loss, loss_st, loss_mt, loss_ae, st_acc))

    assert bool(jnp.isfinite(loss)) and bool(jnp.isfinite(st_acc))
    print("KERNEL_OK")
</pallas_src>

<mosaic_0001>
module attributes {stable_mosaic.version = 11 : i64} {
  func.func @k(%arg0: i32, %arg1: memref<8x128xf32, #tpu.memory_space<vmem>>, %arg2: memref<8x128xf32, #tpu.memory_space<vmem>>, %arg3: memref<8x128xf32, #tpu.memory_space<vmem>>) attributes {dimension_semantics = [#tpu.dimension_semantics<arbitrary>], iteration_bounds = array<i64: 2>, scalar_prefetch = 0 : i64, scratch_operands = 0 : i64, tpu.core_type = #tpu.core_type<tc>, window_params = [{transform_indices = @transform_0, window_bounds = array<i64: 8, 128>}, {pipeline_mode = #tpu.pipeline_mode<synchronous>, transform_indices = @transform_1, window_bounds = array<i64: 8, 128>}, {transform_indices = @transform_2, window_bounds = array<i64: 8, 128>}]} {
    %c0 = arith.constant 0 : index
    %c0_0 = arith.constant 0 : index
    %0 = vector.load %arg1[%c0, %c0_0] : memref<8x128xf32, #tpu.memory_space<vmem>>, vector<8x128xf32>
    %c0_1 = arith.constant 0 : index
    %c0_2 = arith.constant 0 : index
    %1 = vector.load %arg2[%c0_1, %c0_2] : memref<8x128xf32, #tpu.memory_space<vmem>>, vector<8x128xf32>
    %2 = arith.addf %0, %1 : vector<8x128xf32>
    %c0_3 = arith.constant 0 : index
    %c0_4 = arith.constant 0 : index
    %3 = vector.load %arg3[%c0_3, %c0_4] : memref<8x128xf32, #tpu.memory_space<vmem>>, vector<8x128xf32>
    tpu.vector_store %arg3[%c0_3, %c0_4], %2 {strides = array<i32>} : memref<8x128xf32, #tpu.memory_space<vmem>>, vector<8x128xf32>,
    return
  }
  func.func @transform_0(%arg0: i32) -> (i32, i32) {
    %c0_i32 = arith.constant 0 : i32
    %c0_i32_0 = arith.constant 0 : i32
    return %arg0, %c0_i32 : i32, i32
  }
  func.func @transform_1(%arg0: i32) -> (i32, i32) {
    %c0_i32 = arith.constant 0 : i32
    %c0_i32_0 = arith.constant 0 : i32
    %c0_i32_1 = arith.constant 0 : i32
    return %c0_i32, %c0_i32_0 : i32, i32
  }
  func.func @transform_2(%arg0: i32) -> (i32, i32) {
    %c0_i32 = arith.constant 0 : i32
    %c0_i32_0 = arith.constant 0 : i32
    return %arg0, %c0_i32 : i32, i32
  }
}

module attributes {stable_mosaic.version = 11 : i64} {
  func.func @kernel(%arg0: i32, %arg1: i32, %arg2: memref<8x32xf32, #tpu.memory_space<vmem>>, %arg3: memref<1x32xf32, #tpu.memory_space<vmem>>, %arg4: memref<1x32xf32, #tpu.memory_space<vmem>>, %arg5: memref<32x96xbf16, #tpu.memory_space<vmem>>, %arg6: memref<1x96xf32, #tpu.memory_space<vmem>>, %arg7: memref<8x96xf32, #tpu.memory_space<vmem>>) attributes {dimension_semantics = [#tpu.dimension_semantics<parallel>, #tpu.dimension_semantics<parallel>], iteration_bounds = array<i64: 2, 1>, scalar_prefetch = 0 : i64, scratch_operands = 0 : i64, tpu.core_type = #tpu.core_type<tc>, window_params = [{transform_indices = @transform_0, window_bounds = array<i64: 8, 32>}, {pipeline_mode = #tpu.pipeline_mode<synchronous>, transform_indices = @transform_1, window_bounds = array<i64: 1, 32>}, {pipeline_mode = #tpu.pipeline_mode<synchronous>, transform_indices = @transform_2, window_bounds = array<i64: 1, 32>}, {transform_indices = @transform_3, window_bounds = array<i64: 32, 96>}, {transform_indices = @transform_4, window_bounds = array<i64: 1, 96>}, {transform_indices = @transform_5, window_bounds = array<i64: 8, 96>}]} {
    %c0 = arith.constant 0 : index
    %c0_0 = arith.constant 0 : index
    %0 = vector.load %arg2[%c0, %c0_0] : memref<8x32xf32, #tpu.memory_space<vmem>>, vector<8x32xf32>
    %cst = arith.constant dense<0.000000e+00> : vector<8xf32>
    %1 = vector.multi_reduction <add>, %0, %cst [1] : vector<8x32xf32> to vector<8xf32>
    %2 = vector.shape_cast %1 : vector<8xf32> to vector<8x1xf32>
    %cst_1 = arith.constant 3.200000e+01 : f32
    %3 = vector.broadcast %cst_1 : f32 to vector<8x1xf32>
    %4 = arith.divf %2, %3 : vector<8x1xf32>
    %5 = vector.broadcast %4 : vector<8x1xf32> to vector<8x32xf32>
    %6 = arith.subf %0, %5 : vector<8x32xf32>
    %7 = arith.mulf %6, %6 : vector<8x32xf32>
    %cst_2 = arith.constant dense<0.000000e+00> : vector<8xf32>
    %8 = vector.multi_reduction <add>, %7, %cst_2 [1] : vector<8x32xf32> to vector<8xf32>
    %9 = vector.shape_cast %8 : vector<8xf32> to vector<8x1xf32>
    %cst_3 = arith.constant 3.200000e+01 : f32
    %10 = vector.broadcast %cst_3 : f32 to vector<8x1xf32>
    %11 = arith.divf %9, %10 : vector<8x1xf32>
    %cst_4 = arith.constant 9.99999996E-13 : f32
    %12 = vector.broadcast %cst_4 : f32 to vector<8x1xf32>
    %13 = arith.addf %11, %12 : vector<8x1xf32>
    %14 = math.rsqrt %13 : vector<8x1xf32>
    %15 = vector.broadcast %14 : vector<8x1xf32> to vector<8x32xf32>
    %16 = arith.mulf %6, %15 : vector<8x32xf32>
    %c0_5 = arith.constant 0 : index
    %c0_6 = arith.constant 0 : index
    %17 = vector.load %arg3[%c0_5, %c0_6] : memref<1x32xf32, #tpu.memory_space<vmem>>, vector<1x32xf32>
    %18 = vector.broadcast %17 : vector<1x32xf32> to vector<8x32xf32>
    %19 = arith.mulf %16, %18 : vector<8x32xf32>
    %c0_7 = arith.constant 0 : index
    %c0_8 = arith.constant 0 : index
    %20 = vector.load %arg4[%c0_7, %c0_8] : memref<1x32xf32, #tpu.memory_space<vmem>>, vector<1x32xf32>
    %21 = vector.broadcast %20 : vector<1x32xf32> to vector<8x32xf32>
    %22 = arith.addf %19, %21 : vector<8x32xf32>
    %23 = arith.truncf %22 : vector<8x32xf32> to vector<8x32xbf16>
    %c0_9 = arith.constant 0 : index
    %c0_10 = arith.constant 0 : index
    %24 = vector.load %arg5[%c0_9, %c0_10] : memref<32x96xbf16, #tpu.memory_space<vmem>>, vector<32x96xbf16>
    %cst_11 = arith.constant dense<0.000000e+00> : vector<8x96xf32>
    %25 = tpu.matmul %23, %24, %cst_11 {dimension_numbers = #tpu.dot_dimension_numbers<[1], [0], [0], [1], [0, 0, 1, 1], [], []>} : vector<8x32xbf16>, vector<32x96xbf16>, vector<8x96xf32> -> vector<8x96xf32>
    %c0_12 = arith.constant 0 : index
    %c0_13 = arith.constant 0 : index
    %26 = vector.load %arg6[%c0_12, %c0_13] : memref<1x96xf32, #tpu.memory_space<vmem>>, vector<1x96xf32>
    %27 = vector.broadcast %26 : vector<1x96xf32> to vector<8x96xf32>
    %28 = arith.addf %25, %27 : vector<8x96xf32>
    %c0_14 = arith.constant 0 : index
    %c0_15 = arith.constant 0 : index
    %29 = vector.load %arg7[%c0_14, %c0_15] : memref<8x96xf32, #tpu.memory_space<vmem>>, vector<8x96xf32>
    tpu.vector_store %arg7[%c0_14, %c0_15], %28 {strides = array<i32>} : memref<8x96xf32, #tpu.memory_space<vmem>>, vector<8x96xf32>,
    return
  }
  func.func @transform_0(%arg0: i32, %arg1: i32) -> (i32, i32) {
    %c0_i32 = arith.constant 0 : i32
    %c0_i32_0 = arith.constant 0 : i32
    return %arg0, %c0_i32 : i32, i32
  }
  func.func @transform_1(%arg0: i32, %arg1: i32) -> (i32, i32) {
    %c0_i32 = arith.constant 0 : i32
    %c0_i32_0 = arith.constant 0 : i32
    %c0_i32_1 = arith.constant 0 : i32
    return %c0_i32, %c0_i32_0 : i32, i32
  }
  func.func @transform_2(%arg0: i32, %arg1: i32) -> (i32, i32) {
    %c0_i32 = arith.constant 0 : i32
    %c0_i32_0 = arith.constant 0 : i32
    %c0_i32_1 = arith.constant 0 : i32
    return %c0_i32, %c0_i32_0 : i32, i32
  }
  func.func @transform_3(%arg0: i32, %arg1: i32) -> (i32, i32) {
    %c0_i32 = arith.constant 0 : i32
    %c0_i32_0 = arith.constant 0 : i32
    return %c0_i32, %arg1 : i32, i32
  }
  func.func @transform_4(%arg0: i32, %arg1: i32) -> (i32, i32) {
    %c0_i32 = arith.constant 0 : i32
    %c0_i32_0 = arith.constant 0 : i32
    return %c0_i32, %arg1 : i32, i32
  }
  func.func @transform_5(%arg0: i32, %arg1: i32) -> (i32, i32) {
    %c0_i32 = arith.constant 0 : i32
    return %arg0, %arg1 : i32, i32
  }
}

module attributes {stable_mosaic.version = 11 : i64} {
  func.func @kernel(%arg0: i32, %arg1: memref<2xi32, #tpu.memory_space<smem>>, %arg2: memref<1x7x96xf32, #tpu.memory_space<vmem>>, %arg3: memref<1x7x32xf32, #tpu.memory_space<vmem>>) attributes {dimension_semantics = [#tpu.dimension_semantics<parallel>], iteration_bounds = array<i64: 2>, scalar_prefetch = 1 : i64, scratch_operands = 0 : i64, tpu.core_type = #tpu.core_type<tc>, window_params = [{transform_indices = @transform_0, window_bounds = array<i64: 1, 7, 96>}, {transform_indices = @transform_1, window_bounds = array<i64: 1, 7, 32>}]} {
    %0 = arith.index_cast %arg0 : i32 to index
    %1 = memref.load %arg1[%0] : memref<2xi32, #tpu.memory_space<smem>>
    %2 = tpu.iota {dimensions = array<i32: 1>} : vector<7x7xi32>
    %3 = vector.broadcast %1 : i32 to vector<7x7xi32>
    %4 = arith.cmpi slt, %2, %3 : vector<7x7xi32>
    %5 = tpu.iota {dimensions = array<i32: 0>} : vector<7x7xi32>
    %6 = arith.cmpi sle, %2, %5 : vector<7x7xi32>
    %7 = arith.andi %4, %6 : vector<7x7xi1>
    %cst = arith.constant 0.000000e+00 : f32
    %cst_0 = arith.constant -1.000000e+30 : f32
    %8 = vector.broadcast %cst : f32 to vector<7x7xf32>
    %9 = vector.broadcast %cst_0 : f32 to vector<7x7xf32>
    %10 = arith.select %7, %8, %9 : vector<7x7xi1>, vector<7x7xf32>
    %11 = arith.extui %7 : vector<7x7xi1> to vector<7x7xi32>
    %12 = arith.sitofp %11 : vector<7x7xi32> to vector<7x7xf32>
    %c0 = arith.constant 0 : index
    %c0_1 = arith.constant 0 : index
    %c0_2 = arith.constant 0 : index
    %13 = vector.load %arg2[%c0, %c0_1, %c0_2] : memref<1x7x96xf32, #tpu.memory_space<vmem>>, vector<1x7x96xf32>
    %14 = vector.shape_cast %13 : vector<1x7x96xf32> to vector<7x96xf32>
    %15 = vector.extract_strided_slice %14 {offsets = [0, 0], sizes = [7, 32], strides = [1, 1]} : vector<7x96xf32> to vector<7x32xf32>
    %cst_3 = arith.constant 0.353553385 : f32
    %16 = vector.broadcast %cst_3 : f32 to vector<7x32xf32>
    %17 = arith.mulf %15, %16 : vector<7x32xf32>
    %18 = vector.extract_strided_slice %14 {offsets = [0, 32], sizes = [7, 32], strides = [1, 1]} : vector<7x96xf32> to vector<7x32xf32>
    %19 = vector.extract_strided_slice %14 {offsets = [0, 64], sizes = [7, 32], strides = [1, 1]} : vector<7x96xf32> to vector<7x32xf32>
    %20 = vector.extract_strided_slice %17 {offsets = [0, 0], sizes = [7, 8], strides = [1, 1]} : vector<7x32xf32> to vector<7x8xf32>
    %21 = arith.truncf %20 : vector<7x8xf32> to vector<7x8xbf16>
    %22 = vector.extract_strided_slice %18 {offsets = [0, 0], sizes = [7, 8], strides = [1, 1]} : vector<7x32xf32> to vector<7x8xf32>
    %23 = arith.truncf %22 : vector<7x8xf32> to vector<7x8xbf16>
    %24 = vector.extract_strided_slice %19 {offsets = [0, 0], sizes = [7, 8], strides = [1, 1]} : vector<7x32xf32> to vector<7x8xf32>
    %25 = arith.truncf %24 : vector<7x8xf32> to vector<7x8xbf16>
    %cst_4 = arith.constant dense<0.000000e+00> : vector<7x7xf32>
    %26 = tpu.matmul %21, %23, %cst_4 {dimension_numbers = #tpu.dot_dimension_numbers<[1], [1], [0], [0], [0, 0, 1, 0], [], []>} : vector<7x8xbf16>, vector<7x8xbf16>, vector<7x7xf32> -> vector<7x7xf32>
    %27 = arith.addf %26, %10 : vector<7x7xf32>
    %cst_5 = arith.constant dense<0xFF800000> : vector<7xf32>
    %28 = vector.multi_reduction <maximumf>, %27, %cst_5 [1] : vector<7x7xf32> to vector<7xf32>
    %29 = vector.shape_cast %28 : vector<7xf32> to vector<7x1xf32>
    %30 = vector.broadcast %29 : vector<7x1xf32> to vector<7x7xf32>
    %31 = arith.subf %27, %30 : vector<7x7xf32>
    %32 = math.exp %31 : vector<7x7xf32>
    %33 = arith.mulf %32, %12 : vector<7x7xf32>
    %cst_6 = arith.constant dense<0.000000e+00> : vector<7xf32>
    %34 = vector.multi_reduction <add>, %33, %cst_6 [1] : vector<7x7xf32> to vector<7xf32>
    %35 = vector.shape_cast %34 : vector<7xf32> to vector<7x1xf32>
    %cst_7 = arith.constant 1.000000e-30 : f32
    %36 = vector.broadcast %cst_7 : f32 to vector<7x1xf32>
    %37 = arith.maximumf %35, %36 : vector<7x1xf32>
    %38 = tpu.reciprocal %37 {approx = true} : vector<7x1xf32> -> vector<7x1xf32>
    %39 = vector.broadcast %38 : vector<7x1xf32> to vector<7x7xf32>
    %40 = arith.mulf %33, %39 : vector<7x7xf32>
    %41 = arith.truncf %40 : vector<7x7xf32> to vector<7x7xbf16>
    %cst_8 = arith.constant dense<0.000000e+00> : vector<7x8xf32>
    %42 = tpu.matmul %41, %25, %cst_8 {dimension_numbers = #tpu.dot_dimension_numbers<[1], [0], [0], [1], [0, 0, 1, 1], [], []>} : vector<7x7xbf16>, vector<7x8xbf16>, vector<7x8xf32> -> vector<7x8xf32>
    %43 = vector.extract_strided_slice %17 {offsets = [0, 8], sizes = [7, 8], strides = [1, 1]} : vector<7x32xf32> to vector<7x8xf32>
    %44 = arith.truncf %43 : vector<7x8xf32> to vector<7x8xbf16>
    %45 = vector.extract_strided_slice %18 {offsets = [0, 8], sizes = [7, 8], strides = [1, 1]} : vector<7x32xf32> to vector<7x8xf32>
    %46 = arith.truncf %45 : vector<7x8xf32> to vector<7x8xbf16>
    %47 = vector.extract_strided_slice %19 {offsets = [0, 8], sizes = [7, 8], strides = [1, 1]} : vector<7x32xf32> to vector<7x8xf32>
    %48 = arith.truncf %47 : vector<7x8xf32> to vector<7x8xbf16>
    %cst_9 = arith.constant dense<0.000000e+00> : vector<7x7xf32>
    %49 = tpu.matmul %44, %46, %cst_9 {dimension_numbers = #tpu.dot_dimension_numbers<[1], [1], [0], [0], [0, 0, 1, 0], [], []>} : vector<7x8xbf16>, vector<7x8xbf16>, vector<7x7xf32> -> vector<7x7xf32>
    %50 = arith.addf %49, %10 : vector<7x7xf32>
    %cst_10 = arith.constant dense<0xFF800000> : vector<7xf32>
    %51 = vector.multi_reduction <maximumf>, %50, %cst_10 [1] : vector<7x7xf32> to vector<7xf32>
    %52 = vector.shape_cast %51 : vector<7xf32> to vector<7x1xf32>
    %53 = vector.broadcast %52 : vector<7x1xf32> to vector<7x7xf32>
    %54 = arith.subf %50, %53 : vector<7x7xf32>
    %55 = math.exp %54 : vector<7x7xf32>
    %56 = arith.mulf %55, %12 : vector<7x7xf32>
    %cst_11 = arith.constant dense<0.000000e+00> : vector<7xf32>
    %57 = vector.multi_reduction <add>, %56, %cst_11 [1] : vector<7x7xf32> to vector<7xf32>
    %58 = vector.shape_cast %57 : vector<7xf32> to vector<7x1xf32>
    %cst_12 = arith.constant 1.000000e-30 : f32
    %59 = vector.broadcast %cst_12 : f32 to vector<7x1xf32>
    %60 = arith.maximumf %58, %59 : vector<7x1xf32>
    %61 = tpu.reciprocal %60 {approx = true} : vector<7x1xf32> -> vector<7x1xf32>
    %62 = vector.broadcast %61 : vector<7x1xf32> to vector<7x7xf32>
    %63 = arith.mulf %56, %62 : vector<7x7xf32>
    %64 = arith.truncf %63 : vector<7x7xf32> to vector<7x7xbf16>
    %cst_13 = arith.constant dense<0.000000e+00> : vector<7x8xf32>
    %65 = tpu.matmul %64, %48, %cst_13 {dimension_numbers = #tpu.dot_dimension_numbers<[1], [0], [0], [1], [0, 0, 1, 1], [], []>} : vector<7x7xbf16>, vector<7x8xbf16>, vector<7x8xf32> -> vector<7x8xf32>
    %66 = vector.extract_strided_slice %17 {offsets = [0, 16], sizes = [7, 8], strides = [1, 1]} : vector<7x32xf32> to vector<7x8xf32>
    %67 = arith.truncf %66 : vector<7x8xf32> to vector<7x8xbf16>
    %68 = vector.extract_strided_slice %18 {offsets = [0, 16], sizes = [7, 8], strides = [1, 1]} : vector<7x32xf32> to vector<7x8xf32>
    %69 = arith.truncf %68 : vector<7x8xf32> to vector<7x8xbf16>
    %70 = vector.extract_strided_slice %19 {offsets = [0, 16], sizes = [7, 8], strides = [1, 1]} : vector<7x32xf32> to vector<7x8xf32>
    %71 = arith.truncf %70 : vector<7x8xf32> to vector<7x8xbf16>
    %cst_14 = arith.constant dense<0.000000e+00> : vector<7x7xf32>
    %72 = tpu.matmul %67, %69, %cst_14 {dimension_numbers = #tpu.dot_dimension_numbers<[1], [1], [0], [0], [0, 0, 1, 0], [], []>} : vector<7x8xbf16>, vector<7x8xbf16>, vector<7x7xf32> -> vector<7x7xf32>
    %73 = arith.addf %72, %10 : vector<7x7xf32>
    %cst_15 = arith.constant dense<0xFF800000> : vector<7xf32>
    %74 = vector.multi_reduction <maximumf>, %73, %cst_15 [1] : vector<7x7xf32> to vector<7xf32>
    %75 = vector.shape_cast %74 : vector<7xf32> to vector<7x1xf32>
    %76 = vector.broadcast %75 : vector<7x1xf32> to vector<7x7xf32>
    %77 = arith.subf %73, %76 : vector<7x7xf32>
    %78 = math.exp %77 : vector<7x7xf32>
    %79 = arith.mulf %78, %12 : vector<7x7xf32>
    %cst_16 = arith.constant dense<0.000000e+00> : vector<7xf32>
    %80 = vector.multi_reduction <add>, %79, %cst_16 [1] : vector<7x7xf32> to vector<7xf32>
    %81 = vector.shape_cast %80 : vector<7xf32> to vector<7x1xf32>
    %cst_17 = arith.constant 1.000000e-30 : f32
    %82 = vector.broadcast %cst_17 : f32 to vector<7x1xf32>
    %83 = arith.maximumf %81, %82 : vector<7x1xf32>
    %84 = tpu.reciprocal %83 {approx = true} : vector<7x1xf32> -> vector<7x1xf32>
    %85 = vector.broadcast %84 : vector<7x1xf32> to vector<7x7xf32>
    %86 = arith.mulf %79, %85 : vector<7x7xf32>
    %87 = arith.truncf %86 : vector<7x7xf32> to vector<7x7xbf16>
    %cst_18 = arith.constant dense<0.000000e+00> : vector<7x8xf32>
    %88 = tpu.matmul %87, %71, %cst_18 {dimension_numbers = #tpu.dot_dimension_numbers<[1], [0], [0], [1], [0, 0, 1, 1], [], []>} : vector<7x7xbf16>, vector<7x8xbf16>, vector<7x8xf32> -> vector<7x8xf32>
    %89 = vector.extract_strided_slice %17 {offsets = [0, 24], sizes = [7, 8], strides = [1, 1]} : vector<7x32xf32> to vector<7x8xf32>
    %90 = arith.truncf %89 : vector<7x8xf32> to vector<7x8xbf16>
    %91 = vector.extract_strided_slice %18 {offsets = [0, 24], sizes = [7, 8], strides = [1, 1]} : vector<7x32xf32> to vector<7x8xf32>
    %92 = arith.truncf %91 : vector<7x8xf32> to vector<7x8xbf16>
    %93 = vector.extract_strided_slice %19 {offsets = [0, 24], sizes = [7, 8], strides = [1, 1]} : vector<7x32xf32> to vector<7x8xf32>
    %94 = arith.truncf %93 : vector<7x8xf32> to vector<7x8xbf16>
    %cst_19 = arith.constant dense<0.000000e+00> : vector<7x7xf32>
    %95 = tpu.matmul %90, %92, %cst_19 {dimension_numbers = #tpu.dot_dimension_numbers<[1], [1], [0], [0], [0, 0, 1, 0], [], []>} : vector<7x8xbf16>, vector<7x8xbf16>, vector<7x7xf32> -> vector<7x7xf32>
    %96 = arith.addf %95, %10 : vector<7x7xf32>
    %cst_20 = arith.constant dense<0xFF800000> : vector<7xf32>
    %97 = vector.multi_reduction <maximumf>, %96, %cst_20 [1] : vector<7x7xf32> to vector<7xf32>
    %98 = vector.shape_cast %97 : vector<7xf32> to vector<7x1xf32>
    %99 = vector.broadcast %98 : vector<7x1xf32> to vector<7x7xf32>
    %100 = arith.subf %96, %99 : vector<7x7xf32>
    %101 = math.exp %100 : vector<7x7xf32>
    %102 = arith.mulf %101, %12 : vector<7x7xf32>
    %cst_21 = arith.constant dense<0.000000e+00> : vector<7xf32>
    %103 = vector.multi_reduction <add>, %102, %cst_21 [1] : vector<7x7xf32> to vector<7xf32>
    %104 = vector.shape_cast %103 : vector<7xf32> to vector<7x1xf32>
    %cst_22 = arith.constant 1.000000e-30 : f32
    %105 = vector.broadcast %cst_22 : f32 to vector<7x1xf32>
    %106 = arith.maximumf %104, %105 : vector<7x1xf32>
    %107 = tpu.reciprocal %106 {approx = true} : vector<7x1xf32> -> vector<7x1xf32>
    %108 = vector.broadcast %107 : vector<7x1xf32> to vector<7x7xf32>
    %109 = arith.mulf %102, %108 : vector<7x7xf32>
    %110 = arith.truncf %109 : vector<7x7xf32> to vector<7x7xbf16>
    %cst_23 = arith.constant dense<0.000000e+00> : vector<7x8xf32>
    %111 = tpu.matmul %110, %94, %cst_23 {dimension_numbers = #tpu.dot_dimension_numbers<[1], [0], [0], [1], [0, 0, 1, 1], [], []>} : vector<7x7xbf16>, vector<7x8xbf16>, vector<7x8xf32> -> vector<7x8xf32>
    %112 = tpu.concatenate %42, %65, %88, %111 in 1 : vector<7x8xf32>, vector<7x8xf32>, vector<7x8xf32>, vector<7x8xf32> -> vector<7x32xf32>
    %c0_24 = arith.constant 0 : index
    %c0_25 = arith.constant 0 : index
    %c0_26 = arith.constant 0 : index
    %113 = vector.load %arg3[%c0_24, %c0_25, %c0_26] : memref<1x7x32xf32, #tpu.memory_space<vmem>>, vector<1x7x32xf32>
    %114 = vector.shape_cast %113 : vector<1x7x32xf32> to vector<7x32xf32>
    %115 = vector.shape_cast %112 : vector<7x32xf32> to vector<1x7x32xf32>
    tpu.vector_store %arg3[%c0_24, %c0_25, %c0_26], %115 {strides = array<i32>} : memref<1x7x32xf32, #tpu.memory_space<vmem>>, vector<1x7x32xf32>,
    return
  }
  func.func @transform_0(%arg0: i32, %arg1: memref<2xi32, #tpu.memory_space<smem>>) -> (i32, i32, i32) {
    %c0_i32 = arith.constant 0 : i32
    %c0_i32_0 = arith.constant 0 : i32
    %c0_i32_1 = arith.constant 0 : i32
    return %arg0, %c0_i32, %c0_i32_0 : i32, i32, i32
  }
  func.func @transform_1(%arg0: i32, %arg1: memref<2xi32, #tpu.memory_space<smem>>) -> (i32, i32, i32) {
    %c0_i32 = arith.constant 0 : i32
    %c0_i32_0 = arith.constant 0 : i32
    %c0_i32_1 = arith.constant 0 : i32
    return %arg0, %c0_i32, %c0_i32_0 : i32, i32, i32
  }
}

module attributes {stable_mosaic.version = 11 : i64} {
  func.func @kernel(%arg0: i32, %arg1: memref<8x32xf32, #tpu.memory_space<vmem>>, %arg2: memref<8x32xf32, #tpu.memory_space<vmem>>, %arg3: memref<32x32xbf16, #tpu.memory_space<vmem>>, %arg4: memref<1x32xf32, #tpu.memory_space<vmem>>, %arg5: memref<8x32xf32, #tpu.memory_space<vmem>>) attributes {dimension_semantics = [#tpu.dimension_semantics<parallel>], iteration_bounds = array<i64: 2>, scalar_prefetch = 0 : i64, scratch_operands = 0 : i64, tpu.core_type = #tpu.core_type<tc>, window_params = [{transform_indices = @transform_0, window_bounds = array<i64: 8, 32>}, {transform_indices = @transform_1, window_bounds = array<i64: 8, 32>}, {pipeline_mode = #tpu.pipeline_mode<synchronous>, transform_indices = @transform_2, window_bounds = array<i64: 32, 32>}, {pipeline_mode = #tpu.pipeline_mode<synchronous>, transform_indices = @transform_3, window_bounds = array<i64: 1, 32>}, {transform_indices = @transform_4, window_bounds = array<i64: 8, 32>}]} {
    %c0 = arith.constant 0 : index
    %c0_0 = arith.constant 0 : index
    %0 = vector.load %arg1[%c0, %c0_0] : memref<8x32xf32, #tpu.memory_space<vmem>>, vector<8x32xf32>
    %1 = arith.truncf %0 : vector<8x32xf32> to vector<8x32xbf16>
    %c0_1 = arith.constant 0 : index
    %c0_2 = arith.constant 0 : index
    %2 = vector.load %arg2[%c0_1, %c0_2] : memref<8x32xf32, #tpu.memory_space<vmem>>, vector<8x32xf32>
    %c0_3 = arith.constant 0 : index
    %c0_4 = arith.constant 0 : index
    %3 = vector.load %arg3[%c0_3, %c0_4] : memref<32x32xbf16, #tpu.memory_space<vmem>>, vector<32x32xbf16>
    %cst = arith.constant dense<0.000000e+00> : vector<8x32xf32>
    %4 = tpu.matmul %1, %3, %cst {dimension_numbers = #tpu.dot_dimension_numbers<[1], [0], [0], [1], [0, 0, 1, 1], [], []>} : vector<8x32xbf16>, vector<32x32xbf16>, vector<8x32xf32> -> vector<8x32xf32>
    %5 = arith.addf %2, %4 : vector<8x32xf32>
    %c0_5 = arith.constant 0 : index
    %c0_6 = arith.constant 0 : index
    %6 = vector.load %arg4[%c0_5, %c0_6] : memref<1x32xf32, #tpu.memory_space<vmem>>, vector<1x32xf32>
    %7 = vector.broadcast %6 : vector<1x32xf32> to vector<8x32xf32>
    %8 = arith.addf %5, %7 : vector<8x32xf32>
    %c0_7 = arith.constant 0 : index
    %c0_8 = arith.constant 0 : index
    %9 = vector.load %arg5[%c0_7, %c0_8] : memref<8x32xf32, #tpu.memory_space<vmem>>, vector<8x32xf32>
    tpu.vector_store %arg5[%c0_7, %c0_8], %8 {strides = array<i32>} : memref<8x32xf32, #tpu.memory_space<vmem>>, vector<8x32xf32>,
    return
  }
  func.func @transform_0(%arg0: i32) -> (i32, i32) {
    %c0_i32 = arith.constant 0 : i32
    %c0_i32_0 = arith.constant 0 : i32
    return %arg0, %c0_i32 : i32, i32
  }
  func.func @transform_1(%arg0: i32) -> (i32, i32) {
    %c0_i32 = arith.constant 0 : i32
    %c0_i32_0 = arith.constant 0 : i32
    return %arg0, %c0_i32 : i32, i32
  }
  func.func @transform_2(%arg0: i32) -> (i32, i32) {
    %c0_i32 = arith.constant 0 : i32
    %c0_i32_0 = arith.constant 0 : i32
    %c0_i32_1 = arith.constant 0 : i32
    return %c0_i32, %c0_i32_0 : i32, i32
  }
  func.func @transform_3(%arg0: i32) -> (i32, i32) {
    %c0_i32 = arith.constant 0 : i32
    %c0_i32_0 = arith.constant 0 : i32
    %c0_i32_1 = arith.constant 0 : i32
    return %c0_i32, %c0_i32_0 : i32, i32
  }
  func.func @transform_4(%arg0: i32) -> (i32, i32) {
    %c0_i32 = arith.constant 0 : i32
    %c0_i32_0 = arith.constant 0 : i32
    return %arg0, %c0_i32 : i32, i32
  }
}

module attributes {stable_mosaic.version = 11 : i64} {
  func.func @kernel(%arg0: i32, %arg1: i32, %arg2: memref<8x32xf32, #tpu.memory_space<vmem>>, %arg3: memref<1x32xf32, #tpu.memory_space<vmem>>, %arg4: memref<1x32xf32, #tpu.memory_space<vmem>>, %arg5: memref<32x32xbf16, #tpu.memory_space<vmem>>, %arg6: memref<1x32xf32, #tpu.memory_space<vmem>>, %arg7: memref<8x32xf32, #tpu.memory_space<vmem>>) attributes {dimension_semantics = [#tpu.dimension_semantics<parallel>, #tpu.dimension_semantics<parallel>], iteration_bounds = array<i64: 2, 1>, scalar_prefetch = 0 : i64, scratch_operands = 0 : i64, tpu.core_type = #tpu.core_type<tc>, window_params = [{transform_indices = @transform_0, window_bounds = array<i64: 8, 32>}, {pipeline_mode = #tpu.pipeline_mode<synchronous>, transform_indices = @transform_1, window_bounds = array<i64: 1, 32>}, {pipeline_mode = #tpu.pipeline_mode<synchronous>, transform_indices = @transform_2, window_bounds = array<i64: 1, 32>}, {transform_indices = @transform_3, window_bounds = array<i64: 32, 32>}, {transform_indices = @transform_4, window_bounds = array<i64: 1, 32>}, {transform_indices = @transform_5, window_bounds = array<i64: 8, 32>}]} {
    %c0 = arith.constant 0 : index
    %c0_0 = arith.constant 0 : index
    %0 = vector.load %arg2[%c0, %c0_0] : memref<8x32xf32, #tpu.memory_space<vmem>>, vector<8x32xf32>
    %cst = arith.constant dense<0.000000e+00> : vector<8xf32>
    %1 = vector.multi_reduction <add>, %0, %cst [1] : vector<8x32xf32> to vector<8xf32>
    %2 = vector.shape_cast %1 : vector<8xf32> to vector<8x1xf32>
    %cst_1 = arith.constant 3.200000e+01 : f32
    %3 = vector.broadcast %cst_1 : f32 to vector<8x1xf32>
    %4 = arith.divf %2, %3 : vector<8x1xf32>
    %5 = vector.broadcast %4 : vector<8x1xf32> to vector<8x32xf32>
    %6 = arith.subf %0, %5 : vector<8x32xf32>
    %7 = arith.mulf %6, %6 : vector<8x32xf32>
    %cst_2 = arith.constant dense<0.000000e+00> : vector<8xf32>
    %8 = vector.multi_reduction <add>, %7, %cst_2 [1] : vector<8x32xf32> to vector<8xf32>
    %9 = vector.shape_cast %8 : vector<8xf32> to vector<8x1xf32>
    %cst_3 = arith.constant 3.200000e+01 : f32
    %10 = vector.broadcast %cst_3 : f32 to vector<8x1xf32>
    %11 = arith.divf %9, %10 : vector<8x1xf32>
    %cst_4 = arith.constant 9.99999996E-13 : f32
    %12 = vector.broadcast %cst_4 : f32 to vector<8x1xf32>
    %13 = arith.addf %11, %12 : vector<8x1xf32>
    %14 = math.rsqrt %13 : vector<8x1xf32>
    %15 = vector.broadcast %14 : vector<8x1xf32> to vector<8x32xf32>
    %16 = arith.mulf %6, %15 : vector<8x32xf32>
    %c0_5 = arith.constant 0 : index
    %c0_6 = arith.constant 0 : index
    %17 = vector.load %arg3[%c0_5, %c0_6] : memref<1x32xf32, #tpu.memory_space<vmem>>, vector<1x32xf32>
    %18 = vector.broadcast %17 : vector<1x32xf32> to vector<8x32xf32>
    %19 = arith.mulf %16, %18 : vector<8x32xf32>
    %c0_7 = arith.constant 0 : index
    %c0_8 = arith.constant 0 : index
    %20 = vector.load %arg4[%c0_7, %c0_8] : memref<1x32xf32, #tpu.memory_space<vmem>>, vector<1x32xf32>
    %21 = vector.broadcast %20 : vector<1x32xf32> to vector<8x32xf32>
    %22 = arith.addf %19, %21 : vector<8x32xf32>
    %23 = arith.truncf %22 : vector<8x32xf32> to vector<8x32xbf16>
    %c0_9 = arith.constant 0 : index
    %c0_10 = arith.constant 0 : index
    %24 = vector.load %arg5[%c0_9, %c0_10] : memref<32x32xbf16, #tpu.memory_space<vmem>>, vector<32x32xbf16>
    %cst_11 = arith.constant dense<0.000000e+00> : vector<8x32xf32>
    %25 = tpu.matmul %23, %24, %cst_11 {dimension_numbers = #tpu.dot_dimension_numbers<[1], [0], [0], [1], [0, 0, 1, 1], [], []>} : vector<8x32xbf16>, vector<32x32xbf16>, vector<8x32xf32> -> vector<8x32xf32>
    %c0_12 = arith.constant 0 : index
    %c0_13 = arith.constant 0 : index
    %26 = vector.load %arg6[%c0_12, %c0_13] : memref<1x32xf32, #tpu.memory_space<vmem>>, vector<1x32xf32>
    %27 = vector.broadcast %26 : vector<1x32xf32> to vector<8x32xf32>
    %28 = arith.addf %25, %27 : vector<8x32xf32>
    %c0_14 = arith.constant 0 : index
    %c0_15 = arith.constant 0 : index
    %29 = vector.load %arg7[%c0_14, %c0_15] : memref<8x32xf32, #tpu.memory_space<vmem>>, vector<8x32xf32>
    tpu.vector_store %arg7[%c0_14, %c0_15], %28 {strides = array<i32>} : memref<8x32xf32, #tpu.memory_space<vmem>>, vector<8x32xf32>,
    return
  }
  func.func @transform_0(%arg0: i32, %arg1: i32) -> (i32, i32) {
    %c0_i32 = arith.constant 0 : i32
    %c0_i32_0 = arith.constant 0 : i32
    return %arg0, %c0_i32 : i32, i32
  }
  func.func @transform_1(%arg0: i32, %arg1: i32) -> (i32, i32) {
    %c0_i32 = arith.constant 0 : i32
    %c0_i32_0 = arith.constant 0 : i32
    %c0_i32_1 = arith.constant 0 : i32
    return %c0_i32, %c0_i32_0 : i32, i32
  }
  func.func @transform_2(%arg0: i32, %arg1: i32) -> (i32, i32) {
    %c0_i32 = arith.constant 0 : i32
    %c0_i32_0 = arith.constant 0 : i32
    %c0_i32_1 = arith.constant 0 : i32
    return %c0_i32, %c0_i32_0 : i32, i32
  }
  func.func @transform_3(%arg0: i32, %arg1: i32) -> (i32, i32) {
    %c0_i32 = arith.constant 0 : i32
    %c0_i32_0 = arith.constant 0 : i32
    return %c0_i32, %arg1 : i32, i32
  }
  func.func @transform_4(%arg0: i32, %arg1: i32) -> (i32, i32) {
    %c0_i32 = arith.constant 0 : i32
    %c0_i32_0 = arith.constant 0 : i32
    return %c0_i32, %arg1 : i32, i32
  }
  func.func @transform_5(%arg0: i32, %arg1: i32) -> (i32, i32) {
    %c0_i32 = arith.constant 0 : i32
    return %arg0, %arg1 : i32, i32
  }
}

module attributes {stable_mosaic.version = 11 : i64} {
  func.func @kernel(%arg0: i32, %arg1: i32, %arg2: memref<16x32xf32, #tpu.memory_space<vmem>>, %arg3: memref<1x32xf32, #tpu.memory_space<vmem>>, %arg4: memref<1x32xf32, #tpu.memory_space<vmem>>, %arg5: memref<32x96xbf16, #tpu.memory_space<vmem>>, %arg6: memref<1x96xf32, #tpu.memory_space<vmem>>, %arg7: memref<16x96xf32, #tpu.memory_space<vmem>>) attributes {dimension_semantics = [#tpu.dimension_semantics<parallel>, #tpu.dimension_semantics<parallel>], iteration_bounds = array<i64: 2, 1>, scalar_prefetch = 0 : i64, scratch_operands = 0 : i64, tpu.core_type = #tpu.core_type<tc>, window_params = [{transform_indices = @transform_0, window_bounds = array<i64: 16, 32>}, {pipeline_mode = #tpu.pipeline_mode<synchronous>, transform_indices = @transform_1, window_bounds = array<i64: 1, 32>}, {pipeline_mode = #tpu.pipeline_mode<synchronous>, transform_indices = @transform_2, window_bounds = array<i64: 1, 32>}, {transform_indices = @transform_3, window_bounds = array<i64: 32, 96>}, {transform_indices = @transform_4, window_bounds = array<i64: 1, 96>}, {transform_indices = @transform_5, window_bounds = array<i64: 16, 96>}]} {
    %c0 = arith.constant 0 : index
    %c0_0 = arith.constant 0 : index
    %0 = vector.load %arg2[%c0, %c0_0] : memref<16x32xf32, #tpu.memory_space<vmem>>, vector<16x32xf32>
    %cst = arith.constant dense<0.000000e+00> : vector<16xf32>
    %1 = vector.multi_reduction <add>, %0, %cst [1] : vector<16x32xf32> to vector<16xf32>
    %2 = vector.shape_cast %1 : vector<16xf32> to vector<16x1xf32>
    %cst_1 = arith.constant 3.200000e+01 : f32
    %3 = vector.broadcast %cst_1 : f32 to vector<16x1xf32>
    %4 = arith.divf %2, %3 : vector<16x1xf32>
    %5 = vector.broadcast %4 : vector<16x1xf32> to vector<16x32xf32>
    %6 = arith.subf %0, %5 : vector<16x32xf32>
    %7 = arith.mulf %6, %6 : vector<16x32xf32>
    %cst_2 = arith.constant dense<0.000000e+00> : vector<16xf32>
    %8 = vector.multi_reduction <add>, %7, %cst_2 [1] : vector<16x32xf32> to vector<16xf32>
    %9 = vector.shape_cast %8 : vector<16xf32> to vector<16x1xf32>
    %cst_3 = arith.constant 3.200000e+01 : f32
    %10 = vector.broadcast %cst_3 : f32 to vector<16x1xf32>
    %11 = arith.divf %9, %10 : vector<16x1xf32>
    %cst_4 = arith.constant 9.99999996E-13 : f32
    %12 = vector.broadcast %cst_4 : f32 to vector<16x1xf32>
    %13 = arith.addf %11, %12 : vector<16x1xf32>
    %14 = math.rsqrt %13 : vector<16x1xf32>
    %15 = vector.broadcast %14 : vector<16x1xf32> to vector<16x32xf32>
    %16 = arith.mulf %6, %15 : vector<16x32xf32>
    %c0_5 = arith.constant 0 : index
    %c0_6 = arith.constant 0 : index
    %17 = vector.load %arg3[%c0_5, %c0_6] : memref<1x32xf32, #tpu.memory_space<vmem>>, vector<1x32xf32>
    %18 = vector.broadcast %17 : vector<1x32xf32> to vector<16x32xf32>
    %19 = arith.mulf %16, %18 : vector<16x32xf32>
    %c0_7 = arith.constant 0 : index
    %c0_8 = arith.constant 0 : index
    %20 = vector.load %arg4[%c0_7, %c0_8] : memref<1x32xf32, #tpu.memory_space<vmem>>, vector<1x32xf32>
    %21 = vector.broadcast %20 : vector<1x32xf32> to vector<16x32xf32>
    %22 = arith.addf %19, %21 : vector<16x32xf32>
    %23 = arith.truncf %22 : vector<16x32xf32> to vector<16x32xbf16>
    %c0_9 = arith.constant 0 : index
    %c0_10 = arith.constant 0 : index
    %24 = vector.load %arg5[%c0_9, %c0_10] : memref<32x96xbf16, #tpu.memory_space<vmem>>, vector<32x96xbf16>
    %cst_11 = arith.constant dense<0.000000e+00> : vector<16x96xf32>
    %25 = tpu.matmul %23, %24, %cst_11 {dimension_numbers = #tpu.dot_dimension_numbers<[1], [0], [0], [1], [0, 0, 1, 1], [], []>} : vector<16x32xbf16>, vector<32x96xbf16>, vector<16x96xf32> -> vector<16x96xf32>
    %c0_12 = arith.constant 0 : index
    %c0_13 = arith.constant 0 : index
    %26 = vector.load %arg6[%c0_12, %c0_13] : memref<1x96xf32, #tpu.memory_space<vmem>>, vector<1x96xf32>
    %27 = vector.broadcast %26 : vector<1x96xf32> to vector<16x96xf32>
    %28 = arith.addf %25, %27 : vector<16x96xf32>
    %c0_14 = arith.constant 0 : index
    %c0_15 = arith.constant 0 : index
    %29 = vector.load %arg7[%c0_14, %c0_15] : memref<16x96xf32, #tpu.memory_space<vmem>>, vector<16x96xf32>
    tpu.vector_store %arg7[%c0_14, %c0_15], %28 {strides = array<i32>} : memref<16x96xf32, #tpu.memory_space<vmem>>, vector<16x96xf32>,
    return
  }
  func.func @transform_0(%arg0: i32, %arg1: i32) -> (i32, i32) {
    %c0_i32 = arith.constant 0 : i32
    %c0_i32_0 = arith.constant 0 : i32
    return %arg0, %c0_i32 : i32, i32
  }
  func.func @transform_1(%arg0: i32, %arg1: i32) -> (i32, i32) {
    %c0_i32 = arith.constant 0 : i32
    %c0_i32_0 = arith.constant 0 : i32
    %c0_i32_1 = arith.constant 0 : i32
    return %c0_i32, %c0_i32_0 : i32, i32
  }
  func.func @transform_2(%arg0: i32, %arg1: i32) -> (i32, i32) {
    %c0_i32 = arith.constant 0 : i32
    %c0_i32_0 = arith.constant 0 : i32
    %c0_i32_1 = arith.constant 0 : i32
    return %c0_i32, %c0_i32_0 : i32, i32
  }
  func.func @transform_3(%arg0: i32, %arg1: i32) -> (i32, i32) {
    %c0_i32 = arith.constant 0 : i32
    %c0_i32_0 = arith.constant 0 : i32
    return %c0_i32, %arg1 : i32, i32
  }
  func.func @transform_4(%arg0: i32, %arg1: i32) -> (i32, i32) {
    %c0_i32 = arith.constant 0 : i32
    %c0_i32_0 = arith.constant 0 : i32
    return %c0_i32, %arg1 : i32, i32
  }
  func.func @transform_5(%arg0: i32, %arg1: i32) -> (i32, i32) {
    %c0_i32 = arith.constant 0 : i32
    return %arg0, %arg1 : i32, i32
  }
}

module attributes {stable_mosaic.version = 11 : i64} {
  func.func @kernel(%arg0: i32, %arg1: i32, %arg2: memref<1x8x20xf32, #tpu.memory_space<vmem>>, %arg3: memref<20x32xbf16, #tpu.memory_space<vmem>>, %arg4: memref<1x32xf32, #tpu.memory_space<vmem>>, %arg5: memref<1x32xf32, #tpu.memory_space<vmem>>, %arg6: memref<1x32xf32, #tpu.memory_space<vmem>>, %arg7: memref<8x32xf32, #tpu.memory_space<vmem>>, %arg8: memref<1x8x32xf32, #tpu.memory_space<vmem>>) attributes {dimension_semantics = [#tpu.dimension_semantics<parallel>, #tpu.dimension_semantics<parallel>], iteration_bounds = array<i64: 2, 2>, scalar_prefetch = 0 : i64, scratch_operands = 0 : i64, tpu.core_type = #tpu.core_type<tc>, window_params = [{transform_indices = @transform_0, window_bounds = array<i64: 1, 8, 20>}, {pipeline_mode = #tpu.pipeline_mode<synchronous>, transform_indices = @transform_1, window_bounds = array<i64: 20, 32>}, {pipeline_mode = #tpu.pipeline_mode<synchronous>, transform_indices = @transform_2, window_bounds = array<i64: 1, 32>}, {pipeline_mode = #tpu.pipeline_mode<synchronous>, transform_indices = @transform_3, window_bounds = array<i64: 1, 32>}, {pipeline_mode = #tpu.pipeline_mode<synchronous>, transform_indices = @transform_4, window_bounds = array<i64: 1, 32>}, {transform_indices = @transform_5, window_bounds = array<i64: 8, 32>}, {transform_indices = @transform_6, window_bounds = array<i64: 1, 8, 32>}]} {
    %c0 = arith.constant 0 : index
    %c0_0 = arith.constant 0 : index
    %c0_1 = arith.constant 0 : index
    %0 = vector.load %arg2[%c0, %c0_0, %c0_1] : memref<1x8x20xf32, #tpu.memory_space<vmem>>, vector<1x8x20xf32>
    %1 = vector.shape_cast %0 : vector<1x8x20xf32> to vector<8x20xf32>
    %2 = arith.truncf %1 : vector<8x20xf32> to vector<8x20xbf16>
    %c0_2 = arith.constant 0 : index
    %c0_3 = arith.constant 0 : index
    %3 = vector.load %arg3[%c0_2, %c0_3] : memref<20x32xbf16, #tpu.memory_space<vmem>>, vector<20x32xbf16>
    %cst = arith.constant dense<0.000000e+00> : vector<8x32xf32>
    %4 = tpu.matmul %2, %3, %cst {dimension_numbers = #tpu.dot_dimension_numbers<[1], [0], [0], [1], [0, 0, 1, 1], [], []>} : vector<8x20xbf16>, vector<20x32xbf16>, vector<8x32xf32> -> vector<8x32xf32>
    %c0_4 = arith.constant 0 : index
    %c0_5 = arith.constant 0 : index
    %5 = vector.load %arg4[%c0_4, %c0_5] : memref<1x32xf32, #tpu.memory_space<vmem>>, vector<1x32xf32>
    %6 = vector.broadcast %5 : vector<1x32xf32> to vector<8x32xf32>
    %7 = arith.addf %4, %6 : vector<8x32xf32>
    %cst_6 = arith.constant dense<0.000000e+00> : vector<8xf32>
    %8 = vector.multi_reduction <add>, %7, %cst_6 [1] : vector<8x32xf32> to vector<8xf32>
    %9 = vector.shape_cast %8 : vector<8xf32> to vector<8x1xf32>
    %cst_7 = arith.constant 3.200000e+01 : f32
    %10 = vector.broadcast %cst_7 : f32 to vector<8x1xf32>
    %11 = arith.divf %9, %10 : vector<8x1xf32>
    %12 = vector.broadcast %11 : vector<8x1xf32> to vector<8x32xf32>
    %13 = arith.subf %7, %12 : vector<8x32xf32>
    %14 = arith.mulf %13, %13 : vector<8x32xf32>
    %cst_8 = arith.constant dense<0.000000e+00> : vector<8xf32>
    %15 = vector.multi_reduction <add>, %14, %cst_8 [1] : vector<8x32xf32> to vector<8xf32>
    %16 = vector.shape_cast %15 : vector<8xf32> to vector<8x1xf32>
    %cst_9 = arith.constant 3.200000e+01 : f32
    %17 = vector.broadcast %cst_9 : f32 to vector<8x1xf32>
    %18 = arith.divf %16, %17 : vector<8x1xf32>
    %cst_10 = arith.constant 9.99999996E-13 : f32
    %19 = vector.broadcast %cst_10 : f32 to vector<8x1xf32>
    %20 = arith.addf %18, %19 : vector<8x1xf32>
    %21 = math.rsqrt %20 : vector<8x1xf32>
    %22 = vector.broadcast %21 : vector<8x1xf32> to vector<8x32xf32>
    %23 = arith.mulf %13, %22 : vector<8x32xf32>
    %c0_11 = arith.constant 0 : index
    %c0_12 = arith.constant 0 : index
    %24 = vector.load %arg5[%c0_11, %c0_12] : memref<1x32xf32, #tpu.memory_space<vmem>>, vector<1x32xf32>
    %25 = vector.broadcast %24 : vector<1x32xf32> to vector<8x32xf32>
    %26 = arith.mulf %23, %25 : vector<8x32xf32>
    %c0_13 = arith.constant 0 : index
    %c0_14 = arith.constant 0 : index
    %27 = vector.load %arg6[%c0_13, %c0_14] : memref<1x32xf32, #tpu.memory_space<vmem>>, vector<1x32xf32>
    %28 = vector.broadcast %27 : vector<1x32xf32> to vector<8x32xf32>
    %29 = arith.addf %26, %28 : vector<8x32xf32>
    %cst_15 = arith.constant 0.000000e+00 : f32
    %30 = vector.broadcast %cst_15 : f32 to vector<8x32xf32>
    %31 = arith.maximumf %29, %30 : vector<8x32xf32>
    %cst_16 = arith.constant 5.65685415 : f32
    %32 = vector.broadcast %cst_16 : f32 to vector<8x32xf32>
    %33 = arith.mulf %31, %32 : vector<8x32xf32>
    %c0_17 = arith.constant 0 : index
    %c0_18 = arith.constant 0 : index
    %34 = vector.load %arg7[%c0_17, %c0_18] : memref<8x32xf32, #tpu.memory_space<vmem>>, vector<8x32xf32>
    %35 = arith.addf %33, %34 : vector<8x32xf32>
    %c0_19 = arith.constant 0 : index
    %c0_20 = arith.constant 0 : index
    %c0_21 = arith.constant 0 : index
    %36 = vector.load %arg8[%c0_19, %c0_20, %c0_21] : memref<1x8x32xf32, #tpu.memory_space<vmem>>, vector<1x8x32xf32>
    %37 = vector.shape_cast %36 : vector<1x8x32xf32> to vector<8x32xf32>
    %38 = vector.shape_cast %35 : vector<8x32xf32> to vector<1x8x32xf32>
    tpu.vector_store %arg8[%c0_19, %c0_20, %c0_21], %38 {strides = array<i32>} : memref<1x8x32xf32, #tpu.memory_space<vmem>>, vector<1x8x32xf32>,
    return
  }
  func.func @transform_0(%arg0: i32, %arg1: i32) -> (i32, i32, i32) {
    %c0_i32 = arith.constant 0 : i32
    %c0_i32_0 = arith.constant 0 : i32
    return %arg0, %arg1, %c0_i32 : i32, i32, i32
  }
  func.func @transform_1(%arg0: i32, %arg1: i32) -> (i32, i32) {
    %c0_i32 = arith.constant 0 : i32
    %c0_i32_0 = arith.constant 0 : i32
    %c0_i32_1 = arith.constant 0 : i32
    return %c0_i32, %c0_i32_0 : i32, i32
  }
  func.func @transform_2(%arg0: i32, %arg1: i32) -> (i32, i32) {
    %c0_i32 = arith.constant 0 : i32
    %c0_i32_0 = arith.constant 0 : i32
    %c0_i32_1 = arith.constant 0 : i32
    return %c0_i32, %c0_i32_0 : i32, i32
  }
  func.func @transform_3(%arg0: i32, %arg1: i32) -> (i32, i32) {
    %c0_i32 = arith.constant 0 : i32
    %c0_i32_0 = arith.constant 0 : i32
    %c0_i32_1 = arith.constant 0 : i32
    return %c0_i32, %c0_i32_0 : i32, i32
  }
  func.func @transform_4(%arg0: i32, %arg1: i32) -> (i32, i32) {
    %c0_i32 = arith.constant 0 : i32
    %c0_i32_0 = arith.constant 0 : i32
    %c0_i32_1 = arith.constant 0 : i32
    return %c0_i32, %c0_i32_0 : i32, i32
  }
  func.func @transform_5(%arg0: i32, %arg1: i32) -> (i32, i32) {
    %c0_i32 = arith.constant 0 : i32
    %c0_i32_0 = arith.constant 0 : i32
    return %arg1, %c0_i32 : i32, i32
  }
  func.func @transform_6(%arg0: i32, %arg1: i32) -> (i32, i32, i32) {
    %c0_i32 = arith.constant 0 : i32
    %c0_i32_0 = arith.constant 0 : i32
    return %arg0, %arg1, %c0_i32 : i32, i32, i32
  }
}

module attributes {stable_mosaic.version = 11 : i64} {
  func.func @kernel(%arg0: i32, %arg1: memref<2xi32, #tpu.memory_space<smem>>, %arg2: memref<1x16x96xf32, #tpu.memory_space<vmem>>, %arg3: memref<1x16x32xf32, #tpu.memory_space<vmem>>) attributes {dimension_semantics = [#tpu.dimension_semantics<parallel>], iteration_bounds = array<i64: 2>, scalar_prefetch = 1 : i64, scratch_operands = 0 : i64, tpu.core_type = #tpu.core_type<tc>, window_params = [{transform_indices = @transform_0, window_bounds = array<i64: 1, 16, 96>}, {transform_indices = @transform_1, window_bounds = array<i64: 1, 16, 32>}]} {
    %0 = arith.index_cast %arg0 : i32 to index
    %1 = memref.load %arg1[%0] : memref<2xi32, #tpu.memory_space<smem>>
    %2 = tpu.iota {dimensions = array<i32: 1>} : vector<16x16xi32>
    %3 = vector.broadcast %1 : i32 to vector<16x16xi32>
    %4 = arith.cmpi slt, %2, %3 : vector<16x16xi32>
    %cst = arith.constant 0.000000e+00 : f32
    %cst_0 = arith.constant -1.000000e+30 : f32
    %5 = vector.broadcast %cst : f32 to vector<16x16xf32>
    %6 = vector.broadcast %cst_0 : f32 to vector<16x16xf32>
    %7 = arith.select %4, %5, %6 : vector<16x16xi1>, vector<16x16xf32>
    %8 = arith.extui %4 : vector<16x16xi1> to vector<16x16xi32>
    %9 = arith.sitofp %8 : vector<16x16xi32> to vector<16x16xf32>
    %c0 = arith.constant 0 : index
    %c0_1 = arith.constant 0 : index
    %c0_2 = arith.constant 0 : index
    %10 = vector.load %arg2[%c0, %c0_1, %c0_2] : memref<1x16x96xf32, #tpu.memory_space<vmem>>, vector<1x16x96xf32>
    %11 = vector.shape_cast %10 : vector<1x16x96xf32> to vector<16x96xf32>
    %12 = vector.extract_strided_slice %11 {offsets = [0, 0], sizes = [16, 32], strides = [1, 1]} : vector<16x96xf32> to vector<16x32xf32>
    %cst_3 = arith.constant 0.353553385 : f32
    %13 = vector.broadcast %cst_3 : f32 to vector<16x32xf32>
    %14 = arith.mulf %12, %13 : vector<16x32xf32>
    %15 = vector.extract_strided_slice %11 {offsets = [0, 32], sizes = [16, 32], strides = [1, 1]} : vector<16x96xf32> to vector<16x32xf32>
    %16 = vector.extract_strided_slice %11 {offsets = [0, 64], sizes = [16, 32], strides = [1, 1]} : vector<16x96xf32> to vector<16x32xf32>
    %17 = vector.extract_strided_slice %14 {offsets = [0, 0], sizes = [16, 8], strides = [1, 1]} : vector<16x32xf32> to vector<16x8xf32>
    %18 = arith.truncf %17 : vector<16x8xf32> to vector<16x8xbf16>
    %19 = vector.extract_strided_slice %15 {offsets = [0, 0], sizes = [16, 8], strides = [1, 1]} : vector<16x32xf32> to vector<16x8xf32>
    %20 = arith.truncf %19 : vector<16x8xf32> to vector<16x8xbf16>
    %21 = vector.extract_strided_slice %16 {offsets = [0, 0], sizes = [16, 8], strides = [1, 1]} : vector<16x32xf32> to vector<16x8xf32>
    %22 = arith.truncf %21 : vector<16x8xf32> to vector<16x8xbf16>
    %cst_4 = arith.constant dense<0.000000e+00> : vector<16x16xf32>
    %23 = tpu.matmul %18, %20, %cst_4 {dimension_numbers = #tpu.dot_dimension_numbers<[1], [1], [0], [0], [0, 0, 1, 0], [], []>} : vector<16x8xbf16>, vector<16x8xbf16>, vector<16x16xf32> -> vector<16x16xf32>
    %24 = arith.addf %23, %7 : vector<16x16xf32>
    %cst_5 = arith.constant dense<0xFF800000> : vector<16xf32>
    %25 = vector.multi_reduction <maximumf>, %24, %cst_5 [1] : vector<16x16xf32> to vector<16xf32>
    %26 = vector.shape_cast %25 : vector<16xf32> to vector<16x1xf32>
    %27 = vector.broadcast %26 : vector<16x1xf32> to vector<16x16xf32>
    %28 = arith.subf %24, %27 : vector<16x16xf32>
    %29 = math.exp %28 : vector<16x16xf32>
    %30 = arith.mulf %29, %9 : vector<16x16xf32>
    %cst_6 = arith.constant dense<0.000000e+00> : vector<16xf32>
    %31 = vector.multi_reduction <add>, %30, %cst_6 [1] : vector<16x16xf32> to vector<16xf32>
    %32 = vector.shape_cast %31 : vector<16xf32> to vector<16x1xf32>
    %cst_7 = arith.constant 1.000000e-30 : f32
    %33 = vector.broadcast %cst_7 : f32 to vector<16x1xf32>
    %34 = arith.maximumf %32, %33 : vector<16x1xf32>
    %35 = tpu.reciprocal %34 {approx = true} : vector<16x1xf32> -> vector<16x1xf32>
    %36 = vector.broadcast %35 : vector<16x1xf32> to vector<16x16xf32>
    %37 = arith.mulf %30, %36 : vector<16x16xf32>
    %38 = arith.truncf %37 : vector<16x16xf32> to vector<16x16xbf16>
    %cst_8 = arith.constant dense<0.000000e+00> : vector<16x8xf32>
    %39 = tpu.matmul %38, %22, %cst_8 {dimension_numbers = #tpu.dot_dimension_numbers<[1], [0], [0], [1], [0, 0, 1, 1], [], []>} : vector<16x16xbf16>, vector<16x8xbf16>, vector<16x8xf32> -> vector<16x8xf32>
    %40 = vector.extract_strided_slice %14 {offsets = [0, 8], sizes = [16, 8], strides = [1, 1]} : vector<16x32xf32> to vector<16x8xf32>
    %41 = arith.truncf %40 : vector<16x8xf32> to vector<16x8xbf16>
    %42 = vector.extract_strided_slice %15 {offsets = [0, 8], sizes = [16, 8], strides = [1, 1]} : vector<16x32xf32> to vector<16x8xf32>
    %43 = arith.truncf %42 : vector<16x8xf32> to vector<16x8xbf16>
    %44 = vector.extract_strided_slice %16 {offsets = [0, 8], sizes = [16, 8], strides = [1, 1]} : vector<16x32xf32> to vector<16x8xf32>
    %45 = arith.truncf %44 : vector<16x8xf32> to vector<16x8xbf16>
    %cst_9 = arith.constant dense<0.000000e+00> : vector<16x16xf32>
    %46 = tpu.matmul %41, %43, %cst_9 {dimension_numbers = #tpu.dot_dimension_numbers<[1], [1], [0], [0], [0, 0, 1, 0], [], []>} : vector<16x8xbf16>, vector<16x8xbf16>, vector<16x16xf32> -> vector<16x16xf32>
    %47 = arith.addf %46, %7 : vector<16x16xf32>
    %cst_10 = arith.constant dense<0xFF800000> : vector<16xf32>
    %48 = vector.multi_reduction <maximumf>, %47, %cst_10 [1] : vector<16x16xf32> to vector<16xf32>
    %49 = vector.shape_cast %48 : vector<16xf32> to vector<16x1xf32>
    %50 = vector.broadcast %49 : vector<16x1xf32> to vector<16x16xf32>
    %51 = arith.subf %47, %50 : vector<16x16xf32>
    %52 = math.exp %51 : vector<16x16xf32>
    %53 = arith.mulf %52, %9 : vector<16x16xf32>
    %cst_11 = arith.constant dense<0.000000e+00> : vector<16xf32>
    %54 = vector.multi_reduction <add>, %53, %cst_11 [1] : vector<16x16xf32> to vector<16xf32>
    %55 = vector.shape_cast %54 : vector<16xf32> to vector<16x1xf32>
    %cst_12 = arith.constant 1.000000e-30 : f32
    %56 = vector.broadcast %cst_12 : f32 to vector<16x1xf32>
    %57 = arith.maximumf %55, %56 : vector<16x1xf32>
    %58 = tpu.reciprocal %57 {approx = true} : vector<16x1xf32> -> vector<16x1xf32>
    %59 = vector.broadcast %58 : vector<16x1xf32> to vector<16x16xf32>
    %60 = arith.mulf %53, %59 : vector<16x16xf32>
    %61 = arith.truncf %60 : vector<16x16xf32> to vector<16x16xbf16>
    %cst_13 = arith.constant dense<0.000000e+00> : vector<16x8xf32>
    %62 = tpu.matmul %61, %45, %cst_13 {dimension_numbers = #tpu.dot_dimension_numbers<[1], [0], [0], [1], [0, 0, 1, 1], [], []>} : vector<16x16xbf16>, vector<16x8xbf16>, vector<16x8xf32> -> vector<16x8xf32>
    %63 = vector.extract_strided_slice %14 {offsets = [0, 16], sizes = [16, 8], strides = [1, 1]} : vector<16x32xf32> to vector<16x8xf32>
    %64 = arith.truncf %63 : vector<16x8xf32> to vector<16x8xbf16>
    %65 = vector.extract_strided_slice %15 {offsets = [0, 16], sizes = [16, 8], strides = [1, 1]} : vector<16x32xf32> to vector<16x8xf32>
    %66 = arith.truncf %65 : vector<16x8xf32> to vector<16x8xbf16>
    %67 = vector.extract_strided_slice %16 {offsets = [0, 16], sizes = [16, 8], strides = [1, 1]} : vector<16x32xf32> to vector<16x8xf32>
    %68 = arith.truncf %67 : vector<16x8xf32> to vector<16x8xbf16>
    %cst_14 = arith.constant dense<0.000000e+00> : vector<16x16xf32>
    %69 = tpu.matmul %64, %66, %cst_14 {dimension_numbers = #tpu.dot_dimension_numbers<[1], [1], [0], [0], [0, 0, 1, 0], [], []>} : vector<16x8xbf16>, vector<16x8xbf16>, vector<16x16xf32> -> vector<16x16xf32>
    %70 = arith.addf %69, %7 : vector<16x16xf32>
    %cst_15 = arith.constant dense<0xFF800000> : vector<16xf32>
    %71 = vector.multi_reduction <maximumf>, %70, %cst_15 [1] : vector<16x16xf32> to vector<16xf32>
    %72 = vector.shape_cast %71 : vector<16xf32> to vector<16x1xf32>
    %73 = vector.broadcast %72 : vector<16x1xf32> to vector<16x16xf32>
    %74 = arith.subf %70, %73 : vector<16x16xf32>
    %75 = math.exp %74 : vector<16x16xf32>
    %76 = arith.mulf %75, %9 : vector<16x16xf32>
    %cst_16 = arith.constant dense<0.000000e+00> : vector<16xf32>
    %77 = vector.multi_reduction <add>, %76, %cst_16 [1] : vector<16x16xf32> to vector<16xf32>
    %78 = vector.shape_cast %77 : vector<16xf32> to vector<16x1xf32>
    %cst_17 = arith.constant 1.000000e-30 : f32
    %79 = vector.broadcast %cst_17 : f32 to vector<16x1xf32>
    %80 = arith.maximumf %78, %79 : vector<16x1xf32>
    %81 = tpu.reciprocal %80 {approx = true} : vector<16x1xf32> -> vector<16x1xf32>
    %82 = vector.broadcast %81 : vector<16x1xf32> to vector<16x16xf32>
    %83 = arith.mulf %76, %82 : vector<16x16xf32>
    %84 = arith.truncf %83 : vector<16x16xf32> to vector<16x16xbf16>
    %cst_18 = arith.constant dense<0.000000e+00> : vector<16x8xf32>
    %85 = tpu.matmul %84, %68, %cst_18 {dimension_numbers = #tpu.dot_dimension_numbers<[1], [0], [0], [1], [0, 0, 1, 1], [], []>} : vector<16x16xbf16>, vector<16x8xbf16>, vector<16x8xf32> -> vector<16x8xf32>
    %86 = vector.extract_strided_slice %14 {offsets = [0, 24], sizes = [16, 8], strides = [1, 1]} : vector<16x32xf32> to vector<16x8xf32>
    %87 = arith.truncf %86 : vector<16x8xf32> to vector<16x8xbf16>
    %88 = vector.extract_strided_slice %15 {offsets = [0, 24], sizes = [16, 8], strides = [1, 1]} : vector<16x32xf32> to vector<16x8xf32>
    %89 = arith.truncf %88 : vector<16x8xf32> to vector<16x8xbf16>
    %90 = vector.extract_strided_slice %16 {offsets = [0, 24], sizes = [16, 8], strides = [1, 1]} : vector<16x32xf32> to vector<16x8xf32>
    %91 = arith.truncf %90 : vector<16x8xf32> to vector<16x8xbf16>
    %cst_19 = arith.constant dense<0.000000e+00> : vector<16x16xf32>
    %92 = tpu.matmul %87, %89, %cst_19 {dimension_numbers = #tpu.dot_dimension_numbers<[1], [1], [0], [0], [0, 0, 1, 0], [], []>} : vector<16x8xbf16>, vector<16x8xbf16>, vector<16x16xf32> -> vector<16x16xf32>
    %93 = arith.addf %92, %7 : vector<16x16xf32>
    %cst_20 = arith.constant dense<0xFF800000> : vector<16xf32>
    %94 = vector.multi_reduction <maximumf>, %93, %cst_20 [1] : vector<16x16xf32> to vector<16xf32>
    %95 = vector.shape_cast %94 : vector<16xf32> to vector<16x1xf32>
    %96 = vector.broadcast %95 : vector<16x1xf32> to vector<16x16xf32>
    %97 = arith.subf %93, %96 : vector<16x16xf32>
    %98 = math.exp %97 : vector<16x16xf32>
    %99 = arith.mulf %98, %9 : vector<16x16xf32>
    %cst_21 = arith.constant dense<0.000000e+00> : vector<16xf32>
    %100 = vector.multi_reduction <add>, %99, %cst_21 [1] : vector<16x16xf32> to vector<16xf32>
    %101 = vector.shape_cast %100 : vector<16xf32> to vector<16x1xf32>
    %cst_22 = arith.constant 1.000000e-30 : f32
    %102 = vector.broadcast %cst_22 : f32 to vector<16x1xf32>
    %103 = arith.maximumf %101, %102 : vector<16x1xf32>
    %104 = tpu.reciprocal %103 {approx = true} : vector<16x1xf32> -> vector<16x1xf32>
    %105 = vector.broadcast %104 : vector<16x1xf32> to vector<16x16xf32>
    %106 = arith.mulf %99, %105 : vector<16x16xf32>
    %107 = arith.truncf %106 : vector<16x16xf32> to vector<16x16xbf16>
    %cst_23 = arith.constant dense<0.000000e+00> : vector<16x8xf32>
    %108 = tpu.matmul %107, %91, %cst_23 {dimension_numbers = #tpu.dot_dimension_numbers<[1], [0], [0], [1], [0, 0, 1, 1], [], []>} : vector<16x16xbf16>, vector<16x8xbf16>, vector<16x8xf32> -> vector<16x8xf32>
    %109 = tpu.concatenate %39, %62, %85, %108 in 1 : vector<16x8xf32>, vector<16x8xf32>, vector<16x8xf32>, vector<16x8xf32> -> vector<16x32xf32>
    %c0_24 = arith.constant 0 : index
    %c0_25 = arith.constant 0 : index
    %c0_26 = arith.constant 0 : index
    %110 = vector.load %arg3[%c0_24, %c0_25, %c0_26] : memref<1x16x32xf32, #tpu.memory_space<vmem>>, vector<1x16x32xf32>
    %111 = vector.shape_cast %110 : vector<1x16x32xf32> to vector<16x32xf32>
    %112 = vector.shape_cast %109 : vector<16x32xf32> to vector<1x16x32xf32>
    tpu.vector_store %arg3[%c0_24, %c0_25, %c0_26], %112 {strides = array<i32>} : memref<1x16x32xf32, #tpu.memory_space<vmem>>, vector<1x16x32xf32>,
    return
  }
  func.func @transform_0(%arg0: i32, %arg1: memref<2xi32, #tpu.memory_space<smem>>) -> (i32, i32, i32) {
    %c0_i32 = arith.constant 0 : i32
    %c0_i32_0 = arith.constant 0 : i32
    %c0_i32_1 = arith.constant 0 : i32
    return %arg0, %c0_i32, %c0_i32_0 : i32, i32, i32
  }
  func.func @transform_1(%arg0: i32, %arg1: memref<2xi32, #tpu.memory_space<smem>>) -> (i32, i32, i32) {
    %c0_i32 = arith.constant 0 : i32
    %c0_i32_0 = arith.constant 0 : i32
    %c0_i32_1 = arith.constant 0 : i32
    return %arg0, %c0_i32, %c0_i32_0 : i32, i32, i32
  }
}

module attributes {stable_mosaic.version = 11 : i64} {
  func.func @kernel(%arg0: i32, %arg1: memref<16x32xf32, #tpu.memory_space<vmem>>, %arg2: memref<16x32xf32, #tpu.memory_space<vmem>>, %arg3: memref<32x32xbf16, #tpu.memory_space<vmem>>, %arg4: memref<1x32xf32, #tpu.memory_space<vmem>>, %arg5: memref<16x32xf32, #tpu.memory_space<vmem>>) attributes {dimension_semantics = [#tpu.dimension_semantics<parallel>], iteration_bounds = array<i64: 2>, scalar_prefetch = 0 : i64, scratch_operands = 0 : i64, tpu.core_type = #tpu.core_type<tc>, window_params = [{transform_indices = @transform_0, window_bounds = array<i64: 16, 32>}, {transform_indices = @transform_1, window_bounds = array<i64: 16, 32>}, {pipeline_mode = #tpu.pipeline_mode<synchronous>, transform_indices = @transform_2, window_bounds = array<i64: 32, 32>}, {pipeline_mode = #tpu.pipeline_mode<synchronous>, transform_indices = @transform_3, window_bounds = array<i64: 1, 32>}, {transform_indices = @transform_4, window_bounds = array<i64: 16, 32>}]} {
    %c0 = arith.constant 0 : index
    %c0_0 = arith.constant 0 : index
    %0 = vector.load %arg1[%c0, %c0_0] : memref<16x32xf32, #tpu.memory_space<vmem>>, vector<16x32xf32>
    %1 = arith.truncf %0 : vector<16x32xf32> to vector<16x32xbf16>
    %c0_1 = arith.constant 0 : index
    %c0_2 = arith.constant 0 : index
    %2 = vector.load %arg2[%c0_1, %c0_2] : memref<16x32xf32, #tpu.memory_space<vmem>>, vector<16x32xf32>
    %c0_3 = arith.constant 0 : index
    %c0_4 = arith.constant 0 : index
    %3 = vector.load %arg3[%c0_3, %c0_4] : memref<32x32xbf16, #tpu.memory_space<vmem>>, vector<32x32xbf16>
    %cst = arith.constant dense<0.000000e+00> : vector<16x32xf32>
    %4 = tpu.matmul %1, %3, %cst {dimension_numbers = #tpu.dot_dimension_numbers<[1], [0], [0], [1], [0, 0, 1, 1], [], []>} : vector<16x32xbf16>, vector<32x32xbf16>, vector<16x32xf32> -> vector<16x32xf32>
    %5 = arith.addf %2, %4 : vector<16x32xf32>
    %c0_5 = arith.constant 0 : index
    %c0_6 = arith.constant 0 : index
    %6 = vector.load %arg4[%c0_5, %c0_6] : memref<1x32xf32, #tpu.memory_space<vmem>>, vector<1x32xf32>
    %7 = vector.broadcast %6 : vector<1x32xf32> to vector<16x32xf32>
    %8 = arith.addf %5, %7 : vector<16x32xf32>
    %c0_7 = arith.constant 0 : index
    %c0_8 = arith.constant 0 : index
    %9 = vector.load %arg5[%c0_7, %c0_8] : memref<16x32xf32, #tpu.memory_space<vmem>>, vector<16x32xf32>
    tpu.vector_store %arg5[%c0_7, %c0_8], %8 {strides = array<i32>} : memref<16x32xf32, #tpu.memory_space<vmem>>, vector<16x32xf32>,
    return
  }
  func.func @transform_0(%arg0: i32) -> (i32, i32) {
    %c0_i32 = arith.constant 0 : i32
    %c0_i32_0 = arith.constant 0 : i32
    return %arg0, %c0_i32 : i32, i32
  }
  func.func @transform_1(%arg0: i32) -> (i32, i32) {
    %c0_i32 = arith.constant 0 : i32
    %c0_i32_0 = arith.constant 0 : i32
    return %arg0, %c0_i32 : i32, i32
  }
  func.func @transform_2(%arg0: i32) -> (i32, i32) {
    %c0_i32 = arith.constant 0 : i32
    %c0_i32_0 = arith.constant 0 : i32
    %c0_i32_1 = arith.constant 0 : i32
    return %c0_i32, %c0_i32_0 : i32, i32
  }
  func.func @transform_3(%arg0: i32) -> (i32, i32) {
    %c0_i32 = arith.constant 0 : i32
    %c0_i32_0 = arith.constant 0 : i32
    %c0_i32_1 = arith.constant 0 : i32
    return %c0_i32, %c0_i32_0 : i32, i32
  }
  func.func @transform_4(%arg0: i32) -> (i32, i32) {
    %c0_i32 = arith.constant 0 : i32
    %c0_i32_0 = arith.constant 0 : i32
    return %arg0, %c0_i32 : i32, i32
  }
}

module attributes {stable_mosaic.version = 11 : i64} {
  func.func @kernel(%arg0: i32, %arg1: memref<16x32xf32, #tpu.memory_space<vmem>>, %arg2: memref<32x64xbf16, #tpu.memory_space<vmem>>, %arg3: memref<1x64xf32, #tpu.memory_space<vmem>>, %arg4: memref<16x64xf32, #tpu.memory_space<vmem>>) attributes {dimension_semantics = [#tpu.dimension_semantics<parallel>], iteration_bounds = array<i64: 2>, scalar_prefetch = 0 : i64, scratch_operands = 0 : i64, tpu.core_type = #tpu.core_type<tc>, window_params = [{transform_indices = @transform_0, window_bounds = array<i64: 16, 32>}, {pipeline_mode = #tpu.pipeline_mode<synchronous>, transform_indices = @transform_1, window_bounds = array<i64: 32, 64>}, {pipeline_mode = #tpu.pipeline_mode<synchronous>, transform_indices = @transform_2, window_bounds = array<i64: 1, 64>}, {transform_indices = @transform_3, window_bounds = array<i64: 16, 64>}]} {
    %c0 = arith.constant 0 : index
    %c0_0 = arith.constant 0 : index
    %0 = vector.load %arg1[%c0, %c0_0] : memref<16x32xf32, #tpu.memory_space<vmem>>, vector<16x32xf32>
    %1 = arith.truncf %0 : vector<16x32xf32> to vector<16x32xbf16>
    %c0_1 = arith.constant 0 : index
    %c0_2 = arith.constant 0 : index
    %2 = vector.load %arg2[%c0_1, %c0_2] : memref<32x64xbf16, #tpu.memory_space<vmem>>, vector<32x64xbf16>
    %cst = arith.constant dense<0.000000e+00> : vector<16x64xf32>
    %3 = tpu.matmul %1, %2, %cst {dimension_numbers = #tpu.dot_dimension_numbers<[1], [0], [0], [1], [0, 0, 1, 1], [], []>} : vector<16x32xbf16>, vector<32x64xbf16>, vector<16x64xf32> -> vector<16x64xf32>
    %c0_3 = arith.constant 0 : index
    %c0_4 = arith.constant 0 : index
    %4 = vector.load %arg3[%c0_3, %c0_4] : memref<1x64xf32, #tpu.memory_space<vmem>>, vector<1x64xf32>
    %5 = vector.broadcast %4 : vector<1x64xf32> to vector<16x64xf32>
    %6 = arith.addf %3, %5 : vector<16x64xf32>
    %c0_5 = arith.constant 0 : index
    %c0_6 = arith.constant 0 : index
    %7 = vector.load %arg4[%c0_5, %c0_6] : memref<16x64xf32, #tpu.memory_space<vmem>>, vector<16x64xf32>
    tpu.vector_store %arg4[%c0_5, %c0_6], %6 {strides = array<i32>} : memref<16x64xf32, #tpu.memory_space<vmem>>, vector<16x64xf32>,
    return
  }
  func.func @transform_0(%arg0: i32) -> (i32, i32) {
    %c0_i32 = arith.constant 0 : i32
    %c0_i32_0 = arith.constant 0 : i32
    return %arg0, %c0_i32 : i32, i32
  }
  func.func @transform_1(%arg0: i32) -> (i32, i32) {
    %c0_i32 = arith.constant 0 : i32
    %c0_i32_0 = arith.constant 0 : i32
    %c0_i32_1 = arith.constant 0 : i32
    return %c0_i32, %c0_i32_0 : i32, i32
  }
  func.func @transform_2(%arg0: i32) -> (i32, i32) {
    %c0_i32 = arith.constant 0 : i32
    %c0_i32_0 = arith.constant 0 : i32
    %c0_i32_1 = arith.constant 0 : i32
    return %c0_i32, %c0_i32_0 : i32, i32
  }
  func.func @transform_3(%arg0: i32) -> (i32, i32) {
    %c0_i32 = arith.constant 0 : i32
    %c0_i32_0 = arith.constant 0 : i32
    return %arg0, %c0_i32 : i32, i32
  }
}

module attributes {stable_mosaic.version = 11 : i64} {
  func.func @kernel(%arg0: i32, %arg1: memref<16x32xf32, #tpu.memory_space<vmem>>, %arg2: memref<1x32xf32, #tpu.memory_space<vmem>>, %arg3: memref<1x32xf32, #tpu.memory_space<vmem>>, %arg4: memref<32x64xbf16, #tpu.memory_space<vmem>>, %arg5: memref<1x64xf32, #tpu.memory_space<vmem>>, %arg6: memref<64x32xbf16, #tpu.memory_space<vmem>>, %arg7: memref<1x32xf32, #tpu.memory_space<vmem>>, %arg8: memref<16x32xf32, #tpu.memory_space<vmem>>) attributes {dimension_semantics = [#tpu.dimension_semantics<parallel>], iteration_bounds = array<i64: 2>, scalar_prefetch = 0 : i64, scratch_operands = 0 : i64, tpu.core_type = #tpu.core_type<tc>, window_params = [{transform_indices = @transform_0, window_bounds = array<i64: 16, 32>}, {pipeline_mode = #tpu.pipeline_mode<synchronous>, transform_indices = @transform_1, window_bounds = array<i64: 1, 32>}, {pipeline_mode = #tpu.pipeline_mode<synchronous>, transform_indices = @transform_2, window_bounds = array<i64: 1, 32>}, {pipeline_mode = #tpu.pipeline_mode<synchronous>, transform_indices = @transform_3, window_bounds = array<i64: 32, 64>}, {pipeline_mode = #tpu.pipeline_mode<synchronous>, transform_indices = @transform_4, window_bounds = array<i64: 1, 64>}, {pipeline_mode = #tpu.pipeline_mode<synchronous>, transform_indices = @transform_5, window_bounds = array<i64: 64, 32>}, {pipeline_mode = #tpu.pipeline_mode<synchronous>, transform_indices = @transform_6, window_bounds = array<i64: 1, 32>}, {transform_indices = @transform_7, window_bounds = array<i64: 16, 32>}]} {
    %c0 = arith.constant 0 : index
    %c0_0 = arith.constant 0 : index
    %0 = vector.load %arg1[%c0, %c0_0] : memref<16x32xf32, #tpu.memory_space<vmem>>, vector<16x32xf32>
    %cst = arith.constant dense<0.000000e+00> : vector<16xf32>
    %1 = vector.multi_reduction <add>, %0, %cst [1] : vector<16x32xf32> to vector<16xf32>
    %2 = vector.shape_cast %1 : vector<16xf32> to vector<16x1xf32>
    %cst_1 = arith.constant 3.200000e+01 : f32
    %3 = vector.broadcast %cst_1 : f32 to vector<16x1xf32>
    %4 = arith.divf %2, %3 : vector<16x1xf32>
    %5 = vector.broadcast %4 : vector<16x1xf32> to vector<16x32xf32>
    %6 = arith.subf %0, %5 : vector<16x32xf32>
    %7 = arith.mulf %6, %6 : vector<16x32xf32>
    %cst_2 = arith.constant dense<0.000000e+00> : vector<16xf32>
    %8 = vector.multi_reduction <add>, %7, %cst_2 [1] : vector<16x32xf32> to vector<16xf32>
    %9 = vector.shape_cast %8 : vector<16xf32> to vector<16x1xf32>
    %cst_3 = arith.constant 3.200000e+01 : f32
    %10 = vector.broadcast %cst_3 : f32 to vector<16x1xf32>
    %11 = arith.divf %9, %10 : vector<16x1xf32>
    %cst_4 = arith.constant 9.99999996E-13 : f32
    %12 = vector.broadcast %cst_4 : f32 to vector<16x1xf32>
    %13 = arith.addf %11, %12 : vector<16x1xf32>
    %14 = math.rsqrt %13 : vector<16x1xf32>
    %15 = vector.broadcast %14 : vector<16x1xf32> to vector<16x32xf32>
    %16 = arith.mulf %6, %15 : vector<16x32xf32>
    %c0_5 = arith.constant 0 : index
    %c0_6 = arith.constant 0 : index
    %17 = vector.load %arg2[%c0_5, %c0_6] : memref<1x32xf32, #tpu.memory_space<vmem>>, vector<1x32xf32>
    %18 = vector.broadcast %17 : vector<1x32xf32> to vector<16x32xf32>
    %19 = arith.mulf %16, %18 : vector<16x32xf32>
    %c0_7 = arith.constant 0 : index
    %c0_8 = arith.constant 0 : index
    %20 = vector.load %arg3[%c0_7, %c0_8] : memref<1x32xf32, #tpu.memory_space<vmem>>, vector<1x32xf32>
    %21 = vector.broadcast %20 : vector<1x32xf32> to vector<16x32xf32>
    %22 = arith.addf %19, %21 : vector<16x32xf32>
    %23 = arith.truncf %22 : vector<16x32xf32> to vector<16x32xbf16>
    %c0_9 = arith.constant 0 : index
    %c0_10 = arith.constant 0 : index
    %24 = vector.load %arg4[%c0_9, %c0_10] : memref<32x64xbf16, #tpu.memory_space<vmem>>, vector<32x64xbf16>
    %cst_11 = arith.constant dense<0.000000e+00> : vector<16x64xf32>
    %25 = tpu.matmul %23, %24, %cst_11 {dimension_numbers = #tpu.dot_dimension_numbers<[1], [0], [0], [1], [0, 0, 1, 1], [], []>} : vector<16x32xbf16>, vector<32x64xbf16>, vector<16x64xf32> -> vector<16x64xf32>
    %c0_12 = arith.constant 0 : index
    %c0_13 = arith.constant 0 : index
    %26 = vector.load %arg5[%c0_12, %c0_13] : memref<1x64xf32, #tpu.memory_space<vmem>>, vector<1x64xf32>
    %27 = vector.broadcast %26 : vector<1x64xf32> to vector<16x64xf32>
    %28 = arith.addf %25, %27 : vector<16x64xf32>
    %cst_14 = arith.constant 0.000000e+00 : f32
    %29 = vector.broadcast %cst_14 : f32 to vector<16x64xf32>
    %30 = arith.maximumf %28, %29 : vector<16x64xf32>
    %31 = arith.truncf %30 : vector<16x64xf32> to vector<16x64xbf16>
    %c0_15 = arith.constant 0 : index
    %c0_16 = arith.constant 0 : index
    %32 = vector.load %arg6[%c0_15, %c0_16] : memref<64x32xbf16, #tpu.memory_space<vmem>>, vector<64x32xbf16>
    %cst_17 = arith.constant dense<0.000000e+00> : vector<16x32xf32>
    %33 = tpu.matmul %31, %32, %cst_17 {dimension_numbers = #tpu.dot_dimension_numbers<[1], [0], [0], [1], [0, 0, 1, 1], [], []>} : vector<16x64xbf16>, vector<64x32xbf16>, vector<16x32xf32> -> vector<16x32xf32>
    %34 = arith.addf %0, %33 : vector<16x32xf32>
    %c0_18 = arith.constant 0 : index
    %c0_19 = arith.constant 0 : index
    %35 = vector.load %arg7[%c0_18, %c0_19] : memref<1x32xf32, #tpu.memory_space<vmem>>, vector<1x32xf32>
    %36 = vector.broadcast %35 : vector<1x32xf32> to vector<16x32xf32>
    %37 = arith.addf %34, %36 : vector<16x32xf32>
    %c0_20 = arith.constant 0 : index
    %c0_21 = arith.constant 0 : index
    %38 = vector.load %arg8[%c0_20, %c0_21] : memref<16x32xf32, #tpu.memory_space<vmem>>, vector<16x32xf32>
    tpu.vector_store %arg8[%c0_20, %c0_21], %37 {strides = array<i32>} : memref<16x32xf32, #tpu.memory_space<vmem>>, vector<16x32xf32>,
    return
  }
  func.func @transform_0(%arg0: i32) -> (i32, i32) {
    %c0_i32 = arith.constant 0 : i32
    %c0_i32_0 = arith.constant 0 : i32
    return %arg0, %c0_i32 : i32, i32
  }
  func.func @transform_1(%arg0: i32) -> (i32, i32) {
    %c0_i32 = arith.constant 0 : i32
    %c0_i32_0 = arith.constant 0 : i32
    %c0_i32_1 = arith.constant 0 : i32
    return %c0_i32, %c0_i32_0 : i32, i32
  }
  func.func @transform_2(%arg0: i32) -> (i32, i32) {
    %c0_i32 = arith.constant 0 : i32
    %c0_i32_0 = arith.constant 0 : i32
    %c0_i32_1 = arith.constant 0 : i32
    return %c0_i32, %c0_i32_0 : i32, i32
  }
  func.func @transform_3(%arg0: i32) -> (i32, i32) {
    %c0_i32 = arith.constant 0 : i32
    %c0_i32_0 = arith.constant 0 : i32
    %c0_i32_1 = arith.constant 0 : i32
    return %c0_i32, %c0_i32_0 : i32, i32
  }
  func.func @transform_4(%arg0: i32) -> (i32, i32) {
    %c0_i32 = arith.constant 0 : i32
    %c0_i32_0 = arith.constant 0 : i32
    %c0_i32_1 = arith.constant 0 : i32
    return %c0_i32, %c0_i32_0 : i32, i32
  }
  func.func @transform_5(%arg0: i32) -> (i32, i32) {
    %c0_i32 = arith.constant 0 : i32
    %c0_i32_0 = arith.constant 0 : i32
    %c0_i32_1 = arith.constant 0 : i32
    return %c0_i32, %c0_i32_0 : i32, i32
  }
  func.func @transform_6(%arg0: i32) -> (i32, i32) {
    %c0_i32 = arith.constant 0 : i32
    %c0_i32_0 = arith.constant 0 : i32
    %c0_i32_1 = arith.constant 0 : i32
    return %c0_i32, %c0_i32_0 : i32, i32
  }
  func.func @transform_7(%arg0: i32) -> (i32, i32) {
    %c0_i32 = arith.constant 0 : i32
    %c0_i32_0 = arith.constant 0 : i32
    return %arg0, %c0_i32 : i32, i32
  }
}

module attributes {stable_mosaic.version = 11 : i64} {
  func.func @kernel(%arg0: i32, %arg1: memref<16x32xf32, #tpu.memory_space<vmem>>, %arg2: memref<1x32xf32, #tpu.memory_space<vmem>>, %arg3: memref<1x32xf32, #tpu.memory_space<vmem>>, %arg4: memref<16x32xf32, #tpu.memory_space<vmem>>) attributes {dimension_semantics = [#tpu.dimension_semantics<parallel>], iteration_bounds = array<i64: 2>, scalar_prefetch = 0 : i64, scratch_operands = 0 : i64, tpu.core_type = #tpu.core_type<tc>, window_params = [{transform_indices = @transform_0, window_bounds = array<i64: 16, 32>}, {pipeline_mode = #tpu.pipeline_mode<synchronous>, transform_indices = @transform_1, window_bounds = array<i64: 1, 32>}, {pipeline_mode = #tpu.pipeline_mode<synchronous>, transform_indices = @transform_2, window_bounds = array<i64: 1, 32>}, {transform_indices = @transform_3, window_bounds = array<i64: 16, 32>}]} {
    %c0 = arith.constant 0 : index
    %c0_0 = arith.constant 0 : index
    %0 = vector.load %arg1[%c0, %c0_0] : memref<16x32xf32, #tpu.memory_space<vmem>>, vector<16x32xf32>
    %cst = arith.constant dense<0.000000e+00> : vector<16xf32>
    %1 = vector.multi_reduction <add>, %0, %cst [1] : vector<16x32xf32> to vector<16xf32>
    %2 = vector.shape_cast %1 : vector<16xf32> to vector<16x1xf32>
    %cst_1 = arith.constant 3.200000e+01 : f32
    %3 = vector.broadcast %cst_1 : f32 to vector<16x1xf32>
    %4 = arith.divf %2, %3 : vector<16x1xf32>
    %5 = vector.broadcast %4 : vector<16x1xf32> to vector<16x32xf32>
    %6 = arith.subf %0, %5 : vector<16x32xf32>
    %7 = arith.mulf %6, %6 : vector<16x32xf32>
    %cst_2 = arith.constant dense<0.000000e+00> : vector<16xf32>
    %8 = vector.multi_reduction <add>, %7, %cst_2 [1] : vector<16x32xf32> to vector<16xf32>
    %9 = vector.shape_cast %8 : vector<16xf32> to vector<16x1xf32>
    %cst_3 = arith.constant 3.200000e+01 : f32
    %10 = vector.broadcast %cst_3 : f32 to vector<16x1xf32>
    %11 = arith.divf %9, %10 : vector<16x1xf32>
    %cst_4 = arith.constant 9.99999996E-13 : f32
    %12 = vector.broadcast %cst_4 : f32 to vector<16x1xf32>
    %13 = arith.addf %11, %12 : vector<16x1xf32>
    %14 = math.rsqrt %13 : vector<16x1xf32>
    %15 = vector.broadcast %14 : vector<16x1xf32> to vector<16x32xf32>
    %16 = arith.mulf %6, %15 : vector<16x32xf32>
    %c0_5 = arith.constant 0 : index
    %c0_6 = arith.constant 0 : index
    %17 = vector.load %arg2[%c0_5, %c0_6] : memref<1x32xf32, #tpu.memory_space<vmem>>, vector<1x32xf32>
    %18 = vector.broadcast %17 : vector<1x32xf32> to vector<16x32xf32>
    %19 = arith.mulf %16, %18 : vector<16x32xf32>
    %c0_7 = arith.constant 0 : index
    %c0_8 = arith.constant 0 : index
    %20 = vector.load %arg3[%c0_7, %c0_8] : memref<1x32xf32, #tpu.memory_space<vmem>>, vector<1x32xf32>
    %21 = vector.broadcast %20 : vector<1x32xf32> to vector<16x32xf32>
    %22 = arith.addf %19, %21 : vector<16x32xf32>
    %c0_9 = arith.constant 0 : index
    %c0_10 = arith.constant 0 : index
    %23 = vector.load %arg4[%c0_9, %c0_10] : memref<16x32xf32, #tpu.memory_space<vmem>>, vector<16x32xf32>
    tpu.vector_store %arg4[%c0_9, %c0_10], %22 {strides = array<i32>} : memref<16x32xf32, #tpu.memory_space<vmem>>, vector<16x32xf32>,
    return
  }
  func.func @transform_0(%arg0: i32) -> (i32, i32) {
    %c0_i32 = arith.constant 0 : i32
    %c0_i32_0 = arith.constant 0 : i32
    return %arg0, %c0_i32 : i32, i32
  }
  func.func @transform_1(%arg0: i32) -> (i32, i32) {
    %c0_i32 = arith.constant 0 : i32
    %c0_i32_0 = arith.constant 0 : i32
    %c0_i32_1 = arith.constant 0 : i32
    return %c0_i32, %c0_i32_0 : i32, i32
  }
  func.func @transform_2(%arg0: i32) -> (i32, i32) {
    %c0_i32 = arith.constant 0 : i32
    %c0_i32_0 = arith.constant 0 : i32
    %c0_i32_1 = arith.constant 0 : i32
    return %c0_i32, %c0_i32_0 : i32, i32
  }
  func.func @transform_3(%arg0: i32) -> (i32, i32) {
    %c0_i32 = arith.constant 0 : i32
    %c0_i32_0 = arith.constant 0 : i32
    return %arg0, %c0_i32 : i32, i32
  }
}

module attributes {stable_mosaic.version = 11 : i64} {
  func.func @kernel(%arg0: i32, %arg1: memref<2xi32, #tpu.memory_space<smem>>, %arg2: memref<1x7x32xf32, #tpu.memory_space<vmem>>, %arg3: memref<1x16x64xf32, #tpu.memory_space<vmem>>, %arg4: memref<1x7x32xf32, #tpu.memory_space<vmem>>) attributes {dimension_semantics = [#tpu.dimension_semantics<parallel>], iteration_bounds = array<i64: 2>, scalar_prefetch = 1 : i64, scratch_operands = 0 : i64, tpu.core_type = #tpu.core_type<tc>, window_params = [{transform_indices = @transform_0, window_bounds = array<i64: 1, 7, 32>}, {transform_indices = @transform_1, window_bounds = array<i64: 1, 16, 64>}, {transform_indices = @transform_2, window_bounds = array<i64: 1, 7, 32>}]} {
    %0 = arith.index_cast %arg0 : i32 to index
    %1 = memref.load %arg1[%0] : memref<2xi32, #tpu.memory_space<smem>>
    %2 = tpu.iota {dimensions = array<i32: 1>} : vector<7x16xi32>
    %3 = vector.broadcast %1 : i32 to vector<7x16xi32>
    %4 = arith.cmpi slt, %2, %3 : vector<7x16xi32>
    %cst = arith.constant 0.000000e+00 : f32
    %cst_0 = arith.constant -1.000000e+30 : f32
    %5 = vector.broadcast %cst : f32 to vector<7x16xf32>
    %6 = vector.broadcast %cst_0 : f32 to vector<7x16xf32>
    %7 = arith.select %4, %5, %6 : vector<7x16xi1>, vector<7x16xf32>
    %8 = arith.extui %4 : vector<7x16xi1> to vector<7x16xi32>
    %9 = arith.sitofp %8 : vector<7x16xi32> to vector<7x16xf32>
    %c0 = arith.constant 0 : index
    %c0_1 = arith.constant 0 : index
    %c0_2 = arith.constant 0 : index
    %10 = vector.load %arg2[%c0, %c0_1, %c0_2] : memref<1x7x32xf32, #tpu.memory_space<vmem>>, vector<1x7x32xf32>
    %11 = vector.shape_cast %10 : vector<1x7x32xf32> to vector<7x32xf32>
    %cst_3 = arith.constant 0.353553385 : f32
    %12 = vector.broadcast %cst_3 : f32 to vector<7x32xf32>
    %13 = arith.mulf %11, %12 : vector<7x32xf32>
    %c0_4 = arith.constant 0 : index
    %c0_5 = arith.constant 0 : index
    %c0_6 = arith.constant 0 : index
    %14 = vector.load %arg3[%c0_4, %c0_5, %c0_6] : memref<1x16x64xf32, #tpu.memory_space<vmem>>, vector<1x16x64xf32>
    %15 = vector.shape_cast %14 : vector<1x16x64xf32> to vector<16x64xf32>
    %16 = vector.extract_strided_slice %15 {offsets = [0, 0], sizes = [16, 32], strides = [1, 1]} : vector<16x64xf32> to vector<16x32xf32>
    %17 = vector.extract_strided_slice %15 {offsets = [0, 32], sizes = [16, 32], strides = [1, 1]} : vector<16x64xf32> to vector<16x32xf32>
    %18 = vector.extract_strided_slice %13 {offsets = [0, 0], sizes = [7, 8], strides = [1, 1]} : vector<7x32xf32> to vector<7x8xf32>
    %19 = arith.truncf %18 : vector<7x8xf32> to vector<7x8xbf16>
    %20 = vector.extract_strided_slice %16 {offsets = [0, 0], sizes = [16, 8], strides = [1, 1]} : vector<16x32xf32> to vector<16x8xf32>
    %21 = arith.truncf %20 : vector<16x8xf32> to vector<16x8xbf16>
    %22 = vector.extract_strided_slice %17 {offsets = [0, 0], sizes = [16, 8], strides = [1, 1]} : vector<16x32xf32> to vector<16x8xf32>
    %23 = arith.truncf %22 : vector<16x8xf32> to vector<16x8xbf16>
    %cst_7 = arith.constant dense<0.000000e+00> : vector<7x16xf32>
    %24 = tpu.matmul %19, %21, %cst_7 {dimension_numbers = #tpu.dot_dimension_numbers<[1], [1], [0], [0], [0, 0, 1, 0], [], []>} : vector<7x8xbf16>, vector<16x8xbf16>, vector<7x16xf32> -> vector<7x16xf32>
    %25 = arith.addf %24, %7 : vector<7x16xf32>
    %cst_8 = arith.constant dense<0xFF800000> : vector<7xf32>
    %26 = vector.multi_reduction <maximumf>, %25, %cst_8 [1] : vector<7x16xf32> to vector<7xf32>
    %27 = vector.shape_cast %26 : vector<7xf32> to vector<7x1xf32>
    %28 = vector.broadcast %27 : vector<7x1xf32> to vector<7x16xf32>
    %29 = arith.subf %25, %28 : vector<7x16xf32>
    %30 = math.exp %29 : vector<7x16xf32>
    %31 = arith.mulf %30, %9 : vector<7x16xf32>
    %cst_9 = arith.constant dense<0.000000e+00> : vector<7xf32>
    %32 = vector.multi_reduction <add>, %31, %cst_9 [1] : vector<7x16xf32> to vector<7xf32>
    %33 = vector.shape_cast %32 : vector<7xf32> to vector<7x1xf32>
    %cst_10 = arith.constant 1.000000e-30 : f32
    %34 = vector.broadcast %cst_10 : f32 to vector<7x1xf32>
    %35 = arith.maximumf %33, %34 : vector<7x1xf32>
    %36 = tpu.reciprocal %35 {approx = true} : vector<7x1xf32> -> vector<7x1xf32>
    %37 = vector.broadcast %36 : vector<7x1xf32> to vector<7x16xf32>
    %38 = arith.mulf %31, %37 : vector<7x16xf32>
    %39 = arith.truncf %38 : vector<7x16xf32> to vector<7x16xbf16>
    %cst_11 = arith.constant dense<0.000000e+00> : vector<7x8xf32>
    %40 = tpu.matmul %39, %23, %cst_11 {dimension_numbers = #tpu.dot_dimension_numbers<[1], [0], [0], [1], [0, 0, 1, 1], [], []>} : vector<7x16xbf16>, vector<16x8xbf16>, vector<7x8xf32> -> vector<7x8xf32>
    %41 = vector.extract_strided_slice %13 {offsets = [0, 8], sizes = [7, 8], strides = [1, 1]} : vector<7x32xf32> to vector<7x8xf32>
    %42 = arith.truncf %41 : vector<7x8xf32> to vector<7x8xbf16>
    %43 = vector.extract_strided_slice %16 {offsets = [0, 8], sizes = [16, 8], strides = [1, 1]} : vector<16x32xf32> to vector<16x8xf32>
    %44 = arith.truncf %43 : vector<16x8xf32> to vector<16x8xbf16>
    %45 = vector.extract_strided_slice %17 {offsets = [0, 8], sizes = [16, 8], strides = [1, 1]} : vector<16x32xf32> to vector<16x8xf32>
    %46 = arith.truncf %45 : vector<16x8xf32> to vector<16x8xbf16>
    %cst_12 = arith.constant dense<0.000000e+00> : vector<7x16xf32>
    %47 = tpu.matmul %42, %44, %cst_12 {dimension_numbers = #tpu.dot_dimension_numbers<[1], [1], [0], [0], [0, 0, 1, 0], [], []>} : vector<7x8xbf16>, vector<16x8xbf16>, vector<7x16xf32> -> vector<7x16xf32>
    %48 = arith.addf %47, %7 : vector<7x16xf32>
    %cst_13 = arith.constant dense<0xFF800000> : vector<7xf32>
    %49 = vector.multi_reduction <maximumf>, %48, %cst_13 [1] : vector<7x16xf32> to vector<7xf32>
    %50 = vector.shape_cast %49 : vector<7xf32> to vector<7x1xf32>
    %51 = vector.broadcast %50 : vector<7x1xf32> to vector<7x16xf32>
    %52 = arith.subf %48, %51 : vector<7x16xf32>
    %53 = math.exp %52 : vector<7x16xf32>
    %54 = arith.mulf %53, %9 : vector<7x16xf32>
    %cst_14 = arith.constant dense<0.000000e+00> : vector<7xf32>
    %55 = vector.multi_reduction <add>, %54, %cst_14 [1] : vector<7x16xf32> to vector<7xf32>
    %56 = vector.shape_cast %55 : vector<7xf32> to vector<7x1xf32>
    %cst_15 = arith.constant 1.000000e-30 : f32
    %57 = vector.broadcast %cst_15 : f32 to vector<7x1xf32>
    %58 = arith.maximumf %56, %57 : vector<7x1xf32>
    %59 = tpu.reciprocal %58 {approx = true} : vector<7x1xf32> -> vector<7x1xf32>
    %60 = vector.broadcast %59 : vector<7x1xf32> to vector<7x16xf32>
    %61 = arith.mulf %54, %60 : vector<7x16xf32>
    %62 = arith.truncf %61 : vector<7x16xf32> to vector<7x16xbf16>
    %cst_16 = arith.constant dense<0.000000e+00> : vector<7x8xf32>
    %63 = tpu.matmul %62, %46, %cst_16 {dimension_numbers = #tpu.dot_dimension_numbers<[1], [0], [0], [1], [0, 0, 1, 1], [], []>} : vector<7x16xbf16>, vector<16x8xbf16>, vector<7x8xf32> -> vector<7x8xf32>
    %64 = vector.extract_strided_slice %13 {offsets = [0, 16], sizes = [7, 8], strides = [1, 1]} : vector<7x32xf32> to vector<7x8xf32>
    %65 = arith.truncf %64 : vector<7x8xf32> to vector<7x8xbf16>
    %66 = vector.extract_strided_slice %16 {offsets = [0, 16], sizes = [16, 8], strides = [1, 1]} : vector<16x32xf32> to vector<16x8xf32>
    %67 = arith.truncf %66 : vector<16x8xf32> to vector<16x8xbf16>
    %68 = vector.extract_strided_slice %17 {offsets = [0, 16], sizes = [16, 8], strides = [1, 1]} : vector<16x32xf32> to vector<16x8xf32>
    %69 = arith.truncf %68 : vector<16x8xf32> to vector<16x8xbf16>
    %cst_17 = arith.constant dense<0.000000e+00> : vector<7x16xf32>
    %70 = tpu.matmul %65, %67, %cst_17 {dimension_numbers = #tpu.dot_dimension_numbers<[1], [1], [0], [0], [0, 0, 1, 0], [], []>} : vector<7x8xbf16>, vector<16x8xbf16>, vector<7x16xf32> -> vector<7x16xf32>
    %71 = arith.addf %70, %7 : vector<7x16xf32>
    %cst_18 = arith.constant dense<0xFF800000> : vector<7xf32>
    %72 = vector.multi_reduction <maximumf>, %71, %cst_18 [1] : vector<7x16xf32> to vector<7xf32>
    %73 = vector.shape_cast %72 : vector<7xf32> to vector<7x1xf32>
    %74 = vector.broadcast %73 : vector<7x1xf32> to vector<7x16xf32>
    %75 = arith.subf %71, %74 : vector<7x16xf32>
    %76 = math.exp %75 : vector<7x16xf32>
    %77 = arith.mulf %76, %9 : vector<7x16xf32>
    %cst_19 = arith.constant dense<0.000000e+00> : vector<7xf32>
    %78 = vector.multi_reduction <add>, %77, %cst_19 [1] : vector<7x16xf32> to vector<7xf32>
    %79 = vector.shape_cast %78 : vector<7xf32> to vector<7x1xf32>
    %cst_20 = arith.constant 1.000000e-30 : f32
    %80 = vector.broadcast %cst_20 : f32 to vector<7x1xf32>
    %81 = arith.maximumf %79, %80 : vector<7x1xf32>
    %82 = tpu.reciprocal %81 {approx = true} : vector<7x1xf32> -> vector<7x1xf32>
    %83 = vector.broadcast %82 : vector<7x1xf32> to vector<7x16xf32>
    %84 = arith.mulf %77, %83 : vector<7x16xf32>
    %85 = arith.truncf %84 : vector<7x16xf32> to vector<7x16xbf16>
    %cst_21 = arith.constant dense<0.000000e+00> : vector<7x8xf32>
    %86 = tpu.matmul %85, %69, %cst_21 {dimension_numbers = #tpu.dot_dimension_numbers<[1], [0], [0], [1], [0, 0, 1, 1], [], []>} : vector<7x16xbf16>, vector<16x8xbf16>, vector<7x8xf32> -> vector<7x8xf32>
    %87 = vector.extract_strided_slice %13 {offsets = [0, 24], sizes = [7, 8], strides = [1, 1]} : vector<7x32xf32> to vector<7x8xf32>
    %88 = arith.truncf %87 : vector<7x8xf32> to vector<7x8xbf16>
    %89 = vector.extract_strided_slice %16 {offsets = [0, 24], sizes = [16, 8], strides = [1, 1]} : vector<16x32xf32> to vector<16x8xf32>
    %90 = arith.truncf %89 : vector<16x8xf32> to vector<16x8xbf16>
    %91 = vector.extract_strided_slice %17 {offsets = [0, 24], sizes = [16, 8], strides = [1, 1]} : vector<16x32xf32> to vector<16x8xf32>
    %92 = arith.truncf %91 : vector<16x8xf32> to vector<16x8xbf16>
    %cst_22 = arith.constant dense<0.000000e+00> : vector<7x16xf32>
    %93 = tpu.matmul %88, %90, %cst_22 {dimension_numbers = #tpu.dot_dimension_numbers<[1], [1], [0], [0], [0, 0, 1, 0], [], []>} : vector<7x8xbf16>, vector<16x8xbf16>, vector<7x16xf32> -> vector<7x16xf32>
    %94 = arith.addf %93, %7 : vector<7x16xf32>
    %cst_23 = arith.constant dense<0xFF800000> : vector<7xf32>
    %95 = vector.multi_reduction <maximumf>, %94, %cst_23 [1] : vector<7x16xf32> to vector<7xf32>
    %96 = vector.shape_cast %95 : vector<7xf32> to vector<7x1xf32>
    %97 = vector.broadcast %96 : vector<7x1xf32> to vector<7x16xf32>
    %98 = arith.subf %94, %97 : vector<7x16xf32>
    %99 = math.exp %98 : vector<7x16xf32>
    %100 = arith.mulf %99, %9 : vector<7x16xf32>
    %cst_24 = arith.constant dense<0.000000e+00> : vector<7xf32>
    %101 = vector.multi_reduction <add>, %100, %cst_24 [1] : vector<7x16xf32> to vector<7xf32>
    %102 = vector.shape_cast %101 : vector<7xf32> to vector<7x1xf32>
    %cst_25 = arith.constant 1.000000e-30 : f32
    %103 = vector.broadcast %cst_25 : f32 to vector<7x1xf32>
    %104 = arith.maximumf %102, %103 : vector<7x1xf32>
    %105 = tpu.reciprocal %104 {approx = true} : vector<7x1xf32> -> vector<7x1xf32>
    %106 = vector.broadcast %105 : vector<7x1xf32> to vector<7x16xf32>
    %107 = arith.mulf %100, %106 : vector<7x16xf32>
    %108 = arith.truncf %107 : vector<7x16xf32> to vector<7x16xbf16>
    %cst_26 = arith.constant dense<0.000000e+00> : vector<7x8xf32>
    %109 = tpu.matmul %108, %92, %cst_26 {dimension_numbers = #tpu.dot_dimension_numbers<[1], [0], [0], [1], [0, 0, 1, 1], [], []>} : vector<7x16xbf16>, vector<16x8xbf16>, vector<7x8xf32> -> vector<7x8xf32>
    %110 = tpu.concatenate %40, %63, %86, %109 in 1 : vector<7x8xf32>, vector<7x8xf32>, vector<7x8xf32>, vector<7x8xf32> -> vector<7x32xf32>
    %c0_27 = arith.constant 0 : index
    %c0_28 = arith.constant 0 : index
    %c0_29 = arith.constant 0 : index
    %111 = vector.load %arg4[%c0_27, %c0_28, %c0_29] : memref<1x7x32xf32, #tpu.memory_space<vmem>>, vector<1x7x32xf32>
    %112 = vector.shape_cast %111 : vector<1x7x32xf32> to vector<7x32xf32>
    %113 = vector.shape_cast %110 : vector<7x32xf32> to vector<1x7x32xf32>
    tpu.vector_store %arg4[%c0_27, %c0_28, %c0_29], %113 {strides = array<i32>} : memref<1x7x32xf32, #tpu.memory_space<vmem>>, vector<1x7x32xf32>,
    return
  }
  func.func @transform_0(%arg0: i32, %arg1: memref<2xi32, #tpu.memory_space<smem>>) -> (i32, i32, i32) {
    %c0_i32 = arith.constant 0 : i32
    %c0_i32_0 = arith.constant 0 : i32
    %c0_i32_1 = arith.constant 0 : i32
    return %arg0, %c0_i32, %c0_i32_0 : i32, i32, i32
  }
  func.func @transform_1(%arg0: i32, %arg1: memref<2xi32, #tpu.memory_space<smem>>) -> (i32, i32, i32) {
    %c0_i32 = arith.constant 0 : i32
    %c0_i32_0 = arith.constant 0 : i32
    %c0_i32_1 = arith.constant 0 : i32
    return %arg0, %c0_i32, %c0_i32_0 : i32, i32, i32
  }
  func.func @transform_2(%arg0: i32, %arg1: memref<2xi32, #tpu.memory_space<smem>>) -> (i32, i32, i32) {
    %c0_i32 = arith.constant 0 : i32
    %c0_i32_0 = arith.constant 0 : i32
    %c0_i32_1 = arith.constant 0 : i32
    return %arg0, %c0_i32, %c0_i32_0 : i32, i32, i32
  }
}

module attributes {stable_mosaic.version = 11 : i64} {
  func.func @kernel(%arg0: i32, %arg1: memref<8x32xf32, #tpu.memory_space<vmem>>, %arg2: memref<1x32xf32, #tpu.memory_space<vmem>>, %arg3: memref<1x32xf32, #tpu.memory_space<vmem>>, %arg4: memref<32x64xbf16, #tpu.memory_space<vmem>>, %arg5: memref<1x64xf32, #tpu.memory_space<vmem>>, %arg6: memref<64x32xbf16, #tpu.memory_space<vmem>>, %arg7: memref<1x32xf32, #tpu.memory_space<vmem>>, %arg8: memref<8x32xf32, #tpu.memory_space<vmem>>) attributes {dimension_semantics = [#tpu.dimension_semantics<parallel>], iteration_bounds = array<i64: 2>, scalar_prefetch = 0 : i64, scratch_operands = 0 : i64, tpu.core_type = #tpu.core_type<tc>, window_params = [{transform_indices = @transform_0, window_bounds = array<i64: 8, 32>}, {pipeline_mode = #tpu.pipeline_mode<synchronous>, transform_indices = @transform_1, window_bounds = array<i64: 1, 32>}, {pipeline_mode = #tpu.pipeline_mode<synchronous>, transform_indices = @transform_2, window_bounds = array<i64: 1, 32>}, {pipeline_mode = #tpu.pipeline_mode<synchronous>, transform_indices = @transform_3, window_bounds = array<i64: 32, 64>}, {pipeline_mode = #tpu.pipeline_mode<synchronous>, transform_indices = @transform_4, window_bounds = array<i64: 1, 64>}, {pipeline_mode = #tpu.pipeline_mode<synchronous>, transform_indices = @transform_5, window_bounds = array<i64: 64, 32>}, {pipeline_mode = #tpu.pipeline_mode<synchronous>, transform_indices = @transform_6, window_bounds = array<i64: 1, 32>}, {transform_indices = @transform_7, window_bounds = array<i64: 8, 32>}]} {
    %c0 = arith.constant 0 : index
    %c0_0 = arith.constant 0 : index
    %0 = vector.load %arg1[%c0, %c0_0] : memref<8x32xf32, #tpu.memory_space<vmem>>, vector<8x32xf32>
    %cst = arith.constant dense<0.000000e+00> : vector<8xf32>
    %1 = vector.multi_reduction <add>, %0, %cst [1] : vector<8x32xf32> to vector<8xf32>
    %2 = vector.shape_cast %1 : vector<8xf32> to vector<8x1xf32>
    %cst_1 = arith.constant 3.200000e+01 : f32
    %3 = vector.broadcast %cst_1 : f32 to vector<8x1xf32>
    %4 = arith.divf %2, %3 : vector<8x1xf32>
    %5 = vector.broadcast %4 : vector<8x1xf32> to vector<8x32xf32>
    %6 = arith.subf %0, %5 : vector<8x32xf32>
    %7 = arith.mulf %6, %6 : vector<8x32xf32>
    %cst_2 = arith.constant dense<0.000000e+00> : vector<8xf32>
    %8 = vector.multi_reduction <add>, %7, %cst_2 [1] : vector<8x32xf32> to vector<8xf32>
    %9 = vector.shape_cast %8 : vector<8xf32> to vector<8x1xf32>
    %cst_3 = arith.constant 3.200000e+01 : f32
    %10 = vector.broadcast %cst_3 : f32 to vector<8x1xf32>
    %11 = arith.divf %9, %10 : vector<8x1xf32>
    %cst_4 = arith.constant 9.99999996E-13 : f32
    %12 = vector.broadcast %cst_4 : f32 to vector<8x1xf32>
    %13 = arith.addf %11, %12 : vector<8x1xf32>
    %14 = math.rsqrt %13 : vector<8x1xf32>
    %15 = vector.broadcast %14 : vector<8x1xf32> to vector<8x32xf32>
    %16 = arith.mulf %6, %15 : vector<8x32xf32>
    %c0_5 = arith.constant 0 : index
    %c0_6 = arith.constant 0 : index
    %17 = vector.load %arg2[%c0_5, %c0_6] : memref<1x32xf32, #tpu.memory_space<vmem>>, vector<1x32xf32>
    %18 = vector.broadcast %17 : vector<1x32xf32> to vector<8x32xf32>
    %19 = arith.mulf %16, %18 : vector<8x32xf32>
    %c0_7 = arith.constant 0 : index
    %c0_8 = arith.constant 0 : index
    %20 = vector.load %arg3[%c0_7, %c0_8] : memref<1x32xf32, #tpu.memory_space<vmem>>, vector<1x32xf32>
    %21 = vector.broadcast %20 : vector<1x32xf32> to vector<8x32xf32>
    %22 = arith.addf %19, %21 : vector<8x32xf32>
    %23 = arith.truncf %22 : vector<8x32xf32> to vector<8x32xbf16>
    %c0_9 = arith.constant 0 : index
    %c0_10 = arith.constant 0 : index
    %24 = vector.load %arg4[%c0_9, %c0_10] : memref<32x64xbf16, #tpu.memory_space<vmem>>, vector<32x64xbf16>
    %cst_11 = arith.constant dense<0.000000e+00> : vector<8x64xf32>
    %25 = tpu.matmul %23, %24, %cst_11 {dimension_numbers = #tpu.dot_dimension_numbers<[1], [0], [0], [1], [0, 0, 1, 1], [], []>} : vector<8x32xbf16>, vector<32x64xbf16>, vector<8x64xf32> -> vector<8x64xf32>
    %c0_12 = arith.constant 0 : index
    %c0_13 = arith.constant 0 : index
    %26 = vector.load %arg5[%c0_12, %c0_13] : memref<1x64xf32, #tpu.memory_space<vmem>>, vector<1x64xf32>
    %27 = vector.broadcast %26 : vector<1x64xf32> to vector<8x64xf32>
    %28 = arith.addf %25, %27 : vector<8x64xf32>
    %cst_14 = arith.constant 0.000000e+00 : f32
    %29 = vector.broadcast %cst_14 : f32 to vector<8x64xf32>
    %30 = arith.maximumf %28, %29 : vector<8x64xf32>
    %31 = arith.truncf %30 : vector<8x64xf32> to vector<8x64xbf16>
    %c0_15 = arith.constant 0 : index
    %c0_16 = arith.constant 0 : index
    %32 = vector.load %arg6[%c0_15, %c0_16] : memref<64x32xbf16, #tpu.memory_space<vmem>>, vector<64x32xbf16>
    %cst_17 = arith.constant dense<0.000000e+00> : vector<8x32xf32>
    %33 = tpu.matmul %31, %32, %cst_17 {dimension_numbers = #tpu.dot_dimension_numbers<[1], [0], [0], [1], [0, 0, 1, 1], [], []>} : vector<8x64xbf16>, vector<64x32xbf16>, vector<8x32xf32> -> vector<8x32xf32>
    %34 = arith.addf %0, %33 : vector<8x32xf32>
    %c0_18 = arith.constant 0 : index
    %c0_19 = arith.constant 0 : index
    %35 = vector.load %arg7[%c0_18, %c0_19] : memref<1x32xf32, #tpu.memory_space<vmem>>, vector<1x32xf32>
    %36 = vector.broadcast %35 : vector<1x32xf32> to vector<8x32xf32>
    %37 = arith.addf %34, %36 : vector<8x32xf32>
    %c0_20 = arith.constant 0 : index
    %c0_21 = arith.constant 0 : index
    %38 = vector.load %arg8[%c0_20, %c0_21] : memref<8x32xf32, #tpu.memory_space<vmem>>, vector<8x32xf32>
    tpu.vector_store %arg8[%c0_20, %c0_21], %37 {strides = array<i32>} : memref<8x32xf32, #tpu.memory_space<vmem>>, vector<8x32xf32>,
    return
  }
  func.func @transform_0(%arg0: i32) -> (i32, i32) {
    %c0_i32 = arith.constant 0 : i32
    %c0_i32_0 = arith.constant 0 : i32
    return %arg0, %c0_i32 : i32, i32
  }
  func.func @transform_1(%arg0: i32) -> (i32, i32) {
    %c0_i32 = arith.constant 0 : i32
    %c0_i32_0 = arith.constant 0 : i32
    %c0_i32_1 = arith.constant 0 : i32
    return %c0_i32, %c0_i32_0 : i32, i32
  }
  func.func @transform_2(%arg0: i32) -> (i32, i32) {
    %c0_i32 = arith.constant 0 : i32
    %c0_i32_0 = arith.constant 0 : i32
    %c0_i32_1 = arith.constant 0 : i32
    return %c0_i32, %c0_i32_0 : i32, i32
  }
  func.func @transform_3(%arg0: i32) -> (i32, i32) {
    %c0_i32 = arith.constant 0 : i32
    %c0_i32_0 = arith.constant 0 : i32
    %c0_i32_1 = arith.constant 0 : i32
    return %c0_i32, %c0_i32_0 : i32, i32
  }
  func.func @transform_4(%arg0: i32) -> (i32, i32) {
    %c0_i32 = arith.constant 0 : i32
    %c0_i32_0 = arith.constant 0 : i32
    %c0_i32_1 = arith.constant 0 : i32
    return %c0_i32, %c0_i32_0 : i32, i32
  }
  func.func @transform_5(%arg0: i32) -> (i32, i32) {
    %c0_i32 = arith.constant 0 : i32
    %c0_i32_0 = arith.constant 0 : i32
    %c0_i32_1 = arith.constant 0 : i32
    return %c0_i32, %c0_i32_0 : i32, i32
  }
  func.func @transform_6(%arg0: i32) -> (i32, i32) {
    %c0_i32 = arith.constant 0 : i32
    %c0_i32_0 = arith.constant 0 : i32
    %c0_i32_1 = arith.constant 0 : i32
    return %c0_i32, %c0_i32_0 : i32, i32
  }
  func.func @transform_7(%arg0: i32) -> (i32, i32) {
    %c0_i32 = arith.constant 0 : i32
    %c0_i32_0 = arith.constant 0 : i32
    return %arg0, %c0_i32 : i32, i32
  }
}

module attributes {stable_mosaic.version = 11 : i64} {
  func.func @kernel(%arg0: i32, %arg1: i32, %arg2: memref<8x32xf32, #tpu.memory_space<vmem>>, %arg3: memref<1x32xf32, #tpu.memory_space<vmem>>, %arg4: memref<1x32xf32, #tpu.memory_space<vmem>>, %arg5: memref<32x128xbf16, #tpu.memory_space<vmem>>, %arg6: memref<1x128xf32, #tpu.memory_space<vmem>>, %arg7: memref<8x128xf32, #tpu.memory_space<vmem>>) attributes {dimension_semantics = [#tpu.dimension_semantics<parallel>, #tpu.dimension_semantics<parallel>], iteration_bounds = array<i64: 2, 1>, scalar_prefetch = 0 : i64, scratch_operands = 0 : i64, tpu.core_type = #tpu.core_type<tc>, window_params = [{transform_indices = @transform_0, window_bounds = array<i64: 8, 32>}, {pipeline_mode = #tpu.pipeline_mode<synchronous>, transform_indices = @transform_1, window_bounds = array<i64: 1, 32>}, {pipeline_mode = #tpu.pipeline_mode<synchronous>, transform_indices = @transform_2, window_bounds = array<i64: 1, 32>}, {transform_indices = @transform_3, window_bounds = array<i64: 32, 128>}, {transform_indices = @transform_4, window_bounds = array<i64: 1, 128>}, {transform_indices = @transform_5, window_bounds = array<i64: 8, 128>}]} {
    %c0 = arith.constant 0 : index
    %c0_0 = arith.constant 0 : index
    %0 = vector.load %arg2[%c0, %c0_0] : memref<8x32xf32, #tpu.memory_space<vmem>>, vector<8x32xf32>
    %cst = arith.constant dense<0.000000e+00> : vector<8xf32>
    %1 = vector.multi_reduction <add>, %0, %cst [1] : vector<8x32xf32> to vector<8xf32>
    %2 = vector.shape_cast %1 : vector<8xf32> to vector<8x1xf32>
    %cst_1 = arith.constant 3.200000e+01 : f32
    %3 = vector.broadcast %cst_1 : f32 to vector<8x1xf32>
    %4 = arith.divf %2, %3 : vector<8x1xf32>
    %5 = vector.broadcast %4 : vector<8x1xf32> to vector<8x32xf32>
    %6 = arith.subf %0, %5 : vector<8x32xf32>
    %7 = arith.mulf %6, %6 : vector<8x32xf32>
    %cst_2 = arith.constant dense<0.000000e+00> : vector<8xf32>
    %8 = vector.multi_reduction <add>, %7, %cst_2 [1] : vector<8x32xf32> to vector<8xf32>
    %9 = vector.shape_cast %8 : vector<8xf32> to vector<8x1xf32>
    %cst_3 = arith.constant 3.200000e+01 : f32
    %10 = vector.broadcast %cst_3 : f32 to vector<8x1xf32>
    %11 = arith.divf %9, %10 : vector<8x1xf32>
    %cst_4 = arith.constant 9.99999996E-13 : f32
    %12 = vector.broadcast %cst_4 : f32 to vector<8x1xf32>
    %13 = arith.addf %11, %12 : vector<8x1xf32>
    %14 = math.rsqrt %13 : vector<8x1xf32>
    %15 = vector.broadcast %14 : vector<8x1xf32> to vector<8x32xf32>
    %16 = arith.mulf %6, %15 : vector<8x32xf32>
    %c0_5 = arith.constant 0 : index
    %c0_6 = arith.constant 0 : index
    %17 = vector.load %arg3[%c0_5, %c0_6] : memref<1x32xf32, #tpu.memory_space<vmem>>, vector<1x32xf32>
    %18 = vector.broadcast %17 : vector<1x32xf32> to vector<8x32xf32>
    %19 = arith.mulf %16, %18 : vector<8x32xf32>
    %c0_7 = arith.constant 0 : index
    %c0_8 = arith.constant 0 : index
    %20 = vector.load %arg4[%c0_7, %c0_8] : memref<1x32xf32, #tpu.memory_space<vmem>>, vector<1x32xf32>
    %21 = vector.broadcast %20 : vector<1x32xf32> to vector<8x32xf32>
    %22 = arith.addf %19, %21 : vector<8x32xf32>
    %23 = arith.truncf %22 : vector<8x32xf32> to vector<8x32xbf16>
    %c0_9 = arith.constant 0 : index
    %c0_10 = arith.constant 0 : index
    %24 = vector.load %arg5[%c0_9, %c0_10] : memref<32x128xbf16, #tpu.memory_space<vmem>>, vector<32x128xbf16>
    %cst_11 = arith.constant dense<0.000000e+00> : vector<8x128xf32>
    %25 = tpu.matmul %23, %24, %cst_11 {dimension_numbers = #tpu.dot_dimension_numbers<[1], [0], [0], [1], [0, 0, 1, 1], [], []>} : vector<8x32xbf16>, vector<32x128xbf16>, vector<8x128xf32> -> vector<8x128xf32>
    %c0_12 = arith.constant 0 : index
    %c0_13 = arith.constant 0 : index
    %26 = vector.load %arg6[%c0_12, %c0_13] : memref<1x128xf32, #tpu.memory_space<vmem>>, vector<1x128xf32>
    %27 = vector.broadcast %26 : vector<1x128xf32> to vector<8x128xf32>
    %28 = arith.addf %25, %27 : vector<8x128xf32>
    %c0_14 = arith.constant 0 : index
    %c0_15 = arith.constant 0 : index
    %29 = vector.load %arg7[%c0_14, %c0_15] : memref<8x128xf32, #tpu.memory_space<vmem>>, vector<8x128xf32>
    tpu.vector_store %arg7[%c0_14, %c0_15], %28 {strides = array<i32>} : memref<8x128xf32, #tpu.memory_space<vmem>>, vector<8x128xf32>,
    return
  }
  func.func @transform_0(%arg0: i32, %arg1: i32) -> (i32, i32) {
    %c0_i32 = arith.constant 0 : i32
    %c0_i32_0 = arith.constant 0 : i32
    return %arg0, %c0_i32 : i32, i32
  }
  func.func @transform_1(%arg0: i32, %arg1: i32) -> (i32, i32) {
    %c0_i32 = arith.constant 0 : i32
    %c0_i32_0 = arith.constant 0 : i32
    %c0_i32_1 = arith.constant 0 : i32
    return %c0_i32, %c0_i32_0 : i32, i32
  }
  func.func @transform_2(%arg0: i32, %arg1: i32) -> (i32, i32) {
    %c0_i32 = arith.constant 0 : i32
    %c0_i32_0 = arith.constant 0 : i32
    %c0_i32_1 = arith.constant 0 : i32
    return %c0_i32, %c0_i32_0 : i32, i32
  }
  func.func @transform_3(%arg0: i32, %arg1: i32) -> (i32, i32) {
    %c0_i32 = arith.constant 0 : i32
    %c0_i32_0 = arith.constant 0 : i32
    return %c0_i32, %arg1 : i32, i32
  }
  func.func @transform_4(%arg0: i32, %arg1: i32) -> (i32, i32) {
    %c0_i32 = arith.constant 0 : i32
    %c0_i32_0 = arith.constant 0 : i32
    return %c0_i32, %arg1 : i32, i32
  }
  func.func @transform_5(%arg0: i32, %arg1: i32) -> (i32, i32) {
    %c0_i32 = arith.constant 0 : i32
    return %arg0, %arg1 : i32, i32
  }
}

module attributes {stable_mosaic.version = 11 : i64} {
  func.func @kernel(%arg0: i32, %arg1: memref<8x128xf32, #tpu.memory_space<vmem>>, %arg2: memref<8x1xi32, #tpu.memory_space<vmem>>, %arg3: memref<8x128xf32, #tpu.memory_space<vmem>>) attributes {dimension_semantics = [#tpu.dimension_semantics<parallel>], iteration_bounds = array<i64: 2>, scalar_prefetch = 0 : i64, scratch_operands = 0 : i64, tpu.core_type = #tpu.core_type<tc>, window_params = [{transform_indices = @transform_0, window_bounds = array<i64: 8, 128>}, {transform_indices = @transform_1, window_bounds = array<i64: 8, 1>}, {transform_indices = @transform_2, window_bounds = array<i64: 8, 128>}]} {
    %c0 = arith.constant 0 : index
    %c0_0 = arith.constant 0 : index
    %0 = vector.load %arg1[%c0, %c0_0] : memref<8x128xf32, #tpu.memory_space<vmem>>, vector<8x128xf32>
    %c0_1 = arith.constant 0 : index
    %c0_2 = arith.constant 0 : index
    %1 = vector.load %arg2[%c0_1, %c0_2] : memref<8x1xi32, #tpu.memory_space<vmem>>, vector<8x1xi32>
    %2 = tpu.iota {dimensions = array<i32: 1>} : vector<8x128xi32>
    %c12_i32 = arith.constant 12 : i32
    %3 = vector.broadcast %c12_i32 : i32 to vector<8x128xi32>
    %4 = arith.cmpi slt, %2, %3 : vector<8x128xi32>
    %cst = arith.constant -1.000000e+30 : f32
    %5 = vector.broadcast %cst : f32 to vector<8x128xf32>
    %6 = arith.select %4, %0, %5 : vector<8x128xi1>, vector<8x128xf32>
    %cst_3 = arith.constant dense<0xFF800000> : vector<8xf32>
    %7 = vector.multi_reduction <maximumf>, %6, %cst_3 [1] : vector<8x128xf32> to vector<8xf32>
    %8 = vector.shape_cast %7 : vector<8xf32> to vector<8x1xf32>
    %9 = vector.broadcast %8 : vector<8x1xf32> to vector<8x128xf32>
    %10 = arith.subf %6, %9 : vector<8x128xf32>
    %11 = math.exp %10 : vector<8x128xf32>
    %cst_4 = arith.constant dense<0.000000e+00> : vector<8xf32>
    %12 = vector.multi_reduction <add>, %11, %cst_4 [1] : vector<8x128xf32> to vector<8xf32>
    %13 = vector.shape_cast %12 : vector<8xf32> to vector<8x1xf32>
    %14 = math.log %13 : vector<8x1xf32>
    %15 = arith.addf %8, %14 : vector<8x1xf32>
    %cst_5 = arith.constant 0.000000e+00 : f32
    %16 = vector.broadcast %cst_5 : f32 to vector<8x128xf32>
    %17 = arith.select %4, %0, %16 : vector<8x128xi1>, vector<8x128xf32>
    %cst_6 = arith.constant dense<0.000000e+00> : vector<8xf32>
    %18 = vector.multi_reduction <add>, %17, %cst_6 [1] : vector<8x128xf32> to vector<8xf32>
    %19 = vector.shape_cast %18 : vector<8xf32> to vector<8x1xf32>
    %20 = vector.broadcast %1 : vector<8x1xi32> to vector<8x128xi32>
    %21 = arith.cmpi eq, %2, %20 : vector<8x128xi32>
    %cst_7 = arith.constant 0.000000e+00 : f32
    %22 = vector.broadcast %cst_7 : f32 to vector<8x128xf32>
    %23 = arith.select %21, %0, %22 : vector<8x128xi1>, vector<8x128xf32>
    %cst_8 = arith.constant dense<0.000000e+00> : vector<8xf32>
    %24 = vector.multi_reduction <add>, %23, %cst_8 [1] : vector<8x128xf32> to vector<8xf32>
    %25 = vector.shape_cast %24 : vector<8xf32> to vector<8x1xf32>
    %26 = arith.subf %25, %15 : vector<8x1xf32>
    %cst_9 = arith.constant 1.200000e+01 : f32
    %27 = vector.broadcast %cst_9 : f32 to vector<8x1xf32>
    %28 = arith.mulf %27, %15 : vector<8x1xf32>
    %29 = arith.subf %19, %28 : vector<8x1xf32>
    %cst_10 = arith.constant -0.890909075 : f32
    %30 = vector.broadcast %cst_10 : f32 to vector<8x1xf32>
    %31 = arith.mulf %30, %26 : vector<8x1xf32>
    %cst_11 = arith.constant -0.564872503 : f32
    %32 = vector.broadcast %cst_11 : f32 to vector<8x1xf32>
    %33 = arith.addf %32, %31 : vector<8x1xf32>
    %cst_12 = arith.constant 0.0090909088 : f32
    %34 = vector.broadcast %cst_12 : f32 to vector<8x1xf32>
    %35 = arith.mulf %34, %29 : vector<8x1xf32>
    %36 = arith.subf %33, %35 : vector<8x1xf32>
    %c-1_i32 = arith.constant -1 : i32
    %37 = vector.broadcast %c-1_i32 : i32 to vector<8x1xi32>
    %38 = arith.cmpi eq, %1, %37 : vector<8x1xi32>
    %cst_13 = arith.constant 0.000000e+00 : f32
    %cst_14 = arith.constant 1.000000e+00 : f32
    %39 = vector.broadcast %cst_13 : f32 to vector<8x1xf32>
    %40 = vector.broadcast %cst_14 : f32 to vector<8x1xf32>
    %41 = arith.select %38, %39, %40 : vector<8x1xi1>, vector<8x1xf32>
    %42 = arith.mulf %36, %41 : vector<8x1xf32>
    %43 = vector.broadcast %8 : vector<8x1xf32> to vector<8x128xf32>
    %44 = arith.cmpf oge, %6, %43 : vector<8x128xf32>
    %c128_i32 = arith.constant 128 : i32
    %45 = vector.broadcast %c128_i32 : i32 to vector<8x128xi32>
    %46 = arith.select %44, %2, %45 : vector<8x128xi1>, vector<8x128xi32>
    %cst_15 = arith.constant dense<2147483647> : vector<8xi32>
    %47 = vector.multi_reduction <minsi>, %46, %cst_15 [1] : vector<8x128xi32> to vector<8xi32>
    %48 = vector.shape_cast %47 : vector<8xi32> to vector<8x1xi32>
    %49 = arith.cmpi eq, %48, %1 : vector<8x1xi32>
    %cst_16 = arith.constant dense<true> : vector<8x1xi1>
    %50 = arith.xori %38, %cst_16 : vector<8x1xi1>
    %51 = arith.andi %49, %50 : vector<8x1xi1>
    %cst_17 = arith.constant 1.000000e+00 : f32
    %cst_18 = arith.constant 0.000000e+00 : f32
    %52 = vector.broadcast %cst_17 : f32 to vector<8x1xf32>
    %53 = vector.broadcast %cst_18 : f32 to vector<8x1xf32>
    %54 = arith.select %51, %52, %53 : vector<8x1xi1>, vector<8x1xf32>
    %55 = tpu.iota {dimensions = array<i32: 1>} : vector<8x128xi32>
    %c0_i32 = arith.constant 0 : i32
    %56 = vector.broadcast %c0_i32 : i32 to vector<8x128xi32>
    %57 = arith.cmpi eq, %55, %56 : vector<8x128xi32>
    %cst_19 = arith.constant 0.000000e+00 : f32
    %58 = vector.shape_cast %42 : vector<8x1xf32> to vector<8x1xf32>
    %59 = vector.broadcast %58 : vector<8x1xf32> to vector<8x128xf32>
    %60 = vector.broadcast %cst_19 : f32 to vector<8x128xf32>
    %61 = arith.select %57, %59, %60 : vector<8x128xi1>, vector<8x128xf32>
    %c1_i32 = arith.constant 1 : i32
    %62 = vector.broadcast %c1_i32 : i32 to vector<8x128xi32>
    %63 = arith.cmpi eq, %55, %62 : vector<8x128xi32>
    %cst_20 = arith.constant 0.000000e+00 : f32
    %64 = vector.shape_cast %54 : vector<8x1xf32> to vector<8x1xf32>
    %65 = vector.broadcast %64 : vector<8x1xf32> to vector<8x128xf32>
    %66 = vector.broadcast %cst_20 : f32 to vector<8x128xf32>
    %67 = arith.select %63, %65, %66 : vector<8x128xi1>, vector<8x128xf32>
    %68 = arith.addf %61, %67 : vector<8x128xf32>
    %c2_i32 = arith.constant 2 : i32
    %69 = vector.broadcast %c2_i32 : i32 to vector<8x128xi32>
    %70 = arith.cmpi eq, %55, %69 : vector<8x128xi32>
    %cst_21 = arith.constant 0.000000e+00 : f32
    %71 = vector.shape_cast %41 : vector<8x1xf32> to vector<8x1xf32>
    %72 = vector.broadcast %71 : vector<8x1xf32> to vector<8x128xf32>
    %73 = vector.broadcast %cst_21 : f32 to vector<8x128xf32>
    %74 = arith.select %70, %72, %73 : vector<8x128xi1>, vector<8x128xf32>
    %75 = arith.addf %68, %74 : vector<8x128xf32>
    %c0_22 = arith.constant 0 : index
    %c0_23 = arith.constant 0 : index
    %76 = vector.load %arg3[%c0_22, %c0_23] : memref<8x128xf32, #tpu.memory_space<vmem>>, vector<8x128xf32>
    tpu.vector_store %arg3[%c0_22, %c0_23], %75 {strides = array<i32>} : memref<8x128xf32, #tpu.memory_space<vmem>>, vector<8x128xf32>,
    return
  }
  func.func @transform_0(%arg0: i32) -> (i32, i32) {
    %c0_i32 = arith.constant 0 : i32
    %c0_i32_0 = arith.constant 0 : i32
    return %arg0, %c0_i32 : i32, i32
  }
  func.func @transform_1(%arg0: i32) -> (i32, i32) {
    %c0_i32 = arith.constant 0 : i32
    %c0_i32_0 = arith.constant 0 : i32
    return %arg0, %c0_i32 : i32, i32
  }
  func.func @transform_2(%arg0: i32) -> (i32, i32) {
    %c0_i32 = arith.constant 0 : i32
    %c0_i32_0 = arith.constant 0 : i32
    return %arg0, %c0_i32 : i32, i32
  }
}

</mosaic_0001>

<llo_original>
// kernel: tpu_custom_call.1
$region0: #{tpu_custom_call.1}
  #allocation0 [shape = 'u32[]', space=smem, size = 0x4, offset = 0x4, fixed_abs, tag = 'smem constant byte address 0x4 - core index']
  #allocation1 [shape = 'u32[144,128]{1,0:T(1,128)}', space=vmem, size = 0x12000, scoped, tag = 'internal scratch']
  %s0 = inlined_call_operand.hbm [shape: f32[16,128], index: 0, kind: input, shape index: {}]
  %s1 = inlined_call_operand.hbm [shape: f32[8,128], index: 1, kind: input, shape index: {}]
  %s2 = inlined_call_operand.hbm [shape: f32[16,128], index: 2, kind: output, shape index: {}]
  %s3 = sld [smem:[#allocation0]]
  $region49: #{tpu_custom_call.1} parent=0
    _
  %s5 = ssub.s32 1, %s3
  %s6 = scalar_select 0, %s5, %s3
  $region1: #{tpu_custom_call.1} parent=0
    #allocation2 [shape = 'u8[8192]{0}', space=vmem, size = 0x2000, scoped, tag = 'input window, operand 0']
    #allocation3 [shape = 's32[2]{0}', space=sflag, size = 0x8, scoped, tag = 'scoped memory for tpu_custom_call.1']
    #allocation4 [shape = 's32[2]{0}', space=sflag, size = 0x8, scoped, tag = 'scoped memory for tpu_custom_call.1']
    #allocation5 [shape = 'u8[4096]{0}', space=vmem, size = 0x1000, scoped, tag = 'input window, operand 1, single buffered']
    #allocation6 [shape = 's32[1]{0}', space=sflag, size = 0x4, scoped, tag = 'scoped memory for tpu_custom_call.1']
    #allocation7 [shape = 'u8[8192]{0}', space=vmem, size = 0x2000, scoped, tag = 'output window, operand 0']
    %7 = vsyncpa [#allocation3], 0
    %s8 = scalar_lea.sflag [#allocation3], 1
    %9 = vsyncpa %s8, 0
    %10 = vsyncpa [#allocation6], 0
    %11 = vsyncpa [#allocation4], 0
    %s12 = scalar_lea.sflag [#allocation4], 1
    %13 = vsyncpa %s12, 0
    loop: start=0, step=1, limit=4
    $region2: #{tpu_custom_call.1} parent=1 // loop_pre_header
      _
    $region3: #{tpu_custom_call.1} parent=1 // loop_header
      %s15 = sphi 0, %s19
      %p16 = scmp.ge.s32.totalorder %s15, 4
      %s25 = sphi 0, %s27
      %s28 = sphi 0, %s25
      %s29 = sphi 0, %s28
      %s45 = sphi 0, %s29
      %s49 = sphi 0, %s49
      %s51 = sphi 0, %s49
      %s52 = sphi 0, %s51
      %s66 = sphi 0, %s52
      %s72 = sphi 0, %s74
      %s75 = sphi 0, %s72
      %s76 = sphi 0, %s75
      %s92 = sphi 0, %s76
    $region4: #{tpu_custom_call.1} parent=1 // loop_header_branch
      %18 = sbr.rel (%p16) target = $region8
    $region5: #{tpu_custom_call.1} parent=1 // loop_body
      %s20 = ssub.s32 %s15, 1
      %s21 = ssub.s32 %s15, 2
      %s22 = sadd.s32 %s15, 1
      %s23 = ssub.s32 %s15, %s22
      %p24 = scmp.eq.s32.totalorder %s23, 0
      %s26 = sadd.s32 %s25, 1
      %s27 = scalar_select %p24, %s25, %s26
      %p30 = pneg %p24
      %p31 = scmp.eq.s32.totalorder %s15, 1
      %p32 = por %p30, %p31
      %p33 = scmp.ne.s32.totalorder %s25, %s28
      %p34 = scmp.eq.s32.totalorder %s15, 0
      %p35 = por %p33, %p34
      %p36 = scmp.ne.s32.totalorder %s25, %s28
      %p37 = scmp.eq.s32.totalorder %s20, 1
      %p38 = por %p36, %p37
      %p39 = scmp.ne.s32.totalorder %s28, %s29
      %p40 = scmp.eq.s32.totalorder %s20, 0
      %p41 = por %p39, %p40
      %p42 = scmp.ne.s32.totalorder %s28, %s29
      %p43 = scmp.eq.s32.totalorder %s21, 1
      %p44 = por %p42, %p43
      %p46 = scmp.ne.s32.totalorder %s29, %s45
      %p47 = scmp.eq.s32.totalorder %s21, 0
      %p48 = por %p46, %p47
      %s50 = sadd.s32 %s49, 1
      %p53 = scmp.eq.s32.totalorder %s15, 1
      %p54 = scmp.ne.s32.totalorder %s49, %s51
      %p55 = scmp.eq.s32.totalorder %s15, 0
      %p56 = por %p54, %p55
      %p57 = scmp.ne.s32.totalorder %s49, %s51
      %p58 = scmp.eq.s32.totalorder %s20, 1
      %p59 = por %p57, %p58
      %p60 = scmp.ne.s32.totalorder %s51, %s52
      %p61 = scmp.eq.s32.totalorder %s20, 0
      %p62 = por %p60, %p61
      %p63 = scmp.ne.s32.totalorder %s51, %s52
      %p64 = scmp.eq.s32.totalorder %s21, 1
      %p65 = por %p63, %p64
      %p67 = scmp.ne.s32.totalorder %s52, %s66
      %p68 = scmp.eq.s32.totalorder %s21, 0
      %p69 = por %p67, %p68
      %s70 = ssub.s32 %s15, %s22
      %p71 = scmp.eq.s32.totalorder %s70, 0
      %s73 = sadd.s32 %s72, 1
      %s74 = scalar_select %p71, %s72, %s73
      %p77 = pneg %p71
      %p78 = scmp.eq.s32.totalorder %s15, 1
      %p79 = por %p77, %p78
      %p80 = scmp.ne.s32.totalorder %s72, %s75
      %p81 = scmp.eq.s32.totalorder %s15, 0
      %p82 = por %p80, %p81
      %p83 = scmp.ne.s32.totalorder %s72, %s75
      %p84 = scmp.eq.s32.totalorder %s20, 1
      %p85 = por %p83, %p84
      %p86 = scmp.ne.s32.totalorder %s75, %s76
      %p87 = scmp.eq.s32.totalorder %s20, 0
      %p88 = por %p86, %p87
      %p89 = scmp.ne.s32.totalorder %s75, %s76
      %p90 = scmp.eq.s32.totalorder %s21, 1
      %p91 = por %p89, %p90
      %p93 = scmp.ne.s32.totalorder %s76, %s92
      %p94 = scmp.eq.s32.totalorder %s21, 0
      %p95 = por %p93, %p94
      %p96 = scmp.le.s32.totalorder 1, %s15
      %p97 = scmp.lt.s32.totalorder %s15, 3
      %p98 = pnand %p96, %p97
      %p99 = pneg %p98
      // Predicated region
      $region9: #{tpu_custom_call.1} parent=5 // pred_check
        _
      $region10: #{tpu_custom_call.1} parent=5 // pred_check_branch
        %101 = sbr.rel (%p98) target = $region12
      $region11: #{tpu_custom_call.1} parent=5 // pred_region
        %s102 = ssub.s32 %s15, 1
        // Predicated region
        $region13: #{tpu_custom_call.1} parent=11 // pred_check
          %p103 = pneg %p62
        $region14: #{tpu_custom_call.1} parent=11 // pred_check_branch
          %105 = sbr.rel (%p103) target = $region16
        $region15: #{tpu_custom_call.1} parent=11 // pred_region
          %s107 = ssub.s32 128, 128
          %108 = vsyncadd [#allocation6], %s107
          %s110 = sshll.u32 [#allocation5], 4
          %s111 = int_to_ptr.vmem [resolvable:$true] %s110
          %113 = dma.hbm_to_vmem [thread:$0]  %s1, 128, %s111, [#allocation6]
        $region16: #{tpu_custom_call.1} parent=11 // pred_fallthru
          _
      $region12: #{tpu_custom_call.1} parent=5 // pred_fallthru
        _
      %p114 = scmp.lt.s32.totalorder %s15, 2
      // Predicated region
      $region17: #{tpu_custom_call.1} parent=5 // pred_check
        %p115 = pneg %p114
      $region18: #{tpu_custom_call.1} parent=5 // pred_check_branch
        %117 = sbr.rel (%p115) target = $region20
      $region19: #{tpu_custom_call.1} parent=5 // pred_region
        // Predicated region
        $region21: #{tpu_custom_call.1} parent=19 // pred_check
          %p118 = pneg %p35
        $region22: #{tpu_custom_call.1} parent=19 // pred_check_branch
          %120 = sbr.rel (%p118) target = $region24
        $region23: #{tpu_custom_call.1} parent=19 // pred_region
          %s121 = sand.u32 %s25, 1
          %s122 = scalar_lea.sflag [#allocation3], %s121
          %s123 = sand.u32 %s25, 1
          %s124 = smul.addr %s123, 8
          %s125 = scalar_lea.vmem [#allocation2], %s124
          %s127 = ssub.s32 128, 128
          %128 = vsyncadd %s122, %s127
          %s129 = smul.addr %s15, 128
          %s130 = scalar_lea.hbm %s0, %s129
          %s132 = sshll.u32 %s125, 4
          %s133 = int_to_ptr.vmem [resolvable:$true] %s132
          %135 = dma.hbm_to_vmem [thread:$0]  %s130, 128, %s133, %s122
        $region24: #{tpu_custom_call.1} parent=19 // pred_fallthru
          _
      $region20: #{tpu_custom_call.1} parent=5 // pred_fallthru
        _
      %p136 = scmp.le.s32.totalorder 1, %s15
      %p137 = scmp.lt.s32.totalorder %s15, 3
      %p138 = pnand %p136, %p137
      %p139 = pneg %p138
      // Predicated region
      $region25: #{tpu_custom_call.1} parent=5 // pred_check
        _
      $region26: #{tpu_custom_call.1} parent=5 // pred_check_branch
        %141 = sbr.rel (%p138) target = $region28
      $region27: #{tpu_custom_call.1} parent=5 // pred_region
        %s142 = ssub.s32 %s15, 1
        %s143 = sand.u32 %s28, 1
        %s144 = scalar_lea.sflag [#allocation3], %s143
        %s145 = sand.u32 %s28, 1
        %s146 = smul.addr %s145, 8
        %s147 = scalar_lea.vmem [#allocation2], %s146
        // Predicated region
        $region29: #{tpu_custom_call.1} parent=27 // pred_check
          %p148 = pneg %p41
        $region30: #{tpu_custom_call.1} parent=27 // pred_check_branch
          %150 = sbr.rel (%p148) target = $region32
        $region31: #{tpu_custom_call.1} parent=27 // pred_region
          %151 = dma.done %s144, 128
        $region32: #{tpu_custom_call.1} parent=27 // pred_fallthru
          _
        // Predicated region
        $region33: #{tpu_custom_call.1} parent=27 // pred_check
          %p152 = pneg %p62
        $region34: #{tpu_custom_call.1} parent=27 // pred_check_branch
          %154 = sbr.rel (%p152) target = $region36
        $region35: #{tpu_custom_call.1} parent=27 // pred_region
          %155 = dma.done [#allocation6], 128
        $region36: #{tpu_custom_call.1} parent=27 // pred_fallthru
          _
        %s156 = sand.u32 %s28, 1
        %s157 = scalar_lea.sflag [#allocation3], %s156
        %s158 = sand.u32 %s28, 1
        %s159 = smul.addr %s158, 8
        %s160 = scalar_lea.vmem [#allocation2], %s159
        %p161 = pneg %p41
        %p162 = pneg %p38
        %p163 = pneg %p62
        %p164 = pneg %p59
        %p165 = pneg %p88
        %p166 = pneg %p85
        %s167 = sand.u32 %s75, 1
        %s168 = scalar_lea.sflag [#allocation4], %s167
        %s169 = sand.u32 %s75, 1
        %s170 = smul.addr %s169, 8
        %s171 = scalar_lea.vmem [#allocation7], %s170
        %v172 = vld [vmem:[%s147] sm:$0xff]
        %v173 = vld [vmem:[#allocation5] sm:$0xff]
        %v174 = vadd.f32 %v172, %v173
        %175 = vst [vmem:[%s171] sm:$0xff] %v174
        %s176 = sand.u32 %s75, 1
        %s177 = scalar_lea.sflag [#allocation4], %s176
        %s178 = sand.u32 %s75, 1
        %s179 = smul.addr %s178, 8
        %s180 = scalar_lea.vmem [#allocation7], %s179
        // Predicated region
        $region37: #{tpu_custom_call.1} parent=27 // pred_check
          %p181 = pneg %p85
        $region38: #{tpu_custom_call.1} parent=27 // pred_check_branch
          %183 = sbr.rel (%p181) target = $region40
        $region39: #{tpu_custom_call.1} parent=27 // pred_region
          %s185 = ssub.s32 128, 128
          %186 = vsyncadd %s177, %s185
          %s187 = smul.addr %s20, 128
          %s188 = scalar_lea.hbm %s2, %s187
          %s190 = sshll.u32 %s180, 4
          %s191 = int_to_ptr.vmem [resolvable:$true] %s190
          %193 = dma.vmem_to_hbm [thread:$0]  %s191, 128, %s188, %s177
        $region40: #{tpu_custom_call.1} parent=27 // pred_fallthru
          _
      $region28: #{tpu_custom_call.1} parent=5 // pred_fallthru
        _
      %p194 = scmp.le.s32.totalorder 2, %s15
      // Predicated region
      $region41: #{tpu_custom_call.1} parent=5 // pred_check
        %p195 = pneg %p194
      $region42: #{tpu_custom_call.1} parent=5 // pred_check_branch
        %197 = sbr.rel (%p195) target = $region44
      $region43: #{tpu_custom_call.1} parent=5 // pred_region
        %s198 = ssub.s32 %s15, 2
        // Predicated region
        $region45: #{tpu_custom_call.1} parent=43 // pred_check
          %p199 = pneg %p91
        $region46: #{tpu_custom_call.1} parent=43 // pred_check_branch
          %201 = sbr.rel (%p199) target = $region48
        $region47: #{tpu_custom_call.1} parent=43 // pred_region
          %s202 = sand.u32 %s76, 1
          %s203 = scalar_lea.sflag [#allocation4], %s202
          %s204 = sand.u32 %s76, 1
          %s205 = smul.addr %s204, 8
          %s206 = scalar_lea.vmem [#allocation7], %s205
          %207 = dma.done %s203, 128
        $region48: #{tpu_custom_call.1} parent=43 // pred_fallthru
          _
      $region44: #{tpu_custom_call.1} parent=5 // pred_fallthru
        _
    $region6: #{tpu_custom_call.1} parent=1 // loop_footer
      %s19 = sadd.s32 1, %s15
    $region7: #{tpu_custom_call.1} parent=1 // loop_footer_branch
      %14 = sbr.rel target = $region3
    $region8: #{tpu_custom_call.1} parent=1 // loop_exit
      _
    %208 = vsyncpa [#allocation3], 1
    %s209 = scalar_lea.sflag [#allocation3], 1
    %210 = vsyncpa %s209, 1
    %211 = vsyncpa [#allocation6], 1
    %212 = vsyncpa [#allocation4], 1
    %s213 = scalar_lea.sflag [#allocation4], 1
    %214 = vsyncpa %s213, 1

// kernel: e2e_forward.40
$region0: #{e2e_forward.40}
  #allocation0 [shape = 'u32[]', space=smem, size = 0x4, offset = 0x4, fixed_abs, tag = 'smem constant byte address 0x4 - core index']
  #allocation1 [shape = 'u32[144,128]{1,0:T(1,128)}', space=vmem, size = 0x12000, scoped, tag = 'internal scratch']
  %s0 = inlined_call_operand.vmem [shape: f32[16,32], index: 0, kind: input, shape index: {}]
  %s1 = inlined_call_operand.vmem [shape: f32[16,32], index: 1, kind: input, shape index: {}]
  %s2 = inlined_call_operand.vmem [shape: bf16[32,32], index: 2, kind: input, shape index: {}]
  %s3 = inlined_call_operand.vmem [shape: f32[1,32], index: 3, kind: input, shape index: {}]
  %s4 = inlined_call_operand.vmem [shape: f32[16,32], index: 4, kind: output, shape index: {}]
  %s5 = sld [smem:[#allocation0]]
  $region49: #{e2e_forward.40} parent=0
    _
  %s7 = ssub.s32 1, %s5
  %s8 = scalar_select 0, %s7, %s5
  loop: start=0, step=1, limit=4
  $region2: #{e2e_forward.40} parent=0 // loop_pre_header
    _
  $region3: #{e2e_forward.40} parent=0 // loop_header
    %s10 = sphi 0, %s14
    %p11 = scmp.ge.s32.totalorder %s10, 4
    %s20 = sphi 0, %s22
    %s23 = sphi 0, %s20
    %s24 = sphi 0, %s23
    %s40 = sphi 0, %s24
    %s46 = sphi 0, %s48
    %s49 = sphi 0, %s46
    %s50 = sphi 0, %s49
    %s66 = sphi 0, %s50
    %s70 = sphi 0, %s70
    %s72 = sphi 0, %s70
    %s73 = sphi 0, %s72
    %s87 = sphi 0, %s73
    %s91 = sphi 0, %s91
    %s93 = sphi 0, %s91
    %s94 = sphi 0, %s93
    %s108 = sphi 0, %s94
    %s114 = sphi 0, %s116
    %s117 = sphi 0, %s114
    %s118 = sphi 0, %s117
    %s134 = sphi 0, %s118
  $region4: #{e2e_forward.40} parent=0 // loop_header_branch
    %13 = sbr.rel (%p11) target = $region8
  $region5: #{e2e_forward.40} parent=0 // loop_body
    %s15 = ssub.s32 %s10, 1
    %s16 = ssub.s32 %s10, 2
    %s17 = sadd.s32 %s10, 1
    %s18 = ssub.s32 %s10, %s17
    %p19 = scmp.eq.s32.totalorder %s18, 0
    %s21 = sadd.s32 %s20, 1
    %s22 = scalar_select %p19, %s20, %s21
    %p25 = pneg %p19
    %p26 = scmp.eq.s32.totalorder %s10, 1
    %p27 = por %p25, %p26
    %p28 = scmp.ne.s32.totalorder %s20, %s23
    %p29 = scmp.eq.s32.totalorder %s10, 0
    %p30 = por %p28, %p29
    %p31 = scmp.ne.s32.totalorder %s20, %s23
    %p32 = scmp.eq.s32.totalorder %s15, 1
    %p33 = por %p31, %p32
    %p34 = scmp.ne.s32.totalorder %s23, %s24
    %p35 = scmp.eq.s32.totalorder %s15, 0
    %p36 = por %p34, %p35
    %p37 = scmp.ne.s32.totalorder %s23, %s24
    %p38 = scmp.eq.s32.totalorder %s16, 1
    %p39 = por %p37, %p38
    %p41 = scmp.ne.s32.totalorder %s24, %s40
    %p42 = scmp.eq.s32.totalorder %s16, 0
    %p43 = por %p41, %p42
    %s44 = ssub.s32 %s10, %s17
    %p45 = scmp.eq.s32.totalorder %s44, 0
    %s47 = sadd.s32 %s46, 1
    %s48 = scalar_select %p45, %s46, %s47
    %p51 = pneg %p45
    %p52 = scmp.eq.s32.totalorder %s10, 1
    %p53 = por %p51, %p52
    %p54 = scmp.ne.s32.totalorder %s46, %s49
    %p55 = scmp.eq.s32.totalorder %s10, 0
    %p56 = por %p54, %p55
    %p57 = scmp.ne.s32.totalorder %s46, %s49
    %p58 = scmp.eq.s32.totalorder %s15, 1
    %p59 = por %p57, %p58
    %p60 = scmp.ne.s32.totalorder %s49, %s50
    %p61 = scmp.eq.s32.totalorder %s15, 0
    %p62 = por %p60, %p61
    %p63 = scmp.ne.s32.totalorder %s49, %s50
    %p64 = scmp.eq.s32.totalorder %s16, 1
    %p65 = por %p63, %p64
    %p67 = scmp.ne.s32.totalorder %s50, %s66
    %p68 = scmp.eq.s32.totalorder %s16, 0
    %p69 = por %p67, %p68
    %s71 = sadd.s32 %s70, 1
    %p74 = scmp.eq.s32.totalorder %s10, 1
    %p75 = scmp.ne.s32.totalorder %s70, %s72
    %p76 = scmp.eq.s32.totalorder %s10, 0
    %p77 = por %p75, %p76
    %p78 = scmp.ne.s32.totalorder %s70, %s72
    %p79 = scmp.eq.s32.totalorder %s15, 1
    %p80 = por %p78, %p79
    %p81 = scmp.ne.s32.totalorder %s72, %s73
    %p82 = scmp.eq.s32.totalorder %s15, 0
    %p83 = por %p81, %p82
    %p84 = scmp.ne.s32.totalorder %s72, %s73
    %p85 = scmp.eq.s32.totalorder %s16, 1
    %p86 = por %p84, %p85
    %p88 = scmp.ne.s32.totalorder %s73, %s87
    %p89 = scmp.eq.s32.totalorder %s16, 0
    %p90 = por %p88, %p89
    %s92 = sadd.s32 %s91, 1
    %p95 = scmp.eq.s32.totalorder %s10, 1
    %p96 = scmp.ne.s32.totalorder %s91, %s93
    %p97 = scmp.eq.s32.totalorder %s10, 0
    %p98 = por %p96, %p97
    %p99 = scmp.ne.s32.totalorder %s91, %s93
    %p100 = scmp.eq.s32.totalorder %s15, 1
    %p101 = por %p99, %p100
    %p102 = scmp.ne.s32.totalorder %s93, %s94
    %p103 = scmp.eq.s32.totalorder %s15, 0
    %p104 = por %p102, %p103
    %p105 = scmp.ne.s32.totalorder %s93, %s94
    %p106 = scmp.eq.s32.totalorder %s16, 1
    %p107 = por %p105, %p106
    %p109 = scmp.ne.s32.totalorder %s94, %s108
    %p110 = scmp.eq.s32.totalorder %s16, 0
    %p111 = por %p109, %p110
    %s112 = ssub.s32 %s10, %s17
    %p113 = scmp.eq.s32.totalorder %s112, 0
    %s115 = sadd.s32 %s114, 1
    %s116 = scalar_select %p113, %s114, %s115
    %p119 = pneg %p113
    %p120 = scmp.eq.s32.totalorder %s10, 1
    %p121 = por %p119, %p120
    %p122 = scmp.ne.s32.totalorder %s114, %s117
    %p123 = scmp.eq.s32.totalorder %s10, 0
    %p124 = por %p122, %p123
    %p125 = scmp.ne.s32.totalorder %s114, %s117
    %p126 = scmp.eq.s32.totalorder %s15, 1
    %p127 = por %p125, %p126
    %p128 = scmp.ne.s32.totalorder %s117, %s118
    %p129 = scmp.eq.s32.totalorder %s15, 0
    %p130 = por %p128, %p129
    %p131 = scmp.ne.s32.totalorder %s117, %s118
    %p132 = scmp.eq.s32.totalorder %s16, 1
    %p133 = por %p131, %p132
    %p135 = scmp.ne.s32.totalorder %s118, %s134
    %p136 = scmp.eq.s32.totalorder %s16, 0
    %p137 = por %p135, %p136
    %p138 = scmp.le.s32.totalorder 1, %s10
    %p139 = scmp.lt.s32.totalorder %s10, 3
    %p140 = pnand %p138, %p139
    %p141 = pneg %p140
    // Predicated region
    $region9: #{e2e_forward.40} parent=5 // pred_check
      _
    $region10: #{e2e_forward.40} parent=5 // pred_check_branch
      %143 = sbr.rel (%p140) target = $region12
    $region11: #{e2e_forward.40} parent=5 // pred_region
      %s144 = ssub.s32 %s10, 1
      // Predicated region
      $region13: #{e2e_forward.40} parent=11 // pred_check
        %p145 = pneg %p83
      $region14: #{e2e_forward.40} parent=11 // pred_check_branch
        %147 = sbr.rel (%p145) target = $region16
      $region15: #{e2e_forward.40} parent=11 // pred_region
        _
      $region16: #{e2e_forward.40} parent=11 // pred_fallthru
        _
      // Predicated region
      $region17: #{e2e_forward.40} parent=11 // pred_check
        %p148 = pneg %p104
      $region18: #{e2e_forward.40} parent=11 // pred_check_branch
        %150 = sbr.rel (%p148) target = $region20
      $region19: #{e2e_forward.40} parent=11 // pred_region
        _
      $region20: #{e2e_forward.40} parent=11 // pred_fallthru
        _
    $region12: #{e2e_forward.40} parent=5 // pred_fallthru
      _
    %p151 = scmp.lt.s32.totalorder %s10, 2
    // Predicated region
    $region21: #{e2e_forward.40} parent=5 // pred_check
      %p152 = pneg %p151
    $region22: #{e2e_forward.40} parent=5 // pred_check_branch
      %154 = sbr.rel (%p152) target = $region24
    $region23: #{e2e_forward.40} parent=5 // pred_region
      // Predicated region
      $region25: #{e2e_forward.40} parent=23 // pred_check
        %p155 = pneg %p30
      $region26: #{e2e_forward.40} parent=23 // pred_check_branch
        %157 = sbr.rel (%p155) target = $region28
      $region27: #{e2e_forward.40} parent=23 // pred_region
        %p158 = scmp.lt.s32.totalorder %s10, 1
        %s159 = scalar_select %p158, %s10, 1
        %s160 = smul.addr %s159, 8
        %s161 = scalar_lea.vmem %s0, %s160
      $region28: #{e2e_forward.40} parent=23 // pred_fallthru
        _
      // Predicated region
      $region29: #{e2e_forward.40} parent=23 // pred_check
        %p162 = pneg %p56
      $region30: #{e2e_forward.40} parent=23 // pred_check_branch
        %164 = sbr.rel (%p162) target = $region32
      $region31: #{e2e_forward.40} parent=23 // pred_region
        %p165 = scmp.lt.s32.totalorder %s10, 1
        %s166 = scalar_select %p165, %s10, 1
        %s167 = smul.addr %s166, 8
        %s168 = scalar_lea.vmem %s1, %s167
      $region32: #{e2e_forward.40} parent=23 // pred_fallthru
        _
    $region24: #{e2e_forward.40} parent=5 // pred_fallthru
      _
    %p169 = scmp.le.s32.totalorder 1, %s10
    %p170 = scmp.lt.s32.totalorder %s10, 3
    %p171 = pnand %p169, %p170
    %p172 = pneg %p171
    // Predicated region
    $region33: #{e2e_forward.40} parent=5 // pred_check
      _
    $region34: #{e2e_forward.40} parent=5 // pred_check_branch
      %174 = sbr.rel (%p171) target = $region36
    $region35: #{e2e_forward.40} parent=5 // pred_region
      %s175 = ssub.s32 %s10, 1
      %p176 = scmp.lt.s32.totalorder %s15, 1
      %s177 = scalar_select %p176, %s15, 1
      %s178 = smul.addr %s177, 8
      %s179 = scalar_lea.vmem %s0, %s178
      %p180 = pneg %p36
      %p181 = pneg %p33
      %p182 = scmp.lt.s32.totalorder %s15, 1
      %s183 = scalar_select %p182, %s15, 1
      %s184 = smul.addr %s183, 8
      %s185 = scalar_lea.vmem %s1, %s184
      %p186 = pneg %p62
      %p187 = pneg %p59
      %p188 = pneg %p83
      %p189 = pneg %p80
      %p190 = pneg %p104
      %p191 = pneg %p101
      %p192 = pneg %p130
      %p193 = pneg %p127
      %p194 = scmp.lt.s32.totalorder %s15, 1
      %s195 = scalar_select %p194, %s15, 1
      %s196 = smul.addr %s195, 8
      %s197 = scalar_lea.vmem %s4, %s196
      %p198 = scmp.lt.s32.totalorder %s15, 1
      %s199 = scalar_select %p198, %s15, 1
      %s200 = smul.addr %s199, 8
      %s201 = scalar_lea.vmem %s0, %s200
      %p202 = scmp.lt.s32.totalorder %s15, 1
      %s203 = scalar_select %p202, %s15, 1
      %s204 = smul.addr %s203, 8
      %s205 = scalar_lea.vmem %s1, %s204
      %p206 = scmp.lt.s32.totalorder %s15, 1
      %s207 = scalar_select %p206, %s15, 1
      %s208 = smul.addr %s207, 8
      %s209 = scalar_lea.vmem %s4, %s208
      %v211 = vld [vmem:[%s201] sm:$0xff]
      %v212 = vpack.c.bf16 %v211, %v211
      %v213 = vld [vmem:[%s205] sm:$0xff]
      %v214 = vld [vmem:[%s2] sm:$0xf]
      %v215 = vld [vmem:[%s2 + $0x4] sm:$0xf]
      %v216 = vld [vmem:[%s2 + $0x8] sm:$0xf]
      %v217 = vld [vmem:[%s2 + $0xc] sm:$0xf]
      %v222 = vunpack.c.l.b16 %v214
      %v223 = vunpack.c.l.b16 %v215
      %v224 = vunpack.c.l.b16 %v216
      %v225 = vunpack.c.l.b16 %v217
      %v226 = vpack.c.b16 %v223, %v222
      %v227 = vpack.c.b16 %v225, %v224
      %vm230 = vcmask 261120
      %v232 = vsel %vm230, %v212, 0
      %234 = vmatprep.subr.bf16.mxu0 0
      %235 = vmatpush1.bf16.msra.mxu0 %v226
      %236 = vmatprep.subr.bf16.mxu0 0
      %237 = vmatpush1.bf16.msra.mxu0 %v227
      %238 = vmatprep.subr.bf16.mxu0 0
      %239 = vmatpush1.bf16.msra.mxu0 0
      %240 = vmatprep.subr.bf16.mxu0 0
      %241 = vmatpush1.bf16.msra.mxu0 0
      %242 = vmatprep.subr.bf16.mxu0 0
      %243 = vmatpush1.bf16.msra.mxu0 0
      %244 = vmatprep.subr.bf16.mxu0 0
      %245 = vmatpush1.bf16.msra.mxu0 0
      %246 = vmatprep.subr.bf16.mxu0 0
      %247 = vmatpush1.bf16.msra.mxu0 0
      %248 = vmatprep.subr.bf16.mxu0 0
      %249 = vmatpush1.bf16.msra.mxu0 0
      %250 = vmatprep.subr.bf16.mxu0 0
      %251 = vmatpush1.bf16.msra.mxu0 0
      %252 = vmatprep.subr.bf16.mxu0 0
      %253 = vmatpush1.bf16.msra.mxu0 0
      %254 = vmatprep.subr.bf16.mxu0 0
      %255 = vmatpush1.bf16.msra.mxu0 0
      %256 = vmatprep.subr.bf16.mxu0 0
      %257 = vmatpush1.bf16.msra.mxu0 0
      %258 = vmatprep.subr.bf16.mxu0 0
      %259 = vmatpush1.bf16.msra.mxu0 0
      %260 = vmatprep.subr.bf16.mxu0 0
      %261 = vmatpush1.bf16.msra.mxu0 0
      %262 = vmatprep.subr.bf16.mxu0 0
      %263 = vmatpush1.bf16.msra.mxu0 0
      %264 = vmatprep.subr.bf16.mxu0 0
      %265 = vmatpush1.bf16.msra.mxu0 0
      %266 = vmatprep.mubr.bf16.mxu0 0
      %267 = vmatmul.mubr.bf16.gmra.mrb[0].mxu0 %v232
      %v268 = vpop.f32.mrb[0].mxu0
      %v269 = vadd.f32 0.0, %v268
      %v270 = vpop.f32.mrb[0].mxu0
      %v271 = vpop.f32.mrb[0].mxu0
      %v272 = vpop.f32.mrb[0].mxu0
      %273 = vdwg.mxu0
      %v274 = vadd.f32 %v213, %v269
      %v275 = vld [vmem:[%s3] sm:$0x1]
      %v277 = vlaneseq
      %v278 = vshrl.u32 %v277, 7
      %v279 = vsub.s32 0, %v278
      %v280 = vrot.slane %v275, %v279
      %v282 = vadd.f32 %v274, %v280
      %283 = vst.msk [vmem:[%s209] sm:$0xff] %vm230, %v282
      %p284 = scmp.lt.s32.totalorder %s15, 1
      %s285 = scalar_select %p284, %s15, 1
      %s286 = smul.addr %s285, 8
      %s287 = scalar_lea.vmem %s4, %s286
      // Predicated region
      $region37: #{e2e_forward.40} parent=35 // pred_check
        %p288 = pneg %p127
      $region38: #{e2e_forward.40} parent=35 // pred_check_branch
        %290 = sbr.rel (%p288) target = $region40
      $region39: #{e2e_forward.40} parent=35 // pred_region
        _
      $region40: #{e2e_forward.40} parent=35 // pred_fallthru
        _
    $region36: #{e2e_forward.40} parent=5 // pred_fallthru
      _
    %p291 = scmp.le.s32.totalorder 2, %s10
    // Predicated region
    $region41: #{e2e_forward.40} parent=5 // pred_check
      %p292 = pneg %p291
    $region42: #{e2e_forward.40} parent=5 // pred_check_branch
      %294 = sbr.rel (%p292) target = $region44
    $region43: #{e2e_forward.40} parent=5 // pred_region
      %s295 = ssub.s32 %s10, 2
      // Predicated region
      $region45: #{e2e_forward.40} parent=43 // pred_check
        %p296 = pneg %p133
      $region46: #{e2e_forward.40} parent=43 // pred_check_branch
        %298 = sbr.rel (%p296) target = $region48
      $region47: #{e2e_forward.40} parent=43 // pred_region
        %p299 = scmp.lt.s32.totalorder %s16, 1
        %s300 = scalar_select %p299, %s16, 1
        %s301 = smul.addr %s300, 8
        %s302 = scalar_lea.vmem %s4, %s301
      $region48: #{e2e_forward.40} parent=43 // pred_fallthru
        _
    $region44: #{e2e_forward.40} parent=5 // pred_fallthru
      _
  $region6: #{e2e_forward.40} parent=0 // loop_footer
    %s14 = sadd.s32 1, %s10
  $region7: #{e2e_forward.40} parent=0 // loop_footer_branch
    %9 = sbr.rel target = $region3
  $region8: #{e2e_forward.40} parent=0 // loop_exit
    _

// kernel: e2e_forward.38
$region0: #{e2e_forward.38}
  #allocation0 [shape = 'u32[]', space=smem, size = 0x4, offset = 0x4, fixed_abs, tag = 'smem constant byte address 0x4 - core index']
  #allocation1 [shape = 'u32[144,128]{1,0:T(1,128)}', space=vmem, size = 0x12000, scoped, tag = 'internal scratch']
  %s0 = inlined_call_operand.vmem [shape: f32[16,32], index: 0, kind: input, shape index: {}]
  %s1 = inlined_call_operand.vmem [shape: f32[1,32], index: 1, kind: input, shape index: {}]
  %s2 = inlined_call_operand.vmem [shape: f32[1,32], index: 2, kind: input, shape index: {}]
  %s3 = inlined_call_operand.vmem [shape: bf16[32,96], index: 3, kind: input, shape index: {}]
  %s4 = inlined_call_operand.vmem [shape: f32[1,96], index: 4, kind: input, shape index: {}]
  %s5 = inlined_call_operand.vmem [shape: f32[16,96], index: 5, kind: output, shape index: {}]
  %s6 = sld [smem:[#allocation0]]
  $region53: #{e2e_forward.38} parent=0
    _
  %s8 = ssub.s32 1, %s6
  %s9 = scalar_select 0, %s8, %s6
  loop: start=0, step=1, limit=4
  $region2: #{e2e_forward.38} parent=0 // loop_pre_header
    _
  $region3: #{e2e_forward.38} parent=0 // loop_header
    %s11 = sphi 0, %s15
    %p12 = scmp.ge.s32.totalorder %s11, 4
    %s18 = sphi 0, %s30
    %s19 = sphi 0, %s26
    %s20 = sphi 0, %s18
    %s21 = sphi 0, %s19
    %s22 = sphi 0, %s20
    %s23 = sphi 0, %s21
    %s33 = sphi 0, %s35
    %s36 = sphi 0, %s33
    %s37 = sphi 0, %s36
    %s53 = sphi 0, %s37
    %s57 = sphi 0, %s57
    %s59 = sphi 0, %s57
    %s60 = sphi 0, %s59
    %s74 = sphi 0, %s60
    %s78 = sphi 0, %s78
    %s80 = sphi 0, %s78
    %s81 = sphi 0, %s80
    %s95 = sphi 0, %s81
    %s101 = sphi 0, %s103
    %s104 = sphi 0, %s101
    %s105 = sphi 0, %s104
    %s121 = sphi 0, %s105
    %s127 = sphi 0, %s129
    %s130 = sphi 0, %s127
    %s131 = sphi 0, %s130
    %s147 = sphi 0, %s131
    %s155 = sphi 0, %s157
    %s158 = sphi 0, %s155
    %s159 = sphi 0, %s158
    %s175 = sphi 0, %s159
  $region4: #{e2e_forward.38} parent=0 // loop_header_branch
    %14 = sbr.rel (%p12) target = $region8
  $region5: #{e2e_forward.38} parent=0 // loop_body
    %s16 = ssub.s32 %s11, 1
    %s17 = ssub.s32 %s11, 2
    %s24 = sadd.s32 1, %s19
    %p25 = scmp.ge.s32.totalorder %s24, 1
    %s26 = scalar_select %p25, 0, %s24
    %s27 = sadd.s32 1, %s18
    %s28 = scalar_select %p25, %s27, %s18
    %p29 = scmp.ge.s32.totalorder %s28, 2
    %s30 = scalar_select %p29, 0, %s28
    %s31 = ssub.s32 %s18, %s30
    %p32 = scmp.eq.s32.totalorder %s31, 0
    %s34 = sadd.s32 %s33, 1
    %s35 = scalar_select %p32, %s33, %s34
    %p38 = pneg %p32
    %p39 = scmp.eq.s32.totalorder %s11, 1
    %p40 = por %p38, %p39
    %p41 = scmp.ne.s32.totalorder %s33, %s36
    %p42 = scmp.eq.s32.totalorder %s11, 0
    %p43 = por %p41, %p42
    %p44 = scmp.ne.s32.totalorder %s33, %s36
    %p45 = scmp.eq.s32.totalorder %s16, 1
    %p46 = por %p44, %p45
    %p47 = scmp.ne.s32.totalorder %s36, %s37
    %p48 = scmp.eq.s32.totalorder %s16, 0
    %p49 = por %p47, %p48
    %p50 = scmp.ne.s32.totalorder %s36, %s37
    %p51 = scmp.eq.s32.totalorder %s17, 1
    %p52 = por %p50, %p51
    %p54 = scmp.ne.s32.totalorder %s37, %s53
    %p55 = scmp.eq.s32.totalorder %s17, 0
    %p56 = por %p54, %p55
    %s58 = sadd.s32 %s57, 1
    %p61 = scmp.eq.s32.totalorder %s11, 1
    %p62 = scmp.ne.s32.totalorder %s57, %s59
    %p63 = scmp.eq.s32.totalorder %s11, 0
    %p64 = por %p62, %p63
    %p65 = scmp.ne.s32.totalorder %s57, %s59
    %p66 = scmp.eq.s32.totalorder %s16, 1
    %p67 = por %p65, %p66
    %p68 = scmp.ne.s32.totalorder %s59, %s60
    %p69 = scmp.eq.s32.totalorder %s16, 0
    %p70 = por %p68, %p69
    %p71 = scmp.ne.s32.totalorder %s59, %s60
    %p72 = scmp.eq.s32.totalorder %s17, 1
    %p73 = por %p71, %p72
    %p75 = scmp.ne.s32.totalorder %s60, %s74
    %p76 = scmp.eq.s32.totalorder %s17, 0
    %p77 = por %p75, %p76
    %s79 = sadd.s32 %s78, 1
    %p82 = scmp.eq.s32.totalorder %s11, 1
    %p83 = scmp.ne.s32.totalorder %s78, %s80
    %p84 = scmp.eq.s32.totalorder %s11, 0
    %p85 = por %p83, %p84
    %p86 = scmp.ne.s32.totalorder %s78, %s80
    %p87 = scmp.eq.s32.totalorder %s16, 1
    %p88 = por %p86, %p87
    %p89 = scmp.ne.s32.totalorder %s80, %s81
    %p90 = scmp.eq.s32.totalorder %s16, 0
    %p91 = por %p89, %p90
    %p92 = scmp.ne.s32.totalorder %s80, %s81
    %p93 = scmp.eq.s32.totalorder %s17, 1
    %p94 = por %p92, %p93
    %p96 = scmp.ne.s32.totalorder %s81, %s95
    %p97 = scmp.eq.s32.totalorder %s17, 0
    %p98 = por %p96, %p97
    %s99 = ssub.s32 %s19, %s26
    %p100 = scmp.eq.s32.totalorder %s99, 0
    %s102 = sadd.s32 %s101, 1
    %s103 = scalar_select %p100, %s101, %s102
    %p106 = pneg %p100
    %p107 = scmp.eq.s32.totalorder %s11, 1
    %p108 = por %p106, %p107
    %p109 = scmp.ne.s32.totalorder %s101, %s104
    %p110 = scmp.eq.s32.totalorder %s11, 0
    %p111 = por %p109, %p110
    %p112 = scmp.ne.s32.totalorder %s101, %s104
    %p113 = scmp.eq.s32.totalorder %s16, 1
    %p114 = por %p112, %p113
    %p115 = scmp.ne.s32.totalorder %s104, %s105
    %p116 = scmp.eq.s32.totalorder %s16, 0
    %p117 = por %p115, %p116
    %p118 = scmp.ne.s32.totalorder %s104, %s105
    %p119 = scmp.eq.s32.totalorder %s17, 1
    %p120 = por %p118, %p119
    %p122 = scmp.ne.s32.totalorder %s105, %s121
    %p123 = scmp.eq.s32.totalorder %s17, 0
    %p124 = por %p122, %p123
    %s125 = ssub.s32 %s19, %s26
    %p126 = scmp.eq.s32.totalorder %s125, 0
    %s128 = sadd.s32 %s127, 1
    %s129 = scalar_select %p126, %s127, %s128
    %p132 = pneg %p126
    %p133 = scmp.eq.s32.totalorder %s11, 1
    %p134 = por %p132, %p133
    %p135 = scmp.ne.s32.totalorder %s127, %s130
    %p136 = scmp.eq.s32.totalorder %s11, 0
    %p137 = por %p135, %p136
    %p138 = scmp.ne.s32.totalorder %s127, %s130
    %p139 = scmp.eq.s32.totalorder %s16, 1
    %p140 = por %p138, %p139
    %p141 = scmp.ne.s32.totalorder %s130, %s131
    %p142 = scmp.eq.s32.totalorder %s16, 0
    %p143 = por %p141, %p142
    %p144 = scmp.ne.s32.totalorder %s130, %s131
    %p145 = scmp.eq.s32.totalorder %s17, 1
    %p146 = por %p144, %p145
    %p148 = scmp.ne.s32.totalorder %s131, %s147
    %p149 = scmp.eq.s32.totalorder %s17, 0
    %p150 = por %p148, %p149
    %s151 = ssub.s32 %s18, %s30
    %s152 = ssub.s32 %s19, %s26
    %s153 = sor.u32 %s151, %s152
    %p154 = scmp.eq.s32.totalorder %s153, 0
    %s156 = sadd.s32 %s155, 1
    %s157 = scalar_select %p154, %s155, %s156
    %p160 = pneg %p154
    %p161 = scmp.eq.s32.totalorder %s11, 1
    %p162 = por %p160, %p161
    %p163 = scmp.ne.s32.totalorder %s155, %s158
    %p164 = scmp.eq.s32.totalorder %s11, 0
    %p165 = por %p163, %p164
    %p166 = scmp.ne.s32.totalorder %s155, %s158
    %p167 = scmp.eq.s32.totalorder %s16, 1
    %p168 = por %p166, %p167
    %p169 = scmp.ne.s32.totalorder %s158, %s159
    %p170 = scmp.eq.s32.totalorder %s16, 0
    %p171 = por %p169, %p170
    %p172 = scmp.ne.s32.totalorder %s158, %s159
    %p173 = scmp.eq.s32.totalorder %s17, 1
    %p174 = por %p172, %p173
    %p176 = scmp.ne.s32.totalorder %s159, %s175
    %p177 = scmp.eq.s32.totalorder %s17, 0
    %p178 = por %p176, %p177
    %p179 = scmp.le.s32.totalorder 1, %s11
    %p180 = scmp.lt.s32.totalorder %s11, 3
    %p181 = pnand %p179, %p180
    %p182 = pneg %p181
    // Predicated region
    $region9: #{e2e_forward.38} parent=5 // pred_check
      _
    $region10: #{e2e_forward.38} parent=5 // pred_check_branch
      %184 = sbr.rel (%p181) target = $region12
    $region11: #{e2e_forward.38} parent=5 // pred_region
      %s185 = ssub.s32 %s11, 1
      // Predicated region
      $region13: #{e2e_forward.38} parent=11 // pred_check
        %p186 = pneg %p70
      $region14: #{e2e_forward.38} parent=11 // pred_check_branch
        %188 = sbr.rel (%p186) target = $region16
      $region15: #{e2e_forward.38} parent=11 // pred_region
        _
      $region16: #{e2e_forward.38} parent=11 // pred_fallthru
        _
      // Predicated region
      $region17: #{e2e_forward.38} parent=11 // pred_check
        %p189 = pneg %p91
      $region18: #{e2e_forward.38} parent=11 // pred_check_branch
        %191 = sbr.rel (%p189) target = $region20
      $region19: #{e2e_forward.38} parent=11 // pred_region
        _
      $region20: #{e2e_forward.38} parent=11 // pred_fallthru
        _
      // Predicated region
      $region21: #{e2e_forward.38} parent=11 // pred_check
        %p192 = pneg %p117
      $region22: #{e2e_forward.38} parent=11 // pred_check_branch
        %194 = sbr.rel (%p192) target = $region24
      $region23: #{e2e_forward.38} parent=11 // pred_region
        %p195 = scmp.lt.s32.totalorder %s21, 0
        %s196 = scalar_select %p195, %s21, 0
        %s197 = smul.addr %s196, 4
        %s198 = scalar_lea.vmem %s3, %s197
      $region24: #{e2e_forward.38} parent=11 // pred_fallthru
        _
      // Predicated region
      $region25: #{e2e_forward.38} parent=11 // pred_check
        %p199 = pneg %p143
      $region26: #{e2e_forward.38} parent=11 // pred_check_branch
        %201 = sbr.rel (%p199) target = $region28
      $region27: #{e2e_forward.38} parent=11 // pred_region
        %p202 = scmp.lt.s32.totalorder %s21, 0
        %s203 = scalar_select %p202, %s21, 0
        %s204 = scalar_lea.vmem %s4, %s203
      $region28: #{e2e_forward.38} parent=11 // pred_fallthru
        _
    $region12: #{e2e_forward.38} parent=5 // pred_fallthru
      _
    %p205 = scmp.lt.s32.totalorder %s11, 2
    // Predicated region
    $region29: #{e2e_forward.38} parent=5 // pred_check
      %p206 = pneg %p205
    $region30: #{e2e_forward.38} parent=5 // pred_check_branch
      %208 = sbr.rel (%p206) target = $region32
    $region31: #{e2e_forward.38} parent=5 // pred_region
      // Predicated region
      $region33: #{e2e_forward.38} parent=31 // pred_check
        %p209 = pneg %p43
      $region34: #{e2e_forward.38} parent=31 // pred_check_branch
        %211 = sbr.rel (%p209) target = $region36
      $region35: #{e2e_forward.38} parent=31 // pred_region
        %p212 = scmp.lt.s32.totalorder %s18, 1
        %s213 = scalar_select %p212, %s18, 1
        %s214 = smul.addr %s213, 8
        %s215 = scalar_lea.vmem %s0, %s214
      $region36: #{e2e_forward.38} parent=31 // pred_fallthru
        _
    $region32: #{e2e_forward.38} parent=5 // pred_fallthru
      _
    %p216 = scmp.le.s32.totalorder 1, %s11
    %p217 = scmp.lt.s32.totalorder %s11, 3
    %p218 = pnand %p216, %p217
    %p219 = pneg %p218
    // Predicated region
    $region37: #{e2e_forward.38} parent=5 // pred_check
      _
    $region38: #{e2e_forward.38} parent=5 // pred_check_branch
      %221 = sbr.rel (%p218) target = $region40
    $region39: #{e2e_forward.38} parent=5 // pred_region
      %s222 = ssub.s32 %s11, 1
      %p223 = scmp.lt.s32.totalorder %s20, 1
      %s224 = scalar_select %p223, %s20, 1
      %s225 = smul.addr %s224, 8
      %s226 = scalar_lea.vmem %s0, %s225
      %p227 = pneg %p49
      %p228 = pneg %p46
      %p229 = pneg %p70
      %p230 = pneg %p67
      %p231 = pneg %p91
      %p232 = pneg %p88
      %p233 = scmp.lt.s32.totalorder %s21, 0
      %s234 = scalar_select %p233, %s21, 0
      %s235 = smul.addr %s234, 4
      %s236 = scalar_lea.vmem %s3, %s235
      %p237 = pneg %p117
      %p238 = pneg %p114
      %p239 = scmp.lt.s32.totalorder %s21, 0
      %s240 = scalar_select %p239, %s21, 0
      %s241 = scalar_lea.vmem %s4, %s240
      %p242 = pneg %p143
      %p243 = pneg %p140
      %p244 = pneg %p171
      %p245 = pneg %p168
      %p246 = scmp.lt.s32.totalorder %s20, 1
      %s247 = scalar_select %p246, %s20, 1
      %p248 = scmp.lt.s32.totalorder %s21, 0
      %s249 = scalar_select %p248, %s21, 0
      %s250 = sadd.s32 %s249, %s247
      %s251 = smul.addr %s250, 8
      %s252 = scalar_lea.vmem %s5, %s251
      %p253 = scmp.lt.s32.totalorder %s20, 1
      %s254 = scalar_select %p253, %s20, 1
      %s255 = smul.addr %s254, 8
      %s256 = scalar_lea.vmem %s0, %s255
      %p257 = scmp.lt.s32.totalorder %s21, 0
      %s258 = scalar_select %p257, %s21, 0
      %s259 = smul.addr %s258, 4
      %s260 = scalar_lea.vmem %s3, %s259
      %p261 = scmp.lt.s32.totalorder %s21, 0
      %s262 = scalar_select %p261, %s21, 0
      %s263 = scalar_lea.vmem %s4, %s262
      %p264 = scmp.lt.s32.totalorder %s20, 1
      %s265 = scalar_select %p264, %s20, 1
      %p266 = scmp.lt.s32.totalorder %s21, 0
      %s267 = scalar_select %p266, %s21, 0
      %s268 = sadd.s32 %s267, %s265
      %s269 = smul.addr %s268, 8
      %s270 = scalar_lea.vmem %s5, %s269
      %v272 = vld [vmem:[%s256] sm:$0xff]
      %vm273 = vcmask 261120
      %v274 = vsel %vm273, %v272, 0.0
      %275 = vadd.xlane.f32.xlu0 %v274
      %v276 = vpop.xlane.xlu0 %275
      %v277 = vrcp.pop 32.0
      %v278 = vmul.f32 %v276, %v277
      %v279 = vsub.f32 %v272, %v278
      %v280 = vmul.f32 %v279, %v279
      %v281 = vsel %vm273, %v280, 0.0
      %282 = vadd.xlane.f32.xlu0 %v281
      %v283 = vpop.xlane.xlu0 %282
      %v284 = vmul.f32 %v283, %v277
      %v285 = vadd.f32 %v284, 1e-12
      %v286 = vrsqrt.pop %v285
      %v287 = vmul.f32 %v279, %v286
      %v288 = vld [vmem:[%s1] sm:$0x1]
      %v290 = vlaneseq
      %v291 = vshrl.u32 %v290, 7
      %v292 = vsub.s32 0, %v291
      %v293 = vrot.slane %v288, %v292
      %v295 = vmul.f32 %v287, %v293
      %v296 = vld [vmem:[%s2] sm:$0x1]
      %v298 = vlaneseq
      %v299 = vshrl.u32 %v298, 7
      %v300 = vsub.s32 0, %v299
      %v301 = vrot.slane %v296, %v300
      %v303 = vadd.f32 %v295, %v301
      %v304 = vpack.c.bf16 %v303, %v303
      %v305 = vld [vmem:[%s260] sm:$0xf]
      %v306 = vld [vmem:[%s260 + $0x4] sm:$0xf]
      %v307 = vld [vmem:[%s260 + $0x8] sm:$0xf]
      %v308 = vld [vmem:[%s260 + $0xc] sm:$0xf]
      %v309 = vld [vmem:[%s263] sm:$0x1]
      %v311 = vlaneseq
      %v312 = vshrl.u32 %v311, 7
      %v313 = vsub.s32 0, %v312
      %v314 = vrot.slane %v309, %v313
      %v320 = vunpack.c.l.b16 %v305
      %v321 = vunpack.c.l.b16 %v306
      %v322 = vunpack.c.l.b16 %v307
      %v323 = vunpack.c.l.b16 %v308
      %v324 = vpack.c.b16 %v321, %v320
      %v325 = vpack.c.b16 %v323, %v322
      %v329 = vsel %vm273, %v304, 0
      %331 = vmatprep.subr.bf16.mxu0 0
      %332 = vmatpush1.bf16.msra.mxu0 %v324
      %333 = vmatprep.subr.bf16.mxu0 0
      %334 = vmatpush1.bf16.msra.mxu0 %v325
      %335 = vmatprep.subr.bf16.mxu0 0
      %336 = vmatpush1.bf16.msra.mxu0 0
      %337 = vmatprep.subr.bf16.mxu0 0
      %338 = vmatpush1.bf16.msra.mxu0 0
      %339 = vmatprep.subr.bf16.mxu0 0
      %340 = vmatpush1.bf16.msra.mxu0 0
      %341 = vmatprep.subr.bf16.mxu0 0
      %342 = vmatpush1.bf16.msra.mxu0 0
      %343 = vmatprep.subr.bf16.mxu0 0
      %344 = vmatpush1.bf16.msra.mxu0 0
      %345 = vmatprep.subr.bf16.mxu0 0
      %346 = vmatpush1.bf16.msra.mxu0 0
      %347 = vmatprep.subr.bf16.mxu0 0
      %348 = vmatpush1.bf16.msra.mxu0 0
      %349 = vmatprep.subr.bf16.mxu0 0
      %350 = vmatpush1.bf16.msra.mxu0 0
      %351 = vmatprep.subr.bf16.mxu0 0
      %352 = vmatpush1.bf16.msra.mxu0 0
      %353 = vmatprep.subr.bf16.mxu0 0
      %354 = vmatpush1.bf16.msra.mxu0 0
      %355 = vmatprep.subr.bf16.mxu0 0
      %356 = vmatpush1.bf16.msra.mxu0 0
      %357 = vmatprep.subr.bf16.mxu0 0
      %358 = vmatpush1.bf16.msra.mxu0 0
      %359 = vmatprep.subr.bf16.mxu0 0
      %360 = vmatpush1.bf16.msra.mxu0 0
      %361 = vmatprep.subr.bf16.mxu0 0
      %362 = vmatpush1.bf16.msra.mxu0 0
      %363 = vmatprep.mubr.bf16.mxu0 0
      %364 = vmatmul.mubr.bf16.gmra.mrb[0].mxu0 %v329
      %v365 = vpop.f32.mrb[0].mxu0
      %v366 = vadd.f32 %v314, %v365
      %v367 = vpop.f32.mrb[0].mxu0
      %v368 = vpop.f32.mrb[0].mxu0
      %v369 = vpop.f32.mrb[0].mxu0
      %370 = vdwg.mxu0
      %vm371 = vcmask 785408
      %372 = vst.msk [vmem:[%s270] sm:$0xff] %vm371, %v366
      %p373 = scmp.lt.s32.totalorder %s20, 1
      %s374 = scalar_select %p373, %s20, 1
      %p375 = scmp.lt.s32.totalorder %s21, 0
      %s376 = scalar_select %p375, %s21, 0
      %s377 = sadd.s32 %s376, %s374
      %s378 = smul.addr %s377, 8
      %s379 = scalar_lea.vmem %s5, %s378
      // Predicated region
      $region41: #{e2e_forward.38} parent=39 // pred_check
        %p380 = pneg %p168
      $region42: #{e2e_forward.38} parent=39 // pred_check_branch
        %382 = sbr.rel (%p380) target = $region44
      $region43: #{e2e_forward.38} parent=39 // pred_region
        _
      $region44: #{e2e_forward.38} parent=39 // pred_fallthru
        _
    $region40: #{e2e_forward.38} parent=5 // pred_fallthru
      _
    %p383 = scmp.le.s32.totalorder 2, %s11
    // Predicated region
    $region45: #{e2e_forward.38} parent=5 // pred_check
      %p384 = pneg %p383
    $region46: #{e2e_forward.38} parent=5 // pred_check_branch
      %386 = sbr.rel (%p384) target = $region48
    $region47: #{e2e_forward.38} parent=5 // pred_region
      %s387 = ssub.s32 %s11, 2
      // Predicated region
      $region49: #{e2e_forward.38} parent=47 // pred_check
        %p388 = pneg %p174
      $region50: #{e2e_forward.38} parent=47 // pred_check_branch
        %390 = sbr.rel (%p388) target = $region52
      $region51: #{e2e_forward.38} parent=47 // pred_region
        %p391 = scmp.lt.s32.totalorder %s22, 1
        %s392 = scalar_select %p391, %s22, 1
        %p393 = scmp.lt.s32.totalorder %s23, 0
        %s394 = scalar_select %p393, %s23, 0
        %s395 = sadd.s32 %s394, %s392
        %s396 = smul.addr %s395, 8
        %s397 = scalar_lea.vmem %s5, %s396
      $region52: #{e2e_forward.38} parent=47 // pred_fallthru
        _
    $region48: #{e2e_forward.38} parent=5 // pred_fallthru
      _
  $region6: #{e2e_forward.38} parent=0 // loop_footer
    %s15 = sadd.s32 1, %s11
  $region7: #{e2e_forward.38} parent=0 // loop_footer_branch
    %10 = sbr.rel target = $region3
  $region8: #{e2e_forward.38} parent=0 // loop_exit
    _

// kernel: e2e_forward.41
$region0: #{e2e_forward.41}
  #allocation0 [shape = 'u32[]', space=smem, size = 0x4, offset = 0x4, fixed_abs, tag = 'smem constant byte address 0x4 - core index']
  #allocation1 [shape = 'u32[144,128]{1,0:T(1,128)}', space=vmem, size = 0x12000, scoped, tag = 'internal scratch']
  %s0 = inlined_call_operand.vmem [shape: f32[16,32], index: 0, kind: input, shape index: {}]
  %s1 = inlined_call_operand.vmem [shape: f32[1,32], index: 1, kind: input, shape index: {}]
  %s2 = inlined_call_operand.vmem [shape: f32[1,32], index: 2, kind: input, shape index: {}]
  %s3 = inlined_call_operand.vmem [shape: bf16[32,32], index: 3, kind: input, shape index: {}]
  %s4 = inlined_call_operand.vmem [shape: f32[1,32], index: 4, kind: input, shape index: {}]
  %s5 = inlined_call_operand.vmem [shape: f32[16,32], index: 5, kind: output, shape index: {}]
  %s6 = sld [smem:[#allocation0]]
  $region53: #{e2e_forward.41} parent=0
    _
  %s8 = ssub.s32 1, %s6
  %s9 = scalar_select 0, %s8, %s6
  loop: start=0, step=1, limit=4
  $region2: #{e2e_forward.41} parent=0 // loop_pre_header
    _
  $region3: #{e2e_forward.41} parent=0 // loop_header
    %s11 = sphi 0, %s15
    %p12 = scmp.ge.s32.totalorder %s11, 4
    %s18 = sphi 0, %s30
    %s19 = sphi 0, %s26
    %s20 = sphi 0, %s18
    %s21 = sphi 0, %s19
    %s22 = sphi 0, %s20
    %s23 = sphi 0, %s21
    %s33 = sphi 0, %s35
    %s36 = sphi 0, %s33
    %s37 = sphi 0, %s36
    %s53 = sphi 0, %s37
    %s57 = sphi 0, %s57
    %s59 = sphi 0, %s57
    %s60 = sphi 0, %s59
    %s74 = sphi 0, %s60
    %s78 = sphi 0, %s78
    %s80 = sphi 0, %s78
    %s81 = sphi 0, %s80
    %s95 = sphi 0, %s81
    %s101 = sphi 0, %s103
    %s104 = sphi 0, %s101
    %s105 = sphi 0, %s104
    %s121 = sphi 0, %s105
    %s127 = sphi 0, %s129
    %s130 = sphi 0, %s127
    %s131 = sphi 0, %s130
    %s147 = sphi 0, %s131
    %s155 = sphi 0, %s157
    %s158 = sphi 0, %s155
    %s159 = sphi 0, %s158
    %s175 = sphi 0, %s159
  $region4: #{e2e_forward.41} parent=0 // loop_header_branch
    %14 = sbr.rel (%p12) target = $region8
  $region5: #{e2e_forward.41} parent=0 // loop_body
    %s16 = ssub.s32 %s11, 1
    %s17 = ssub.s32 %s11, 2
    %s24 = sadd.s32 1, %s19
    %p25 = scmp.ge.s32.totalorder %s24, 1
    %s26 = scalar_select %p25, 0, %s24
    %s27 = sadd.s32 1, %s18
    %s28 = scalar_select %p25, %s27, %s18
    %p29 = scmp.ge.s32.totalorder %s28, 2
    %s30 = scalar_select %p29, 0, %s28
    %s31 = ssub.s32 %s18, %s30
    %p32 = scmp.eq.s32.totalorder %s31, 0
    %s34 = sadd.s32 %s33, 1
    %s35 = scalar_select %p32, %s33, %s34
    %p38 = pneg %p32
    %p39 = scmp.eq.s32.totalorder %s11, 1
    %p40 = por %p38, %p39
    %p41 = scmp.ne.s32.totalorder %s33, %s36
    %p42 = scmp.eq.s32.totalorder %s11, 0
    %p43 = por %p41, %p42
    %p44 = scmp.ne.s32.totalorder %s33, %s36
    %p45 = scmp.eq.s32.totalorder %s16, 1
    %p46 = por %p44, %p45
    %p47 = scmp.ne.s32.totalorder %s36, %s37
    %p48 = scmp.eq.s32.totalorder %s16, 0
    %p49 = por %p47, %p48
    %p50 = scmp.ne.s32.totalorder %s36, %s37
    %p51 = scmp.eq.s32.totalorder %s17, 1
    %p52 = por %p50, %p51
    %p54 = scmp.ne.s32.totalorder %s37, %s53
    %p55 = scmp.eq.s32.totalorder %s17, 0
    %p56 = por %p54, %p55
    %s58 = sadd.s32 %s57, 1
    %p61 = scmp.eq.s32.totalorder %s11, 1
    %p62 = scmp.ne.s32.totalorder %s57, %s59
    %p63 = scmp.eq.s32.totalorder %s11, 0
    %p64 = por %p62, %p63
    %p65 = scmp.ne.s32.totalorder %s57, %s59
    %p66 = scmp.eq.s32.totalorder %s16, 1
    %p67 = por %p65, %p66
    %p68 = scmp.ne.s32.totalorder %s59, %s60
    %p69 = scmp.eq.s32.totalorder %s16, 0
    %p70 = por %p68, %p69
    %p71 = scmp.ne.s32.totalorder %s59, %s60
    %p72 = scmp.eq.s32.totalorder %s17, 1
    %p73 = por %p71, %p72
    %p75 = scmp.ne.s32.totalorder %s60, %s74
    %p76 = scmp.eq.s32.totalorder %s17, 0
    %p77 = por %p75, %p76
    %s79 = sadd.s32 %s78, 1
    %p82 = scmp.eq.s32.totalorder %s11, 1
    %p83 = scmp.ne.s32.totalorder %s78, %s80
    %p84 = scmp.eq.s32.totalorder %s11, 0
    %p85 = por %p83, %p84
    %p86 = scmp.ne.s32.totalorder %s78, %s80
    %p87 = scmp.eq.s32.totalorder %s16, 1
    %p88 = por %p86, %p87
    %p89 = scmp.ne.s32.totalorder %s80, %s81
    %p90 = scmp.eq.s32.totalorder %s16, 0
    %p91 = por %p89, %p90
    %p92 = scmp.ne.s32.totalorder %s80, %s81
    %p93 = scmp.eq.s32.totalorder %s17, 1
    %p94 = por %p92, %p93
    %p96 = scmp.ne.s32.totalorder %s81, %s95
    %p97 = scmp.eq.s32.totalorder %s17, 0
    %p98 = por %p96, %p97
    %s99 = ssub.s32 %s19, %s26
    %p100 = scmp.eq.s32.totalorder %s99, 0
    %s102 = sadd.s32 %s101, 1
    %s103 = scalar_select %p100, %s101, %s102
    %p106 = pneg %p100
    %p107 = scmp.eq.s32.totalorder %s11, 1
    %p108 = por %p106, %p107
    %p109 = scmp.ne.s32.totalorder %s101, %s104
    %p110 = scmp.eq.s32.totalorder %s11, 0
    %p111 = por %p109, %p110
    %p112 = scmp.ne.s32.totalorder %s101, %s104
    %p113 = scmp.eq.s32.totalorder %s16, 1
    %p114 = por %p112, %p113
    %p115 = scmp.ne.s32.totalorder %s104, %s105
    %p116 = scmp.eq.s32.totalorder %s16, 0
    %p117 = por %p115, %p116
    %p118 = scmp.ne.s32.totalorder %s104, %s105
    %p119 = scmp.eq.s32.totalorder %s17, 1
    %p120 = por %p118, %p119
    %p122 = scmp.ne.s32.totalorder %s105, %s121
    %p123 = scmp.eq.s32.totalorder %s17, 0
    %p124 = por %p122, %p123
    %s125 = ssub.s32 %s19, %s26
    %p126 = scmp.eq.s32.totalorder %s125, 0
    %s128 = sadd.s32 %s127, 1
    %s129 = scalar_select %p126, %s127, %s128
    %p132 = pneg %p126
    %p133 = scmp.eq.s32.totalorder %s11, 1
    %p134 = por %p132, %p133
    %p135 = scmp.ne.s32.totalorder %s127, %s130
    %p136 = scmp.eq.s32.totalorder %s11, 0
    %p137 = por %p135, %p136
    %p138 = scmp.ne.s32.totalorder %s127, %s130
    %p139 = scmp.eq.s32.totalorder %s16, 1
    %p140 = por %p138, %p139
    %p141 = scmp.ne.s32.totalorder %s130, %s131
    %p142 = scmp.eq.s32.totalorder %s16, 0
    %p143 = por %p141, %p142
    %p144 = scmp.ne.s32.totalorder %s130, %s131
    %p145 = scmp.eq.s32.totalorder %s17, 1
    %p146 = por %p144, %p145
    %p148 = scmp.ne.s32.totalorder %s131, %s147
    %p149 = scmp.eq.s32.totalorder %s17, 0
    %p150 = por %p148, %p149
    %s151 = ssub.s32 %s18, %s30
    %s152 = ssub.s32 %s19, %s26
    %s153 = sor.u32 %s151, %s152
    %p154 = scmp.eq.s32.totalorder %s153, 0
    %s156 = sadd.s32 %s155, 1
    %s157 = scalar_select %p154, %s155, %s156
    %p160 = pneg %p154
    %p161 = scmp.eq.s32.totalorder %s11, 1
    %p162 = por %p160, %p161
    %p163 = scmp.ne.s32.totalorder %s155, %s158
    %p164 = scmp.eq.s32.totalorder %s11, 0
    %p165 = por %p163, %p164
    %p166 = scmp.ne.s32.totalorder %s155, %s158
    %p167 = scmp.eq.s32.totalorder %s16, 1
    %p168 = por %p166, %p167
    %p169 = scmp.ne.s32.totalorder %s158, %s159
    %p170 = scmp.eq.s32.totalorder %s16, 0
    %p171 = por %p169, %p170
    %p172 = scmp.ne.s32.totalorder %s158, %s159
    %p173 = scmp.eq.s32.totalorder %s17, 1
    %p174 = por %p172, %p173
    %p176 = scmp.ne.s32.totalorder %s159, %s175
    %p177 = scmp.eq.s32.totalorder %s17, 0
    %p178 = por %p176, %p177
    %p179 = scmp.le.s32.totalorder 1, %s11
    %p180 = scmp.lt.s32.totalorder %s11, 3
    %p181 = pnand %p179, %p180
    %p182 = pneg %p181
    // Predicated region
    $region9: #{e2e_forward.41} parent=5 // pred_check
      _
    $region10: #{e2e_forward.41} parent=5 // pred_check_branch
      %184 = sbr.rel (%p181) target = $region12
    $region11: #{e2e_forward.41} parent=5 // pred_region
      %s185 = ssub.s32 %s11, 1
      // Predicated region
      $region13: #{e2e_forward.41} parent=11 // pred_check
        %p186 = pneg %p70
      $region14: #{e2e_forward.41} parent=11 // pred_check_branch
        %188 = sbr.rel (%p186) target = $region16
      $region15: #{e2e_forward.41} parent=11 // pred_region
        _
      $region16: #{e2e_forward.41} parent=11 // pred_fallthru
        _
      // Predicated region
      $region17: #{e2e_forward.41} parent=11 // pred_check
        %p189 = pneg %p91
      $region18: #{e2e_forward.41} parent=11 // pred_check_branch
        %191 = sbr.rel (%p189) target = $region20
      $region19: #{e2e_forward.41} parent=11 // pred_region
        _
      $region20: #{e2e_forward.41} parent=11 // pred_fallthru
        _
      // Predicated region
      $region21: #{e2e_forward.41} parent=11 // pred_check
        %p192 = pneg %p117
      $region22: #{e2e_forward.41} parent=11 // pred_check_branch
        %194 = sbr.rel (%p192) target = $region24
      $region23: #{e2e_forward.41} parent=11 // pred_region
        %p195 = scmp.lt.s32.totalorder %s21, 0
        %s196 = scalar_select %p195, %s21, 0
        %s197 = smul.addr %s196, 4
        %s198 = scalar_lea.vmem %s3, %s197
      $region24: #{e2e_forward.41} parent=11 // pred_fallthru
        _
      // Predicated region
      $region25: #{e2e_forward.41} parent=11 // pred_check
        %p199 = pneg %p143
      $region26: #{e2e_forward.41} parent=11 // pred_check_branch
        %201 = sbr.rel (%p199) target = $region28
      $region27: #{e2e_forward.41} parent=11 // pred_region
        %p202 = scmp.lt.s32.totalorder %s21, 0
        %s203 = scalar_select %p202, %s21, 0
        %s204 = scalar_lea.vmem %s4, %s203
      $region28: #{e2e_forward.41} parent=11 // pred_fallthru
        _
    $region12: #{e2e_forward.41} parent=5 // pred_fallthru
      _
    %p205 = scmp.lt.s32.totalorder %s11, 2
    // Predicated region
    $region29: #{e2e_forward.41} parent=5 // pred_check
      %p206 = pneg %p205
    $region30: #{e2e_forward.41} parent=5 // pred_check_branch
      %208 = sbr.rel (%p206) target = $region32
    $region31: #{e2e_forward.41} parent=5 // pred_region
      // Predicated region
      $region33: #{e2e_forward.41} parent=31 // pred_check
        %p209 = pneg %p43
      $region34: #{e2e_forward.41} parent=31 // pred_check_branch
        %211 = sbr.rel (%p209) target = $region36
      $region35: #{e2e_forward.41} parent=31 // pred_region
        %p212 = scmp.lt.s32.totalorder %s18, 1
        %s213 = scalar_select %p212, %s18, 1
        %s214 = smul.addr %s213, 8
        %s215 = scalar_lea.vmem %s0, %s214
      $region36: #{e2e_forward.41} parent=31 // pred_fallthru
        _
    $region32: #{e2e_forward.41} parent=5 // pred_fallthru
      _
    %p216 = scmp.le.s32.totalorder 1, %s11
    %p217 = scmp.lt.s32.totalorder %s11, 3
    %p218 = pnand %p216, %p217
    %p219 = pneg %p218
    // Predicated region
    $region37: #{e2e_forward.41} parent=5 // pred_check
      _
    $region38: #{e2e_forward.41} parent=5 // pred_check_branch
      %221 = sbr.rel (%p218) target = $region40
    $region39: #{e2e_forward.41} parent=5 // pred_region
      %s222 = ssub.s32 %s11, 1
      %p223 = scmp.lt.s32.totalorder %s20, 1
      %s224 = scalar_select %p223, %s20, 1
      %s225 = smul.addr %s224, 8
      %s226 = scalar_lea.vmem %s0, %s225
      %p227 = pneg %p49
      %p228 = pneg %p46
      %p229 = pneg %p70
      %p230 = pneg %p67
      %p231 = pneg %p91
      %p232 = pneg %p88
      %p233 = scmp.lt.s32.totalorder %s21, 0
      %s234 = scalar_select %p233, %s21, 0
      %s235 = smul.addr %s234, 4
      %s236 = scalar_lea.vmem %s3, %s235
      %p237 = pneg %p117
      %p238 = pneg %p114
      %p239 = scmp.lt.s32.totalorder %s21, 0
      %s240 = scalar_select %p239, %s21, 0
      %s241 = scalar_lea.vmem %s4, %s240
      %p242 = pneg %p143
      %p243 = pneg %p140
      %p244 = pneg %p171
      %p245 = pneg %p168
      %p246 = scmp.lt.s32.totalorder %s20, 1
      %s247 = scalar_select %p246, %s20, 1
      %p248 = scmp.lt.s32.totalorder %s21, 0
      %s249 = scalar_select %p248, %s21, 0
      %s250 = sadd.s32 %s249, %s247
      %s251 = smul.addr %s250, 8
      %s252 = scalar_lea.vmem %s5, %s251
      %p253 = scmp.lt.s32.totalorder %s20, 1
      %s254 = scalar_select %p253, %s20, 1
      %s255 = smul.addr %s254, 8
      %s256 = scalar_lea.vmem %s0, %s255
      %p257 = scmp.lt.s32.totalorder %s21, 0
      %s258 = scalar_select %p257, %s21, 0
      %s259 = smul.addr %s258, 4
      %s260 = scalar_lea.vmem %s3, %s259
      %p261 = scmp.lt.s32.totalorder %s21, 0
      %s262 = scalar_select %p261, %s21, 0
      %s263 = scalar_lea.vmem %s4, %s262
      %p264 = scmp.lt.s32.totalorder %s20, 1
      %s265 = scalar_select %p264, %s20, 1
      %p266 = scmp.lt.s32.totalorder %s21, 0
      %s267 = scalar_select %p266, %s21, 0
      %s268 = sadd.s32 %s267, %s265
      %s269 = smul.addr %s268, 8
      %s270 = scalar_lea.vmem %s5, %s269
      %v272 = vld [vmem:[%s256] sm:$0xff]
      %vm273 = vcmask 261120
      %v274 = vsel %vm273, %v272, 0.0
      %275 = vadd.xlane.f32.xlu0 %v274
      %v276 = vpop.xlane.xlu0 %275
      %v277 = vrcp.pop 32.0
      %v278 = vmul.f32 %v276, %v277
      %v279 = vsub.f32 %v272, %v278
      %v280 = vmul.f32 %v279, %v279
      %v281 = vsel %vm273, %v280, 0.0
      %282 = vadd.xlane.f32.xlu0 %v281
      %v283 = vpop.xlane.xlu0 %282
      %v284 = vmul.f32 %v283, %v277
      %v285 = vadd.f32 %v284, 1e-12
      %v286 = vrsqrt.pop %v285
      %v287 = vmul.f32 %v279, %v286
      %v288 = vld [vmem:[%s1] sm:$0x1]
      %v290 = vlaneseq
      %v291 = vshrl.u32 %v290, 7
      %v292 = vsub.s32 0, %v291
      %v293 = vrot.slane %v288, %v292
      %v295 = vmul.f32 %v287, %v293
      %v296 = vld [vmem:[%s2] sm:$0x1]
      %v298 = vlaneseq
      %v299 = vshrl.u32 %v298, 7
      %v300 = vsub.s32 0, %v299
      %v301 = vrot.slane %v296, %v300
      %v303 = vadd.f32 %v295, %v301
      %v304 = vpack.c.bf16 %v303, %v303
      %v305 = vld [vmem:[%s260] sm:$0xf]
      %v306 = vld [vmem:[%s260 + $0x4] sm:$0xf]
      %v307 = vld [vmem:[%s260 + $0x8] sm:$0xf]
      %v308 = vld [vmem:[%s260 + $0xc] sm:$0xf]
      %v309 = vld [vmem:[%s263] sm:$0x1]
      %v311 = vlaneseq
      %v312 = vshrl.u32 %v311, 7
      %v313 = vsub.s32 0, %v312
      %v314 = vrot.slane %v309, %v313
      %v320 = vunpack.c.l.b16 %v305
      %v321 = vunpack.c.l.b16 %v306
      %v322 = vunpack.c.l.b16 %v307
      %v323 = vunpack.c.l.b16 %v308
      %v324 = vpack.c.b16 %v321, %v320
      %v325 = vpack.c.b16 %v323, %v322
      %v329 = vsel %vm273, %v304, 0
      %331 = vmatprep.subr.bf16.mxu0 0
      %332 = vmatpush1.bf16.msra.mxu0 %v324
      %333 = vmatprep.subr.bf16.mxu0 0
      %334 = vmatpush1.bf16.msra.mxu0 %v325
      %335 = vmatprep.subr.bf16.mxu0 0
      %336 = vmatpush1.bf16.msra.mxu0 0
      %337 = vmatprep.subr.bf16.mxu0 0
      %338 = vmatpush1.bf16.msra.mxu0 0
      %339 = vmatprep.subr.bf16.mxu0 0
      %340 = vmatpush1.bf16.msra.mxu0 0
      %341 = vmatprep.subr.bf16.mxu0 0
      %342 = vmatpush1.bf16.msra.mxu0 0
      %343 = vmatprep.subr.bf16.mxu0 0
      %344 = vmatpush1.bf16.msra.mxu0 0
      %345 = vmatprep.subr.bf16.mxu0 0
      %346 = vmatpush1.bf16.msra.mxu0 0
      %347 = vmatprep.subr.bf16.mxu0 0
      %348 = vmatpush1.bf16.msra.mxu0 0
      %349 = vmatprep.subr.bf16.mxu0 0
      %350 = vmatpush1.bf16.msra.mxu0 0
      %351 = vmatprep.subr.bf16.mxu0 0
      %352 = vmatpush1.bf16.msra.mxu0 0
      %353 = vmatprep.subr.bf16.mxu0 0
      %354 = vmatpush1.bf16.msra.mxu0 0
      %355 = vmatprep.subr.bf16.mxu0 0
      %356 = vmatpush1.bf16.msra.mxu0 0
      %357 = vmatprep.subr.bf16.mxu0 0
      %358 = vmatpush1.bf16.msra.mxu0 0
      %359 = vmatprep.subr.bf16.mxu0 0
      %360 = vmatpush1.bf16.msra.mxu0 0
      %361 = vmatprep.subr.bf16.mxu0 0
      %362 = vmatpush1.bf16.msra.mxu0 0
      %363 = vmatprep.mubr.bf16.mxu0 0
      %364 = vmatmul.mubr.bf16.gmra.mrb[0].mxu0 %v329
      %v365 = vpop.f32.mrb[0].mxu0
      %v366 = vadd.f32 %v314, %v365
      %v367 = vpop.f32.mrb[0].mxu0
      %v368 = vpop.f32.mrb[0].mxu0
      %v369 = vpop.f32.mrb[0].mxu0
      %370 = vdwg.mxu0
      %371 = vst.msk [vmem:[%s270] sm:$0xff] %vm273, %v366
      %p372 = scmp.lt.s32.totalorder %s20, 1
      %s373 = scalar_select %p372, %s20, 1
      %p374 = scmp.lt.s32.totalorder %s21, 0
      %s375 = scalar_select %p374, %s21, 0
      %s376 = sadd.s32 %s375, %s373
      %s377 = smul.addr %s376, 8
      %s378 = scalar_lea.vmem %s5, %s377
      // Predicated region
      $region41: #{e2e_forward.41} parent=39 // pred_check
        %p379 = pneg %p168
      $region42: #{e2e_forward.41} parent=39 // pred_check_branch
        %381 = sbr.rel (%p379) target = $region44
      $region43: #{e2e_forward.41} parent=39 // pred_region
        _
      $region44: #{e2e_forward.41} parent=39 // pred_fallthru
        _
    $region40: #{e2e_forward.41} parent=5 // pred_fallthru
      _
    %p382 = scmp.le.s32.totalorder 2, %s11
    // Predicated region
    $region45: #{e2e_forward.41} parent=5 // pred_check
      %p383 = pneg %p382
    $region46: #{e2e_forward.41} parent=5 // pred_check_branch
      %385 = sbr.rel (%p383) target = $region48
    $region47: #{e2e_forward.41} parent=5 // pred_region
      %s386 = ssub.s32 %s11, 2
      // Predicated region
      $region49: #{e2e_forward.41} parent=47 // pred_check
        %p387 = pneg %p174
      $region50: #{e2e_forward.41} parent=47 // pred_check_branch
        %389 = sbr.rel (%p387) target = $region52
      $region51: #{e2e_forward.41} parent=47 // pred_region
        %p390 = scmp.lt.s32.totalorder %s22, 1
        %s391 = scalar_select %p390, %s22, 1
        %p392 = scmp.lt.s32.totalorder %s23, 0
        %s393 = scalar_select %p392, %s23, 0
        %s394 = sadd.s32 %s393, %s391
        %s395 = smul.addr %s394, 8
        %s396 = scalar_lea.vmem %s5, %s395
      $region52: #{e2e_forward.41} parent=47 // pred_fallthru
        _
    $region48: #{e2e_forward.41} parent=5 // pred_fallthru
      _
  $region6: #{e2e_forward.41} parent=0 // loop_footer
    %s15 = sadd.s32 1, %s11
  $region7: #{e2e_forward.41} parent=0 // loop_footer_branch
    %10 = sbr.rel target = $region3
  $region8: #{e2e_forward.41} parent=0 // loop_exit
    _

// kernel: e2e_forward.39
$region0: #{e2e_forward.39}
  #allocation0 [shape = 'u32[]', space=smem, size = 0x4, offset = 0x4, fixed_abs, tag = 'smem constant byte address 0x4 - core index']
  #allocation1 [shape = 'u32[144,128]{1,0:T(1,128)}', space=vmem, size = 0x12000, scoped, tag = 'internal scratch']
  #allocation2 [shape = 's32[1]{0}', space=sflag, size = 0x4, scoped, tag = 'scoped memory for e2e_forward.39']
  #allocation3 [shape = 'u8[512]{0}', space=smem, size = 0x200, scoped, tag = 'prefetched SMEM operand 0']
  %s0 = inlined_call_operand.vmem [shape: s32[2], index: 0, kind: input, shape index: {}]
  %s1 = inlined_call_operand.vmem [shape: f32[2,7,96], index: 1, kind: input, shape index: {}]
  %s2 = inlined_call_operand.vmem [shape: f32[2,7,32], index: 2, kind: output, shape index: {}]
  %s3 = sld [smem:[#allocation0]]
  $region37: #{e2e_forward.39} parent=0
    _
  %s5 = ssub.s32 1, %s3
  %s6 = scalar_select 0, %s5, %s3
  %s7 = sshll.u32 %s0, 4
  %s8 = int_to_ptr.vmem [resolvable:$true] %s7
  %10 = dma.vmem_to_smem %s8, 16, [#allocation3], [#allocation2]
  %11 = dma.done [#allocation2], 16
  %12 = sfence
  loop: start=0, step=1, limit=4
  $region2: #{e2e_forward.39} parent=0 // loop_pre_header
    _
  $region3: #{e2e_forward.39} parent=0 // loop_header
    %s14 = sphi 0, %s18
    %p15 = scmp.ge.s32.totalorder %s14, 4
    %s24 = sphi 0, %s26
    %s27 = sphi 0, %s24
    %s28 = sphi 0, %s27
    %s44 = sphi 0, %s28
    %s50 = sphi 0, %s52
    %s53 = sphi 0, %s50
    %s54 = sphi 0, %s53
    %s70 = sphi 0, %s54
  $region4: #{e2e_forward.39} parent=0 // loop_header_branch
    %17 = sbr.rel (%p15) target = $region8
  $region5: #{e2e_forward.39} parent=0 // loop_body
    %s19 = ssub.s32 %s14, 1
    %s20 = ssub.s32 %s14, 2
    %s21 = sadd.s32 %s14, 1
    %s22 = ssub.s32 %s14, %s21
    %p23 = scmp.eq.s32.totalorder %s22, 0
    %s25 = sadd.s32 %s24, 1
    %s26 = scalar_select %p23, %s24, %s25
    %p29 = pneg %p23
    %p30 = scmp.eq.s32.totalorder %s14, 1
    %p31 = por %p29, %p30
    %p32 = scmp.ne.s32.totalorder %s24, %s27
    %p33 = scmp.eq.s32.totalorder %s14, 0
    %p34 = por %p32, %p33
    %p35 = scmp.ne.s32.totalorder %s24, %s27
    %p36 = scmp.eq.s32.totalorder %s19, 1
    %p37 = por %p35, %p36
    %p38 = scmp.ne.s32.totalorder %s27, %s28
    %p39 = scmp.eq.s32.totalorder %s19, 0
    %p40 = por %p38, %p39
    %p41 = scmp.ne.s32.totalorder %s27, %s28
    %p42 = scmp.eq.s32.totalorder %s20, 1
    %p43 = por %p41, %p42
    %p45 = scmp.ne.s32.totalorder %s28, %s44
    %p46 = scmp.eq.s32.totalorder %s20, 0
    %p47 = por %p45, %p46
    %s48 = ssub.s32 %s14, %s21
    %p49 = scmp.eq.s32.totalorder %s48, 0
    %s51 = sadd.s32 %s50, 1
    %s52 = scalar_select %p49, %s50, %s51
    %p55 = pneg %p49
    %p56 = scmp.eq.s32.totalorder %s14, 1
    %p57 = por %p55, %p56
    %p58 = scmp.ne.s32.totalorder %s50, %s53
    %p59 = scmp.eq.s32.totalorder %s14, 0
    %p60 = por %p58, %p59
    %p61 = scmp.ne.s32.totalorder %s50, %s53
    %p62 = scmp.eq.s32.totalorder %s19, 1
    %p63 = por %p61, %p62
    %p64 = scmp.ne.s32.totalorder %s53, %s54
    %p65 = scmp.eq.s32.totalorder %s19, 0
    %p66 = por %p64, %p65
    %p67 = scmp.ne.s32.totalorder %s53, %s54
    %p68 = scmp.eq.s32.totalorder %s20, 1
    %p69 = por %p67, %p68
    %p71 = scmp.ne.s32.totalorder %s54, %s70
    %p72 = scmp.eq.s32.totalorder %s20, 0
    %p73 = por %p71, %p72
    %p74 = scmp.le.s32.totalorder 1, %s14
    %p75 = scmp.lt.s32.totalorder %s14, 3
    %p76 = pnand %p74, %p75
    %p77 = pneg %p76
    // Predicated region
    $region9: #{e2e_forward.39} parent=5 // pred_check
      _
    $region10: #{e2e_forward.39} parent=5 // pred_check_branch
      %79 = sbr.rel (%p76) target = $region12
    $region11: #{e2e_forward.39} parent=5 // pred_region
      %s80 = ssub.s32 %s14, 1
    $region12: #{e2e_forward.39} parent=5 // pred_fallthru
      _
    %p81 = scmp.lt.s32.totalorder %s14, 2
    // Predicated region
    $region13: #{e2e_forward.39} parent=5 // pred_check
      %p82 = pneg %p81
    $region14: #{e2e_forward.39} parent=5 // pred_check_branch
      %84 = sbr.rel (%p82) target = $region16
    $region15: #{e2e_forward.39} parent=5 // pred_region
      // Predicated region
      $region17: #{e2e_forward.39} parent=15 // pred_check
        %p85 = pneg %p34
      $region18: #{e2e_forward.39} parent=15 // pred_check_branch
        %87 = sbr.rel (%p85) target = $region20
      $region19: #{e2e_forward.39} parent=15 // pred_region
        %p88 = scmp.lt.s32.totalorder %s14, 1
        %s89 = scalar_select %p88, %s14, 1
        %s90 = smul.addr %s89, 8
        %s91 = scalar_lea.vmem %s1, %s90
      $region20: #{e2e_forward.39} parent=15 // pred_fallthru
        _
    $region16: #{e2e_forward.39} parent=5 // pred_fallthru
      _
    %p92 = scmp.le.s32.totalorder 1, %s14
    %p93 = scmp.lt.s32.totalorder %s14, 3
    %p94 = pnand %p92, %p93
    %p95 = pneg %p94
    // Predicated region
    $region21: #{e2e_forward.39} parent=5 // pred_check
      _
    $region22: #{e2e_forward.39} parent=5 // pred_check_branch
      %97 = sbr.rel (%p94) target = $region24
    $region23: #{e2e_forward.39} parent=5 // pred_region
      %s98 = ssub.s32 %s14, 1
      %p99 = scmp.lt.s32.totalorder %s19, 1
      %s100 = scalar_select %p99, %s19, 1
      %s101 = smul.addr %s100, 8
      %s102 = scalar_lea.vmem %s1, %s101
      %p103 = pneg %p40
      %p104 = pneg %p37
      %p105 = pneg %p66
      %p106 = pneg %p63
      %p107 = scmp.lt.s32.totalorder %s19, 1
      %s108 = scalar_select %p107, %s19, 1
      %s109 = smul.addr %s108, 8
      %s110 = scalar_lea.vmem %s2, %s109
      %p111 = scmp.lt.s32.totalorder %s19, 1
      %s112 = scalar_select %p111, %s19, 1
      %s113 = smul.addr %s112, 8
      %s114 = scalar_lea.vmem %s1, %s113
      %p115 = scmp.lt.s32.totalorder %s19, 1
      %s116 = scalar_select %p115, %s19, 1
      %s117 = smul.addr %s116, 8
      %s118 = scalar_lea.vmem %s2, %s117
      %s120 = sld [smem:[#allocation3 + %s19]]
      %v121 = vlaneseq
      %v122 = vand.u32 %v121, 127
      %v123 = vstv %s120
      %vm124 = vcmp.lt.s32.totalorder %v122, %v123
      %v125 = vlaneseq
      %v126 = vshrl.u32 %v125, 7
      %vm127 = vcmp.le.s32.totalorder %v122, %v126
      %vm128 = vmand %vm124, %vm127
      %v129 = vsel %vm128, 0.0, -1e+30
      %v130 = vsel %vm128, 1, 0
      %v131 = vcvt.s32.f32 %v130
      %v132 = vld [vmem:[%s114] sm:$0x7f]
      %v133 = vmul.f32 %v132, 0.35355338
      %v134 = vpack.c.bf16 %v133, %v133
      %v135 = vpack.c.bf16 %v132, %v132
      %137 = vrot.lane.b32.xlu0 %v135, 96
      %v138 = vpop.permute.xlu0 %137
      %vm139 = vcmask 64512
      %v141 = vsel %vm139, %v134, 0
      %v144 = vsel %vm139, %v138, 0
      %146 = vmatprep.subr.bf16.mxu0 0
      %147 = vmatpush1.bf16.xpose.msra.mxu0 %v144
      %148 = vmatprep.subr.bf16.mxu0 0
      %149 = vmatpush1.bf16.xpose.msra.mxu0 0
      %150 = vmatprep.subr.bf16.mxu0 0
      %151 = vmatpush1.bf16.xpose.msra.mxu0 0
      %152 = vmatprep.subr.bf16.mxu0 0
      %153 = vmatpush1.bf16.xpose.msra.mxu0 0
      %154 = vmatprep.subr.bf16.mxu0 0
      %155 = vmatpush1.bf16.xpose.msra.mxu0 0
      %156 = vmatprep.subr.bf16.mxu0 0
      %157 = vmatpush1.bf16.xpose.msra.mxu0 0
      %158 = vmatprep.subr.bf16.mxu0 0
      %159 = vmatpush1.bf16.xpose.msra.mxu0 0
      %160 = vmatprep.subr.bf16.mxu0 0
      %161 = vmatpush1.bf16.xpose.msra.mxu0 0
      %162 = vmatprep.subr.bf16.mxu0 0
      %163 = vmatpush1.bf16.xpose.msra.mxu0 0
      %164 = vmatprep.subr.bf16.mxu0 0
      %165 = vmatpush1.bf16.xpose.msra.mxu0 0
      %166 = vmatprep.subr.bf16.mxu0 0
      %167 = vmatpush1.bf16.xpose.msra.mxu0 0
      %168 = vmatprep.subr.bf16.mxu0 0
      %169 = vmatpush1.bf16.xpose.msra.mxu0 0
      %170 = vmatprep.subr.bf16.mxu0 0
      %171 = vmatpush1.bf16.xpose.msra.mxu0 0
      %172 = vmatprep.subr.bf16.mxu0 0
      %173 = vmatpush1.bf16.xpose.msra.mxu0 0
      %174 = vmatprep.subr.bf16.mxu0 0
      %175 = vmatpush1.bf16.xpose.msra.mxu0 0
      %176 = vmatprep.subr.bf16.mxu0 0
      %177 = vmatpush1.bf16.xpose.msra.mxu0 0
      %178 = vmatprep.mubr.bf16.mxu0 0
      %179 = vmatmul.mubr.bf16.gmra.mrb[0].mxu0 %v141
      %v180 = vpop.f32.mrb[0].mxu0
      %v181 = vadd.f32 %v129, %v180
      %v182 = vpop.f32.mrb[0].mxu0
      %v183 = vpop.f32.mrb[0].mxu0
      %v184 = vpop.f32.mrb[0].mxu0
      %185 = vdwg.mxu0
      %vm186 = vcmask 55296
      %v187 = vsel %vm186, %v181, -inf
      %188 = vmax.xlane.f32.xlu0 %v187
      %v189 = vpop.xlane.xlu0 %188
      %v190 = vsub.f32 %v181, %v189
      %v191 = vmul.f32 %v190, 1.442695
      %v192 = vpow.pop %v191
      %v193 = vmul.f32 %v192, %v131
      %v194 = vsel %vm186, %v193, 0.0
      %195 = vadd.xlane.f32.xlu0 %v194
      %v196 = vpop.xlane.xlu0 %195
      %v197 = vmax.f32 %v196, 1e-30
      %v198 = vrcp.pop %v197
      %v199 = vmul.f32 %v193, %v198
      %v200 = vpack.c.bf16 %v199, %v199
      %201 = vrot.lane.b32.xlu0 %v135, 64
      %v202 = vpop.permute.xlu0 %201
      %vm203 = vcmask 56320
      %v205 = vsel %vm203, %v200, 0
      %vm207 = vcmask 1042432
      %vm208 = vcmask 1043456
      %v209 = vsel %vm207, 4294967295, 65535
      %v210 = vsel %vm208, %v209, 0
      %v212 = vand.u32 %v202, %v210
      %214 = vmatprep.subr.bf16.mxu0 0
      %215 = vmatpush1.bf16.msra.mxu0 %v212
      %216 = vmatprep.subr.bf16.mxu0 0
      %217 = vmatpush1.bf16.msra.mxu0 0
      %218 = vmatprep.subr.bf16.mxu0 0
      %219 = vmatpush1.bf16.msra.mxu0 0
      %220 = vmatprep.subr.bf16.mxu0 0
      %221 = vmatpush1.bf16.msra.mxu0 0
      %222 = vmatprep.subr.bf16.mxu0 0
      %223 = vmatpush1.bf16.msra.mxu0 0
      %224 = vmatprep.subr.bf16.mxu0 0
      %225 = vmatpush1.bf16.msra.mxu0 0
      %226 = vmatprep.subr.bf16.mxu0 0
      %227 = vmatpush1.bf16.msra.mxu0 0
      %228 = vmatprep.subr.bf16.mxu0 0
      %229 = vmatpush1.bf16.msra.mxu0 0
      %230 = vmatprep.subr.bf16.mxu0 0
      %231 = vmatpush1.bf16.msra.mxu0 0
      %232 = vmatprep.subr.bf16.mxu0 0
      %233 = vmatpush1.bf16.msra.mxu0 0
      %234 = vmatprep.subr.bf16.mxu0 0
      %235 = vmatpush1.bf16.msra.mxu0 0
      %236 = vmatprep.subr.bf16.mxu0 0
      %237 = vmatpush1.bf16.msra.mxu0 0
      %238 = vmatprep.subr.bf16.mxu0 0
      %239 = vmatpush1.bf16.msra.mxu0 0
      %240 = vmatprep.subr.bf16.mxu0 0
      %241 = vmatpush1.bf16.msra.mxu0 0
      %242 = vmatprep.subr.bf16.mxu0 0
      %243 = vmatpush1.bf16.msra.mxu0 0
      %244 = vmatprep.subr.bf16.mxu0 0
      %245 = vmatpush1.bf16.msra.mxu0 0
      %246 = vmatprep.mubr.bf16.mxu0 0
      %247 = vmatmul.mubr.bf16.gmra.mrb[0].mxu0 %v205
      %v248 = vpop.f32.mrb[0].mxu0
      %v249 = vadd.f32 0.0, %v248
      %v250 = vpop.f32.mrb[0].mxu0
      %v251 = vpop.f32.mrb[0].mxu0
      %v252 = vpop.f32.mrb[0].mxu0
      %253 = vdwg.mxu0
      %255 = vrot.lane.b32.xlu0 %v134, 120
      %v256 = vpop.permute.xlu0 %255
      %257 = vrot.lane.b32.xlu0 %v135, 88
      %v258 = vpop.permute.xlu0 %257
      %v260 = vsel %vm139, %v256, 0
      %v263 = vsel %vm139, %v258, 0
      %265 = vmatprep.subr.bf16.mxu0 0
      %266 = vmatpush1.bf16.xpose.msra.mxu0 %v263
      %267 = vmatprep.subr.bf16.mxu0 0
      %268 = vmatpush1.bf16.xpose.msra.mxu0 0
      %269 = vmatprep.subr.bf16.mxu0 0
      %270 = vmatpush1.bf16.xpose.msra.mxu0 0
      %271 = vmatprep.subr.bf16.mxu0 0
      %272 = vmatpush1.bf16.xpose.msra.mxu0 0
      %273 = vmatprep.subr.bf16.mxu0 0
      %274 = vmatpush1.bf16.xpose.msra.mxu0 0
      %275 = vmatprep.subr.bf16.mxu0 0
      %276 = vmatpush1.bf16.xpose.msra.mxu0 0
      %277 = vmatprep.subr.bf16.mxu0 0
      %278 = vmatpush1.bf16.xpose.msra.mxu0 0
      %279 = vmatprep.subr.bf16.mxu0 0
      %280 = vmatpush1.bf16.xpose.msra.mxu0 0
      %281 = vmatprep.subr.bf16.mxu0 0
      %282 = vmatpush1.bf16.xpose.msra.mxu0 0
      %283 = vmatprep.subr.bf16.mxu0 0
      %284 = vmatpush1.bf16.xpose.msra.mxu0 0
      %285 = vmatprep.subr.bf16.mxu0 0
      %286 = vmatpush1.bf16.xpose.msra.mxu0 0
      %287 = vmatprep.subr.bf16.mxu0 0
      %288 = vmatpush1.bf16.xpose.msra.mxu0 0
      %289 = vmatprep.subr.bf16.mxu0 0
      %290 = vmatpush1.bf16.xpose.msra.mxu0 0
      %291 = vmatprep.subr.bf16.mxu0 0
      %292 = vmatpush1.bf16.xpose.msra.mxu0 0
      %293 = vmatprep.subr.bf16.mxu0 0
      %294 = vmatpush1.bf16.xpose.msra.mxu0 0
      %295 = vmatprep.subr.bf16.mxu0 0
      %296 = vmatpush1.bf16.xpose.msra.mxu0 0
      %297 = vmatprep.mubr.bf16.mxu0 0
      %298 = vmatmul.mubr.bf16.gmra.mrb[0].mxu0 %v260
      %v299 = vpop.f32.mrb[0].mxu0
      %v300 = vadd.f32 %v129, %v299
      %v301 = vpop.f32.mrb[0].mxu0
      %v302 = vpop.f32.mrb[0].mxu0
      %v303 = vpop.f32.mrb[0].mxu0
      %304 = vdwg.mxu0
      %v305 = vsel %vm186, %v300, -inf
      %306 = vmax.xlane.f32.xlu0 %v305
      %v307 = vpop.xlane.xlu0 %306
      %v308 = vsub.f32 %v300, %v307
      %v309 = vmul.f32 %v308, 1.442695
      %v310 = vpow.pop %v309
      %v311 = vmul.f32 %v310, %v131
      %v312 = vsel %vm186, %v311, 0.0
      %313 = vadd.xlane.f32.xlu0 %v312
      %v314 = vpop.xlane.xlu0 %313
      %v315 = vmax.f32 %v314, 1e-30
      %v316 = vrcp.pop %v315
      %v317 = vmul.f32 %v311, %v316
      %v318 = vpack.c.bf16 %v317, %v317
      %319 = vrot.lane.b32.xlu0 %v135, 56
      %v320 = vpop.permute.xlu0 %319
      %v322 = vsel %vm203, %v318, 0
      %v325 = vand.u32 %v320, %v210
      %327 = vmatprep.subr.bf16.mxu0 0
      %328 = vmatpush1.bf16.msra.mxu0 %v325
      %329 = vmatprep.subr.bf16.mxu0 0
      %330 = vmatpush1.bf16.msra.mxu0 0
      %331 = vmatprep.subr.bf16.mxu0 0
      %332 = vmatpush1.bf16.msra.mxu0 0
      %333 = vmatprep.subr.bf16.mxu0 0
      %334 = vmatpush1.bf16.msra.mxu0 0
      %335 = vmatprep.subr.bf16.mxu0 0
      %336 = vmatpush1.bf16.msra.mxu0 0
      %337 = vmatprep.subr.bf16.mxu0 0
      %338 = vmatpush1.bf16.msra.mxu0 0
      %339 = vmatprep.subr.bf16.mxu0 0
      %340 = vmatpush1.bf16.msra.mxu0 0
      %341 = vmatprep.subr.bf16.mxu0 0
      %342 = vmatpush1.bf16.msra.mxu0 0
      %343 = vmatprep.subr.bf16.mxu0 0
      %344 = vmatpush1.bf16.msra.mxu0 0
      %345 = vmatprep.subr.bf16.mxu0 0
      %346 = vmatpush1.bf16.msra.mxu0 0
      %347 = vmatprep.subr.bf16.mxu0 0
      %348 = vmatpush1.bf16.msra.mxu0 0
      %349 = vmatprep.subr.bf16.mxu0 0
      %350 = vmatpush1.bf16.msra.mxu0 0
      %351 = vmatprep.subr.bf16.mxu0 0
      %352 = vmatpush1.bf16.msra.mxu0 0
      %353 = vmatprep.subr.bf16.mxu0 0
      %354 = vmatpush1.bf16.msra.mxu0 0
      %355 = vmatprep.subr.bf16.mxu0 0
      %356 = vmatpush1.bf16.msra.mxu0 0
      %357 = vmatprep.subr.bf16.mxu0 0
      %358 = vmatpush1.bf16.msra.mxu0 0
      %359 = vmatprep.mubr.bf16.mxu0 0
      %360 = vmatmul.mubr.bf16.gmra.mrb[0].mxu0 %v322
      %v361 = vpop.f32.mrb[0].mxu0
      %v362 = vadd.f32 0.0, %v361
      %v363 = vpop.f32.mrb[0].mxu0
      %v364 = vpop.f32.mrb[0].mxu0
      %v365 = vpop.f32.mrb[0].mxu0
      %366 = vdwg.mxu0
      %367 = vrot.lane.b32.xlu0 %v134, 112
      %v368 = vpop.permute.xlu0 %367
      %369 = vrot.lane.b32.xlu0 %v135, 80
      %v370 = vpop.permute.xlu0 %369
      %v372 = vsel %vm139, %v368, 0
      %v375 = vsel %vm139, %v370, 0
      %377 = vmatprep.subr.bf16.mxu0 0
      %378 = vmatpush1.bf16.xpose.msra.mxu0 %v375
      %379 = vmatprep.subr.bf16.mxu0 0
      %380 = vmatpush1.bf16.xpose.msra.mxu0 0
      %381 = vmatprep.subr.bf16.mxu0 0
      %382 = vmatpush1.bf16.xpose.msra.mxu0 0
      %383 = vmatprep.subr.bf16.mxu0 0
      %384 = vmatpush1.bf16.xpose.msra.mxu0 0
      %385 = vmatprep.subr.bf16.mxu0 0
      %386 = vmatpush1.bf16.xpose.msra.mxu0 0
      %387 = vmatprep.subr.bf16.mxu0 0
      %388 = vmatpush1.bf16.xpose.msra.mxu0 0
      %389 = vmatprep.subr.bf16.mxu0 0
      %390 = vmatpush1.bf16.xpose.msra.mxu0 0
      %391 = vmatprep.subr.bf16.mxu0 0
      %392 = vmatpush1.bf16.xpose.msra.mxu0 0
      %393 = vmatprep.subr.bf16.mxu0 0
      %394 = vmatpush1.bf16.xpose.msra.mxu0 0
      %395 = vmatprep.subr.bf16.mxu0 0
      %396 = vmatpush1.bf16.xpose.msra.mxu0 0
      %397 = vmatprep.subr.bf16.mxu0 0
      %398 = vmatpush1.bf16.xpose.msra.mxu0 0
      %399 = vmatprep.subr.bf16.mxu0 0
      %400 = vmatpush1.bf16.xpose.msra.mxu0 0
      %401 = vmatprep.subr.bf16.mxu0 0
      %402 = vmatpush1.bf16.xpose.msra.mxu0 0
      %403 = vmatprep.subr.bf16.mxu0 0
      %404 = vmatpush1.bf16.xpose.msra.mxu0 0
      %405 = vmatprep.subr.bf16.mxu0 0
      %406 = vmatpush1.bf16.xpose.msra.mxu0 0
      %407 = vmatprep.subr.bf16.mxu0 0
      %408 = vmatpush1.bf16.xpose.msra.mxu0 0
      %409 = vmatprep.mubr.bf16.mxu0 0
      %410 = vmatmul.mubr.bf16.gmra.mrb[0].mxu0 %v372
      %v411 = vpop.f32.mrb[0].mxu0
      %v412 = vadd.f32 %v129, %v411
      %v413 = vpop.f32.mrb[0].mxu0
      %v414 = vpop.f32.mrb[0].mxu0
      %v415 = vpop.f32.mrb[0].mxu0
      %416 = vdwg.mxu0
      %v417 = vsel %vm186, %v412, -inf
      %418 = vmax.xlane.f32.xlu0 %v417
      %v419 = vpop.xlane.xlu0 %418
      %v420 = vsub.f32 %v412, %v419
      %v421 = vmul.f32 %v420, 1.442695
      %v422 = vpow.pop %v421
      %v423 = vmul.f32 %v422, %v131
      %v424 = vsel %vm186, %v423, 0.0
      %425 = vadd.xlane.f32.xlu0 %v424
      %v426 = vpop.xlane.xlu0 %425
      %v427 = vmax.f32 %v426, 1e-30
      %v428 = vrcp.pop %v427
      %v429 = vmul.f32 %v423, %v428
      %v430 = vpack.c.bf16 %v429, %v429
      %431 = vrot.lane.b32.xlu0 %v135, 48
      %v432 = vpop.permute.xlu0 %431
      %v434 = vsel %vm203, %v430, 0
      %v437 = vand.u32 %v432, %v210
      %439 = vmatprep.subr.bf16.mxu0 0
      %440 = vmatpush1.bf16.msra.mxu0 %v437
      %441 = vmatprep.subr.bf16.mxu0 0
      %442 = vmatpush1.bf16.msra.mxu0 0
      %443 = vmatprep.subr.bf16.mxu0 0
      %444 = vmatpush1.bf16.msra.mxu0 0
      %445 = vmatprep.subr.bf16.mxu0 0
      %446 = vmatpush1.bf16.msra.mxu0 0
      %447 = vmatprep.subr.bf16.mxu0 0
      %448 = vmatpush1.bf16.msra.mxu0 0
      %449 = vmatprep.subr.bf16.mxu0 0
      %450 = vmatpush1.bf16.msra.mxu0 0
      %451 = vmatprep.subr.bf16.mxu0 0
      %452 = vmatpush1.bf16.msra.mxu0 0
      %453 = vmatprep.subr.bf16.mxu0 0
      %454 = vmatpush1.bf16.msra.mxu0 0
      %455 = vmatprep.subr.bf16.mxu0 0
      %456 = vmatpush1.bf16.msra.mxu0 0
      %457 = vmatprep.subr.bf16.mxu0 0
      %458 = vmatpush1.bf16.msra.mxu0 0
      %459 = vmatprep.subr.bf16.mxu0 0
      %460 = vmatpush1.bf16.msra.mxu0 0
      %461 = vmatprep.subr.bf16.mxu0 0
      %462 = vmatpush1.bf16.msra.mxu0 0
      %463 = vmatprep.subr.bf16.mxu0 0
      %464 = vmatpush1.bf16.msra.mxu0 0
      %465 = vmatprep.subr.bf16.mxu0 0
      %466 = vmatpush1.bf16.msra.mxu0 0
      %467 = vmatprep.subr.bf16.mxu0 0
      %468 = vmatpush1.bf16.msra.mxu0 0
      %469 = vmatprep.subr.bf16.mxu0 0
      %470 = vmatpush1.bf16.msra.mxu0 0
      %471 = vmatprep.mubr.bf16.mxu0 0
      %472 = vmatmul.mubr.bf16.gmra.mrb[0].mxu0 %v434
      %v473 = vpop.f32.mrb[0].mxu0
      %v474 = vadd.f32 0.0, %v473
      %v475 = vpop.f32.mrb[0].mxu0
      %v476 = vpop.f32.mrb[0].mxu0
      %v477 = vpop.f32.mrb[0].mxu0
      %478 = vdwg.mxu0
      %479 = vrot.lane.b32.xlu0 %v134, 104
      %v480 = vpop.permute.xlu0 %479
      %481 = vrot.lane.b32.xlu0 %v135, 72
      %v482 = vpop.permute.xlu0 %481
      %v484 = vsel %vm139, %v480, 0
      %v487 = vsel %vm139, %v482, 0
      %489 = vmatprep.subr.bf16.mxu0 0
      %490 = vmatpush1.bf16.xpose.msra.mxu0 %v487
      %491 = vmatprep.subr.bf16.mxu0 0
      %492 = vmatpush1.bf16.xpose.msra.mxu0 0
      %493 = vmatprep.subr.bf16.mxu0 0
      %494 = vmatpush1.bf16.xpose.msra.mxu0 0
      %495 = vmatprep.subr.bf16.mxu0 0
      %496 = vmatpush1.bf16.xpose.msra.mxu0 0
      %497 = vmatprep.subr.bf16.mxu0 0
      %498 = vmatpush1.bf16.xpose.msra.mxu0 0
      %499 = vmatprep.subr.bf16.mxu0 0
      %500 = vmatpush1.bf16.xpose.msra.mxu0 0
      %501 = vmatprep.subr.bf16.mxu0 0
      %502 = vmatpush1.bf16.xpose.msra.mxu0 0
      %503 = vmatprep.subr.bf16.mxu0 0
      %504 = vmatpush1.bf16.xpose.msra.mxu0 0
      %505 = vmatprep.subr.bf16.mxu0 0
      %506 = vmatpush1.bf16.xpose.msra.mxu0 0
      %507 = vmatprep.subr.bf16.mxu0 0
      %508 = vmatpush1.bf16.xpose.msra.mxu0 0
      %509 = vmatprep.subr.bf16.mxu0 0
      %510 = vmatpush1.bf16.xpose.msra.mxu0 0
      %511 = vmatprep.subr.bf16.mxu0 0
      %512 = vmatpush1.bf16.xpose.msra.mxu0 0
      %513 = vmatprep.subr.bf16.mxu0 0
      %514 = vmatpush1.bf16.xpose.msra.mxu0 0
      %515 = vmatprep.subr.bf16.mxu0 0
      %516 = vmatpush1.bf16.xpose.msra.mxu0 0
      %517 = vmatprep.subr.bf16.mxu0 0
      %518 = vmatpush1.bf16.xpose.msra.mxu0 0
      %519 = vmatprep.subr.bf16.mxu0 0
      %520 = vmatpush1.bf16.xpose.msra.mxu0 0
      %521 = vmatprep.mubr.bf16.mxu0 0
      %522 = vmatmul.mubr.bf16.gmra.mrb[0].mxu0 %v484
      %v523 = vpop.f32.mrb[0].mxu0
      %v524 = vadd.f32 %v129, %v523
      %v525 = vpop.f32.mrb[0].mxu0
      %v526 = vpop.f32.mrb[0].mxu0
      %v527 = vpop.f32.mrb[0].mxu0
      %528 = vdwg.mxu0
      %v529 = vsel %vm186, %v524, -inf
      %530 = vmax.xlane.f32.xlu0 %v529
      %v531 = vpop.xlane.xlu0 %530
      %v532 = vsub.f32 %v524, %v531
      %v533 = vmul.f32 %v532, 1.442695
      %v534 = vpow.pop %v533
      %v535 = vmul.f32 %v534, %v131
      %v536 = vsel %vm186, %v535, 0.0
      %537 = vadd.xlane.f32.xlu0 %v536
      %v538 = vpop.xlane.xlu0 %537
      %v539 = vmax.f32 %v538, 1e-30
      %v540 = vrcp.pop %v539
      %v541 = vmul.f32 %v535, %v540
      %v542 = vpack.c.bf16 %v541, %v541
      %543 = vrot.lane.b32.xlu0 %v135, 40
      %v544 = vpop.permute.xlu0 %543
      %v546 = vsel %vm203, %v542, 0
      %v549 = vand.u32 %v544, %v210
      %551 = vmatprep.subr.bf16.mxu0 0
      %552 = vmatpush1.bf16.msra.mxu0 %v549
      %553 = vmatprep.subr.bf16.mxu0 0
      %554 = vmatpush1.bf16.msra.mxu0 0
      %555 = vmatprep.subr.bf16.mxu0 0
      %556 = vmatpush1.bf16.msra.mxu0 0
      %557 = vmatprep.subr.bf16.mxu0 0
      %558 = vmatpush1.bf16.msra.mxu0 0
      %559 = vmatprep.subr.bf16.mxu0 0
      %560 = vmatpush1.bf16.msra.mxu0 0
      %561 = vmatprep.subr.bf16.mxu0 0
      %562 = vmatpush1.bf16.msra.mxu0 0
      %563 = vmatprep.subr.bf16.mxu0 0
      %564 = vmatpush1.bf16.msra.mxu0 0
      %565 = vmatprep.subr.bf16.mxu0 0
      %566 = vmatpush1.bf16.msra.mxu0 0
      %567 = vmatprep.subr.bf16.mxu0 0
      %568 = vmatpush1.bf16.msra.mxu0 0
      %569 = vmatprep.subr.bf16.mxu0 0
      %570 = vmatpush1.bf16.msra.mxu0 0
      %571 = vmatprep.subr.bf16.mxu0 0
      %572 = vmatpush1.bf16.msra.mxu0 0
      %573 = vmatprep.subr.bf16.mxu0 0
      %574 = vmatpush1.bf16.msra.mxu0 0
      %575 = vmatprep.subr.bf16.mxu0 0
      %576 = vmatpush1.bf16.msra.mxu0 0
      %577 = vmatprep.subr.bf16.mxu0 0
      %578 = vmatpush1.bf16.msra.mxu0 0
      %579 = vmatprep.subr.bf16.mxu0 0
      %580 = vmatpush1.bf16.msra.mxu0 0
      %581 = vmatprep.subr.bf16.mxu0 0
      %582 = vmatpush1.bf16.msra.mxu0 0
      %583 = vmatprep.mubr.bf16.mxu0 0
      %584 = vmatmul.mubr.bf16.gmra.mrb[0].mxu0 %v546
      %v585 = vpop.f32.mrb[0].mxu0
      %v586 = vadd.f32 0.0, %v585
      %v587 = vpop.f32.mrb[0].mxu0
      %v588 = vpop.f32.mrb[0].mxu0
      %v589 = vpop.f32.mrb[0].mxu0
      %590 = vdwg.mxu0
      %592 = vrot.lane.b32.xlu0 %v362, 8
      %v593 = vpop.permute.xlu0 %592
      %596 = vrot.lane.b32.xlu0 %v474, 16
      %v597 = vpop.permute.xlu0 %596
      %600 = vrot.lane.b32.xlu0 %v586, 24
      %v601 = vpop.permute.xlu0 %600
      %v603 = vsel %vm139, %v249, %v593
      %vm604 = vcmask 130048
      %v605 = vsel %vm604, %v603, %v597
      %vm606 = vcmask 195584
      %v607 = vsel %vm606, %v605, %v601
      %vm608 = vcmask 260096
      %609 = vst.msk [vmem:[%s118] sm:$0x7f] %vm608, %v607
      %p610 = scmp.lt.s32.totalorder %s19, 1
      %s611 = scalar_select %p610, %s19, 1
      %s612 = smul.addr %s611, 8
      %s613 = scalar_lea.vmem %s2, %s612
      // Predicated region
      $region25: #{e2e_forward.39} parent=23 // pred_check
        %p614 = pneg %p63
      $region26: #{e2e_forward.39} parent=23 // pred_check_branch
        %616 = sbr.rel (%p614) target = $region28
      $region27: #{e2e_forward.39} parent=23 // pred_region
        _
      $region28: #{e2e_forward.39} parent=23 // pred_fallthru
        _
    $region24: #{e2e_forward.39} parent=5 // pred_fallthru
      _
    %p617 = scmp.le.s32.totalorder 2, %s14
    // Predicated region
    $region29: #{e2e_forward.39} parent=5 // pred_check
      %p618 = pneg %p617
    $region30: #{e2e_forward.39} parent=5 // pred_check_branch
      %620 = sbr.rel (%p618) target = $region32
    $region31: #{e2e_forward.39} parent=5 // pred_region
      %s621 = ssub.s32 %s14, 2
      // Predicated region
      $region33: #{e2e_forward.39} parent=31 // pred_check
        %p622 = pneg %p69
      $region34: #{e2e_forward.39} parent=31 // pred_check_branch
        %624 = sbr.rel (%p622) target = $region36
      $region35: #{e2e_forward.39} parent=31 // pred_region
        %p625 = scmp.lt.s32.totalorder %s20, 1
        %s626 = scalar_select %p625, %s20, 1
        %s627 = smul.addr %s626, 8
        %s628 = scalar_lea.vmem %s2, %s627
      $region36: #{e2e_forward.39} parent=31 // pred_fallthru
        _
    $region32: #{e2e_forward.39} parent=5 // pred_fallthru
      _
  $region6: #{e2e_forward.39} parent=0 // loop_footer
    %s18 = sadd.s32 1, %s14
  $region7: #{e2e_forward.39} parent=0 // loop_footer_branch
    %13 = sbr.rel target = $region3
  $region8: #{e2e_forward.39} parent=0 // loop_exit
    _

// kernel: e2e_forward.29
$region0: #{e2e_forward.29}
  #allocation0 [shape = 'u32[]', space=smem, size = 0x4, offset = 0x4, fixed_abs, tag = 'smem constant byte address 0x4 - core index']
  #allocation1 [shape = 'u32[144,128]{1,0:T(1,128)}', space=vmem, size = 0x12000, scoped, tag = 'internal scratch']
  %s0 = inlined_call_operand.vmem [shape: f32[32,32], index: 0, kind: input, shape index: {}]
  %s1 = inlined_call_operand.vmem [shape: f32[1,32], index: 1, kind: input, shape index: {}]
  %s2 = inlined_call_operand.vmem [shape: f32[1,32], index: 2, kind: input, shape index: {}]
  %s3 = inlined_call_operand.vmem [shape: bf16[32,96], index: 3, kind: input, shape index: {}]
  %s4 = inlined_call_operand.vmem [shape: f32[1,96], index: 4, kind: input, shape index: {}]
  %s5 = inlined_call_operand.vmem [shape: f32[32,96], index: 5, kind: output, shape index: {}]
  %s6 = sld [smem:[#allocation0]]
  $region53: #{e2e_forward.29} parent=0
    _
  %s8 = ssub.s32 1, %s6
  %s9 = scalar_select 0, %s8, %s6
  loop: start=0, step=1, limit=4
  $region2: #{e2e_forward.29} parent=0 // loop_pre_header
    _
  $region3: #{e2e_forward.29} parent=0 // loop_header
    %s11 = sphi 0, %s15
    %p12 = scmp.ge.s32.totalorder %s11, 4
    %s18 = sphi 0, %s30
    %s19 = sphi 0, %s26
    %s20 = sphi 0, %s18
    %s21 = sphi 0, %s19
    %s22 = sphi 0, %s20
    %s23 = sphi 0, %s21
    %s33 = sphi 0, %s35
    %s36 = sphi 0, %s33
    %s37 = sphi 0, %s36
    %s53 = sphi 0, %s37
    %s57 = sphi 0, %s57
    %s59 = sphi 0, %s57
    %s60 = sphi 0, %s59
    %s74 = sphi 0, %s60
    %s78 = sphi 0, %s78
    %s80 = sphi 0, %s78
    %s81 = sphi 0, %s80
    %s95 = sphi 0, %s81
    %s101 = sphi 0, %s103
    %s104 = sphi 0, %s101
    %s105 = sphi 0, %s104
    %s121 = sphi 0, %s105
    %s127 = sphi 0, %s129
    %s130 = sphi 0, %s127
    %s131 = sphi 0, %s130
    %s147 = sphi 0, %s131
    %s155 = sphi 0, %s157
    %s158 = sphi 0, %s155
    %s159 = sphi 0, %s158
    %s175 = sphi 0, %s159
  $region4: #{e2e_forward.29} parent=0 // loop_header_branch
    %14 = sbr.rel (%p12) target = $region8
  $region5: #{e2e_forward.29} parent=0 // loop_body
    %s16 = ssub.s32 %s11, 1
    %s17 = ssub.s32 %s11, 2
    %s24 = sadd.s32 1, %s19
    %p25 = scmp.ge.s32.totalorder %s24, 1
    %s26 = scalar_select %p25, 0, %s24
    %s27 = sadd.s32 1, %s18
    %s28 = scalar_select %p25, %s27, %s18
    %p29 = scmp.ge.s32.totalorder %s28, 2
    %s30 = scalar_select %p29, 0, %s28
    %s31 = ssub.s32 %s18, %s30
    %p32 = scmp.eq.s32.totalorder %s31, 0
    %s34 = sadd.s32 %s33, 1
    %s35 = scalar_select %p32, %s33, %s34
    %p38 = pneg %p32
    %p39 = scmp.eq.s32.totalorder %s11, 1
    %p40 = por %p38, %p39
    %p41 = scmp.ne.s32.totalorder %s33, %s36
    %p42 = scmp.eq.s32.totalorder %s11, 0
    %p43 = por %p41, %p42
    %p44 = scmp.ne.s32.totalorder %s33, %s36
    %p45 = scmp.eq.s32.totalorder %s16, 1
    %p46 = por %p44, %p45
    %p47 = scmp.ne.s32.totalorder %s36, %s37
    %p48 = scmp.eq.s32.totalorder %s16, 0
    %p49 = por %p47, %p48
    %p50 = scmp.ne.s32.totalorder %s36, %s37
    %p51 = scmp.eq.s32.totalorder %s17, 1
    %p52 = por %p50, %p51
    %p54 = scmp.ne.s32.totalorder %s37, %s53
    %p55 = scmp.eq.s32.totalorder %s17, 0
    %p56 = por %p54, %p55
    %s58 = sadd.s32 %s57, 1
    %p61 = scmp.eq.s32.totalorder %s11, 1
    %p62 = scmp.ne.s32.totalorder %s57, %s59
    %p63 = scmp.eq.s32.totalorder %s11, 0
    %p64 = por %p62, %p63
    %p65 = scmp.ne.s32.totalorder %s57, %s59
    %p66 = scmp.eq.s32.totalorder %s16, 1
    %p67 = por %p65, %p66
    %p68 = scmp.ne.s32.totalorder %s59, %s60
    %p69 = scmp.eq.s32.totalorder %s16, 0
    %p70 = por %p68, %p69
    %p71 = scmp.ne.s32.totalorder %s59, %s60
    %p72 = scmp.eq.s32.totalorder %s17, 1
    %p73 = por %p71, %p72
    %p75 = scmp.ne.s32.totalorder %s60, %s74
    %p76 = scmp.eq.s32.totalorder %s17, 0
    %p77 = por %p75, %p76
    %s79 = sadd.s32 %s78, 1
    %p82 = scmp.eq.s32.totalorder %s11, 1
    %p83 = scmp.ne.s32.totalorder %s78, %s80
    %p84 = scmp.eq.s32.totalorder %s11, 0
    %p85 = por %p83, %p84
    %p86 = scmp.ne.s32.totalorder %s78, %s80
    %p87 = scmp.eq.s32.totalorder %s16, 1
    %p88 = por %p86, %p87
    %p89 = scmp.ne.s32.totalorder %s80, %s81
    %p90 = scmp.eq.s32.totalorder %s16, 0
    %p91 = por %p89, %p90
    %p92 = scmp.ne.s32.totalorder %s80, %s81
    %p93 = scmp.eq.s32.totalorder %s17, 1
    %p94 = por %p92, %p93
    %p96 = scmp.ne.s32.totalorder %s81, %s95
    %p97 = scmp.eq.s32.totalorder %s17, 0
    %p98 = por %p96, %p97
    %s99 = ssub.s32 %s19, %s26
    %p100 = scmp.eq.s32.totalorder %s99, 0
    %s102 = sadd.s32 %s101, 1
    %s103 = scalar_select %p100, %s101, %s102
    %p106 = pneg %p100
    %p107 = scmp.eq.s32.totalorder %s11, 1
    %p108 = por %p106, %p107
    %p109 = scmp.ne.s32.totalorder %s101, %s104
    %p110 = scmp.eq.s32.totalorder %s11, 0
    %p111 = por %p109, %p110
    %p112 = scmp.ne.s32.totalorder %s101, %s104
    %p113 = scmp.eq.s32.totalorder %s16, 1
    %p114 = por %p112, %p113
    %p115 = scmp.ne.s32.totalorder %s104, %s105
    %p116 = scmp.eq.s32.totalorder %s16, 0
    %p117 = por %p115, %p116
    %p118 = scmp.ne.s32.totalorder %s104, %s105
    %p119 = scmp.eq.s32.totalorder %s17, 1
    %p120 = por %p118, %p119
    %p122 = scmp.ne.s32.totalorder %s105, %s121
    %p123 = scmp.eq.s32.totalorder %s17, 0
    %p124 = por %p122, %p123
    %s125 = ssub.s32 %s19, %s26
    %p126 = scmp.eq.s32.totalorder %s125, 0
    %s128 = sadd.s32 %s127, 1
    %s129 = scalar_select %p126, %s127, %s128
    %p132 = pneg %p126
    %p133 = scmp.eq.s32.totalorder %s11, 1
    %p134 = por %p132, %p133
    %p135 = scmp.ne.s32.totalorder %s127, %s130
    %p136 = scmp.eq.s32.totalorder %s11, 0
    %p137 = por %p135, %p136
    %p138 = scmp.ne.s32.totalorder %s127, %s130
    %p139 = scmp.eq.s32.totalorder %s16, 1
    %p140 = por %p138, %p139
    %p141 = scmp.ne.s32.totalorder %s130, %s131
    %p142 = scmp.eq.s32.totalorder %s16, 0
    %p143 = por %p141, %p142
    %p144 = scmp.ne.s32.totalorder %s130, %s131
    %p145 = scmp.eq.s32.totalorder %s17, 1
    %p146 = por %p144, %p145
    %p148 = scmp.ne.s32.totalorder %s131, %s147
    %p149 = scmp.eq.s32.totalorder %s17, 0
    %p150 = por %p148, %p149
    %s151 = ssub.s32 %s18, %s30
    %s152 = ssub.s32 %s19, %s26
    %s153 = sor.u32 %s151, %s152
    %p154 = scmp.eq.s32.totalorder %s153, 0
    %s156 = sadd.s32 %s155, 1
    %s157 = scalar_select %p154, %s155, %s156
    %p160 = pneg %p154
    %p161 = scmp.eq.s32.totalorder %s11, 1
    %p162 = por %p160, %p161
    %p163 = scmp.ne.s32.totalorder %s155, %s158
    %p164 = scmp.eq.s32.totalorder %s11, 0
    %p165 = por %p163, %p164
    %p166 = scmp.ne.s32.totalorder %s155, %s158
    %p167 = scmp.eq.s32.totalorder %s16, 1
    %p168 = por %p166, %p167
    %p169 = scmp.ne.s32.totalorder %s158, %s159
    %p170 = scmp.eq.s32.totalorder %s16, 0
    %p171 = por %p169, %p170
    %p172 = scmp.ne.s32.totalorder %s158, %s159
    %p173 = scmp.eq.s32.totalorder %s17, 1
    %p174 = por %p172, %p173
    %p176 = scmp.ne.s32.totalorder %s159, %s175
    %p177 = scmp.eq.s32.totalorder %s17, 0
    %p178 = por %p176, %p177
    %p179 = scmp.le.s32.totalorder 1, %s11
    %p180 = scmp.lt.s32.totalorder %s11, 3
    %p181 = pnand %p179, %p180
    %p182 = pneg %p181
    // Predicated region
    $region9: #{e2e_forward.29} parent=5 // pred_check
      _
    $region10: #{e2e_forward.29} parent=5 // pred_check_branch
      %184 = sbr.rel (%p181) target = $region12
    $region11: #{e2e_forward.29} parent=5 // pred_region
      %s185 = ssub.s32 %s11, 1
      // Predicated region
      $region13: #{e2e_forward.29} parent=11 // pred_check
        %p186 = pneg %p70
      $region14: #{e2e_forward.29} parent=11 // pred_check_branch
        %188 = sbr.rel (%p186) target = $region16
      $region15: #{e2e_forward.29} parent=11 // pred_region
        _
      $region16: #{e2e_forward.29} parent=11 // pred_fallthru
        _
      // Predicated region
      $region17: #{e2e_forward.29} parent=11 // pred_check
        %p189 = pneg %p91
      $region18: #{e2e_forward.29} parent=11 // pred_check_branch
        %191 = sbr.rel (%p189) target = $region20
      $region19: #{e2e_forward.29} parent=11 // pred_region
        _
      $region20: #{e2e_forward.29} parent=11 // pred_fallthru
        _
      // Predicated region
      $region21: #{e2e_forward.29} parent=11 // pred_check
        %p192 = pneg %p117
      $region22: #{e2e_forward.29} parent=11 // pred_check_branch
        %194 = sbr.rel (%p192) target = $region24
      $region23: #{e2e_forward.29} parent=11 // pred_region
        %p195 = scmp.lt.s32.totalorder %s21, 0
        %s196 = scalar_select %p195, %s21, 0
        %s197 = smul.addr %s196, 4
        %s198 = scalar_lea.vmem %s3, %s197
      $region24: #{e2e_forward.29} parent=11 // pred_fallthru
        _
      // Predicated region
      $region25: #{e2e_forward.29} parent=11 // pred_check
        %p199 = pneg %p143
      $region26: #{e2e_forward.29} parent=11 // pred_check_branch
        %201 = sbr.rel (%p199) target = $region28
      $region27: #{e2e_forward.29} parent=11 // pred_region
        %p202 = scmp.lt.s32.totalorder %s21, 0
        %s203 = scalar_select %p202, %s21, 0
        %s204 = scalar_lea.vmem %s4, %s203
      $region28: #{e2e_forward.29} parent=11 // pred_fallthru
        _
    $region12: #{e2e_forward.29} parent=5 // pred_fallthru
      _
    %p205 = scmp.lt.s32.totalorder %s11, 2
    // Predicated region
    $region29: #{e2e_forward.29} parent=5 // pred_check
      %p206 = pneg %p205
    $region30: #{e2e_forward.29} parent=5 // pred_check_branch
      %208 = sbr.rel (%p206) target = $region32
    $region31: #{e2e_forward.29} parent=5 // pred_region
      // Predicated region
      $region33: #{e2e_forward.29} parent=31 // pred_check
        %p209 = pneg %p43
      $region34: #{e2e_forward.29} parent=31 // pred_check_branch
        %211 = sbr.rel (%p209) target = $region36
      $region35: #{e2e_forward.29} parent=31 // pred_region
        %s212 = smul.u32 2, %s18
        %p213 = scmp.lt.s32.totalorder %s212, 3
        %s214 = scalar_select %p213, %s212, 3
        %s215 = smul.addr %s214, 8
        %s216 = scalar_lea.vmem %s0, %s215
        %s217 = smul.u32 2, %s18
      $region36: #{e2e_forward.29} parent=31 // pred_fallthru
        _
    $region32: #{e2e_forward.29} parent=5 // pred_fallthru
      _
    %p218 = scmp.le.s32.totalorder 1, %s11
    %p219 = scmp.lt.s32.totalorder %s11, 3
    %p220 = pnand %p218, %p219
    %p221 = pneg %p220
    // Predicated region
    $region37: #{e2e_forward.29} parent=5 // pred_check
      _
    $region38: #{e2e_forward.29} parent=5 // pred_check_branch
      %223 = sbr.rel (%p220) target = $region40
    $region39: #{e2e_forward.29} parent=5 // pred_region
      %s224 = ssub.s32 %s11, 1
      %s225 = smul.u32 2, %s20
      %p226 = scmp.lt.s32.totalorder %s225, 3
      %s227 = scalar_select %p226, %s225, 3
      %s228 = smul.addr %s227, 8
      %s229 = scalar_lea.vmem %s0, %s228
      %p230 = pneg %p49
      %p231 = pneg %p46
      %p232 = pneg %p70
      %p233 = pneg %p67
      %p234 = pneg %p91
      %p235 = pneg %p88
      %p236 = scmp.lt.s32.totalorder %s21, 0
      %s237 = scalar_select %p236, %s21, 0
      %s238 = smul.addr %s237, 4
      %s239 = scalar_lea.vmem %s3, %s238
      %p240 = pneg %p117
      %p241 = pneg %p114
      %p242 = scmp.lt.s32.totalorder %s21, 0
      %s243 = scalar_select %p242, %s21, 0
      %s244 = scalar_lea.vmem %s4, %s243
      %p245 = pneg %p143
      %p246 = pneg %p140
      %p247 = pneg %p171
      %p248 = pneg %p168
      %s249 = smul.u32 2, %s20
      %p250 = scmp.lt.s32.totalorder %s249, 3
      %s251 = scalar_select %p250, %s249, 3
      %p252 = scmp.lt.s32.totalorder %s21, 0
      %s253 = scalar_select %p252, %s21, 0
      %s254 = sadd.s32 %s253, %s251
      %s255 = smul.addr %s254, 8
      %s256 = scalar_lea.vmem %s5, %s255
      %s257 = smul.u32 2, %s20
      %p258 = scmp.lt.s32.totalorder %s257, 3
      %s259 = scalar_select %p258, %s257, 3
      %s260 = smul.addr %s259, 8
      %s261 = scalar_lea.vmem %s0, %s260
      %s262 = smul.u32 2, %s20
      %p263 = scmp.lt.s32.totalorder %s21, 0
      %s264 = scalar_select %p263, %s21, 0
      %s265 = smul.addr %s264, 4
      %s266 = scalar_lea.vmem %s3, %s265
      %p267 = scmp.lt.s32.totalorder %s21, 0
      %s268 = scalar_select %p267, %s21, 0
      %s269 = scalar_lea.vmem %s4, %s268
      %s270 = smul.u32 2, %s20
      %p271 = scmp.lt.s32.totalorder %s270, 3
      %s272 = scalar_select %p271, %s270, 3
      %p273 = scmp.lt.s32.totalorder %s21, 0
      %s274 = scalar_select %p273, %s21, 0
      %s275 = sadd.s32 %s274, %s272
      %s276 = smul.addr %s275, 8
      %s277 = scalar_lea.vmem %s5, %s276
      %s278 = smul.u32 2, %s20
      %v280 = vld [vmem:[%s261] sm:$0xff]
      %v281 = vld [vmem:[%s261 + $0x8] sm:$0xff]
      %vm282 = vcmask 261120
      %v283 = vsel %vm282, %v280, 0.0
      %284 = vadd.xlane.f32.xlu0 %v283
      %v285 = vpop.xlane.xlu0 %284
      %v286 = vsel %vm282, %v281, 0.0
      %287 = vadd.xlane.f32.xlu0 %v286
      %v288 = vpop.xlane.xlu0 %287
      %v289 = vrcp.pop 32.0
      %v290 = vmul.f32 %v285, %v289
      %v291 = vmul.f32 %v288, %v289
      %v292 = vsub.f32 %v280, %v290
      %v293 = vsub.f32 %v281, %v291
      %v294 = vmul.f32 %v292, %v292
      %v295 = vmul.f32 %v293, %v293
      %v296 = vsel %vm282, %v294, 0.0
      %297 = vadd.xlane.f32.xlu0 %v296
      %v298 = vpop.xlane.xlu0 %297
      %v299 = vsel %vm282, %v295, 0.0
      %300 = vadd.xlane.f32.xlu0 %v299
      %v301 = vpop.xlane.xlu0 %300
      %v302 = vmul.f32 %v298, %v289
      %v303 = vmul.f32 %v301, %v289
      %v304 = vadd.f32 %v302, 1e-12
      %v305 = vadd.f32 %v303, 1e-12
      %v306 = vrsqrt.pop %v304
      %v307 = vrsqrt.pop %v305
      %v308 = vmul.f32 %v292, %v306
      %v309 = vmul.f32 %v293, %v307
      %v310 = vld [vmem:[%s1] sm:$0x1]
      %v312 = vlaneseq
      %v313 = vshrl.u32 %v312, 7
      %v314 = vsub.s32 0, %v313
      %v315 = vrot.slane %v310, %v314
      %v317 = vmul.f32 %v308, %v315
      %v318 = vmul.f32 %v309, %v315
      %v319 = vld [vmem:[%s2] sm:$0x1]
      %v321 = vlaneseq
      %v322 = vshrl.u32 %v321, 7
      %v323 = vsub.s32 0, %v322
      %v324 = vrot.slane %v319, %v323
      %v326 = vadd.f32 %v317, %v324
      %v327 = vadd.f32 %v318, %v324
      %v328 = vpack.c.bf16 %v327, %v326
      %v329 = vld [vmem:[%s266] sm:$0xf]
      %v330 = vld [vmem:[%s266 + $0x4] sm:$0xf]
      %v331 = vld [vmem:[%s266 + $0x8] sm:$0xf]
      %v332 = vld [vmem:[%s266 + $0xc] sm:$0xf]
      %v333 = vld [vmem:[%s269] sm:$0x1]
      %v335 = vlaneseq
      %v336 = vshrl.u32 %v335, 7
      %v337 = vsub.s32 0, %v336
      %v338 = vrot.slane %v333, %v337
      %v344 = vunpack.c.l.b16 %v329
      %v345 = vunpack.c.l.b16 %v330
      %v346 = vunpack.c.l.b16 %v331
      %v347 = vunpack.c.l.b16 %v332
      %v348 = vpack.c.b16 %v345, %v344
      %v349 = vpack.c.b16 %v347, %v346
      %v353 = vsel %vm282, %v328, 0
      %355 = vmatprep.subr.bf16.mxu0 0
      %356 = vmatpush1.bf16.msra.mxu0 %v348
      %357 = vmatprep.subr.bf16.mxu0 0
      %358 = vmatpush1.bf16.msra.mxu0 %v349
      %359 = vmatprep.subr.bf16.mxu0 0
      %360 = vmatpush1.bf16.msra.mxu0 0
      %361 = vmatprep.subr.bf16.mxu0 0
      %362 = vmatpush1.bf16.msra.mxu0 0
      %363 = vmatprep.subr.bf16.mxu0 0
      %364 = vmatpush1.bf16.msra.mxu0 0
      %365 = vmatprep.subr.bf16.mxu0 0
      %366 = vmatpush1.bf16.msra.mxu0 0
      %367 = vmatprep.subr.bf16.mxu0 0
      %368 = vmatpush1.bf16.msra.mxu0 0
      %369 = vmatprep.subr.bf16.mxu0 0
      %370 = vmatpush1.bf16.msra.mxu0 0
      %371 = vmatprep.subr.bf16.mxu0 0
      %372 = vmatpush1.bf16.msra.mxu0 0
      %373 = vmatprep.subr.bf16.mxu0 0
      %374 = vmatpush1.bf16.msra.mxu0 0
      %375 = vmatprep.subr.bf16.mxu0 0
      %376 = vmatpush1.bf16.msra.mxu0 0
      %377 = vmatprep.subr.bf16.mxu0 0
      %378 = vmatpush1.bf16.msra.mxu0 0
      %379 = vmatprep.subr.bf16.mxu0 0
      %380 = vmatpush1.bf16.msra.mxu0 0
      %381 = vmatprep.subr.bf16.mxu0 0
      %382 = vmatpush1.bf16.msra.mxu0 0
      %383 = vmatprep.subr.bf16.mxu0 0
      %384 = vmatpush1.bf16.msra.mxu0 0
      %385 = vmatprep.subr.bf16.mxu0 0
      %386 = vmatpush1.bf16.msra.mxu0 0
      %387 = vmatprep.mubr.bf16.mxu0 0
      %388 = vmatmul.mubr.bf16.gmra.mrb[0].mxu0 %v353
      %v389 = vpop.f32.mrb[0].mxu0
      %v390 = vadd.f32 %v338, %v389
      %v391 = vpop.f32.mrb[0].mxu0
      %v392 = vpop.f32.mrb[0].mxu0
      %v393 = vadd.f32 %v338, %v392
      %v394 = vpop.f32.mrb[0].mxu0
      %395 = vdwg.mxu0
      %vm396 = vcmask 785408
      %397 = vst.msk [vmem:[%s277] sm:$0xff] %vm396, %v390
      %398 = vst.msk [vmem:[%s277 + $0x8] sm:$0xff] %vm396, %v393
      %s399 = smul.u32 2, %s20
      %p400 = scmp.lt.s32.totalorder %s399, 3
      %s401 = scalar_select %p400, %s399, 3
      %p402 = scmp.lt.s32.totalorder %s21, 0
      %s403 = scalar_select %p402, %s21, 0
      %s404 = sadd.s32 %s403, %s401
      %s405 = smul.addr %s404, 8
      %s406 = scalar_lea.vmem %s5, %s405
      // Predicated region
      $region41: #{e2e_forward.29} parent=39 // pred_check
        %p407 = pneg %p168
      $region42: #{e2e_forward.29} parent=39 // pred_check_branch
        %409 = sbr.rel (%p407) target = $region44
      $region43: #{e2e_forward.29} parent=39 // pred_region
        %s410 = smul.u32 2, %s20
      $region44: #{e2e_forward.29} parent=39 // pred_fallthru
        _
    $region40: #{e2e_forward.29} parent=5 // pred_fallthru
      _
    %p411 = scmp.le.s32.totalorder 2, %s11
    // Predicated region
    $region45: #{e2e_forward.29} parent=5 // pred_check
      %p412 = pneg %p411
    $region46: #{e2e_forward.29} parent=5 // pred_check_branch
      %414 = sbr.rel (%p412) target = $region48
    $region47: #{e2e_forward.29} parent=5 // pred_region
      %s415 = ssub.s32 %s11, 2
      // Predicated region
      $region49: #{e2e_forward.29} parent=47 // pred_check
        %p416 = pneg %p174
      $region50: #{e2e_forward.29} parent=47 // pred_check_branch
        %418 = sbr.rel (%p416) target = $region52
      $region51: #{e2e_forward.29} parent=47 // pred_region
        %s419 = smul.u32 2, %s22
        %p420 = scmp.lt.s32.totalorder %s419, 3
        %s421 = scalar_select %p420, %s419, 3
        %p422 = scmp.lt.s32.totalorder %s23, 0
        %s423 = scalar_select %p422, %s23, 0
        %s424 = sadd.s32 %s423, %s421
        %s425 = smul.addr %s424, 8
        %s426 = scalar_lea.vmem %s5, %s425
      $region52: #{e2e_forward.29} parent=47 // pred_fallthru
        _
    $region48: #{e2e_forward.29} parent=5 // pred_fallthru
      _
  $region6: #{e2e_forward.29} parent=0 // loop_footer
    %s15 = sadd.s32 1, %s11
  $region7: #{e2e_forward.29} parent=0 // loop_footer_branch
    %10 = sbr.rel target = $region3
  $region8: #{e2e_forward.29} parent=0 // loop_exit
    _

// kernel: e2e_forward.28
$region0: #{e2e_forward.28}
  #allocation0 [shape = 'u32[]', space=smem, size = 0x4, offset = 0x4, fixed_abs, tag = 'smem constant byte address 0x4 - core index']
  #allocation1 [shape = 'u32[144,128]{1,0:T(1,128)}', space=vmem, size = 0x12000, scoped, tag = 'internal scratch']
  %s0 = inlined_call_operand.vmem [shape: f32[2,16,20], index: 0, kind: input, shape index: {}]
  %s1 = inlined_call_operand.vmem [shape: bf16[20,32], index: 1, kind: input, shape index: {}]
  %s2 = inlined_call_operand.vmem [shape: f32[1,32], index: 2, kind: input, shape index: {}]
  %s3 = inlined_call_operand.vmem [shape: f32[1,32], index: 3, kind: input, shape index: {}]
  %s4 = inlined_call_operand.vmem [shape: f32[1,32], index: 4, kind: input, shape index: {}]
  %s5 = inlined_call_operand.vmem [shape: f32[16,32], index: 5, kind: input, shape index: {}]
  %s6 = inlined_call_operand.vmem [shape: f32[2,16,32], index: 6, kind: output, shape index: {}]
  %s7 = sld [smem:[#allocation0]]
  $region57: #{e2e_forward.28} parent=0
    _
  %s9 = ssub.s32 1, %s7
  %s10 = scalar_select 0, %s9, %s7
  loop: start=0, step=1, limit=6
  $region2: #{e2e_forward.28} parent=0 // loop_pre_header
    _
  $region3: #{e2e_forward.28} parent=0 // loop_header
    %s12 = sphi 0, %s16
    %p13 = scmp.ge.s32.totalorder %s12, 6
    %s19 = sphi 0, %s31
    %s20 = sphi 0, %s27
    %s21 = sphi 0, %s19
    %s22 = sphi 0, %s20
    %s23 = sphi 0, %s21
    %s24 = sphi 0, %s22
    %s36 = sphi 0, %s38
    %s39 = sphi 0, %s36
    %s40 = sphi 0, %s39
    %s56 = sphi 0, %s40
    %s60 = sphi 0, %s60
    %s62 = sphi 0, %s60
    %s63 = sphi 0, %s62
    %s77 = sphi 0, %s63
    %s81 = sphi 0, %s81
    %s83 = sphi 0, %s81
    %s84 = sphi 0, %s83
    %s98 = sphi 0, %s84
    %s102 = sphi 0, %s102
    %s104 = sphi 0, %s102
    %s105 = sphi 0, %s104
    %s119 = sphi 0, %s105
    %s123 = sphi 0, %s123
    %s125 = sphi 0, %s123
    %s126 = sphi 0, %s125
    %s140 = sphi 0, %s126
    %s146 = sphi 0, %s148
    %s149 = sphi 0, %s146
    %s150 = sphi 0, %s149
    %s166 = sphi 0, %s150
    %s174 = sphi 0, %s176
    %s177 = sphi 0, %s174
    %s178 = sphi 0, %s177
    %s194 = sphi 0, %s178
  $region4: #{e2e_forward.28} parent=0 // loop_header_branch
    %15 = sbr.rel (%p13) target = $region8
  $region5: #{e2e_forward.28} parent=0 // loop_body
    %s17 = ssub.s32 %s12, 1
    %s18 = ssub.s32 %s12, 2
    %s25 = sadd.s32 1, %s20
    %p26 = scmp.ge.s32.totalorder %s25, 2
    %s27 = scalar_select %p26, 0, %s25
    %s28 = sadd.s32 1, %s19
    %s29 = scalar_select %p26, %s28, %s19
    %p30 = scmp.ge.s32.totalorder %s29, 2
    %s31 = scalar_select %p30, 0, %s29
    %s32 = ssub.s32 %s19, %s31
    %s33 = ssub.s32 %s20, %s27
    %s34 = sor.u32 %s32, %s33
    %p35 = scmp.eq.s32.totalorder %s34, 0
    %s37 = sadd.s32 %s36, 1
    %s38 = scalar_select %p35, %s36, %s37
    %p41 = pneg %p35
    %p42 = scmp.eq.s32.totalorder %s12, 3
    %p43 = por %p41, %p42
    %p44 = scmp.ne.s32.totalorder %s36, %s39
    %p45 = scmp.eq.s32.totalorder %s12, 0
    %p46 = por %p44, %p45
    %p47 = scmp.ne.s32.totalorder %s36, %s39
    %p48 = scmp.eq.s32.totalorder %s17, 3
    %p49 = por %p47, %p48
    %p50 = scmp.ne.s32.totalorder %s39, %s40
    %p51 = scmp.eq.s32.totalorder %s17, 0
    %p52 = por %p50, %p51
    %p53 = scmp.ne.s32.totalorder %s39, %s40
    %p54 = scmp.eq.s32.totalorder %s18, 3
    %p55 = por %p53, %p54
    %p57 = scmp.ne.s32.totalorder %s40, %s56
    %p58 = scmp.eq.s32.totalorder %s18, 0
    %p59 = por %p57, %p58
    %s61 = sadd.s32 %s60, 1
    %p64 = scmp.eq.s32.totalorder %s12, 3
    %p65 = scmp.ne.s32.totalorder %s60, %s62
    %p66 = scmp.eq.s32.totalorder %s12, 0
    %p67 = por %p65, %p66
    %p68 = scmp.ne.s32.totalorder %s60, %s62
    %p69 = scmp.eq.s32.totalorder %s17, 3
    %p70 = por %p68, %p69
    %p71 = scmp.ne.s32.totalorder %s62, %s63
    %p72 = scmp.eq.s32.totalorder %s17, 0
    %p73 = por %p71, %p72
    %p74 = scmp.ne.s32.totalorder %s62, %s63
    %p75 = scmp.eq.s32.totalorder %s18, 3
    %p76 = por %p74, %p75
    %p78 = scmp.ne.s32.totalorder %s63, %s77
    %p79 = scmp.eq.s32.totalorder %s18, 0
    %p80 = por %p78, %p79
    %s82 = sadd.s32 %s81, 1
    %p85 = scmp.eq.s32.totalorder %s12, 3
    %p86 = scmp.ne.s32.totalorder %s81, %s83
    %p87 = scmp.eq.s32.totalorder %s12, 0
    %p88 = por %p86, %p87
    %p89 = scmp.ne.s32.totalorder %s81, %s83
    %p90 = scmp.eq.s32.totalorder %s17, 3
    %p91 = por %p89, %p90
    %p92 = scmp.ne.s32.totalorder %s83, %s84
    %p93 = scmp.eq.s32.totalorder %s17, 0
    %p94 = por %p92, %p93
    %p95 = scmp.ne.s32.totalorder %s83, %s84
    %p96 = scmp.eq.s32.totalorder %s18, 3
    %p97 = por %p95, %p96
    %p99 = scmp.ne.s32.totalorder %s84, %s98
    %p100 = scmp.eq.s32.totalorder %s18, 0
    %p101 = por %p99, %p100
    %s103 = sadd.s32 %s102, 1
    %p106 = scmp.eq.s32.totalorder %s12, 3
    %p107 = scmp.ne.s32.totalorder %s102, %s104
    %p108 = scmp.eq.s32.totalorder %s12, 0
    %p109 = por %p107, %p108
    %p110 = scmp.ne.s32.totalorder %s102, %s104
    %p111 = scmp.eq.s32.totalorder %s17, 3
    %p112 = por %p110, %p111
    %p113 = scmp.ne.s32.totalorder %s104, %s105
    %p114 = scmp.eq.s32.totalorder %s17, 0
    %p115 = por %p113, %p114
    %p116 = scmp.ne.s32.totalorder %s104, %s105
    %p117 = scmp.eq.s32.totalorder %s18, 3
    %p118 = por %p116, %p117
    %p120 = scmp.ne.s32.totalorder %s105, %s119
    %p121 = scmp.eq.s32.totalorder %s18, 0
    %p122 = por %p120, %p121
    %s124 = sadd.s32 %s123, 1
    %p127 = scmp.eq.s32.totalorder %s12, 3
    %p128 = scmp.ne.s32.totalorder %s123, %s125
    %p129 = scmp.eq.s32.totalorder %s12, 0
    %p130 = por %p128, %p129
    %p131 = scmp.ne.s32.totalorder %s123, %s125
    %p132 = scmp.eq.s32.totalorder %s17, 3
    %p133 = por %p131, %p132
    %p134 = scmp.ne.s32.totalorder %s125, %s126
    %p135 = scmp.eq.s32.totalorder %s17, 0
    %p136 = por %p134, %p135
    %p137 = scmp.ne.s32.totalorder %s125, %s126
    %p138 = scmp.eq.s32.totalorder %s18, 3
    %p139 = por %p137, %p138
    %p141 = scmp.ne.s32.totalorder %s126, %s140
    %p142 = scmp.eq.s32.totalorder %s18, 0
    %p143 = por %p141, %p142
    %s144 = ssub.s32 %s20, %s27
    %p145 = scmp.eq.s32.totalorder %s144, 0
    %s147 = sadd.s32 %s146, 1
    %s148 = scalar_select %p145, %s146, %s147
    %p151 = pneg %p145
    %p152 = scmp.eq.s32.totalorder %s12, 3
    %p153 = por %p151, %p152
    %p154 = scmp.ne.s32.totalorder %s146, %s149
    %p155 = scmp.eq.s32.totalorder %s12, 0
    %p156 = por %p154, %p155
    %p157 = scmp.ne.s32.totalorder %s146, %s149
    %p158 = scmp.eq.s32.totalorder %s17, 3
    %p159 = por %p157, %p158
    %p160 = scmp.ne.s32.totalorder %s149, %s150
    %p161 = scmp.eq.s32.totalorder %s17, 0
    %p162 = por %p160, %p161
    %p163 = scmp.ne.s32.totalorder %s149, %s150
    %p164 = scmp.eq.s32.totalorder %s18, 3
    %p165 = por %p163, %p164
    %p167 = scmp.ne.s32.totalorder %s150, %s166
    %p168 = scmp.eq.s32.totalorder %s18, 0
    %p169 = por %p167, %p168
    %s170 = ssub.s32 %s19, %s31
    %s171 = ssub.s32 %s20, %s27
    %s172 = sor.u32 %s170, %s171
    %p173 = scmp.eq.s32.totalorder %s172, 0
    %s175 = sadd.s32 %s174, 1
    %s176 = scalar_select %p173, %s174, %s175
    %p179 = pneg %p173
    %p180 = scmp.eq.s32.totalorder %s12, 3
    %p181 = por %p179, %p180
    %p182 = scmp.ne.s32.totalorder %s174, %s177
    %p183 = scmp.eq.s32.totalorder %s12, 0
    %p184 = por %p182, %p183
    %p185 = scmp.ne.s32.totalorder %s174, %s177
    %p186 = scmp.eq.s32.totalorder %s17, 3
    %p187 = por %p185, %p186
    %p188 = scmp.ne.s32.totalorder %s177, %s178
    %p189 = scmp.eq.s32.totalorder %s17, 0
    %p190 = por %p188, %p189
    %p191 = scmp.ne.s32.totalorder %s177, %s178
    %p192 = scmp.eq.s32.totalorder %s18, 3
    %p193 = por %p191, %p192
    %p195 = scmp.ne.s32.totalorder %s178, %s194
    %p196 = scmp.eq.s32.totalorder %s18, 0
    %p197 = por %p195, %p196
    %p198 = scmp.le.s32.totalorder 1, %s12
    %p199 = scmp.lt.s32.totalorder %s12, 5
    %p200 = pnand %p198, %p199
    %p201 = pneg %p200
    // Predicated region
    $region9: #{e2e_forward.28} parent=5 // pred_check
      _
    $region10: #{e2e_forward.28} parent=5 // pred_check_branch
      %203 = sbr.rel (%p200) target = $region12
    $region11: #{e2e_forward.28} parent=5 // pred_region
      %s204 = ssub.s32 %s12, 1
      // Predicated region
      $region13: #{e2e_forward.28} parent=11 // pred_check
        %p205 = pneg %p73
      $region14: #{e2e_forward.28} parent=11 // pred_check_branch
        %207 = sbr.rel (%p205) target = $region16
      $region15: #{e2e_forward.28} parent=11 // pred_region
        _
      $region16: #{e2e_forward.28} parent=11 // pred_fallthru
        _
      // Predicated region
      $region17: #{e2e_forward.28} parent=11 // pred_check
        %p208 = pneg %p94
      $region18: #{e2e_forward.28} parent=11 // pred_check_branch
        %210 = sbr.rel (%p208) target = $region20
      $region19: #{e2e_forward.28} parent=11 // pred_region
        _
      $region20: #{e2e_forward.28} parent=11 // pred_fallthru
        _
      // Predicated region
      $region21: #{e2e_forward.28} parent=11 // pred_check
        %p211 = pneg %p115
      $region22: #{e2e_forward.28} parent=11 // pred_check_branch
        %213 = sbr.rel (%p211) target = $region24
      $region23: #{e2e_forward.28} parent=11 // pred_region
        _
      $region24: #{e2e_forward.28} parent=11 // pred_fallthru
        _
      // Predicated region
      $region25: #{e2e_forward.28} parent=11 // pred_check
        %p214 = pneg %p136
      $region26: #{e2e_forward.28} parent=11 // pred_check_branch
        %216 = sbr.rel (%p214) target = $region28
      $region27: #{e2e_forward.28} parent=11 // pred_region
        _
      $region28: #{e2e_forward.28} parent=11 // pred_fallthru
        _
    $region12: #{e2e_forward.28} parent=5 // pred_fallthru
      _
    %p217 = scmp.lt.s32.totalorder %s12, 4
    // Predicated region
    $region29: #{e2e_forward.28} parent=5 // pred_check
      %p218 = pneg %p217
    $region30: #{e2e_forward.28} parent=5 // pred_check_branch
      %220 = sbr.rel (%p218) target = $region32
    $region31: #{e2e_forward.28} parent=5 // pred_region
      // Predicated region
      $region33: #{e2e_forward.28} parent=31 // pred_check
        %p221 = pneg %p46
      $region34: #{e2e_forward.28} parent=31 // pred_check_branch
        %223 = sbr.rel (%p221) target = $region36
      $region35: #{e2e_forward.28} parent=31 // pred_region
        %p224 = scmp.lt.s32.totalorder %s19, 1
        %s225 = scalar_select %p224, %s19, 1
        %p226 = scmp.lt.s32.totalorder %s20, 1
        %s227 = scalar_select %p226, %s20, 1
        %s228 = smul.addr %s225, 2
        %s229 = sadd.s32 %s227, %s228
        %s230 = smul.addr %s229, 8
        %s231 = scalar_lea.vmem %s0, %s230
      $region36: #{e2e_forward.28} parent=31 // pred_fallthru
        _
      // Predicated region
      $region37: #{e2e_forward.28} parent=31 // pred_check
        %p232 = pneg %p156
      $region38: #{e2e_forward.28} parent=31 // pred_check_branch
        %234 = sbr.rel (%p232) target = $region40
      $region39: #{e2e_forward.28} parent=31 // pred_region
        %p235 = scmp.lt.s32.totalorder %s20, 1
        %s236 = scalar_select %p235, %s20, 1
        %s237 = smul.addr %s236, 8
        %s238 = scalar_lea.vmem %s5, %s237
      $region40: #{e2e_forward.28} parent=31 // pred_fallthru
        _
    $region32: #{e2e_forward.28} parent=5 // pred_fallthru
      _
    %p239 = scmp.le.s32.totalorder 1, %s12
    %p240 = scmp.lt.s32.totalorder %s12, 5
    %p241 = pnand %p239, %p240
    %p242 = pneg %p241
    // Predicated region
    $region41: #{e2e_forward.28} parent=5 // pred_check
      _
    $region42: #{e2e_forward.28} parent=5 // pred_check_branch
      %244 = sbr.rel (%p241) target = $region44
    $region43: #{e2e_forward.28} parent=5 // pred_region
      %s245 = ssub.s32 %s12, 1
      %p246 = scmp.lt.s32.totalorder %s21, 1
      %s247 = scalar_select %p246, %s21, 1
      %p248 = scmp.lt.s32.totalorder %s22, 1
      %s249 = scalar_select %p248, %s22, 1
      %s250 = smul.addr %s247, 2
      %s251 = sadd.s32 %s249, %s250
      %s252 = smul.addr %s251, 8
      %s253 = scalar_lea.vmem %s0, %s252
      %p254 = pneg %p52
      %p255 = pneg %p49
      %p256 = pneg %p73
      %p257 = pneg %p70
      %p258 = pneg %p94
      %p259 = pneg %p91
      %p260 = pneg %p115
      %p261 = pneg %p112
      %p262 = pneg %p136
      %p263 = pneg %p133
      %p264 = scmp.lt.s32.totalorder %s22, 1
      %s265 = scalar_select %p264, %s22, 1
      %s266 = smul.addr %s265, 8
      %s267 = scalar_lea.vmem %s5, %s266
      %p268 = pneg %p162
      %p269 = pneg %p159
      %p270 = pneg %p190
      %p271 = pneg %p187
      %p272 = scmp.lt.s32.totalorder %s21, 1
      %s273 = scalar_select %p272, %s21, 1
      %p274 = scmp.lt.s32.totalorder %s22, 1
      %s275 = scalar_select %p274, %s22, 1
      %s276 = smul.addr %s273, 2
      %s277 = sadd.s32 %s275, %s276
      %s278 = smul.addr %s277, 8
      %s279 = scalar_lea.vmem %s6, %s278
      %p280 = scmp.lt.s32.totalorder %s21, 1
      %s281 = scalar_select %p280, %s21, 1
      %p282 = scmp.lt.s32.totalorder %s22, 1
      %s283 = scalar_select %p282, %s22, 1
      %s284 = smul.addr %s281, 2
      %s285 = sadd.s32 %s283, %s284
      %s286 = smul.addr %s285, 8
      %s287 = scalar_lea.vmem %s0, %s286
      %p288 = scmp.lt.s32.totalorder %s22, 1
      %s289 = scalar_select %p288, %s22, 1
      %s290 = smul.addr %s289, 8
      %s291 = scalar_lea.vmem %s5, %s290
      %p292 = scmp.lt.s32.totalorder %s21, 1
      %s293 = scalar_select %p292, %s21, 1
      %p294 = scmp.lt.s32.totalorder %s22, 1
      %s295 = scalar_select %p294, %s22, 1
      %s296 = smul.addr %s293, 2
      %s297 = sadd.s32 %s295, %s296
      %s298 = smul.addr %s297, 8
      %s299 = scalar_lea.vmem %s6, %s298
      %v301 = vld [vmem:[%s287] sm:$0xff]
      %v302 = vpack.c.bf16 %v301, %v301
      %v303 = vld [vmem:[%s1] sm:$0xf]
      %v304 = vld [vmem:[%s1 + $0x4] sm:$0xf]
      %v305 = vld [vmem:[%s1 + $0x8] sm:$0x3]
      %v306 = vld [vmem:[%s2] sm:$0x1]
      %v308 = vlaneseq
      %v309 = vshrl.u32 %v308, 7
      %v310 = vsub.s32 0, %v309
      %v311 = vrot.slane %v306, %v310
      %v316 = vunpack.c.l.b16 %v303
      %v317 = vunpack.c.l.b16 %v304
      %v318 = vunpack.c.l.b16 %v305
      %v319 = vpack.c.b16 %v317, %v316
      %v320 = vpack.c.b16 %v318, %v318
      %vm322 = vcmask 162816
      %v324 = vsel %vm322, %v302, 0
      %vm326 = vcmask 1041408
      %v328 = vsel %vm326, %v320, 0
      %330 = vmatprep.subr.bf16.mxu0 0
      %331 = vmatpush1.bf16.msra.mxu0 %v319
      %332 = vmatprep.subr.bf16.mxu0 0
      %333 = vmatpush1.bf16.msra.mxu0 %v328
      %334 = vmatprep.subr.bf16.mxu0 0
      %335 = vmatpush1.bf16.msra.mxu0 0
      %336 = vmatprep.subr.bf16.mxu0 0
      %337 = vmatpush1.bf16.msra.mxu0 0
      %338 = vmatprep.subr.bf16.mxu0 0
      %339 = vmatpush1.bf16.msra.mxu0 0
      %340 = vmatprep.subr.bf16.mxu0 0
      %341 = vmatpush1.bf16.msra.mxu0 0
      %342 = vmatprep.subr.bf16.mxu0 0
      %343 = vmatpush1.bf16.msra.mxu0 0
      %344 = vmatprep.subr.bf16.mxu0 0
      %345 = vmatpush1.bf16.msra.mxu0 0
      %346 = vmatprep.subr.bf16.mxu0 0
      %347 = vmatpush1.bf16.msra.mxu0 0
      %348 = vmatprep.subr.bf16.mxu0 0
      %349 = vmatpush1.bf16.msra.mxu0 0
      %350 = vmatprep.subr.bf16.mxu0 0
      %351 = vmatpush1.bf16.msra.mxu0 0
      %352 = vmatprep.subr.bf16.mxu0 0
      %353 = vmatpush1.bf16.msra.mxu0 0
      %354 = vmatprep.subr.bf16.mxu0 0
      %355 = vmatpush1.bf16.msra.mxu0 0
      %356 = vmatprep.subr.bf16.mxu0 0
      %357 = vmatpush1.bf16.msra.mxu0 0
      %358 = vmatprep.subr.bf16.mxu0 0
      %359 = vmatpush1.bf16.msra.mxu0 0
      %360 = vmatprep.subr.bf16.mxu0 0
      %361 = vmatpush1.bf16.msra.mxu0 0
      %362 = vmatprep.mubr.bf16.mxu0 0
      %363 = vmatmul.mubr.bf16.gmra.mrb[0].mxu0 %v324
      %v364 = vpop.f32.mrb[0].mxu0
      %v365 = vadd.f32 %v311, %v364
      %v366 = vpop.f32.mrb[0].mxu0
      %v367 = vpop.f32.mrb[0].mxu0
      %v368 = vpop.f32.mrb[0].mxu0
      %369 = vdwg.mxu0
      %vm370 = vcmask 261120
      %v371 = vsel %vm370, %v365, 0.0
      %372 = vadd.xlane.f32.xlu0 %v371
      %v373 = vpop.xlane.xlu0 %372
      %v374 = vrcp.pop 32.0
      %v375 = vmul.f32 %v373, %v374
      %v376 = vsub.f32 %v365, %v375
      %v377 = vmul.f32 %v376, %v376
      %v378 = vsel %vm370, %v377, 0.0
      %379 = vadd.xlane.f32.xlu0 %v378
      %v380 = vpop.xlane.xlu0 %379
      %v381 = vmul.f32 %v380, %v374
      %v382 = vadd.f32 %v381, 1e-12
      %v383 = vrsqrt.pop %v382
      %v384 = vmul.f32 %v376, %v383
      %v385 = vld [vmem:[%s3] sm:$0x1]
      %v387 = vlaneseq
      %v388 = vshrl.u32 %v387, 7
      %v389 = vsub.s32 0, %v388
      %v390 = vrot.slane %v385, %v389
      %v392 = vmul.f32 %v384, %v390
      %v393 = vld [vmem:[%s4] sm:$0x1]
      %v395 = vlaneseq
      %v396 = vshrl.u32 %v395, 7
      %v397 = vsub.s32 0, %v396
      %v398 = vrot.slane %v393, %v397
      %v400 = vadd.f32 %v392, %v398
      %v401 = vmax.f32 %v400, 0.0
      %v402 = vmul.f32 %v401, 5.656854
      %v403 = vld [vmem:[%s291] sm:$0xff]
      %v404 = vadd.f32 %v402, %v403
      %405 = vst.msk [vmem:[%s299] sm:$0xff] %vm370, %v404
      %p406 = scmp.lt.s32.totalorder %s21, 1
      %s407 = scalar_select %p406, %s21, 1
      %p408 = scmp.lt.s32.totalorder %s22, 1
      %s409 = scalar_select %p408, %s22, 1
      %s410 = smul.addr %s407, 2
      %s411 = sadd.s32 %s409, %s410
      %s412 = smul.addr %s411, 8
      %s413 = scalar_lea.vmem %s6, %s412
      // Predicated region
      $region45: #{e2e_forward.28} parent=43 // pred_check
        %p414 = pneg %p187
      $region46: #{e2e_forward.28} parent=43 // pred_check_branch
        %416 = sbr.rel (%p414) target = $region48
      $region47: #{e2e_forward.28} parent=43 // pred_region
        _
      $region48: #{e2e_forward.28} parent=43 // pred_fallthru
        _
    $region44: #{e2e_forward.28} parent=5 // pred_fallthru
      _
    %p417 = scmp.le.s32.totalorder 2, %s12
    // Predicated region
    $region49: #{e2e_forward.28} parent=5 // pred_check
      %p418 = pneg %p417
    $region50: #{e2e_forward.28} parent=5 // pred_check_branch
      %420 = sbr.rel (%p418) target = $region52
    $region51: #{e2e_forward.28} parent=5 // pred_region
      %s421 = ssub.s32 %s12, 2
      // Predicated region
      $region53: #{e2e_forward.28} parent=51 // pred_check
        %p422 = pneg %p193
      $region54: #{e2e_forward.28} parent=51 // pred_check_branch
        %424 = sbr.rel (%p422) target = $region56
      $region55: #{e2e_forward.28} parent=51 // pred_region
        %p425 = scmp.lt.s32.totalorder %s23, 1
        %s426 = scalar_select %p425, %s23, 1
        %p427 = scmp.lt.s32.totalorder %s24, 1
        %s428 = scalar_select %p427, %s24, 1
        %s429 = smul.addr %s426, 2
        %s430 = sadd.s32 %s428, %s429
        %s431 = smul.addr %s430, 8
        %s432 = scalar_lea.vmem %s6, %s431
      $region56: #{e2e_forward.28} parent=51 // pred_fallthru
        _
    $region52: #{e2e_forward.28} parent=5 // pred_fallthru
      _
  $region6: #{e2e_forward.28} parent=0 // loop_footer
    %s16 = sadd.s32 1, %s12
  $region7: #{e2e_forward.28} parent=0 // loop_footer_branch
    %11 = sbr.rel target = $region3
  $region8: #{e2e_forward.28} parent=0 // loop_exit
    _

// kernel: e2e_forward.31
$region0: #{e2e_forward.31}
  #allocation0 [shape = 'u32[]', space=smem, size = 0x4, offset = 0x4, fixed_abs, tag = 'smem constant byte address 0x4 - core index']
  #allocation1 [shape = 'u32[144,128]{1,0:T(1,128)}', space=vmem, size = 0x12000, scoped, tag = 'internal scratch']
  %s0 = inlined_call_operand.vmem [shape: f32[32,32], index: 0, kind: input, shape index: {}]
  %s1 = inlined_call_operand.vmem [shape: f32[32,32], index: 1, kind: input, shape index: {}]
  %s2 = inlined_call_operand.vmem [shape: bf16[32,32], index: 2, kind: input, shape index: {}]
  %s3 = inlined_call_operand.vmem [shape: f32[1,32], index: 3, kind: input, shape index: {}]
  %s4 = inlined_call_operand.vmem [shape: f32[32,32], index: 4, kind: output, shape index: {}]
  %s5 = sld [smem:[#allocation0]]
  $region49: #{e2e_forward.31} parent=0
    _
  %s7 = ssub.s32 1, %s5
  %s8 = scalar_select 0, %s7, %s5
  loop: start=0, step=1, limit=4
  $region2: #{e2e_forward.31} parent=0 // loop_pre_header
    _
  $region3: #{e2e_forward.31} parent=0 // loop_header
    %s10 = sphi 0, %s14
    %p11 = scmp.ge.s32.totalorder %s10, 4
    %s20 = sphi 0, %s22
    %s23 = sphi 0, %s20
    %s24 = sphi 0, %s23
    %s40 = sphi 0, %s24
    %s46 = sphi 0, %s48
    %s49 = sphi 0, %s46
    %s50 = sphi 0, %s49
    %s66 = sphi 0, %s50
    %s70 = sphi 0, %s70
    %s72 = sphi 0, %s70
    %s73 = sphi 0, %s72
    %s87 = sphi 0, %s73
    %s91 = sphi 0, %s91
    %s93 = sphi 0, %s91
    %s94 = sphi 0, %s93
    %s108 = sphi 0, %s94
    %s114 = sphi 0, %s116
    %s117 = sphi 0, %s114
    %s118 = sphi 0, %s117
    %s134 = sphi 0, %s118
  $region4: #{e2e_forward.31} parent=0 // loop_header_branch
    %13 = sbr.rel (%p11) target = $region8
  $region5: #{e2e_forward.31} parent=0 // loop_body
    %s15 = ssub.s32 %s10, 1
    %s16 = ssub.s32 %s10, 2
    %s17 = sadd.s32 %s10, 1
    %s18 = ssub.s32 %s10, %s17
    %p19 = scmp.eq.s32.totalorder %s18, 0
    %s21 = sadd.s32 %s20, 1
    %s22 = scalar_select %p19, %s20, %s21
    %p25 = pneg %p19
    %p26 = scmp.eq.s32.totalorder %s10, 1
    %p27 = por %p25, %p26
    %p28 = scmp.ne.s32.totalorder %s20, %s23
    %p29 = scmp.eq.s32.totalorder %s10, 0
    %p30 = por %p28, %p29
    %p31 = scmp.ne.s32.totalorder %s20, %s23
    %p32 = scmp.eq.s32.totalorder %s15, 1
    %p33 = por %p31, %p32
    %p34 = scmp.ne.s32.totalorder %s23, %s24
    %p35 = scmp.eq.s32.totalorder %s15, 0
    %p36 = por %p34, %p35
    %p37 = scmp.ne.s32.totalorder %s23, %s24
    %p38 = scmp.eq.s32.totalorder %s16, 1
    %p39 = por %p37, %p38
    %p41 = scmp.ne.s32.totalorder %s24, %s40
    %p42 = scmp.eq.s32.totalorder %s16, 0
    %p43 = por %p41, %p42
    %s44 = ssub.s32 %s10, %s17
    %p45 = scmp.eq.s32.totalorder %s44, 0
    %s47 = sadd.s32 %s46, 1
    %s48 = scalar_select %p45, %s46, %s47
    %p51 = pneg %p45
    %p52 = scmp.eq.s32.totalorder %s10, 1
    %p53 = por %p51, %p52
    %p54 = scmp.ne.s32.totalorder %s46, %s49
    %p55 = scmp.eq.s32.totalorder %s10, 0
    %p56 = por %p54, %p55
    %p57 = scmp.ne.s32.totalorder %s46, %s49
    %p58 = scmp.eq.s32.totalorder %s15, 1
    %p59 = por %p57, %p58
    %p60 = scmp.ne.s32.totalorder %s49, %s50
    %p61 = scmp.eq.s32.totalorder %s15, 0
    %p62 = por %p60, %p61
    %p63 = scmp.ne.s32.totalorder %s49, %s50
    %p64 = scmp.eq.s32.totalorder %s16, 1
    %p65 = por %p63, %p64
    %p67 = scmp.ne.s32.totalorder %s50, %s66
    %p68 = scmp.eq.s32.totalorder %s16, 0
    %p69 = por %p67, %p68
    %s71 = sadd.s32 %s70, 1
    %p74 = scmp.eq.s32.totalorder %s10, 1
    %p75 = scmp.ne.s32.totalorder %s70, %s72
    %p76 = scmp.eq.s32.totalorder %s10, 0
    %p77 = por %p75, %p76
    %p78 = scmp.ne.s32.totalorder %s70, %s72
    %p79 = scmp.eq.s32.totalorder %s15, 1
    %p80 = por %p78, %p79
    %p81 = scmp.ne.s32.totalorder %s72, %s73
    %p82 = scmp.eq.s32.totalorder %s15, 0
    %p83 = por %p81, %p82
    %p84 = scmp.ne.s32.totalorder %s72, %s73
    %p85 = scmp.eq.s32.totalorder %s16, 1
    %p86 = por %p84, %p85
    %p88 = scmp.ne.s32.totalorder %s73, %s87
    %p89 = scmp.eq.s32.totalorder %s16, 0
    %p90 = por %p88, %p89
    %s92 = sadd.s32 %s91, 1
    %p95 = scmp.eq.s32.totalorder %s10, 1
    %p96 = scmp.ne.s32.totalorder %s91, %s93
    %p97 = scmp.eq.s32.totalorder %s10, 0
    %p98 = por %p96, %p97
    %p99 = scmp.ne.s32.totalorder %s91, %s93
    %p100 = scmp.eq.s32.totalorder %s15, 1
    %p101 = por %p99, %p100
    %p102 = scmp.ne.s32.totalorder %s93, %s94
    %p103 = scmp.eq.s32.totalorder %s15, 0
    %p104 = por %p102, %p103
    %p105 = scmp.ne.s32.totalorder %s93, %s94
    %p106 = scmp.eq.s32.totalorder %s16, 1
    %p107 = por %p105, %p106
    %p109 = scmp.ne.s32.totalorder %s94, %s108
    %p110 = scmp.eq.s32.totalorder %s16, 0
    %p111 = por %p109, %p110
    %s112 = ssub.s32 %s10, %s17
    %p113 = scmp.eq.s32.totalorder %s112, 0
    %s115 = sadd.s32 %s114, 1
    %s116 = scalar_select %p113, %s114, %s115
    %p119 = pneg %p113
    %p120 = scmp.eq.s32.totalorder %s10, 1
    %p121 = por %p119, %p120
    %p122 = scmp.ne.s32.totalorder %s114, %s117
    %p123 = scmp.eq.s32.totalorder %s10, 0
    %p124 = por %p122, %p123
    %p125 = scmp.ne.s32.totalorder %s114, %s117
    %p126 = scmp.eq.s32.totalorder %s15, 1
    %p127 = por %p125, %p126
    %p128 = scmp.ne.s32.totalorder %s117, %s118
    %p129 = scmp.eq.s32.totalorder %s15, 0
    %p130 = por %p128, %p129
    %p131 = scmp.ne.s32.totalorder %s117, %s118
    %p132 = scmp.eq.s32.totalorder %s16, 1
    %p133 = por %p131, %p132
    %p135 = scmp.ne.s32.totalorder %s118, %s134
    %p136 = scmp.eq.s32.totalorder %s16, 0
    %p137 = por %p135, %p136
    %p138 = scmp.le.s32.totalorder 1, %s10
    %p139 = scmp.lt.s32.totalorder %s10, 3
    %p140 = pnand %p138, %p139
    %p141 = pneg %p140
    // Predicated region
    $region9: #{e2e_forward.31} parent=5 // pred_check
      _
    $region10: #{e2e_forward.31} parent=5 // pred_check_branch
      %143 = sbr.rel (%p140) target = $region12
    $region11: #{e2e_forward.31} parent=5 // pred_region
      %s144 = ssub.s32 %s10, 1
      // Predicated region
      $region13: #{e2e_forward.31} parent=11 // pred_check
        %p145 = pneg %p83
      $region14: #{e2e_forward.31} parent=11 // pred_check_branch
        %147 = sbr.rel (%p145) target = $region16
      $region15: #{e2e_forward.31} parent=11 // pred_region
        _
      $region16: #{e2e_forward.31} parent=11 // pred_fallthru
        _
      // Predicated region
      $region17: #{e2e_forward.31} parent=11 // pred_check
        %p148 = pneg %p104
      $region18: #{e2e_forward.31} parent=11 // pred_check_branch
        %150 = sbr.rel (%p148) target = $region20
      $region19: #{e2e_forward.31} parent=11 // pred_region
        _
      $region20: #{e2e_forward.31} parent=11 // pred_fallthru
        _
    $region12: #{e2e_forward.31} parent=5 // pred_fallthru
      _
    %p151 = scmp.lt.s32.totalorder %s10, 2
    // Predicated region
    $region21: #{e2e_forward.31} parent=5 // pred_check
      %p152 = pneg %p151
    $region22: #{e2e_forward.31} parent=5 // pred_check_branch
      %154 = sbr.rel (%p152) target = $region24
    $region23: #{e2e_forward.31} parent=5 // pred_region
      // Predicated region
      $region25: #{e2e_forward.31} parent=23 // pred_check
        %p155 = pneg %p30
      $region26: #{e2e_forward.31} parent=23 // pred_check_branch
        %157 = sbr.rel (%p155) target = $region28
      $region27: #{e2e_forward.31} parent=23 // pred_region
        %s158 = smul.u32 2, %s10
        %p159 = scmp.lt.s32.totalorder %s158, 3
        %s160 = scalar_select %p159, %s158, 3
        %s161 = smul.addr %s160, 8
        %s162 = scalar_lea.vmem %s0, %s161
        %s163 = smul.u32 2, %s10
      $region28: #{e2e_forward.31} parent=23 // pred_fallthru
        _
      // Predicated region
      $region29: #{e2e_forward.31} parent=23 // pred_check
        %p164 = pneg %p56
      $region30: #{e2e_forward.31} parent=23 // pred_check_branch
        %166 = sbr.rel (%p164) target = $region32
      $region31: #{e2e_forward.31} parent=23 // pred_region
        %s167 = smul.u32 2, %s10
        %p168 = scmp.lt.s32.totalorder %s167, 3
        %s169 = scalar_select %p168, %s167, 3
        %s170 = smul.addr %s169, 8
        %s171 = scalar_lea.vmem %s1, %s170
        %s172 = smul.u32 2, %s10
      $region32: #{e2e_forward.31} parent=23 // pred_fallthru
        _
    $region24: #{e2e_forward.31} parent=5 // pred_fallthru
      _
    %p173 = scmp.le.s32.totalorder 1, %s10
    %p174 = scmp.lt.s32.totalorder %s10, 3
    %p175 = pnand %p173, %p174
    %p176 = pneg %p175
    // Predicated region
    $region33: #{e2e_forward.31} parent=5 // pred_check
      _
    $region34: #{e2e_forward.31} parent=5 // pred_check_branch
      %178 = sbr.rel (%p175) target = $region36
    $region35: #{e2e_forward.31} parent=5 // pred_region
      %s179 = ssub.s32 %s10, 1
      %s180 = smul.u32 2, %s15
      %p181 = scmp.lt.s32.totalorder %s180, 3
      %s182 = scalar_select %p181, %s180, 3
      %s183 = smul.addr %s182, 8
      %s184 = scalar_lea.vmem %s0, %s183
      %p185 = pneg %p36
      %p186 = pneg %p33
      %s187 = smul.u32 2, %s15
      %p188 = scmp.lt.s32.totalorder %s187, 3
      %s189 = scalar_select %p188, %s187, 3
      %s190 = smul.addr %s189, 8
      %s191 = scalar_lea.vmem %s1, %s190
      %p192 = pneg %p62
      %p193 = pneg %p59
      %p194 = pneg %p83
      %p195 = pneg %p80
      %p196 = pneg %p104
      %p197 = pneg %p101
      %p198 = pneg %p130
      %p199 = pneg %p127
      %s200 = smul.u32 2, %s15
      %p201 = scmp.lt.s32.totalorder %s200, 3
      %s202 = scalar_select %p201, %s200, 3
      %s203 = smul.addr %s202, 8
      %s204 = scalar_lea.vmem %s4, %s203
      %s205 = smul.u32 2, %s15
      %p206 = scmp.lt.s32.totalorder %s205, 3
      %s207 = scalar_select %p206, %s205, 3
      %s208 = smul.addr %s207, 8
      %s209 = scalar_lea.vmem %s0, %s208
      %s210 = smul.u32 2, %s15
      %s211 = smul.u32 2, %s15
      %p212 = scmp.lt.s32.totalorder %s211, 3
      %s213 = scalar_select %p212, %s211, 3
      %s214 = smul.addr %s213, 8
      %s215 = scalar_lea.vmem %s1, %s214
      %s216 = smul.u32 2, %s15
      %s217 = smul.u32 2, %s15
      %p218 = scmp.lt.s32.totalorder %s217, 3
      %s219 = scalar_select %p218, %s217, 3
      %s220 = smul.addr %s219, 8
      %s221 = scalar_lea.vmem %s4, %s220
      %s222 = smul.u32 2, %s15
      %v224 = vld [vmem:[%s209] sm:$0xff]
      %v225 = vld [vmem:[%s209 + $0x8] sm:$0xff]
      %v226 = vpack.c.bf16 %v225, %v224
      %v227 = vld [vmem:[%s215] sm:$0xff]
      %v228 = vld [vmem:[%s215 + $0x8] sm:$0xff]
      %v229 = vld [vmem:[%s2] sm:$0xf]
      %v230 = vld [vmem:[%s2 + $0x4] sm:$0xf]
      %v231 = vld [vmem:[%s2 + $0x8] sm:$0xf]
      %v232 = vld [vmem:[%s2 + $0xc] sm:$0xf]
      %v237 = vunpack.c.l.b16 %v229
      %v238 = vunpack.c.l.b16 %v230
      %v239 = vunpack.c.l.b16 %v231
      %v240 = vunpack.c.l.b16 %v232
      %v241 = vpack.c.b16 %v238, %v237
      %v242 = vpack.c.b16 %v240, %v239
      %vm245 = vcmask 261120
      %v247 = vsel %vm245, %v226, 0
      %249 = vmatprep.subr.bf16.mxu0 0
      %250 = vmatpush1.bf16.msra.mxu0 %v241
      %251 = vmatprep.subr.bf16.mxu0 0
      %252 = vmatpush1.bf16.msra.mxu0 %v242
      %253 = vmatprep.subr.bf16.mxu0 0
      %254 = vmatpush1.bf16.msra.mxu0 0
      %255 = vmatprep.subr.bf16.mxu0 0
      %256 = vmatpush1.bf16.msra.mxu0 0
      %257 = vmatprep.subr.bf16.mxu0 0
      %258 = vmatpush1.bf16.msra.mxu0 0
      %259 = vmatprep.subr.bf16.mxu0 0
      %260 = vmatpush1.bf16.msra.mxu0 0
      %261 = vmatprep.subr.bf16.mxu0 0
      %262 = vmatpush1.bf16.msra.mxu0 0
      %263 = vmatprep.subr.bf16.mxu0 0
      %264 = vmatpush1.bf16.msra.mxu0 0
      %265 = vmatprep.subr.bf16.mxu0 0
      %266 = vmatpush1.bf16.msra.mxu0 0
      %267 = vmatprep.subr.bf16.mxu0 0
      %268 = vmatpush1.bf16.msra.mxu0 0
      %269 = vmatprep.subr.bf16.mxu0 0
      %270 = vmatpush1.bf16.msra.mxu0 0
      %271 = vmatprep.subr.bf16.mxu0 0
      %272 = vmatpush1.bf16.msra.mxu0 0
      %273 = vmatprep.subr.bf16.mxu0 0
      %274 = vmatpush1.bf16.msra.mxu0 0
      %275 = vmatprep.subr.bf16.mxu0 0
      %276 = vmatpush1.bf16.msra.mxu0 0
      %277 = vmatprep.subr.bf16.mxu0 0
      %278 = vmatpush1.bf16.msra.mxu0 0
      %279 = vmatprep.subr.bf16.mxu0 0
      %280 = vmatpush1.bf16.msra.mxu0 0
      %281 = vmatprep.mubr.bf16.mxu0 0
      %282 = vmatmul.mubr.bf16.gmra.mrb[0].mxu0 %v247
      %v283 = vpop.f32.mrb[0].mxu0
      %v284 = vadd.f32 0.0, %v283
      %v285 = vpop.f32.mrb[0].mxu0
      %v286 = vpop.f32.mrb[0].mxu0
      %v287 = vadd.f32 0.0, %v286
      %v288 = vpop.f32.mrb[0].mxu0
      %289 = vdwg.mxu0
      %v290 = vadd.f32 %v227, %v284
      %v291 = vadd.f32 %v228, %v287
      %v292 = vld [vmem:[%s3] sm:$0x1]
      %v294 = vlaneseq
      %v295 = vshrl.u32 %v294, 7
      %v296 = vsub.s32 0, %v295
      %v297 = vrot.slane %v292, %v296
      %v299 = vadd.f32 %v290, %v297
      %v300 = vadd.f32 %v291, %v297
      %301 = vst.msk [vmem:[%s221] sm:$0xff] %vm245, %v299
      %302 = vst.msk [vmem:[%s221 + $0x8] sm:$0xff] %vm245, %v300
      %s303 = smul.u32 2, %s15
      %p304 = scmp.lt.s32.totalorder %s303, 3
      %s305 = scalar_select %p304, %s303, 3
      %s306 = smul.addr %s305, 8
      %s307 = scalar_lea.vmem %s4, %s306
      // Predicated region
      $region37: #{e2e_forward.31} parent=35 // pred_check
        %p308 = pneg %p127
      $region38: #{e2e_forward.31} parent=35 // pred_check_branch
        %310 = sbr.rel (%p308) target = $region40
      $region39: #{e2e_forward.31} parent=35 // pred_region
        %s311 = smul.u32 2, %s15
      $region40: #{e2e_forward.31} parent=35 // pred_fallthru
        _
    $region36: #{e2e_forward.31} parent=5 // pred_fallthru
      _
    %p312 = scmp.le.s32.totalorder 2, %s10
    // Predicated region
    $region41: #{e2e_forward.31} parent=5 // pred_check
      %p313 = pneg %p312
    $region42: #{e2e_forward.31} parent=5 // pred_check_branch
      %315 = sbr.rel (%p313) target = $region44
    $region43: #{e2e_forward.31} parent=5 // pred_region
      %s316 = ssub.s32 %s10, 2
      // Predicated region
      $region45: #{e2e_forward.31} parent=43 // pred_check
        %p317 = pneg %p133
      $region46: #{e2e_forward.31} parent=43 // pred_check_branch
        %319 = sbr.rel (%p317) target = $region48
      $region47: #{e2e_forward.31} parent=43 // pred_region
        %s320 = smul.u32 2, %s16
        %p321 = scmp.lt.s32.totalorder %s320, 3
        %s322 = scalar_select %p321, %s320, 3
        %s323 = smul.addr %s322, 8
        %s324 = scalar_lea.vmem %s4, %s323
      $region48: #{e2e_forward.31} parent=43 // pred_fallthru
        _
    $region44: #{e2e_forward.31} parent=5 // pred_fallthru
      _
  $region6: #{e2e_forward.31} parent=0 // loop_footer
    %s14 = sadd.s32 1, %s10
  $region7: #{e2e_forward.31} parent=0 // loop_footer_branch
    %9 = sbr.rel target = $region3
  $region8: #{e2e_forward.31} parent=0 // loop_exit
    _

// kernel: e2e_forward.30
$region0: #{e2e_forward.30}
  #allocation0 [shape = 'u32[]', space=smem, size = 0x4, offset = 0x4, fixed_abs, tag = 'smem constant byte address 0x4 - core index']
  #allocation1 [shape = 'u32[144,128]{1,0:T(1,128)}', space=vmem, size = 0x12000, scoped, tag = 'internal scratch']
  #allocation2 [shape = 's32[1]{0}', space=sflag, size = 0x4, scoped, tag = 'scoped memory for e2e_forward.30']
  #allocation3 [shape = 'u8[512]{0}', space=smem, size = 0x200, scoped, tag = 'prefetched SMEM operand 0']
  %s0 = inlined_call_operand.vmem [shape: s32[2], index: 0, kind: input, shape index: {}]
  %s1 = inlined_call_operand.vmem [shape: f32[2,16,96], index: 1, kind: input, shape index: {}]
  %s2 = inlined_call_operand.vmem [shape: f32[2,16,32], index: 2, kind: output, shape index: {}]
  %s3 = sld [smem:[#allocation0]]
  $region37: #{e2e_forward.30} parent=0
    _
  %s5 = ssub.s32 1, %s3
  %s6 = scalar_select 0, %s5, %s3
  %s7 = sshll.u32 %s0, 4
  %s8 = int_to_ptr.vmem [resolvable:$true] %s7
  %10 = dma.vmem_to_smem %s8, 16, [#allocation3], [#allocation2]
  %11 = dma.done [#allocation2], 16
  %12 = sfence
  loop: start=0, step=1, limit=4
  $region2: #{e2e_forward.30} parent=0 // loop_pre_header
    _
  $region3: #{e2e_forward.30} parent=0 // loop_header
    %s14 = sphi 0, %s18
    %p15 = scmp.ge.s32.totalorder %s14, 4
    %s24 = sphi 0, %s26
    %s27 = sphi 0, %s24
    %s28 = sphi 0, %s27
    %s44 = sphi 0, %s28
    %s50 = sphi 0, %s52
    %s53 = sphi 0, %s50
    %s54 = sphi 0, %s53
    %s70 = sphi 0, %s54
  $region4: #{e2e_forward.30} parent=0 // loop_header_branch
    %17 = sbr.rel (%p15) target = $region8
  $region5: #{e2e_forward.30} parent=0 // loop_body
    %s19 = ssub.s32 %s14, 1
    %s20 = ssub.s32 %s14, 2
    %s21 = sadd.s32 %s14, 1
    %s22 = ssub.s32 %s14, %s21
    %p23 = scmp.eq.s32.totalorder %s22, 0
    %s25 = sadd.s32 %s24, 1
    %s26 = scalar_select %p23, %s24, %s25
    %p29 = pneg %p23
    %p30 = scmp.eq.s32.totalorder %s14, 1
    %p31 = por %p29, %p30
    %p32 = scmp.ne.s32.totalorder %s24, %s27
    %p33 = scmp.eq.s32.totalorder %s14, 0
    %p34 = por %p32, %p33
    %p35 = scmp.ne.s32.totalorder %s24, %s27
    %p36 = scmp.eq.s32.totalorder %s19, 1
    %p37 = por %p35, %p36
    %p38 = scmp.ne.s32.totalorder %s27, %s28
    %p39 = scmp.eq.s32.totalorder %s19, 0
    %p40 = por %p38, %p39
    %p41 = scmp.ne.s32.totalorder %s27, %s28
    %p42 = scmp.eq.s32.totalorder %s20, 1
    %p43 = por %p41, %p42
    %p45 = scmp.ne.s32.totalorder %s28, %s44
    %p46 = scmp.eq.s32.totalorder %s20, 0
    %p47 = por %p45, %p46
    %s48 = ssub.s32 %s14, %s21
    %p49 = scmp.eq.s32.totalorder %s48, 0
    %s51 = sadd.s32 %s50, 1
    %s52 = scalar_select %p49, %s50, %s51
    %p55 = pneg %p49
    %p56 = scmp.eq.s32.totalorder %s14, 1
    %p57 = por %p55, %p56
    %p58 = scmp.ne.s32.totalorder %s50, %s53
    %p59 = scmp.eq.s32.totalorder %s14, 0
    %p60 = por %p58, %p59
    %p61 = scmp.ne.s32.totalorder %s50, %s53
    %p62 = scmp.eq.s32.totalorder %s19, 1
    %p63 = por %p61, %p62
    %p64 = scmp.ne.s32.totalorder %s53, %s54
    %p65 = scmp.eq.s32.totalorder %s19, 0
    %p66 = por %p64, %p65
    %p67 = scmp.ne.s32.totalorder %s53, %s54
    %p68 = scmp.eq.s32.totalorder %s20, 1
    %p69 = por %p67, %p68
    %p71 = scmp.ne.s32.totalorder %s54, %s70
    %p72 = scmp.eq.s32.totalorder %s20, 0
    %p73 = por %p71, %p72
    %p74 = scmp.le.s32.totalorder 1, %s14
    %p75 = scmp.lt.s32.totalorder %s14, 3
    %p76 = pnand %p74, %p75
    %p77 = pneg %p76
    // Predicated region
    $region9: #{e2e_forward.30} parent=5 // pred_check
      _
    $region10: #{e2e_forward.30} parent=5 // pred_check_branch
      %79 = sbr.rel (%p76) target = $region12
    $region11: #{e2e_forward.30} parent=5 // pred_region
      %s80 = ssub.s32 %s14, 1
    $region12: #{e2e_forward.30} parent=5 // pred_fallthru
      _
    %p81 = scmp.lt.s32.totalorder %s14, 2
    // Predicated region
    $region13: #{e2e_forward.30} parent=5 // pred_check
      %p82 = pneg %p81
    $region14: #{e2e_forward.30} parent=5 // pred_check_branch
      %84 = sbr.rel (%p82) target = $region16
    $region15: #{e2e_forward.30} parent=5 // pred_region
      // Predicated region
      $region17: #{e2e_forward.30} parent=15 // pred_check
        %p85 = pneg %p34
      $region18: #{e2e_forward.30} parent=15 // pred_check_branch
        %87 = sbr.rel (%p85) target = $region20
      $region19: #{e2e_forward.30} parent=15 // pred_region
        %p88 = scmp.lt.s32.totalorder %s14, 1
        %s89 = scalar_select %p88, %s14, 1
        %s90 = smul.addr %s89, 2
        %s91 = smul.addr %s90, 8
        %s92 = scalar_lea.vmem %s1, %s91
      $region20: #{e2e_forward.30} parent=15 // pred_fallthru
        _
    $region16: #{e2e_forward.30} parent=5 // pred_fallthru
      _
    %p93 = scmp.le.s32.totalorder 1, %s14
    %p94 = scmp.lt.s32.totalorder %s14, 3
    %p95 = pnand %p93, %p94
    %p96 = pneg %p95
    // Predicated region
    $region21: #{e2e_forward.30} parent=5 // pred_check
      _
    $region22: #{e2e_forward.30} parent=5 // pred_check_branch
      %98 = sbr.rel (%p95) target = $region24
    $region23: #{e2e_forward.30} parent=5 // pred_region
      %s99 = ssub.s32 %s14, 1
      %p100 = scmp.lt.s32.totalorder %s19, 1
      %s101 = scalar_select %p100, %s19, 1
      %s102 = smul.addr %s101, 2
      %s103 = smul.addr %s102, 8
      %s104 = scalar_lea.vmem %s1, %s103
      %p105 = pneg %p40
      %p106 = pneg %p37
      %p107 = pneg %p66
      %p108 = pneg %p63
      %p109 = scmp.lt.s32.totalorder %s19, 1
      %s110 = scalar_select %p109, %s19, 1
      %s111 = smul.addr %s110, 2
      %s112 = smul.addr %s111, 8
      %s113 = scalar_lea.vmem %s2, %s112
      %p114 = scmp.lt.s32.totalorder %s19, 1
      %s115 = scalar_select %p114, %s19, 1
      %s116 = smul.addr %s115, 2
      %s117 = smul.addr %s116, 8
      %s118 = scalar_lea.vmem %s1, %s117
      %p119 = scmp.lt.s32.totalorder %s19, 1
      %s120 = scalar_select %p119, %s19, 1
      %s121 = smul.addr %s120, 2
      %s122 = smul.addr %s121, 8
      %s123 = scalar_lea.vmem %s2, %s122
      %s125 = sld [smem:[#allocation3 + %s19]]
      %v126 = vlaneseq
      %v127 = vand.u32 %v126, 127
      %v128 = vstv %s125
      %vm129 = vcmp.lt.s32.totalorder %v127, %v128
      %v130 = vsel %vm129, 0.0, -1e+30
      %v131 = vsel %vm129, 1, 0
      %v132 = vcvt.s32.f32 %v131
      %v133 = vld [vmem:[%s118] sm:$0xff]
      %v134 = vld [vmem:[%s118 + $0x8] sm:$0xff]
      %v135 = vmul.f32 %v133, 0.35355338
      %v136 = vmul.f32 %v134, 0.35355338
      %v137 = vpack.c.bf16 %v136, %v135
      %v138 = vpack.c.bf16 %v134, %v133
      %140 = vrot.lane.b32.xlu0 %v138, 96
      %v141 = vpop.permute.xlu0 %140
      %vm142 = vcmask 64512
      %v144 = vsel %vm142, %v137, 0
      %v147 = vsel %vm142, %v141, 0
      %149 = vmatprep.subr.bf16.mxu0 0
      %150 = vmatpush1.bf16.xpose.msra.mxu0 %v147
      %151 = vmatprep.subr.bf16.mxu0 0
      %152 = vmatpush1.bf16.xpose.msra.mxu0 0
      %153 = vmatprep.subr.bf16.mxu0 0
      %154 = vmatpush1.bf16.xpose.msra.mxu0 0
      %155 = vmatprep.subr.bf16.mxu0 0
      %156 = vmatpush1.bf16.xpose.msra.mxu0 0
      %157 = vmatprep.subr.bf16.mxu0 0
      %158 = vmatpush1.bf16.xpose.msra.mxu0 0
      %159 = vmatprep.subr.bf16.mxu0 0
      %160 = vmatpush1.bf16.xpose.msra.mxu0 0
      %161 = vmatprep.subr.bf16.mxu0 0
      %162 = vmatpush1.bf16.xpose.msra.mxu0 0
      %163 = vmatprep.subr.bf16.mxu0 0
      %164 = vmatpush1.bf16.xpose.msra.mxu0 0
      %165 = vmatprep.subr.bf16.mxu0 0
      %166 = vmatpush1.bf16.xpose.msra.mxu0 0
      %167 = vmatprep.subr.bf16.mxu0 0
      %168 = vmatpush1.bf16.xpose.msra.mxu0 0
      %169 = vmatprep.subr.bf16.mxu0 0
      %170 = vmatpush1.bf16.xpose.msra.mxu0 0
      %171 = vmatprep.subr.bf16.mxu0 0
      %172 = vmatpush1.bf16.xpose.msra.mxu0 0
      %173 = vmatprep.subr.bf16.mxu0 0
      %174 = vmatpush1.bf16.xpose.msra.mxu0 0
      %175 = vmatprep.subr.bf16.mxu0 0
      %176 = vmatpush1.bf16.xpose.msra.mxu0 0
      %177 = vmatprep.subr.bf16.mxu0 0
      %178 = vmatpush1.bf16.xpose.msra.mxu0 0
      %179 = vmatprep.subr.bf16.mxu0 0
      %180 = vmatpush1.bf16.xpose.msra.mxu0 0
      %181 = vmatprep.mubr.bf16.mxu0 0
      %182 = vmatmul.mubr.bf16.gmra.mrb[0].mxu0 %v144
      %v183 = vpop.f32.mrb[0].mxu0
      %v184 = vadd.f32 %v130, %v183
      %v185 = vpop.f32.mrb[0].mxu0
      %v186 = vpop.f32.mrb[0].mxu0
      %v187 = vadd.f32 %v130, %v186
      %v188 = vpop.f32.mrb[0].mxu0
      %189 = vdwg.mxu0
      %vm190 = vcmask 130048
      %v191 = vsel %vm190, %v184, -inf
      %192 = vmax.xlane.f32.xlu0 %v191
      %v193 = vpop.xlane.xlu0 %192
      %v194 = vsel %vm190, %v187, -inf
      %195 = vmax.xlane.f32.xlu0 %v194
      %v196 = vpop.xlane.xlu0 %195
      %v197 = vsub.f32 %v184, %v193
      %v198 = vsub.f32 %v187, %v196
      %v199 = vmul.f32 %v197, 1.442695
      %v200 = vpow.pop %v199
      %v201 = vmul.f32 %v198, 1.442695
      %v202 = vpow.pop %v201
      %v203 = vmul.f32 %v200, %v132
      %v204 = vmul.f32 %v202, %v132
      %v205 = vsel %vm190, %v203, 0.0
      %206 = vadd.xlane.f32.xlu0 %v205
      %v207 = vpop.xlane.xlu0 %206
      %v208 = vsel %vm190, %v204, 0.0
      %209 = vadd.xlane.f32.xlu0 %v208
      %v210 = vpop.xlane.xlu0 %209
      %v211 = vmax.f32 %v207, 1e-30
      %v212 = vmax.f32 %v210, 1e-30
      %v213 = vrcp.pop %v211
      %v214 = vrcp.pop %v212
      %v215 = vmul.f32 %v203, %v213
      %v216 = vmul.f32 %v204, %v214
      %v217 = vpack.c.bf16 %v216, %v215
      %218 = vrot.lane.b32.xlu0 %v138, 64
      %v219 = vpop.permute.xlu0 %218
      %v222 = vsel %vm190, %v217, 0
      %224 = vmatprep.subr.bf16.mxu0 0
      %225 = vmatpush1.bf16.msra.mxu0 %v219
      %226 = vmatprep.subr.bf16.mxu0 0
      %227 = vmatpush1.bf16.msra.mxu0 0
      %228 = vmatprep.subr.bf16.mxu0 0
      %229 = vmatpush1.bf16.msra.mxu0 0
      %230 = vmatprep.subr.bf16.mxu0 0
      %231 = vmatpush1.bf16.msra.mxu0 0
      %232 = vmatprep.subr.bf16.mxu0 0
      %233 = vmatpush1.bf16.msra.mxu0 0
      %234 = vmatprep.subr.bf16.mxu0 0
      %235 = vmatpush1.bf16.msra.mxu0 0
      %236 = vmatprep.subr.bf16.mxu0 0
      %237 = vmatpush1.bf16.msra.mxu0 0
      %238 = vmatprep.subr.bf16.mxu0 0
      %239 = vmatpush1.bf16.msra.mxu0 0
      %240 = vmatprep.subr.bf16.mxu0 0
      %241 = vmatpush1.bf16.msra.mxu0 0
      %242 = vmatprep.subr.bf16.mxu0 0
      %243 = vmatpush1.bf16.msra.mxu0 0
      %244 = vmatprep.subr.bf16.mxu0 0
      %245 = vmatpush1.bf16.msra.mxu0 0
      %246 = vmatprep.subr.bf16.mxu0 0
      %247 = vmatpush1.bf16.msra.mxu0 0
      %248 = vmatprep.subr.bf16.mxu0 0
      %249 = vmatpush1.bf16.msra.mxu0 0
      %250 = vmatprep.subr.bf16.mxu0 0
      %251 = vmatpush1.bf16.msra.mxu0 0
      %252 = vmatprep.subr.bf16.mxu0 0
      %253 = vmatpush1.bf16.msra.mxu0 0
      %254 = vmatprep.subr.bf16.mxu0 0
      %255 = vmatpush1.bf16.msra.mxu0 0
      %256 = vmatprep.mubr.bf16.mxu0 0
      %257 = vmatmul.mubr.bf16.gmra.mrb[0].mxu0 %v222
      %v258 = vpop.f32.mrb[0].mxu0
      %v259 = vadd.f32 0.0, %v258
      %v260 = vpop.f32.mrb[0].mxu0
      %v261 = vpop.f32.mrb[0].mxu0
      %v262 = vadd.f32 0.0, %v261
      %v263 = vpop.f32.mrb[0].mxu0
      %264 = vdwg.mxu0
      %266 = vrot.lane.b32.xlu0 %v137, 120
      %v267 = vpop.permute.xlu0 %266
      %268 = vrot.lane.b32.xlu0 %v138, 88
      %v269 = vpop.permute.xlu0 %268
      %v271 = vsel %vm142, %v267, 0
      %v274 = vsel %vm142, %v269, 0
      %276 = vmatprep.subr.bf16.mxu0 0
      %277 = vmatpush1.bf16.xpose.msra.mxu0 %v274
      %278 = vmatprep.subr.bf16.mxu0 0
      %279 = vmatpush1.bf16.xpose.msra.mxu0 0
      %280 = vmatprep.subr.bf16.mxu0 0
      %281 = vmatpush1.bf16.xpose.msra.mxu0 0
      %282 = vmatprep.subr.bf16.mxu0 0
      %283 = vmatpush1.bf16.xpose.msra.mxu0 0
      %284 = vmatprep.subr.bf16.mxu0 0
      %285 = vmatpush1.bf16.xpose.msra.mxu0 0
      %286 = vmatprep.subr.bf16.mxu0 0
      %287 = vmatpush1.bf16.xpose.msra.mxu0 0
      %288 = vmatprep.subr.bf16.mxu0 0
      %289 = vmatpush1.bf16.xpose.msra.mxu0 0
      %290 = vmatprep.subr.bf16.mxu0 0
      %291 = vmatpush1.bf16.xpose.msra.mxu0 0
      %292 = vmatprep.subr.bf16.mxu0 0
      %293 = vmatpush1.bf16.xpose.msra.mxu0 0
      %294 = vmatprep.subr.bf16.mxu0 0
      %295 = vmatpush1.bf16.xpose.msra.mxu0 0
      %296 = vmatprep.subr.bf16.mxu0 0
      %297 = vmatpush1.bf16.xpose.msra.mxu0 0
      %298 = vmatprep.subr.bf16.mxu0 0
      %299 = vmatpush1.bf16.xpose.msra.mxu0 0
      %300 = vmatprep.subr.bf16.mxu0 0
      %301 = vmatpush1.bf16.xpose.msra.mxu0 0
      %302 = vmatprep.subr.bf16.mxu0 0
      %303 = vmatpush1.bf16.xpose.msra.mxu0 0
      %304 = vmatprep.subr.bf16.mxu0 0
      %305 = vmatpush1.bf16.xpose.msra.mxu0 0
      %306 = vmatprep.subr.bf16.mxu0 0
      %307 = vmatpush1.bf16.xpose.msra.mxu0 0
      %308 = vmatprep.mubr.bf16.mxu0 0
      %309 = vmatmul.mubr.bf16.gmra.mrb[0].mxu0 %v271
      %v310 = vpop.f32.mrb[0].mxu0
      %v311 = vadd.f32 %v130, %v310
      %v312 = vpop.f32.mrb[0].mxu0
      %v313 = vpop.f32.mrb[0].mxu0
      %v314 = vadd.f32 %v130, %v313
      %v315 = vpop.f32.mrb[0].mxu0
      %316 = vdwg.mxu0
      %v317 = vsel %vm190, %v311, -inf
      %318 = vmax.xlane.f32.xlu0 %v317
      %v319 = vpop.xlane.xlu0 %318
      %v320 = vsel %vm190, %v314, -inf
      %321 = vmax.xlane.f32.xlu0 %v320
      %v322 = vpop.xlane.xlu0 %321
      %v323 = vsub.f32 %v311, %v319
      %v324 = vsub.f32 %v314, %v322
      %v325 = vmul.f32 %v323, 1.442695
      %v326 = vpow.pop %v325
      %v327 = vmul.f32 %v324, 1.442695
      %v328 = vpow.pop %v327
      %v329 = vmul.f32 %v326, %v132
      %v330 = vmul.f32 %v328, %v132
      %v331 = vsel %vm190, %v329, 0.0
      %332 = vadd.xlane.f32.xlu0 %v331
      %v333 = vpop.xlane.xlu0 %332
      %v334 = vsel %vm190, %v330, 0.0
      %335 = vadd.xlane.f32.xlu0 %v334
      %v336 = vpop.xlane.xlu0 %335
      %v337 = vmax.f32 %v333, 1e-30
      %v338 = vmax.f32 %v336, 1e-30
      %v339 = vrcp.pop %v337
      %v340 = vrcp.pop %v338
      %v341 = vmul.f32 %v329, %v339
      %v342 = vmul.f32 %v330, %v340
      %v343 = vpack.c.bf16 %v342, %v341
      %344 = vrot.lane.b32.xlu0 %v138, 56
      %v345 = vpop.permute.xlu0 %344
      %v348 = vsel %vm190, %v343, 0
      %350 = vmatprep.subr.bf16.mxu0 0
      %351 = vmatpush1.bf16.msra.mxu0 %v345
      %352 = vmatprep.subr.bf16.mxu0 0
      %353 = vmatpush1.bf16.msra.mxu0 0
      %354 = vmatprep.subr.bf16.mxu0 0
      %355 = vmatpush1.bf16.msra.mxu0 0
      %356 = vmatprep.subr.bf16.mxu0 0
      %357 = vmatpush1.bf16.msra.mxu0 0
      %358 = vmatprep.subr.bf16.mxu0 0
      %359 = vmatpush1.bf16.msra.mxu0 0
      %360 = vmatprep.subr.bf16.mxu0 0
      %361 = vmatpush1.bf16.msra.mxu0 0
      %362 = vmatprep.subr.bf16.mxu0 0
      %363 = vmatpush1.bf16.msra.mxu0 0
      %364 = vmatprep.subr.bf16.mxu0 0
      %365 = vmatpush1.bf16.msra.mxu0 0
      %366 = vmatprep.subr.bf16.mxu0 0
      %367 = vmatpush1.bf16.msra.mxu0 0
      %368 = vmatprep.subr.bf16.mxu0 0
      %369 = vmatpush1.bf16.msra.mxu0 0
      %370 = vmatprep.subr.bf16.mxu0 0
      %371 = vmatpush1.bf16.msra.mxu0 0
      %372 = vmatprep.subr.bf16.mxu0 0
      %373 = vmatpush1.bf16.msra.mxu0 0
      %374 = vmatprep.subr.bf16.mxu0 0
      %375 = vmatpush1.bf16.msra.mxu0 0
      %376 = vmatprep.subr.bf16.mxu0 0
      %377 = vmatpush1.bf16.msra.mxu0 0
      %378 = vmatprep.subr.bf16.mxu0 0
      %379 = vmatpush1.bf16.msra.mxu0 0
      %380 = vmatprep.subr.bf16.mxu0 0
      %381 = vmatpush1.bf16.msra.mxu0 0
      %382 = vmatprep.mubr.bf16.mxu0 0
      %383 = vmatmul.mubr.bf16.gmra.mrb[0].mxu0 %v348
      %v384 = vpop.f32.mrb[0].mxu0
      %v385 = vadd.f32 0.0, %v384
      %v386 = vpop.f32.mrb[0].mxu0
      %v387 = vpop.f32.mrb[0].mxu0
      %v388 = vadd.f32 0.0, %v387
      %v389 = vpop.f32.mrb[0].mxu0
      %390 = vdwg.mxu0
      %391 = vrot.lane.b32.xlu0 %v137, 112
      %v392 = vpop.permute.xlu0 %391
      %393 = vrot.lane.b32.xlu0 %v138, 80
      %v394 = vpop.permute.xlu0 %393
      %v396 = vsel %vm142, %v392, 0
      %v399 = vsel %vm142, %v394, 0
      %401 = vmatprep.subr.bf16.mxu0 0
      %402 = vmatpush1.bf16.xpose.msra.mxu0 %v399
      %403 = vmatprep.subr.bf16.mxu0 0
      %404 = vmatpush1.bf16.xpose.msra.mxu0 0
      %405 = vmatprep.subr.bf16.mxu0 0
      %406 = vmatpush1.bf16.xpose.msra.mxu0 0
      %407 = vmatprep.subr.bf16.mxu0 0
      %408 = vmatpush1.bf16.xpose.msra.mxu0 0
      %409 = vmatprep.subr.bf16.mxu0 0
      %410 = vmatpush1.bf16.xpose.msra.mxu0 0
      %411 = vmatprep.subr.bf16.mxu0 0
      %412 = vmatpush1.bf16.xpose.msra.mxu0 0
      %413 = vmatprep.subr.bf16.mxu0 0
      %414 = vmatpush1.bf16.xpose.msra.mxu0 0
      %415 = vmatprep.subr.bf16.mxu0 0
      %416 = vmatpush1.bf16.xpose.msra.mxu0 0
      %417 = vmatprep.subr.bf16.mxu0 0
      %418 = vmatpush1.bf16.xpose.msra.mxu0 0
      %419 = vmatprep.subr.bf16.mxu0 0
      %420 = vmatpush1.bf16.xpose.msra.mxu0 0
      %421 = vmatprep.subr.bf16.mxu0 0
      %422 = vmatpush1.bf16.xpose.msra.mxu0 0
      %423 = vmatprep.subr.bf16.mxu0 0
      %424 = vmatpush1.bf16.xpose.msra.mxu0 0
      %425 = vmatprep.subr.bf16.mxu0 0
      %426 = vmatpush1.bf16.xpose.msra.mxu0 0
      %427 = vmatprep.subr.bf16.mxu0 0
      %428 = vmatpush1.bf16.xpose.msra.mxu0 0
      %429 = vmatprep.subr.bf16.mxu0 0
      %430 = vmatpush1.bf16.xpose.msra.mxu0 0
      %431 = vmatprep.subr.bf16.mxu0 0
      %432 = vmatpush1.bf16.xpose.msra.mxu0 0
      %433 = vmatprep.mubr.bf16.mxu0 0
      %434 = vmatmul.mubr.bf16.gmra.mrb[0].mxu0 %v396
      %v435 = vpop.f32.mrb[0].mxu0
      %v436 = vadd.f32 %v130, %v435
      %v437 = vpop.f32.mrb[0].mxu0
      %v438 = vpop.f32.mrb[0].mxu0
      %v439 = vadd.f32 %v130, %v438
      %v440 = vpop.f32.mrb[0].mxu0
      %441 = vdwg.mxu0
      %v442 = vsel %vm190, %v436, -inf
      %443 = vmax.xlane.f32.xlu0 %v442
      %v444 = vpop.xlane.xlu0 %443
      %v445 = vsel %vm190, %v439, -inf
      %446 = vmax.xlane.f32.xlu0 %v445
      %v447 = vpop.xlane.xlu0 %446
      %v448 = vsub.f32 %v436, %v444
      %v449 = vsub.f32 %v439, %v447
      %v450 = vmul.f32 %v448, 1.442695
      %v451 = vpow.pop %v450
      %v452 = vmul.f32 %v449, 1.442695
      %v453 = vpow.pop %v452
      %v454 = vmul.f32 %v451, %v132
      %v455 = vmul.f32 %v453, %v132
      %v456 = vsel %vm190, %v454, 0.0
      %457 = vadd.xlane.f32.xlu0 %v456
      %v458 = vpop.xlane.xlu0 %457
      %v459 = vsel %vm190, %v455, 0.0
      %460 = vadd.xlane.f32.xlu0 %v459
      %v461 = vpop.xlane.xlu0 %460
      %v462 = vmax.f32 %v458, 1e-30
      %v463 = vmax.f32 %v461, 1e-30
      %v464 = vrcp.pop %v462
      %v465 = vrcp.pop %v463
      %v466 = vmul.f32 %v454, %v464
      %v467 = vmul.f32 %v455, %v465
      %v468 = vpack.c.bf16 %v467, %v466
      %469 = vrot.lane.b32.xlu0 %v138, 48
      %v470 = vpop.permute.xlu0 %469
      %v473 = vsel %vm190, %v468, 0
      %475 = vmatprep.subr.bf16.mxu0 0
      %476 = vmatpush1.bf16.msra.mxu0 %v470
      %477 = vmatprep.subr.bf16.mxu0 0
      %478 = vmatpush1.bf16.msra.mxu0 0
      %479 = vmatprep.subr.bf16.mxu0 0
      %480 = vmatpush1.bf16.msra.mxu0 0
      %481 = vmatprep.subr.bf16.mxu0 0
      %482 = vmatpush1.bf16.msra.mxu0 0
      %483 = vmatprep.subr.bf16.mxu0 0
      %484 = vmatpush1.bf16.msra.mxu0 0
      %485 = vmatprep.subr.bf16.mxu0 0
      %486 = vmatpush1.bf16.msra.mxu0 0
      %487 = vmatprep.subr.bf16.mxu0 0
      %488 = vmatpush1.bf16.msra.mxu0 0
      %489 = vmatprep.subr.bf16.mxu0 0
      %490 = vmatpush1.bf16.msra.mxu0 0
      %491 = vmatprep.subr.bf16.mxu0 0
      %492 = vmatpush1.bf16.msra.mxu0 0
      %493 = vmatprep.subr.bf16.mxu0 0
      %494 = vmatpush1.bf16.msra.mxu0 0
      %495 = vmatprep.subr.bf16.mxu0 0
      %496 = vmatpush1.bf16.msra.mxu0 0
      %497 = vmatprep.subr.bf16.mxu0 0
      %498 = vmatpush1.bf16.msra.mxu0 0
      %499 = vmatprep.subr.bf16.mxu0 0
      %500 = vmatpush1.bf16.msra.mxu0 0
      %501 = vmatprep.subr.bf16.mxu0 0
      %502 = vmatpush1.bf16.msra.mxu0 0
      %503 = vmatprep.subr.bf16.mxu0 0
      %504 = vmatpush1.bf16.msra.mxu0 0
      %505 = vmatprep.subr.bf16.mxu0 0
      %506 = vmatpush1.bf16.msra.mxu0 0
      %507 = vmatprep.mubr.bf16.mxu0 0
      %508 = vmatmul.mubr.bf16.gmra.mrb[0].mxu0 %v473
      %v509 = vpop.f32.mrb[0].mxu0
      %v510 = vadd.f32 0.0, %v509
      %v511 = vpop.f32.mrb[0].mxu0
      %v512 = vpop.f32.mrb[0].mxu0
      %v513 = vadd.f32 0.0, %v512
      %v514 = vpop.f32.mrb[0].mxu0
      %515 = vdwg.mxu0
      %516 = vrot.lane.b32.xlu0 %v137, 104
      %v517 = vpop.permute.xlu0 %516
      %518 = vrot.lane.b32.xlu0 %v138, 72
      %v519 = vpop.permute.xlu0 %518
      %v521 = vsel %vm142, %v517, 0
      %v524 = vsel %vm142, %v519, 0
      %526 = vmatprep.subr.bf16.mxu0 0
      %527 = vmatpush1.bf16.xpose.msra.mxu0 %v524
      %528 = vmatprep.subr.bf16.mxu0 0
      %529 = vmatpush1.bf16.xpose.msra.mxu0 0
      %530 = vmatprep.subr.bf16.mxu0 0
      %531 = vmatpush1.bf16.xpose.msra.mxu0 0
      %532 = vmatprep.subr.bf16.mxu0 0
      %533 = vmatpush1.bf16.xpose.msra.mxu0 0
      %534 = vmatprep.subr.bf16.mxu0 0
      %535 = vmatpush1.bf16.xpose.msra.mxu0 0
      %536 = vmatprep.subr.bf16.mxu0 0
      %537 = vmatpush1.bf16.xpose.msra.mxu0 0
      %538 = vmatprep.subr.bf16.mxu0 0
      %539 = vmatpush1.bf16.xpose.msra.mxu0 0
      %540 = vmatprep.subr.bf16.mxu0 0
      %541 = vmatpush1.bf16.xpose.msra.mxu0 0
      %542 = vmatprep.subr.bf16.mxu0 0
      %543 = vmatpush1.bf16.xpose.msra.mxu0 0
      %544 = vmatprep.subr.bf16.mxu0 0
      %545 = vmatpush1.bf16.xpose.msra.mxu0 0
      %546 = vmatprep.subr.bf16.mxu0 0
      %547 = vmatpush1.bf16.xpose.msra.mxu0 0
      %548 = vmatprep.subr.bf16.mxu0 0
      %549 = vmatpush1.bf16.xpose.msra.mxu0 0
      %550 = vmatprep.subr.bf16.mxu0 0
      %551 = vmatpush1.bf16.xpose.msra.mxu0 0
      %552 = vmatprep.subr.bf16.mxu0 0
      %553 = vmatpush1.bf16.xpose.msra.mxu0 0
      %554 = vmatprep.subr.bf16.mxu0 0
      %555 = vmatpush1.bf16.xpose.msra.mxu0 0
      %556 = vmatprep.subr.bf16.mxu0 0
      %557 = vmatpush1.bf16.xpose.msra.mxu0 0
      %558 = vmatprep.mubr.bf16.mxu0 0
      %559 = vmatmul.mubr.bf16.gmra.mrb[0].mxu0 %v521
      %v560 = vpop.f32.mrb[0].mxu0
      %v561 = vadd.f32 %v130, %v560
      %v562 = vpop.f32.mrb[0].mxu0
      %v563 = vpop.f32.mrb[0].mxu0
      %v564 = vadd.f32 %v130, %v563
      %v565 = vpop.f32.mrb[0].mxu0
      %566 = vdwg.mxu0
      %v567 = vsel %vm190, %v561, -inf
      %568 = vmax.xlane.f32.xlu0 %v567
      %v569 = vpop.xlane.xlu0 %568
      %v570 = vsel %vm190, %v564, -inf
      %571 = vmax.xlane.f32.xlu0 %v570
      %v572 = vpop.xlane.xlu0 %571
      %v573 = vsub.f32 %v561, %v569
      %v574 = vsub.f32 %v564, %v572
      %v575 = vmul.f32 %v573, 1.442695
      %v576 = vpow.pop %v575
      %v577 = vmul.f32 %v574, 1.442695
      %v578 = vpow.pop %v577
      %v579 = vmul.f32 %v576, %v132
      %v580 = vmul.f32 %v578, %v132
      %v581 = vsel %vm190, %v579, 0.0
      %582 = vadd.xlane.f32.xlu0 %v581
      %v583 = vpop.xlane.xlu0 %582
      %v584 = vsel %vm190, %v580, 0.0
      %585 = vadd.xlane.f32.xlu0 %v584
      %v586 = vpop.xlane.xlu0 %585
      %v587 = vmax.f32 %v583, 1e-30
      %v588 = vmax.f32 %v586, 1e-30
      %v589 = vrcp.pop %v587
      %v590 = vrcp.pop %v588
      %v591 = vmul.f32 %v579, %v589
      %v592 = vmul.f32 %v580, %v590
      %v593 = vpack.c.bf16 %v592, %v591
      %594 = vrot.lane.b32.xlu0 %v138, 40
      %v595 = vpop.permute.xlu0 %594
      %v598 = vsel %vm190, %v593, 0
      %600 = vmatprep.subr.bf16.mxu0 0
      %601 = vmatpush1.bf16.msra.mxu0 %v595
      %602 = vmatprep.subr.bf16.mxu0 0
      %603 = vmatpush1.bf16.msra.mxu0 0
      %604 = vmatprep.subr.bf16.mxu0 0
      %605 = vmatpush1.bf16.msra.mxu0 0
      %606 = vmatprep.subr.bf16.mxu0 0
      %607 = vmatpush1.bf16.msra.mxu0 0
      %608 = vmatprep.subr.bf16.mxu0 0
      %609 = vmatpush1.bf16.msra.mxu0 0
      %610 = vmatprep.subr.bf16.mxu0 0
      %611 = vmatpush1.bf16.msra.mxu0 0
      %612 = vmatprep.subr.bf16.mxu0 0
      %613 = vmatpush1.bf16.msra.mxu0 0
      %614 = vmatprep.subr.bf16.mxu0 0
      %615 = vmatpush1.bf16.msra.mxu0 0
      %616 = vmatprep.subr.bf16.mxu0 0
      %617 = vmatpush1.bf16.msra.mxu0 0
      %618 = vmatprep.subr.bf16.mxu0 0
      %619 = vmatpush1.bf16.msra.mxu0 0
      %620 = vmatprep.subr.bf16.mxu0 0
      %621 = vmatpush1.bf16.msra.mxu0 0
      %622 = vmatprep.subr.bf16.mxu0 0
      %623 = vmatpush1.bf16.msra.mxu0 0
      %624 = vmatprep.subr.bf16.mxu0 0
      %625 = vmatpush1.bf16.msra.mxu0 0
      %626 = vmatprep.subr.bf16.mxu0 0
      %627 = vmatpush1.bf16.msra.mxu0 0
      %628 = vmatprep.subr.bf16.mxu0 0
      %629 = vmatpush1.bf16.msra.mxu0 0
      %630 = vmatprep.subr.bf16.mxu0 0
      %631 = vmatpush1.bf16.msra.mxu0 0
      %632 = vmatprep.mubr.bf16.mxu0 0
      %633 = vmatmul.mubr.bf16.gmra.mrb[0].mxu0 %v598
      %v634 = vpop.f32.mrb[0].mxu0
      %v635 = vadd.f32 0.0, %v634
      %v636 = vpop.f32.mrb[0].mxu0
      %v637 = vpop.f32.mrb[0].mxu0
      %v638 = vadd.f32 0.0, %v637
      %v639 = vpop.f32.mrb[0].mxu0
      %640 = vdwg.mxu0
      %643 = vrot.lane.b32.xlu0 %v385, 8
      %v644 = vpop.permute.xlu0 %643
      %645 = vrot.lane.b32.xlu0 %v388, 8
      %v646 = vpop.permute.xlu0 %645
      %651 = vrot.lane.b32.xlu0 %v510, 16
      %v652 = vpop.permute.xlu0 %651
      %653 = vrot.lane.b32.xlu0 %v513, 16
      %v654 = vpop.permute.xlu0 %653
      %659 = vrot.lane.b32.xlu0 %v635, 24
      %v660 = vpop.permute.xlu0 %659
      %661 = vrot.lane.b32.xlu0 %v638, 24
      %v662 = vpop.permute.xlu0 %661
      %v665 = vsel %vm142, %v259, %v644
      %v666 = vsel %vm142, %v262, %v646
      %v667 = vsel %vm190, %v665, %v652
      %v668 = vsel %vm190, %v666, %v654
      %vm669 = vcmask 195584
      %v670 = vsel %vm669, %v667, %v660
      %v671 = vsel %vm669, %v668, %v662
      %vm672 = vcmask 261120
      %673 = vst.msk [vmem:[%s123] sm:$0xff] %vm672, %v670
      %674 = vst.msk [vmem:[%s123 + $0x8] sm:$0xff] %vm672, %v671
      %p675 = scmp.lt.s32.totalorder %s19, 1
      %s676 = scalar_select %p675, %s19, 1
      %s677 = smul.addr %s676, 2
      %s678 = smul.addr %s677, 8
      %s679 = scalar_lea.vmem %s2, %s678
      // Predicated region
      $region25: #{e2e_forward.30} parent=23 // pred_check
        %p680 = pneg %p63
      $region26: #{e2e_forward.30} parent=23 // pred_check_branch
        %682 = sbr.rel (%p680) target = $region28
      $region27: #{e2e_forward.30} parent=23 // pred_region
        _
      $region28: #{e2e_forward.30} parent=23 // pred_fallthru
        _
    $region24: #{e2e_forward.30} parent=5 // pred_fallthru
      _
    %p683 = scmp.le.s32.totalorder 2, %s14
    // Predicated region
    $region29: #{e2e_forward.30} parent=5 // pred_check
      %p684 = pneg %p683
    $region30: #{e2e_forward.30} parent=5 // pred_check_branch
      %686 = sbr.rel (%p684) target = $region32
    $region31: #{e2e_forward.30} parent=5 // pred_region
      %s687 = ssub.s32 %s14, 2
      // Predicated region
      $region33: #{e2e_forward.30} parent=31 // pred_check
        %p688 = pneg %p69
      $region34: #{e2e_forward.30} parent=31 // pred_check_branch
        %690 = sbr.rel (%p688) target = $region36
      $region35: #{e2e_forward.30} parent=31 // pred_region
        %p691 = scmp.lt.s32.totalorder %s20, 1
        %s692 = scalar_select %p691, %s20, 1
        %s693 = smul.addr %s692, 2
        %s694 = smul.addr %s693, 8
        %s695 = scalar_lea.vmem %s2, %s694
      $region36: #{e2e_forward.30} parent=31 // pred_fallthru
        _
    $region32: #{e2e_forward.30} parent=5 // pred_fallthru
      _
  $region6: #{e2e_forward.30} parent=0 // loop_footer
    %s18 = sadd.s32 1, %s14
  $region7: #{e2e_forward.30} parent=0 // loop_footer_branch
    %13 = sbr.rel target = $region3
  $region8: #{e2e_forward.30} parent=0 // loop_exit
    _

// kernel: e2e_forward.42
$region0: #{e2e_forward.42}
  #allocation0 [shape = 'u32[]', space=smem, size = 0x4, offset = 0x4, fixed_abs, tag = 'smem constant byte address 0x4 - core index']
  #allocation1 [shape = 'u32[144,128]{1,0:T(1,128)}', space=vmem, size = 0x12000, scoped, tag = 'internal scratch']
  %s0 = inlined_call_operand.vmem [shape: f32[32,32], index: 0, kind: input, shape index: {}]
  %s1 = inlined_call_operand.vmem [shape: bf16[32,64], index: 1, kind: input, shape index: {}]
  %s2 = inlined_call_operand.vmem [shape: f32[1,64], index: 2, kind: input, shape index: {}]
  %s3 = inlined_call_operand.vmem [shape: f32[32,64], index: 3, kind: output, shape index: {}]
  %s4 = sld [smem:[#allocation0]]
  $region45: #{e2e_forward.42} parent=0
    _
  %s6 = ssub.s32 1, %s4
  %s7 = scalar_select 0, %s6, %s4
  loop: start=0, step=1, limit=4
  $region2: #{e2e_forward.42} parent=0 // loop_pre_header
    _
  $region3: #{e2e_forward.42} parent=0 // loop_header
    %s9 = sphi 0, %s13
    %p10 = scmp.ge.s32.totalorder %s9, 4
    %s19 = sphi 0, %s21
    %s22 = sphi 0, %s19
    %s23 = sphi 0, %s22
    %s39 = sphi 0, %s23
    %s43 = sphi 0, %s43
    %s45 = sphi 0, %s43
    %s46 = sphi 0, %s45
    %s60 = sphi 0, %s46
    %s64 = sphi 0, %s64
    %s66 = sphi 0, %s64
    %s67 = sphi 0, %s66
    %s81 = sphi 0, %s67
    %s87 = sphi 0, %s89
    %s90 = sphi 0, %s87
    %s91 = sphi 0, %s90
    %s107 = sphi 0, %s91
  $region4: #{e2e_forward.42} parent=0 // loop_header_branch
    %12 = sbr.rel (%p10) target = $region8
  $region5: #{e2e_forward.42} parent=0 // loop_body
    %s14 = ssub.s32 %s9, 1
    %s15 = ssub.s32 %s9, 2
    %s16 = sadd.s32 %s9, 1
    %s17 = ssub.s32 %s9, %s16
    %p18 = scmp.eq.s32.totalorder %s17, 0
    %s20 = sadd.s32 %s19, 1
    %s21 = scalar_select %p18, %s19, %s20
    %p24 = pneg %p18
    %p25 = scmp.eq.s32.totalorder %s9, 1
    %p26 = por %p24, %p25
    %p27 = scmp.ne.s32.totalorder %s19, %s22
    %p28 = scmp.eq.s32.totalorder %s9, 0
    %p29 = por %p27, %p28
    %p30 = scmp.ne.s32.totalorder %s19, %s22
    %p31 = scmp.eq.s32.totalorder %s14, 1
    %p32 = por %p30, %p31
    %p33 = scmp.ne.s32.totalorder %s22, %s23
    %p34 = scmp.eq.s32.totalorder %s14, 0
    %p35 = por %p33, %p34
    %p36 = scmp.ne.s32.totalorder %s22, %s23
    %p37 = scmp.eq.s32.totalorder %s15, 1
    %p38 = por %p36, %p37
    %p40 = scmp.ne.s32.totalorder %s23, %s39
    %p41 = scmp.eq.s32.totalorder %s15, 0
    %p42 = por %p40, %p41
    %s44 = sadd.s32 %s43, 1
    %p47 = scmp.eq.s32.totalorder %s9, 1
    %p48 = scmp.ne.s32.totalorder %s43, %s45
    %p49 = scmp.eq.s32.totalorder %s9, 0
    %p50 = por %p48, %p49
    %p51 = scmp.ne.s32.totalorder %s43, %s45
    %p52 = scmp.eq.s32.totalorder %s14, 1
    %p53 = por %p51, %p52
    %p54 = scmp.ne.s32.totalorder %s45, %s46
    %p55 = scmp.eq.s32.totalorder %s14, 0
    %p56 = por %p54, %p55
    %p57 = scmp.ne.s32.totalorder %s45, %s46
    %p58 = scmp.eq.s32.totalorder %s15, 1
    %p59 = por %p57, %p58
    %p61 = scmp.ne.s32.totalorder %s46, %s60
    %p62 = scmp.eq.s32.totalorder %s15, 0
    %p63 = por %p61, %p62
    %s65 = sadd.s32 %s64, 1
    %p68 = scmp.eq.s32.totalorder %s9, 1
    %p69 = scmp.ne.s32.totalorder %s64, %s66
    %p70 = scmp.eq.s32.totalorder %s9, 0
    %p71 = por %p69, %p70
    %p72 = scmp.ne.s32.totalorder %s64, %s66
    %p73 = scmp.eq.s32.totalorder %s14, 1
    %p74 = por %p72, %p73
    %p75 = scmp.ne.s32.totalorder %s66, %s67
    %p76 = scmp.eq.s32.totalorder %s14, 0
    %p77 = por %p75, %p76
    %p78 = scmp.ne.s32.totalorder %s66, %s67
    %p79 = scmp.eq.s32.totalorder %s15, 1
    %p80 = por %p78, %p79
    %p82 = scmp.ne.s32.totalorder %s67, %s81
    %p83 = scmp.eq.s32.totalorder %s15, 0
    %p84 = por %p82, %p83
    %s85 = ssub.s32 %s9, %s16
    %p86 = scmp.eq.s32.totalorder %s85, 0
    %s88 = sadd.s32 %s87, 1
    %s89 = scalar_select %p86, %s87, %s88
    %p92 = pneg %p86
    %p93 = scmp.eq.s32.totalorder %s9, 1
    %p94 = por %p92, %p93
    %p95 = scmp.ne.s32.totalorder %s87, %s90
    %p96 = scmp.eq.s32.totalorder %s9, 0
    %p97 = por %p95, %p96
    %p98 = scmp.ne.s32.totalorder %s87, %s90
    %p99 = scmp.eq.s32.totalorder %s14, 1
    %p100 = por %p98, %p99
    %p101 = scmp.ne.s32.totalorder %s90, %s91
    %p102 = scmp.eq.s32.totalorder %s14, 0
    %p103 = por %p101, %p102
    %p104 = scmp.ne.s32.totalorder %s90, %s91
    %p105 = scmp.eq.s32.totalorder %s15, 1
    %p106 = por %p104, %p105
    %p108 = scmp.ne.s32.totalorder %s91, %s107
    %p109 = scmp.eq.s32.totalorder %s15, 0
    %p110 = por %p108, %p109
    %p111 = scmp.le.s32.totalorder 1, %s9
    %p112 = scmp.lt.s32.totalorder %s9, 3
    %p113 = pnand %p111, %p112
    %p114 = pneg %p113
    // Predicated region
    $region9: #{e2e_forward.42} parent=5 // pred_check
      _
    $region10: #{e2e_forward.42} parent=5 // pred_check_branch
      %116 = sbr.rel (%p113) target = $region12
    $region11: #{e2e_forward.42} parent=5 // pred_region
      %s117 = ssub.s32 %s9, 1
      // Predicated region
      $region13: #{e2e_forward.42} parent=11 // pred_check
        %p118 = pneg %p56
      $region14: #{e2e_forward.42} parent=11 // pred_check_branch
        %120 = sbr.rel (%p118) target = $region16
      $region15: #{e2e_forward.42} parent=11 // pred_region
        _
      $region16: #{e2e_forward.42} parent=11 // pred_fallthru
        _
      // Predicated region
      $region17: #{e2e_forward.42} parent=11 // pred_check
        %p121 = pneg %p77
      $region18: #{e2e_forward.42} parent=11 // pred_check_branch
        %123 = sbr.rel (%p121) target = $region20
      $region19: #{e2e_forward.42} parent=11 // pred_region
        _
      $region20: #{e2e_forward.42} parent=11 // pred_fallthru
        _
    $region12: #{e2e_forward.42} parent=5 // pred_fallthru
      _
    %p124 = scmp.lt.s32.totalorder %s9, 2
    // Predicated region
    $region21: #{e2e_forward.42} parent=5 // pred_check
      %p125 = pneg %p124
    $region22: #{e2e_forward.42} parent=5 // pred_check_branch
      %127 = sbr.rel (%p125) target = $region24
    $region23: #{e2e_forward.42} parent=5 // pred_region
      // Predicated region
      $region25: #{e2e_forward.42} parent=23 // pred_check
        %p128 = pneg %p29
      $region26: #{e2e_forward.42} parent=23 // pred_check_branch
        %130 = sbr.rel (%p128) target = $region28
      $region27: #{e2e_forward.42} parent=23 // pred_region
        %s131 = smul.u32 2, %s9
        %p132 = scmp.lt.s32.totalorder %s131, 3
        %s133 = scalar_select %p132, %s131, 3
        %s134 = smul.addr %s133, 8
        %s135 = scalar_lea.vmem %s0, %s134
        %s136 = smul.u32 2, %s9
      $region28: #{e2e_forward.42} parent=23 // pred_fallthru
        _
    $region24: #{e2e_forward.42} parent=5 // pred_fallthru
      _
    %p137 = scmp.le.s32.totalorder 1, %s9
    %p138 = scmp.lt.s32.totalorder %s9, 3
    %p139 = pnand %p137, %p138
    %p140 = pneg %p139
    // Predicated region
    $region29: #{e2e_forward.42} parent=5 // pred_check
      _
    $region30: #{e2e_forward.42} parent=5 // pred_check_branch
      %142 = sbr.rel (%p139) target = $region32
    $region31: #{e2e_forward.42} parent=5 // pred_region
      %s143 = ssub.s32 %s9, 1
      %s144 = smul.u32 2, %s14
      %p145 = scmp.lt.s32.totalorder %s144, 3
      %s146 = scalar_select %p145, %s144, 3
      %s147 = smul.addr %s146, 8
      %s148 = scalar_lea.vmem %s0, %s147
      %p149 = pneg %p35
      %p150 = pneg %p32
      %p151 = pneg %p56
      %p152 = pneg %p53
      %p153 = pneg %p77
      %p154 = pneg %p74
      %p155 = pneg %p103
      %p156 = pneg %p100
      %s157 = smul.u32 2, %s14
      %p158 = scmp.lt.s32.totalorder %s157, 3
      %s159 = scalar_select %p158, %s157, 3
      %s160 = smul.addr %s159, 8
      %s161 = scalar_lea.vmem %s3, %s160
      %s162 = smul.u32 2, %s14
      %p163 = scmp.lt.s32.totalorder %s162, 3
      %s164 = scalar_select %p163, %s162, 3
      %s165 = smul.addr %s164, 8
      %s166 = scalar_lea.vmem %s0, %s165
      %s167 = smul.u32 2, %s14
      %s168 = smul.u32 2, %s14
      %p169 = scmp.lt.s32.totalorder %s168, 3
      %s170 = scalar_select %p169, %s168, 3
      %s171 = smul.addr %s170, 8
      %s172 = scalar_lea.vmem %s3, %s171
      %s173 = smul.u32 2, %s14
      %v175 = vld [vmem:[%s166] sm:$0xff]
      %v176 = vld [vmem:[%s166 + $0x8] sm:$0xff]
      %v177 = vpack.c.bf16 %v176, %v175
      %v178 = vld [vmem:[%s1] sm:$0xf]
      %v179 = vld [vmem:[%s1 + $0x4] sm:$0xf]
      %v180 = vld [vmem:[%s1 + $0x8] sm:$0xf]
      %v181 = vld [vmem:[%s1 + $0xc] sm:$0xf]
      %v182 = vld [vmem:[%s2] sm:$0x1]
      %v184 = vlaneseq
      %v185 = vshrl.u32 %v184, 7
      %v186 = vsub.s32 0, %v185
      %v187 = vrot.slane %v182, %v186
      %v193 = vunpack.c.l.b16 %v178
      %v194 = vunpack.c.l.b16 %v179
      %v195 = vunpack.c.l.b16 %v180
      %v196 = vunpack.c.l.b16 %v181
      %v197 = vpack.c.b16 %v194, %v193
      %v198 = vpack.c.b16 %v196, %v195
      %vm201 = vcmask 261120
      %v203 = vsel %vm201, %v177, 0
      %205 = vmatprep.subr.bf16.mxu0 0
      %206 = vmatpush1.bf16.msra.mxu0 %v197
      %207 = vmatprep.subr.bf16.mxu0 0
      %208 = vmatpush1.bf16.msra.mxu0 %v198
      %209 = vmatprep.subr.bf16.mxu0 0
      %210 = vmatpush1.bf16.msra.mxu0 0
      %211 = vmatprep.subr.bf16.mxu0 0
      %212 = vmatpush1.bf16.msra.mxu0 0
      %213 = vmatprep.subr.bf16.mxu0 0
      %214 = vmatpush1.bf16.msra.mxu0 0
      %215 = vmatprep.subr.bf16.mxu0 0
      %216 = vmatpush1.bf16.msra.mxu0 0
      %217 = vmatprep.subr.bf16.mxu0 0
      %218 = vmatpush1.bf16.msra.mxu0 0
      %219 = vmatprep.subr.bf16.mxu0 0
      %220 = vmatpush1.bf16.msra.mxu0 0
      %221 = vmatprep.subr.bf16.mxu0 0
      %222 = vmatpush1.bf16.msra.mxu0 0
      %223 = vmatprep.subr.bf16.mxu0 0
      %224 = vmatpush1.bf16.msra.mxu0 0
      %225 = vmatprep.subr.bf16.mxu0 0
      %226 = vmatpush1.bf16.msra.mxu0 0
      %227 = vmatprep.subr.bf16.mxu0 0
      %228 = vmatpush1.bf16.msra.mxu0 0
      %229 = vmatprep.subr.bf16.mxu0 0
      %230 = vmatpush1.bf16.msra.mxu0 0
      %231 = vmatprep.subr.bf16.mxu0 0
      %232 = vmatpush1.bf16.msra.mxu0 0
      %233 = vmatprep.subr.bf16.mxu0 0
      %234 = vmatpush1.bf16.msra.mxu0 0
      %235 = vmatprep.subr.bf16.mxu0 0
      %236 = vmatpush1.bf16.msra.mxu0 0
      %237 = vmatprep.mubr.bf16.mxu0 0
      %238 = vmatmul.mubr.bf16.gmra.mrb[0].mxu0 %v203
      %v239 = vpop.f32.mrb[0].mxu0
      %v240 = vadd.f32 %v187, %v239
      %v241 = vpop.f32.mrb[0].mxu0
      %v242 = vpop.f32.mrb[0].mxu0
      %v243 = vadd.f32 %v187, %v242
      %v244 = vpop.f32.mrb[0].mxu0
      %245 = vdwg.mxu0
      %vm246 = vcmask 523264
      %247 = vst.msk [vmem:[%s172] sm:$0xff] %vm246, %v240
      %248 = vst.msk [vmem:[%s172 + $0x8] sm:$0xff] %vm246, %v243
      %s249 = smul.u32 2, %s14
      %p250 = scmp.lt.s32.totalorder %s249, 3
      %s251 = scalar_select %p250, %s249, 3
      %s252 = smul.addr %s251, 8
      %s253 = scalar_lea.vmem %s3, %s252
      // Predicated region
      $region33: #{e2e_forward.42} parent=31 // pred_check
        %p254 = pneg %p100
      $region34: #{e2e_forward.42} parent=31 // pred_check_branch
        %256 = sbr.rel (%p254) target = $region36
      $region35: #{e2e_forward.42} parent=31 // pred_region
        %s257 = smul.u32 2, %s14
      $region36: #{e2e_forward.42} parent=31 // pred_fallthru
        _
    $region32: #{e2e_forward.42} parent=5 // pred_fallthru
      _
    %p258 = scmp.le.s32.totalorder 2, %s9
    // Predicated region
    $region37: #{e2e_forward.42} parent=5 // pred_check
      %p259 = pneg %p258
    $region38: #{e2e_forward.42} parent=5 // pred_check_branch
      %261 = sbr.rel (%p259) target = $region40
    $region39: #{e2e_forward.42} parent=5 // pred_region
      %s262 = ssub.s32 %s9, 2
      // Predicated region
      $region41: #{e2e_forward.42} parent=39 // pred_check
        %p263 = pneg %p106
      $region42: #{e2e_forward.42} parent=39 // pred_check_branch
        %265 = sbr.rel (%p263) target = $region44
      $region43: #{e2e_forward.42} parent=39 // pred_region
        %s266 = smul.u32 2, %s15
        %p267 = scmp.lt.s32.totalorder %s266, 3
        %s268 = scalar_select %p267, %s266, 3
        %s269 = smul.addr %s268, 8
        %s270 = scalar_lea.vmem %s3, %s269
      $region44: #{e2e_forward.42} parent=39 // pred_fallthru
        _
    $region40: #{e2e_forward.42} parent=5 // pred_fallthru
      _
  $region6: #{e2e_forward.42} parent=0 // loop_footer
    %s13 = sadd.s32 1, %s9
  $region7: #{e2e_forward.42} parent=0 // loop_footer_branch
    %8 = sbr.rel target = $region3
  $region8: #{e2e_forward.42} parent=0 // loop_exit
    _

// kernel: e2e_forward.37
$region0: #{e2e_forward.37}
  #allocation0 [shape = 'u32[]', space=smem, size = 0x4, offset = 0x4, fixed_abs, tag = 'smem constant byte address 0x4 - core index']
  #allocation1 [shape = 'u32[144,128]{1,0:T(1,128)}', space=vmem, size = 0x12000, scoped, tag = 'internal scratch']
  %s0 = inlined_call_operand.vmem [shape: f32[32,32], index: 0, kind: input, shape index: {}]
  %s1 = inlined_call_operand.vmem [shape: f32[1,32], index: 1, kind: input, shape index: {}]
  %s2 = inlined_call_operand.vmem [shape: f32[1,32], index: 2, kind: input, shape index: {}]
  %s3 = inlined_call_operand.vmem [shape: f32[32,32], index: 3, kind: output, shape index: {}]
  %s4 = sld [smem:[#allocation0]]
  $region45: #{e2e_forward.37} parent=0
    _
  %s6 = ssub.s32 1, %s4
  %s7 = scalar_select 0, %s6, %s4
  loop: start=0, step=1, limit=4
  $region2: #{e2e_forward.37} parent=0 // loop_pre_header
    _
  $region3: #{e2e_forward.37} parent=0 // loop_header
    %s9 = sphi 0, %s13
    %p10 = scmp.ge.s32.totalorder %s9, 4
    %s19 = sphi 0, %s21
    %s22 = sphi 0, %s19
    %s23 = sphi 0, %s22
    %s39 = sphi 0, %s23
    %s43 = sphi 0, %s43
    %s45 = sphi 0, %s43
    %s46 = sphi 0, %s45
    %s60 = sphi 0, %s46
    %s64 = sphi 0, %s64
    %s66 = sphi 0, %s64
    %s67 = sphi 0, %s66
    %s81 = sphi 0, %s67
    %s87 = sphi 0, %s89
    %s90 = sphi 0, %s87
    %s91 = sphi 0, %s90
    %s107 = sphi 0, %s91
  $region4: #{e2e_forward.37} parent=0 // loop_header_branch
    %12 = sbr.rel (%p10) target = $region8
  $region5: #{e2e_forward.37} parent=0 // loop_body
    %s14 = ssub.s32 %s9, 1
    %s15 = ssub.s32 %s9, 2
    %s16 = sadd.s32 %s9, 1
    %s17 = ssub.s32 %s9, %s16
    %p18 = scmp.eq.s32.totalorder %s17, 0
    %s20 = sadd.s32 %s19, 1
    %s21 = scalar_select %p18, %s19, %s20
    %p24 = pneg %p18
    %p25 = scmp.eq.s32.totalorder %s9, 1
    %p26 = por %p24, %p25
    %p27 = scmp.ne.s32.totalorder %s19, %s22
    %p28 = scmp.eq.s32.totalorder %s9, 0
    %p29 = por %p27, %p28
    %p30 = scmp.ne.s32.totalorder %s19, %s22
    %p31 = scmp.eq.s32.totalorder %s14, 1
    %p32 = por %p30, %p31
    %p33 = scmp.ne.s32.totalorder %s22, %s23
    %p34 = scmp.eq.s32.totalorder %s14, 0
    %p35 = por %p33, %p34
    %p36 = scmp.ne.s32.totalorder %s22, %s23
    %p37 = scmp.eq.s32.totalorder %s15, 1
    %p38 = por %p36, %p37
    %p40 = scmp.ne.s32.totalorder %s23, %s39
    %p41 = scmp.eq.s32.totalorder %s15, 0
    %p42 = por %p40, %p41
    %s44 = sadd.s32 %s43, 1
    %p47 = scmp.eq.s32.totalorder %s9, 1
    %p48 = scmp.ne.s32.totalorder %s43, %s45
    %p49 = scmp.eq.s32.totalorder %s9, 0
    %p50 = por %p48, %p49
    %p51 = scmp.ne.s32.totalorder %s43, %s45
    %p52 = scmp.eq.s32.totalorder %s14, 1
    %p53 = por %p51, %p52
    %p54 = scmp.ne.s32.totalorder %s45, %s46
    %p55 = scmp.eq.s32.totalorder %s14, 0
    %p56 = por %p54, %p55
    %p57 = scmp.ne.s32.totalorder %s45, %s46
    %p58 = scmp.eq.s32.totalorder %s15, 1
    %p59 = por %p57, %p58
    %p61 = scmp.ne.s32.totalorder %s46, %s60
    %p62 = scmp.eq.s32.totalorder %s15, 0
    %p63 = por %p61, %p62
    %s65 = sadd.s32 %s64, 1
    %p68 = scmp.eq.s32.totalorder %s9, 1
    %p69 = scmp.ne.s32.totalorder %s64, %s66
    %p70 = scmp.eq.s32.totalorder %s9, 0
    %p71 = por %p69, %p70
    %p72 = scmp.ne.s32.totalorder %s64, %s66
    %p73 = scmp.eq.s32.totalorder %s14, 1
    %p74 = por %p72, %p73
    %p75 = scmp.ne.s32.totalorder %s66, %s67
    %p76 = scmp.eq.s32.totalorder %s14, 0
    %p77 = por %p75, %p76
    %p78 = scmp.ne.s32.totalorder %s66, %s67
    %p79 = scmp.eq.s32.totalorder %s15, 1
    %p80 = por %p78, %p79
    %p82 = scmp.ne.s32.totalorder %s67, %s81
    %p83 = scmp.eq.s32.totalorder %s15, 0
    %p84 = por %p82, %p83
    %s85 = ssub.s32 %s9, %s16
    %p86 = scmp.eq.s32.totalorder %s85, 0
    %s88 = sadd.s32 %s87, 1
    %s89 = scalar_select %p86, %s87, %s88
    %p92 = pneg %p86
    %p93 = scmp.eq.s32.totalorder %s9, 1
    %p94 = por %p92, %p93
    %p95 = scmp.ne.s32.totalorder %s87, %s90
    %p96 = scmp.eq.s32.totalorder %s9, 0
    %p97 = por %p95, %p96
    %p98 = scmp.ne.s32.totalorder %s87, %s90
    %p99 = scmp.eq.s32.totalorder %s14, 1
    %p100 = por %p98, %p99
    %p101 = scmp.ne.s32.totalorder %s90, %s91
    %p102 = scmp.eq.s32.totalorder %s14, 0
    %p103 = por %p101, %p102
    %p104 = scmp.ne.s32.totalorder %s90, %s91
    %p105 = scmp.eq.s32.totalorder %s15, 1
    %p106 = por %p104, %p105
    %p108 = scmp.ne.s32.totalorder %s91, %s107
    %p109 = scmp.eq.s32.totalorder %s15, 0
    %p110 = por %p108, %p109
    %p111 = scmp.le.s32.totalorder 1, %s9
    %p112 = scmp.lt.s32.totalorder %s9, 3
    %p113 = pnand %p111, %p112
    %p114 = pneg %p113
    // Predicated region
    $region9: #{e2e_forward.37} parent=5 // pred_check
      _
    $region10: #{e2e_forward.37} parent=5 // pred_check_branch
      %116 = sbr.rel (%p113) target = $region12
    $region11: #{e2e_forward.37} parent=5 // pred_region
      %s117 = ssub.s32 %s9, 1
      // Predicated region
      $region13: #{e2e_forward.37} parent=11 // pred_check
        %p118 = pneg %p56
      $region14: #{e2e_forward.37} parent=11 // pred_check_branch
        %120 = sbr.rel (%p118) target = $region16
      $region15: #{e2e_forward.37} parent=11 // pred_region
        _
      $region16: #{e2e_forward.37} parent=11 // pred_fallthru
        _
      // Predicated region
      $region17: #{e2e_forward.37} parent=11 // pred_check
        %p121 = pneg %p77
      $region18: #{e2e_forward.37} parent=11 // pred_check_branch
        %123 = sbr.rel (%p121) target = $region20
      $region19: #{e2e_forward.37} parent=11 // pred_region
        _
      $region20: #{e2e_forward.37} parent=11 // pred_fallthru
        _
    $region12: #{e2e_forward.37} parent=5 // pred_fallthru
      _
    %p124 = scmp.lt.s32.totalorder %s9, 2
    // Predicated region
    $region21: #{e2e_forward.37} parent=5 // pred_check
      %p125 = pneg %p124
    $region22: #{e2e_forward.37} parent=5 // pred_check_branch
      %127 = sbr.rel (%p125) target = $region24
    $region23: #{e2e_forward.37} parent=5 // pred_region
      // Predicated region
      $region25: #{e2e_forward.37} parent=23 // pred_check
        %p128 = pneg %p29
      $region26: #{e2e_forward.37} parent=23 // pred_check_branch
        %130 = sbr.rel (%p128) target = $region28
      $region27: #{e2e_forward.37} parent=23 // pred_region
        %s131 = smul.u32 2, %s9
        %p132 = scmp.lt.s32.totalorder %s131, 3
        %s133 = scalar_select %p132, %s131, 3
        %s134 = smul.addr %s133, 8
        %s135 = scalar_lea.vmem %s0, %s134
        %s136 = smul.u32 2, %s9
      $region28: #{e2e_forward.37} parent=23 // pred_fallthru
        _
    $region24: #{e2e_forward.37} parent=5 // pred_fallthru
      _
    %p137 = scmp.le.s32.totalorder 1, %s9
    %p138 = scmp.lt.s32.totalorder %s9, 3
    %p139 = pnand %p137, %p138
    %p140 = pneg %p139
    // Predicated region
    $region29: #{e2e_forward.37} parent=5 // pred_check
      _
    $region30: #{e2e_forward.37} parent=5 // pred_check_branch
      %142 = sbr.rel (%p139) target = $region32
    $region31: #{e2e_forward.37} parent=5 // pred_region
      %s143 = ssub.s32 %s9, 1
      %s144 = smul.u32 2, %s14
      %p145 = scmp.lt.s32.totalorder %s144, 3
      %s146 = scalar_select %p145, %s144, 3
      %s147 = smul.addr %s146, 8
      %s148 = scalar_lea.vmem %s0, %s147
      %p149 = pneg %p35
      %p150 = pneg %p32
      %p151 = pneg %p56
      %p152 = pneg %p53
      %p153 = pneg %p77
      %p154 = pneg %p74
      %p155 = pneg %p103
      %p156 = pneg %p100
      %s157 = smul.u32 2, %s14
      %p158 = scmp.lt.s32.totalorder %s157, 3
      %s159 = scalar_select %p158, %s157, 3
      %s160 = smul.addr %s159, 8
      %s161 = scalar_lea.vmem %s3, %s160
      %s162 = smul.u32 2, %s14
      %p163 = scmp.lt.s32.totalorder %s162, 3
      %s164 = scalar_select %p163, %s162, 3
      %s165 = smul.addr %s164, 8
      %s166 = scalar_lea.vmem %s0, %s165
      %s167 = smul.u32 2, %s14
      %s168 = smul.u32 2, %s14
      %p169 = scmp.lt.s32.totalorder %s168, 3
      %s170 = scalar_select %p169, %s168, 3
      %s171 = smul.addr %s170, 8
      %s172 = scalar_lea.vmem %s3, %s171
      %s173 = smul.u32 2, %s14
      %v174 = vld [vmem:[%s166] sm:$0xff]
      %v175 = vld [vmem:[%s166 + $0x8] sm:$0xff]
      %vm176 = vcmask 261120
      %v177 = vsel %vm176, %v174, 0.0
      %178 = vadd.xlane.f32.xlu0 %v177
      %v179 = vpop.xlane.xlu0 %178
      %v180 = vsel %vm176, %v175, 0.0
      %181 = vadd.xlane.f32.xlu0 %v180
      %v182 = vpop.xlane.xlu0 %181
      %v183 = vrcp.pop 32.0
      %v184 = vmul.f32 %v179, %v183
      %v185 = vmul.f32 %v182, %v183
      %v186 = vsub.f32 %v174, %v184
      %v187 = vsub.f32 %v175, %v185
      %v188 = vmul.f32 %v186, %v186
      %v189 = vmul.f32 %v187, %v187
      %v190 = vsel %vm176, %v188, 0.0
      %191 = vadd.xlane.f32.xlu0 %v190
      %v192 = vpop.xlane.xlu0 %191
      %v193 = vsel %vm176, %v189, 0.0
      %194 = vadd.xlane.f32.xlu0 %v193
      %v195 = vpop.xlane.xlu0 %194
      %v196 = vmul.f32 %v192, %v183
      %v197 = vmul.f32 %v195, %v183
      %v198 = vadd.f32 %v196, 1e-12
      %v199 = vadd.f32 %v197, 1e-12
      %v200 = vrsqrt.pop %v198
      %v201 = vrsqrt.pop %v199
      %v202 = vmul.f32 %v186, %v200
      %v203 = vmul.f32 %v187, %v201
      %v204 = vld [vmem:[%s1] sm:$0x1]
      %v206 = vlaneseq
      %v207 = vshrl.u32 %v206, 7
      %v208 = vsub.s32 0, %v207
      %v209 = vrot.slane %v204, %v208
      %v211 = vmul.f32 %v202, %v209
      %v212 = vmul.f32 %v203, %v209
      %v213 = vld [vmem:[%s2] sm:$0x1]
      %v215 = vlaneseq
      %v216 = vshrl.u32 %v215, 7
      %v217 = vsub.s32 0, %v216
      %v218 = vrot.slane %v213, %v217
      %v220 = vadd.f32 %v211, %v218
      %v221 = vadd.f32 %v212, %v218
      %222 = vst.msk [vmem:[%s172] sm:$0xff] %vm176, %v220
      %223 = vst.msk [vmem:[%s172 + $0x8] sm:$0xff] %vm176, %v221
      %s224 = smul.u32 2, %s14
      %p225 = scmp.lt.s32.totalorder %s224, 3
      %s226 = scalar_select %p225, %s224, 3
      %s227 = smul.addr %s226, 8
      %s228 = scalar_lea.vmem %s3, %s227
      // Predicated region
      $region33: #{e2e_forward.37} parent=31 // pred_check
        %p229 = pneg %p100
      $region34: #{e2e_forward.37} parent=31 // pred_check_branch
        %231 = sbr.rel (%p229) target = $region36
      $region35: #{e2e_forward.37} parent=31 // pred_region
        %s232 = smul.u32 2, %s14
      $region36: #{e2e_forward.37} parent=31 // pred_fallthru
        _
    $region32: #{e2e_forward.37} parent=5 // pred_fallthru
      _
    %p233 = scmp.le.s32.totalorder 2, %s9
    // Predicated region
    $region37: #{e2e_forward.37} parent=5 // pred_check
      %p234 = pneg %p233
    $region38: #{e2e_forward.37} parent=5 // pred_check_branch
      %236 = sbr.rel (%p234) target = $region40
    $region39: #{e2e_forward.37} parent=5 // pred_region
      %s237 = ssub.s32 %s9, 2
      // Predicated region
      $region41: #{e2e_forward.37} parent=39 // pred_check
        %p238 = pneg %p106
      $region42: #{e2e_forward.37} parent=39 // pred_check_branch
        %240 = sbr.rel (%p238) target = $region44
      $region43: #{e2e_forward.37} parent=39 // pred_region
        %s241 = smul.u32 2, %s15
        %p242 = scmp.lt.s32.totalorder %s241, 3
        %s243 = scalar_select %p242, %s241, 3
        %s244 = smul.addr %s243, 8
        %s245 = scalar_lea.vmem %s3, %s244
      $region44: #{e2e_forward.37} parent=39 // pred_fallthru
        _
    $region40: #{e2e_forward.37} parent=5 // pred_fallthru
      _
  $region6: #{e2e_forward.37} parent=0 // loop_footer
    %s13 = sadd.s32 1, %s9
  $region7: #{e2e_forward.37} parent=0 // loop_footer_branch
    %8 = sbr.rel target = $region3
  $region8: #{e2e_forward.37} parent=0 // loop_exit
    _

// kernel: e2e_forward.32
$region0: #{e2e_forward.32}
  #allocation0 [shape = 'u32[]', space=smem, size = 0x4, offset = 0x4, fixed_abs, tag = 'smem constant byte address 0x4 - core index']
  #allocation1 [shape = 'u32[144,128]{1,0:T(1,128)}', space=vmem, size = 0x12000, scoped, tag = 'internal scratch']
  %s0 = inlined_call_operand.vmem [shape: f32[32,32], index: 0, kind: input, shape index: {}]
  %s1 = inlined_call_operand.vmem [shape: f32[1,32], index: 1, kind: input, shape index: {}]
  %s2 = inlined_call_operand.vmem [shape: f32[1,32], index: 2, kind: input, shape index: {}]
  %s3 = inlined_call_operand.vmem [shape: bf16[32,64], index: 3, kind: input, shape index: {}]
  %s4 = inlined_call_operand.vmem [shape: f32[1,64], index: 4, kind: input, shape index: {}]
  %s5 = inlined_call_operand.vmem [shape: bf16[64,32], index: 5, kind: input, shape index: {}]
  %s6 = inlined_call_operand.vmem [shape: f32[1,32], index: 6, kind: input, shape index: {}]
  %s7 = inlined_call_operand.vmem [shape: f32[32,32], index: 7, kind: output, shape index: {}]
  %s8 = sld [smem:[#allocation0]]
  $region61: #{e2e_forward.32} parent=0
    _
  %s10 = ssub.s32 1, %s8
  %s11 = scalar_select 0, %s10, %s8
  loop: start=0, step=1, limit=4
  $region2: #{e2e_forward.32} parent=0 // loop_pre_header
    _
  $region3: #{e2e_forward.32} parent=0 // loop_header
    %s13 = sphi 0, %s17
    %p14 = scmp.ge.s32.totalorder %s13, 4
    %s23 = sphi 0, %s25
    %s26 = sphi 0, %s23
    %s27 = sphi 0, %s26
    %s43 = sphi 0, %s27
    %s47 = sphi 0, %s47
    %s49 = sphi 0, %s47
    %s50 = sphi 0, %s49
    %s64 = sphi 0, %s50
    %s68 = sphi 0, %s68
    %s70 = sphi 0, %s68
    %s71 = sphi 0, %s70
    %s85 = sphi 0, %s71
    %s89 = sphi 0, %s89
    %s91 = sphi 0, %s89
    %s92 = sphi 0, %s91
    %s106 = sphi 0, %s92
    %s110 = sphi 0, %s110
    %s112 = sphi 0, %s110
    %s113 = sphi 0, %s112
    %s127 = sphi 0, %s113
    %s131 = sphi 0, %s131
    %s133 = sphi 0, %s131
    %s134 = sphi 0, %s133
    %s148 = sphi 0, %s134
    %s152 = sphi 0, %s152
    %s154 = sphi 0, %s152
    %s155 = sphi 0, %s154
    %s169 = sphi 0, %s155
    %s175 = sphi 0, %s177
    %s178 = sphi 0, %s175
    %s179 = sphi 0, %s178
    %s195 = sphi 0, %s179
  $region4: #{e2e_forward.32} parent=0 // loop_header_branch
    %16 = sbr.rel (%p14) target = $region8
  $region5: #{e2e_forward.32} parent=0 // loop_body
    %s18 = ssub.s32 %s13, 1
    %s19 = ssub.s32 %s13, 2
    %s20 = sadd.s32 %s13, 1
    %s21 = ssub.s32 %s13, %s20
    %p22 = scmp.eq.s32.totalorder %s21, 0
    %s24 = sadd.s32 %s23, 1
    %s25 = scalar_select %p22, %s23, %s24
    %p28 = pneg %p22
    %p29 = scmp.eq.s32.totalorder %s13, 1
    %p30 = por %p28, %p29
    %p31 = scmp.ne.s32.totalorder %s23, %s26
    %p32 = scmp.eq.s32.totalorder %s13, 0
    %p33 = por %p31, %p32
    %p34 = scmp.ne.s32.totalorder %s23, %s26
    %p35 = scmp.eq.s32.totalorder %s18, 1
    %p36 = por %p34, %p35
    %p37 = scmp.ne.s32.totalorder %s26, %s27
    %p38 = scmp.eq.s32.totalorder %s18, 0
    %p39 = por %p37, %p38
    %p40 = scmp.ne.s32.totalorder %s26, %s27
    %p41 = scmp.eq.s32.totalorder %s19, 1
    %p42 = por %p40, %p41
    %p44 = scmp.ne.s32.totalorder %s27, %s43
    %p45 = scmp.eq.s32.totalorder %s19, 0
    %p46 = por %p44, %p45
    %s48 = sadd.s32 %s47, 1
    %p51 = scmp.eq.s32.totalorder %s13, 1
    %p52 = scmp.ne.s32.totalorder %s47, %s49
    %p53 = scmp.eq.s32.totalorder %s13, 0
    %p54 = por %p52, %p53
    %p55 = scmp.ne.s32.totalorder %s47, %s49
    %p56 = scmp.eq.s32.totalorder %s18, 1
    %p57 = por %p55, %p56
    %p58 = scmp.ne.s32.totalorder %s49, %s50
    %p59 = scmp.eq.s32.totalorder %s18, 0
    %p60 = por %p58, %p59
    %p61 = scmp.ne.s32.totalorder %s49, %s50
    %p62 = scmp.eq.s32.totalorder %s19, 1
    %p63 = por %p61, %p62
    %p65 = scmp.ne.s32.totalorder %s50, %s64
    %p66 = scmp.eq.s32.totalorder %s19, 0
    %p67 = por %p65, %p66
    %s69 = sadd.s32 %s68, 1
    %p72 = scmp.eq.s32.totalorder %s13, 1
    %p73 = scmp.ne.s32.totalorder %s68, %s70
    %p74 = scmp.eq.s32.totalorder %s13, 0
    %p75 = por %p73, %p74
    %p76 = scmp.ne.s32.totalorder %s68, %s70
    %p77 = scmp.eq.s32.totalorder %s18, 1
    %p78 = por %p76, %p77
    %p79 = scmp.ne.s32.totalorder %s70, %s71
    %p80 = scmp.eq.s32.totalorder %s18, 0
    %p81 = por %p79, %p80
    %p82 = scmp.ne.s32.totalorder %s70, %s71
    %p83 = scmp.eq.s32.totalorder %s19, 1
    %p84 = por %p82, %p83
    %p86 = scmp.ne.s32.totalorder %s71, %s85
    %p87 = scmp.eq.s32.totalorder %s19, 0
    %p88 = por %p86, %p87
    %s90 = sadd.s32 %s89, 1
    %p93 = scmp.eq.s32.totalorder %s13, 1
    %p94 = scmp.ne.s32.totalorder %s89, %s91
    %p95 = scmp.eq.s32.totalorder %s13, 0
    %p96 = por %p94, %p95
    %p97 = scmp.ne.s32.totalorder %s89, %s91
    %p98 = scmp.eq.s32.totalorder %s18, 1
    %p99 = por %p97, %p98
    %p100 = scmp.ne.s32.totalorder %s91, %s92
    %p101 = scmp.eq.s32.totalorder %s18, 0
    %p102 = por %p100, %p101
    %p103 = scmp.ne.s32.totalorder %s91, %s92
    %p104 = scmp.eq.s32.totalorder %s19, 1
    %p105 = por %p103, %p104
    %p107 = scmp.ne.s32.totalorder %s92, %s106
    %p108 = scmp.eq.s32.totalorder %s19, 0
    %p109 = por %p107, %p108
    %s111 = sadd.s32 %s110, 1
    %p114 = scmp.eq.s32.totalorder %s13, 1
    %p115 = scmp.ne.s32.totalorder %s110, %s112
    %p116 = scmp.eq.s32.totalorder %s13, 0
    %p117 = por %p115, %p116
    %p118 = scmp.ne.s32.totalorder %s110, %s112
    %p119 = scmp.eq.s32.totalorder %s18, 1
    %p120 = por %p118, %p119
    %p121 = scmp.ne.s32.totalorder %s112, %s113
    %p122 = scmp.eq.s32.totalorder %s18, 0
    %p123 = por %p121, %p122
    %p124 = scmp.ne.s32.totalorder %s112, %s113
    %p125 = scmp.eq.s32.totalorder %s19, 1
    %p126 = por %p124, %p125
    %p128 = scmp.ne.s32.totalorder %s113, %s127
    %p129 = scmp.eq.s32.totalorder %s19, 0
    %p130 = por %p128, %p129
    %s132 = sadd.s32 %s131, 1
    %p135 = scmp.eq.s32.totalorder %s13, 1
    %p136 = scmp.ne.s32.totalorder %s131, %s133
    %p137 = scmp.eq.s32.totalorder %s13, 0
    %p138 = por %p136, %p137
    %p139 = scmp.ne.s32.totalorder %s131, %s133
    %p140 = scmp.eq.s32.totalorder %s18, 1
    %p141 = por %p139, %p140
    %p142 = scmp.ne.s32.totalorder %s133, %s134
    %p143 = scmp.eq.s32.totalorder %s18, 0
    %p144 = por %p142, %p143
    %p145 = scmp.ne.s32.totalorder %s133, %s134
    %p146 = scmp.eq.s32.totalorder %s19, 1
    %p147 = por %p145, %p146
    %p149 = scmp.ne.s32.totalorder %s134, %s148
    %p150 = scmp.eq.s32.totalorder %s19, 0
    %p151 = por %p149, %p150
    %s153 = sadd.s32 %s152, 1
    %p156 = scmp.eq.s32.totalorder %s13, 1
    %p157 = scmp.ne.s32.totalorder %s152, %s154
    %p158 = scmp.eq.s32.totalorder %s13, 0
    %p159 = por %p157, %p158
    %p160 = scmp.ne.s32.totalorder %s152, %s154
    %p161 = scmp.eq.s32.totalorder %s18, 1
    %p162 = por %p160, %p161
    %p163 = scmp.ne.s32.totalorder %s154, %s155
    %p164 = scmp.eq.s32.totalorder %s18, 0
    %p165 = por %p163, %p164
    %p166 = scmp.ne.s32.totalorder %s154, %s155
    %p167 = scmp.eq.s32.totalorder %s19, 1
    %p168 = por %p166, %p167
    %p170 = scmp.ne.s32.totalorder %s155, %s169
    %p171 = scmp.eq.s32.totalorder %s19, 0
    %p172 = por %p170, %p171
    %s173 = ssub.s32 %s13, %s20
    %p174 = scmp.eq.s32.totalorder %s173, 0
    %s176 = sadd.s32 %s175, 1
    %s177 = scalar_select %p174, %s175, %s176
    %p180 = pneg %p174
    %p181 = scmp.eq.s32.totalorder %s13, 1
    %p182 = por %p180, %p181
    %p183 = scmp.ne.s32.totalorder %s175, %s178
    %p184 = scmp.eq.s32.totalorder %s13, 0
    %p185 = por %p183, %p184
    %p186 = scmp.ne.s32.totalorder %s175, %s178
    %p187 = scmp.eq.s32.totalorder %s18, 1
    %p188 = por %p186, %p187
    %p189 = scmp.ne.s32.totalorder %s178, %s179
    %p190 = scmp.eq.s32.totalorder %s18, 0
    %p191 = por %p189, %p190
    %p192 = scmp.ne.s32.totalorder %s178, %s179
    %p193 = scmp.eq.s32.totalorder %s19, 1
    %p194 = por %p192, %p193
    %p196 = scmp.ne.s32.totalorder %s179, %s195
    %p197 = scmp.eq.s32.totalorder %s19, 0
    %p198 = por %p196, %p197
    %p199 = scmp.le.s32.totalorder 1, %s13
    %p200 = scmp.lt.s32.totalorder %s13, 3
    %p201 = pnand %p199, %p200
    %p202 = pneg %p201
    // Predicated region
    $region9: #{e2e_forward.32} parent=5 // pred_check
      _
    $region10: #{e2e_forward.32} parent=5 // pred_check_branch
      %204 = sbr.rel (%p201) target = $region12
    $region11: #{e2e_forward.32} parent=5 // pred_region
      %s205 = ssub.s32 %s13, 1
      // Predicated region
      $region13: #{e2e_forward.32} parent=11 // pred_check
        %p206 = pneg %p60
      $region14: #{e2e_forward.32} parent=11 // pred_check_branch
        %208 = sbr.rel (%p206) target = $region16
      $region15: #{e2e_forward.32} parent=11 // pred_region
        _
      $region16: #{e2e_forward.32} parent=11 // pred_fallthru
        _
      // Predicated region
      $region17: #{e2e_forward.32} parent=11 // pred_check
        %p209 = pneg %p81
      $region18: #{e2e_forward.32} parent=11 // pred_check_branch
        %211 = sbr.rel (%p209) target = $region20
      $region19: #{e2e_forward.32} parent=11 // pred_region
        _
      $region20: #{e2e_forward.32} parent=11 // pred_fallthru
        _
      // Predicated region
      $region21: #{e2e_forward.32} parent=11 // pred_check
        %p212 = pneg %p102
      $region22: #{e2e_forward.32} parent=11 // pred_check_branch
        %214 = sbr.rel (%p212) target = $region24
      $region23: #{e2e_forward.32} parent=11 // pred_region
        _
      $region24: #{e2e_forward.32} parent=11 // pred_fallthru
        _
      // Predicated region
      $region25: #{e2e_forward.32} parent=11 // pred_check
        %p215 = pneg %p123
      $region26: #{e2e_forward.32} parent=11 // pred_check_branch
        %217 = sbr.rel (%p215) target = $region28
      $region27: #{e2e_forward.32} parent=11 // pred_region
        _
      $region28: #{e2e_forward.32} parent=11 // pred_fallthru
        _
      // Predicated region
      $region29: #{e2e_forward.32} parent=11 // pred_check
        %p218 = pneg %p144
      $region30: #{e2e_forward.32} parent=11 // pred_check_branch
        %220 = sbr.rel (%p218) target = $region32
      $region31: #{e2e_forward.32} parent=11 // pred_region
        _
      $region32: #{e2e_forward.32} parent=11 // pred_fallthru
        _
      // Predicated region
      $region33: #{e2e_forward.32} parent=11 // pred_check
        %p221 = pneg %p165
      $region34: #{e2e_forward.32} parent=11 // pred_check_branch
        %223 = sbr.rel (%p221) target = $region36
      $region35: #{e2e_forward.32} parent=11 // pred_region
        _
      $region36: #{e2e_forward.32} parent=11 // pred_fallthru
        _
    $region12: #{e2e_forward.32} parent=5 // pred_fallthru
      _
    %p224 = scmp.lt.s32.totalorder %s13, 2
    // Predicated region
    $region37: #{e2e_forward.32} parent=5 // pred_check
      %p225 = pneg %p224
    $region38: #{e2e_forward.32} parent=5 // pred_check_branch
      %227 = sbr.rel (%p225) target = $region40
    $region39: #{e2e_forward.32} parent=5 // pred_region
      // Predicated region
      $region41: #{e2e_forward.32} parent=39 // pred_check
        %p228 = pneg %p33
      $region42: #{e2e_forward.32} parent=39 // pred_check_branch
        %230 = sbr.rel (%p228) target = $region44
      $region43: #{e2e_forward.32} parent=39 // pred_region
        %s231 = smul.u32 2, %s13
        %p232 = scmp.lt.s32.totalorder %s231, 3
        %s233 = scalar_select %p232, %s231, 3
        %s234 = smul.addr %s233, 8
        %s235 = scalar_lea.vmem %s0, %s234
        %s236 = smul.u32 2, %s13
      $region44: #{e2e_forward.32} parent=39 // pred_fallthru
        _
    $region40: #{e2e_forward.32} parent=5 // pred_fallthru
      _
    %p237 = scmp.le.s32.totalorder 1, %s13
    %p238 = scmp.lt.s32.totalorder %s13, 3
    %p239 = pnand %p237, %p238
    %p240 = pneg %p239
    // Predicated region
    $region45: #{e2e_forward.32} parent=5 // pred_check
      _
    $region46: #{e2e_forward.32} parent=5 // pred_check_branch
      %242 = sbr.rel (%p239) target = $region48
    $region47: #{e2e_forward.32} parent=5 // pred_region
      %s243 = ssub.s32 %s13, 1
      %s244 = smul.u32 2, %s18
      %p245 = scmp.lt.s32.totalorder %s244, 3
      %s246 = scalar_select %p245, %s244, 3
      %s247 = smul.addr %s246, 8
      %s248 = scalar_lea.vmem %s0, %s247
      %p249 = pneg %p39
      %p250 = pneg %p36
      %p251 = pneg %p60
      %p252 = pneg %p57
      %p253 = pneg %p81
      %p254 = pneg %p78
      %p255 = pneg %p102
      %p256 = pneg %p99
      %p257 = pneg %p123
      %p258 = pneg %p120
      %p259 = pneg %p144
      %p260 = pneg %p141
      %p261 = pneg %p165
      %p262 = pneg %p162
      %p263 = pneg %p191
      %p264 = pneg %p188
      %s265 = smul.u32 2, %s18
      %p266 = scmp.lt.s32.totalorder %s265, 3
      %s267 = scalar_select %p266, %s265, 3
      %s268 = smul.addr %s267, 8
      %s269 = scalar_lea.vmem %s7, %s268
      %s270 = smul.u32 2, %s18
      %p271 = scmp.lt.s32.totalorder %s270, 3
      %s272 = scalar_select %p271, %s270, 3
      %s273 = smul.addr %s272, 8
      %s274 = scalar_lea.vmem %s0, %s273
      %s275 = smul.u32 2, %s18
      %s276 = smul.u32 2, %s18
      %p277 = scmp.lt.s32.totalorder %s276, 3
      %s278 = scalar_select %p277, %s276, 3
      %s279 = smul.addr %s278, 8
      %s280 = scalar_lea.vmem %s7, %s279
      %s281 = smul.u32 2, %s18
      %v283 = vld [vmem:[%s274] sm:$0xff]
      %v284 = vld [vmem:[%s274 + $0x8] sm:$0xff]
      %vm285 = vcmask 261120
      %v286 = vsel %vm285, %v283, 0.0
      %287 = vadd.xlane.f32.xlu0 %v286
      %v288 = vpop.xlane.xlu0 %287
      %v289 = vsel %vm285, %v284, 0.0
      %290 = vadd.xlane.f32.xlu0 %v289
      %v291 = vpop.xlane.xlu0 %290
      %v292 = vrcp.pop 32.0
      %v293 = vmul.f32 %v288, %v292
      %v294 = vmul.f32 %v291, %v292
      %v295 = vsub.f32 %v283, %v293
      %v296 = vsub.f32 %v284, %v294
      %v297 = vmul.f32 %v295, %v295
      %v298 = vmul.f32 %v296, %v296
      %v299 = vsel %vm285, %v297, 0.0
      %300 = vadd.xlane.f32.xlu0 %v299
      %v301 = vpop.xlane.xlu0 %300
      %v302 = vsel %vm285, %v298, 0.0
      %303 = vadd.xlane.f32.xlu0 %v302
      %v304 = vpop.xlane.xlu0 %303
      %v305 = vmul.f32 %v301, %v292
      %v306 = vmul.f32 %v304, %v292
      %v307 = vadd.f32 %v305, 1e-12
      %v308 = vadd.f32 %v306, 1e-12
      %v309 = vrsqrt.pop %v307
      %v310 = vrsqrt.pop %v308
      %v311 = vmul.f32 %v295, %v309
      %v312 = vmul.f32 %v296, %v310
      %v313 = vld [vmem:[%s1] sm:$0x1]
      %v315 = vlaneseq
      %v316 = vshrl.u32 %v315, 7
      %v317 = vsub.s32 0, %v316
      %v318 = vrot.slane %v313, %v317
      %v320 = vmul.f32 %v311, %v318
      %v321 = vmul.f32 %v312, %v318
      %v322 = vld [vmem:[%s2] sm:$0x1]
      %v324 = vlaneseq
      %v325 = vshrl.u32 %v324, 7
      %v326 = vsub.s32 0, %v325
      %v327 = vrot.slane %v322, %v326
      %v329 = vadd.f32 %v320, %v327
      %v330 = vadd.f32 %v321, %v327
      %v331 = vpack.c.bf16 %v330, %v329
      %v332 = vld [vmem:[%s3] sm:$0xf]
      %v333 = vld [vmem:[%s3 + $0x4] sm:$0xf]
      %v334 = vld [vmem:[%s3 + $0x8] sm:$0xf]
      %v335 = vld [vmem:[%s3 + $0xc] sm:$0xf]
      %v336 = vld [vmem:[%s4] sm:$0x1]
      %v338 = vlaneseq
      %v339 = vshrl.u32 %v338, 7
      %v340 = vsub.s32 0, %v339
      %v341 = vrot.slane %v336, %v340
      %v347 = vunpack.c.l.b16 %v332
      %v348 = vunpack.c.l.b16 %v333
      %v349 = vunpack.c.l.b16 %v334
      %v350 = vunpack.c.l.b16 %v335
      %v351 = vpack.c.b16 %v348, %v347
      %v352 = vpack.c.b16 %v350, %v349
      %v356 = vsel %vm285, %v331, 0
      %358 = vmatprep.subr.bf16.mxu0 0
      %359 = vmatpush1.bf16.msra.mxu0 %v351
      %360 = vmatprep.subr.bf16.mxu0 0
      %361 = vmatpush1.bf16.msra.mxu0 %v352
      %362 = vmatprep.subr.bf16.mxu0 0
      %363 = vmatpush1.bf16.msra.mxu0 0
      %364 = vmatprep.subr.bf16.mxu0 0
      %365 = vmatpush1.bf16.msra.mxu0 0
      %366 = vmatprep.subr.bf16.mxu0 0
      %367 = vmatpush1.bf16.msra.mxu0 0
      %368 = vmatprep.subr.bf16.mxu0 0
      %369 = vmatpush1.bf16.msra.mxu0 0
      %370 = vmatprep.subr.bf16.mxu0 0
      %371 = vmatpush1.bf16.msra.mxu0 0
      %372 = vmatprep.subr.bf16.mxu0 0
      %373 = vmatpush1.bf16.msra.mxu0 0
      %374 = vmatprep.subr.bf16.mxu0 0
      %375 = vmatpush1.bf16.msra.mxu0 0
      %376 = vmatprep.subr.bf16.mxu0 0
      %377 = vmatpush1.bf16.msra.mxu0 0
      %378 = vmatprep.subr.bf16.mxu0 0
      %379 = vmatpush1.bf16.msra.mxu0 0
      %380 = vmatprep.subr.bf16.mxu0 0
      %381 = vmatpush1.bf16.msra.mxu0 0
      %382 = vmatprep.subr.bf16.mxu0 0
      %383 = vmatpush1.bf16.msra.mxu0 0
      %384 = vmatprep.subr.bf16.mxu0 0
      %385 = vmatpush1.bf16.msra.mxu0 0
      %386 = vmatprep.subr.bf16.mxu0 0
      %387 = vmatpush1.bf16.msra.mxu0 0
      %388 = vmatprep.subr.bf16.mxu0 0
      %389 = vmatpush1.bf16.msra.mxu0 0
      %390 = vmatprep.mubr.bf16.mxu0 0
      %391 = vmatmul.mubr.bf16.gmra.mrb[0].mxu0 %v356
      %v392 = vpop.f32.mrb[0].mxu0
      %v393 = vadd.f32 %v341, %v392
      %v394 = vpop.f32.mrb[0].mxu0
      %v395 = vpop.f32.mrb[0].mxu0
      %v396 = vadd.f32 %v341, %v395
      %v397 = vpop.f32.mrb[0].mxu0
      %398 = vdwg.mxu0
      %v399 = vmax.f32 %v393, 0.0
      %v400 = vmax.f32 %v396, 0.0
      %v401 = vpack.c.bf16 %v400, %v399
      %v402 = vld [vmem:[%s5] sm:$0xf]
      %v403 = vld [vmem:[%s5 + $0x4] sm:$0xf]
      %v404 = vld [vmem:[%s5 + $0x8] sm:$0xf]
      %v405 = vld [vmem:[%s5 + $0xc] sm:$0xf]
      %v406 = vld [vmem:[%s5 + $0x10] sm:$0xf]
      %v407 = vld [vmem:[%s5 + $0x14] sm:$0xf]
      %v408 = vld [vmem:[%s5 + $0x18] sm:$0xf]
      %v409 = vld [vmem:[%s5 + $0x1c] sm:$0xf]
      %v418 = vunpack.c.l.b16 %v402
      %v419 = vunpack.c.l.b16 %v403
      %v420 = vunpack.c.l.b16 %v404
      %v421 = vunpack.c.l.b16 %v405
      %v422 = vunpack.c.l.b16 %v406
      %v423 = vunpack.c.l.b16 %v407
      %v424 = vunpack.c.l.b16 %v408
      %v425 = vunpack.c.l.b16 %v409
      %v426 = vpack.c.b16 %v419, %v418
      %v427 = vpack.c.b16 %v421, %v420
      %v428 = vpack.c.b16 %v423, %v422
      %v429 = vpack.c.b16 %v425, %v424
      %vm434 = vcmask 523264
      %v436 = vsel %vm434, %v401, 0
      %438 = vmatprep.subr.bf16.mxu0 0
      %439 = vmatpush1.bf16.msra.mxu0 %v426
      %440 = vmatprep.subr.bf16.mxu0 0
      %441 = vmatpush1.bf16.msra.mxu0 %v427
      %442 = vmatprep.subr.bf16.mxu0 0
      %443 = vmatpush1.bf16.msra.mxu0 %v428
      %444 = vmatprep.subr.bf16.mxu0 0
      %445 = vmatpush1.bf16.msra.mxu0 %v429
      %446 = vmatprep.subr.bf16.mxu0 0
      %447 = vmatpush1.bf16.msra.mxu0 0
      %448 = vmatprep.subr.bf16.mxu0 0
      %449 = vmatpush1.bf16.msra.mxu0 0
      %450 = vmatprep.subr.bf16.mxu0 0
      %451 = vmatpush1.bf16.msra.mxu0 0
      %452 = vmatprep.subr.bf16.mxu0 0
      %453 = vmatpush1.bf16.msra.mxu0 0
      %454 = vmatprep.subr.bf16.mxu0 0
      %455 = vmatpush1.bf16.msra.mxu0 0
      %456 = vmatprep.subr.bf16.mxu0 0
      %457 = vmatpush1.bf16.msra.mxu0 0
      %458 = vmatprep.subr.bf16.mxu0 0
      %459 = vmatpush1.bf16.msra.mxu0 0
      %460 = vmatprep.subr.bf16.mxu0 0
      %461 = vmatpush1.bf16.msra.mxu0 0
      %462 = vmatprep.subr.bf16.mxu0 0
      %463 = vmatpush1.bf16.msra.mxu0 0
      %464 = vmatprep.subr.bf16.mxu0 0
      %465 = vmatpush1.bf16.msra.mxu0 0
      %466 = vmatprep.subr.bf16.mxu0 0
      %467 = vmatpush1.bf16.msra.mxu0 0
      %468 = vmatprep.subr.bf16.mxu0 0
      %469 = vmatpush1.bf16.msra.mxu0 0
      %470 = vmatprep.mubr.bf16.mxu0 0
      %471 = vmatmul.mubr.bf16.gmra.mrb[0].mxu0 %v436
      %v472 = vpop.f32.mrb[0].mxu0
      %v473 = vadd.f32 0.0, %v472
      %v474 = vpop.f32.mrb[0].mxu0
      %v475 = vpop.f32.mrb[0].mxu0
      %v476 = vadd.f32 0.0, %v475
      %v477 = vpop.f32.mrb[0].mxu0
      %478 = vdwg.mxu0
      %v479 = vadd.f32 %v283, %v473
      %v480 = vadd.f32 %v284, %v476
      %v481 = vld [vmem:[%s6] sm:$0x1]
      %v483 = vlaneseq
      %v484 = vshrl.u32 %v483, 7
      %v485 = vsub.s32 0, %v484
      %v486 = vrot.slane %v481, %v485
      %v488 = vadd.f32 %v479, %v486
      %v489 = vadd.f32 %v480, %v486
      %490 = vst.msk [vmem:[%s280] sm:$0xff] %vm285, %v488
      %491 = vst.msk [vmem:[%s280 + $0x8] sm:$0xff] %vm285, %v489
      %s492 = smul.u32 2, %s18
      %p493 = scmp.lt.s32.totalorder %s492, 3
      %s494 = scalar_select %p493, %s492, 3
      %s495 = smul.addr %s494, 8
      %s496 = scalar_lea.vmem %s7, %s495
      // Predicated region
      $region49: #{e2e_forward.32} parent=47 // pred_check
        %p497 = pneg %p188
      $region50: #{e2e_forward.32} parent=47 // pred_check_branch
        %499 = sbr.rel (%p497) target = $region52
      $region51: #{e2e_forward.32} parent=47 // pred_region
        %s500 = smul.u32 2, %s18
      $region52: #{e2e_forward.32} parent=47 // pred_fallthru
        _
    $region48: #{e2e_forward.32} parent=5 // pred_fallthru
      _
    %p501 = scmp.le.s32.totalorder 2, %s13
    // Predicated region
    $region53: #{e2e_forward.32} parent=5 // pred_check
      %p502 = pneg %p501
    $region54: #{e2e_forward.32} parent=5 // pred_check_branch
      %504 = sbr.rel (%p502) target = $region56
    $region55: #{e2e_forward.32} parent=5 // pred_region
      %s505 = ssub.s32 %s13, 2
      // Predicated region
      $region57: #{e2e_forward.32} parent=55 // pred_check
        %p506 = pneg %p194
      $region58: #{e2e_forward.32} parent=55 // pred_check_branch
        %508 = sbr.rel (%p506) target = $region60
      $region59: #{e2e_forward.32} parent=55 // pred_region
        %s509 = smul.u32 2, %s19
        %p510 = scmp.lt.s32.totalorder %s509, 3
        %s511 = scalar_select %p510, %s509, 3
        %s512 = smul.addr %s511, 8
        %s513 = scalar_lea.vmem %s7, %s512
      $region60: #{e2e_forward.32} parent=55 // pred_fallthru
        _
    $region56: #{e2e_forward.32} parent=5 // pred_fallthru
      _
  $region6: #{e2e_forward.32} parent=0 // loop_footer
    %s17 = sadd.s32 1, %s13
  $region7: #{e2e_forward.32} parent=0 // loop_footer_branch
    %12 = sbr.rel target = $region3
  $region8: #{e2e_forward.32} parent=0 // loop_exit
    _

// kernel: e2e_forward.43
$region0: #{e2e_forward.43}
  #allocation0 [shape = 'u32[]', space=smem, size = 0x4, offset = 0x4, fixed_abs, tag = 'smem constant byte address 0x4 - core index']
  #allocation1 [shape = 'u32[144,128]{1,0:T(1,128)}', space=vmem, size = 0x12000, scoped, tag = 'internal scratch']
  #allocation2 [shape = 's32[1]{0}', space=sflag, size = 0x4, scoped, tag = 'scoped memory for e2e_forward.43']
  #allocation3 [shape = 'u8[512]{0}', space=smem, size = 0x200, scoped, tag = 'prefetched SMEM operand 0']
  %s0 = inlined_call_operand.vmem [shape: s32[2], index: 0, kind: input, shape index: {}]
  %s1 = inlined_call_operand.vmem [shape: f32[2,7,32], index: 1, kind: input, shape index: {}]
  %s2 = inlined_call_operand.vmem [shape: f32[2,16,64], index: 2, kind: input, shape index: {}]
  %s3 = inlined_call_operand.vmem [shape: f32[2,7,32], index: 3, kind: output, shape index: {}]
  %s4 = sld [smem:[#allocation0]]
  $region41: #{e2e_forward.43} parent=0
    _
  %s6 = ssub.s32 1, %s4
  %s7 = scalar_select 0, %s6, %s4
  %s8 = sshll.u32 %s0, 4
  %s9 = int_to_ptr.vmem [resolvable:$true] %s8
  %11 = dma.vmem_to_smem %s9, 16, [#allocation3], [#allocation2]
  %12 = dma.done [#allocation2], 16
  %13 = sfence
  loop: start=0, step=1, limit=4
  $region2: #{e2e_forward.43} parent=0 // loop_pre_header
    _
  $region3: #{e2e_forward.43} parent=0 // loop_header
    %s15 = sphi 0, %s19
    %p16 = scmp.ge.s32.totalorder %s15, 4
    %s25 = sphi 0, %s27
    %s28 = sphi 0, %s25
    %s29 = sphi 0, %s28
    %s45 = sphi 0, %s29
    %s51 = sphi 0, %s53
    %s54 = sphi 0, %s51
    %s55 = sphi 0, %s54
    %s71 = sphi 0, %s55
    %s77 = sphi 0, %s79
    %s80 = sphi 0, %s77
    %s81 = sphi 0, %s80
    %s97 = sphi 0, %s81
  $region4: #{e2e_forward.43} parent=0 // loop_header_branch
    %18 = sbr.rel (%p16) target = $region8
  $region5: #{e2e_forward.43} parent=0 // loop_body
    %s20 = ssub.s32 %s15, 1
    %s21 = ssub.s32 %s15, 2
    %s22 = sadd.s32 %s15, 1
    %s23 = ssub.s32 %s15, %s22
    %p24 = scmp.eq.s32.totalorder %s23, 0
    %s26 = sadd.s32 %s25, 1
    %s27 = scalar_select %p24, %s25, %s26
    %p30 = pneg %p24
    %p31 = scmp.eq.s32.totalorder %s15, 1
    %p32 = por %p30, %p31
    %p33 = scmp.ne.s32.totalorder %s25, %s28
    %p34 = scmp.eq.s32.totalorder %s15, 0
    %p35 = por %p33, %p34
    %p36 = scmp.ne.s32.totalorder %s25, %s28
    %p37 = scmp.eq.s32.totalorder %s20, 1
    %p38 = por %p36, %p37
    %p39 = scmp.ne.s32.totalorder %s28, %s29
    %p40 = scmp.eq.s32.totalorder %s20, 0
    %p41 = por %p39, %p40
    %p42 = scmp.ne.s32.totalorder %s28, %s29
    %p43 = scmp.eq.s32.totalorder %s21, 1
    %p44 = por %p42, %p43
    %p46 = scmp.ne.s32.totalorder %s29, %s45
    %p47 = scmp.eq.s32.totalorder %s21, 0
    %p48 = por %p46, %p47
    %s49 = ssub.s32 %s15, %s22
    %p50 = scmp.eq.s32.totalorder %s49, 0
    %s52 = sadd.s32 %s51, 1
    %s53 = scalar_select %p50, %s51, %s52
    %p56 = pneg %p50
    %p57 = scmp.eq.s32.totalorder %s15, 1
    %p58 = por %p56, %p57
    %p59 = scmp.ne.s32.totalorder %s51, %s54
    %p60 = scmp.eq.s32.totalorder %s15, 0
    %p61 = por %p59, %p60
    %p62 = scmp.ne.s32.totalorder %s51, %s54
    %p63 = scmp.eq.s32.totalorder %s20, 1
    %p64 = por %p62, %p63
    %p65 = scmp.ne.s32.totalorder %s54, %s55
    %p66 = scmp.eq.s32.totalorder %s20, 0
    %p67 = por %p65, %p66
    %p68 = scmp.ne.s32.totalorder %s54, %s55
    %p69 = scmp.eq.s32.totalorder %s21, 1
    %p70 = por %p68, %p69
    %p72 = scmp.ne.s32.totalorder %s55, %s71
    %p73 = scmp.eq.s32.totalorder %s21, 0
    %p74 = por %p72, %p73
    %s75 = ssub.s32 %s15, %s22
    %p76 = scmp.eq.s32.totalorder %s75, 0
    %s78 = sadd.s32 %s77, 1
    %s79 = scalar_select %p76, %s77, %s78
    %p82 = pneg %p76
    %p83 = scmp.eq.s32.totalorder %s15, 1
    %p84 = por %p82, %p83
    %p85 = scmp.ne.s32.totalorder %s77, %s80
    %p86 = scmp.eq.s32.totalorder %s15, 0
    %p87 = por %p85, %p86
    %p88 = scmp.ne.s32.totalorder %s77, %s80
    %p89 = scmp.eq.s32.totalorder %s20, 1
    %p90 = por %p88, %p89
    %p91 = scmp.ne.s32.totalorder %s80, %s81
    %p92 = scmp.eq.s32.totalorder %s20, 0
    %p93 = por %p91, %p92
    %p94 = scmp.ne.s32.totalorder %s80, %s81
    %p95 = scmp.eq.s32.totalorder %s21, 1
    %p96 = por %p94, %p95
    %p98 = scmp.ne.s32.totalorder %s81, %s97
    %p99 = scmp.eq.s32.totalorder %s21, 0
    %p100 = por %p98, %p99
    %p101 = scmp.le.s32.totalorder 1, %s15
    %p102 = scmp.lt.s32.totalorder %s15, 3
    %p103 = pnand %p101, %p102
    %p104 = pneg %p103
    // Predicated region
    $region9: #{e2e_forward.43} parent=5 // pred_check
      _
    $region10: #{e2e_forward.43} parent=5 // pred_check_branch
      %106 = sbr.rel (%p103) target = $region12
    $region11: #{e2e_forward.43} parent=5 // pred_region
      %s107 = ssub.s32 %s15, 1
    $region12: #{e2e_forward.43} parent=5 // pred_fallthru
      _
    %p108 = scmp.lt.s32.totalorder %s15, 2
    // Predicated region
    $region13: #{e2e_forward.43} parent=5 // pred_check
      %p109 = pneg %p108
    $region14: #{e2e_forward.43} parent=5 // pred_check_branch
      %111 = sbr.rel (%p109) target = $region16
    $region15: #{e2e_forward.43} parent=5 // pred_region
      // Predicated region
      $region17: #{e2e_forward.43} parent=15 // pred_check
        %p112 = pneg %p35
      $region18: #{e2e_forward.43} parent=15 // pred_check_branch
        %114 = sbr.rel (%p112) target = $region20
      $region19: #{e2e_forward.43} parent=15 // pred_region
        %p115 = scmp.lt.s32.totalorder %s15, 1
        %s116 = scalar_select %p115, %s15, 1
        %s117 = smul.addr %s116, 8
        %s118 = scalar_lea.vmem %s1, %s117
      $region20: #{e2e_forward.43} parent=15 // pred_fallthru
        _
      // Predicated region
      $region21: #{e2e_forward.43} parent=15 // pred_check
        %p119 = pneg %p61
      $region22: #{e2e_forward.43} parent=15 // pred_check_branch
        %121 = sbr.rel (%p119) target = $region24
      $region23: #{e2e_forward.43} parent=15 // pred_region
        %p122 = scmp.lt.s32.totalorder %s15, 1
        %s123 = scalar_select %p122, %s15, 1
        %s124 = smul.addr %s123, 2
        %s125 = smul.addr %s124, 8
        %s126 = scalar_lea.vmem %s2, %s125
      $region24: #{e2e_forward.43} parent=15 // pred_fallthru
        _
    $region16: #{e2e_forward.43} parent=5 // pred_fallthru
      _
    %p127 = scmp.le.s32.totalorder 1, %s15
    %p128 = scmp.lt.s32.totalorder %s15, 3
    %p129 = pnand %p127, %p128
    %p130 = pneg %p129
    // Predicated region
    $region25: #{e2e_forward.43} parent=5 // pred_check
      _
    $region26: #{e2e_forward.43} parent=5 // pred_check_branch
      %132 = sbr.rel (%p129) target = $region28
    $region27: #{e2e_forward.43} parent=5 // pred_region
      %s133 = ssub.s32 %s15, 1
      %p134 = scmp.lt.s32.totalorder %s20, 1
      %s135 = scalar_select %p134, %s20, 1
      %s136 = smul.addr %s135, 8
      %s137 = scalar_lea.vmem %s1, %s136
      %p138 = pneg %p41
      %p139 = pneg %p38
      %p140 = scmp.lt.s32.totalorder %s20, 1
      %s141 = scalar_select %p140, %s20, 1
      %s142 = smul.addr %s141, 2
      %s143 = smul.addr %s142, 8
      %s144 = scalar_lea.vmem %s2, %s143
      %p145 = pneg %p67
      %p146 = pneg %p64
      %p147 = pneg %p93
      %p148 = pneg %p90
      %p149 = scmp.lt.s32.totalorder %s20, 1
      %s150 = scalar_select %p149, %s20, 1
      %s151 = smul.addr %s150, 8
      %s152 = scalar_lea.vmem %s3, %s151
      %p153 = scmp.lt.s32.totalorder %s20, 1
      %s154 = scalar_select %p153, %s20, 1
      %s155 = smul.addr %s154, 8
      %s156 = scalar_lea.vmem %s1, %s155
      %p157 = scmp.lt.s32.totalorder %s20, 1
      %s158 = scalar_select %p157, %s20, 1
      %s159 = smul.addr %s158, 2
      %s160 = smul.addr %s159, 8
      %s161 = scalar_lea.vmem %s2, %s160
      %p162 = scmp.lt.s32.totalorder %s20, 1
      %s163 = scalar_select %p162, %s20, 1
      %s164 = smul.addr %s163, 8
      %s165 = scalar_lea.vmem %s3, %s164
      %s167 = sld [smem:[#allocation3 + %s20]]
      %v168 = vlaneseq
      %v169 = vand.u32 %v168, 127
      %v170 = vstv %s167
      %vm171 = vcmp.lt.s32.totalorder %v169, %v170
      %v172 = vsel %vm171, 0.0, -1e+30
      %v173 = vsel %vm171, 1, 0
      %v174 = vcvt.s32.f32 %v173
      %v175 = vld [vmem:[%s156] sm:$0x7f]
      %v176 = vmul.f32 %v175, 0.35355338
      %v177 = vld [vmem:[%s161] sm:$0xff]
      %v178 = vld [vmem:[%s161 + $0x8] sm:$0xff]
      %v179 = vpack.c.bf16 %v176, %v176
      %v180 = vpack.c.bf16 %v178, %v177
      %vm181 = vcmask 64512
      %v183 = vsel %vm181, %v179, 0
      %v186 = vsel %vm181, %v180, 0
      %188 = vmatprep.subr.bf16.mxu0 0
      %189 = vmatpush1.bf16.xpose.msra.mxu0 %v186
      %190 = vmatprep.subr.bf16.mxu0 0
      %191 = vmatpush1.bf16.xpose.msra.mxu0 0
      %192 = vmatprep.subr.bf16.mxu0 0
      %193 = vmatpush1.bf16.xpose.msra.mxu0 0
      %194 = vmatprep.subr.bf16.mxu0 0
      %195 = vmatpush1.bf16.xpose.msra.mxu0 0
      %196 = vmatprep.subr.bf16.mxu0 0
      %197 = vmatpush1.bf16.xpose.msra.mxu0 0
      %198 = vmatprep.subr.bf16.mxu0 0
      %199 = vmatpush1.bf16.xpose.msra.mxu0 0
      %200 = vmatprep.subr.bf16.mxu0 0
      %201 = vmatpush1.bf16.xpose.msra.mxu0 0
      %202 = vmatprep.subr.bf16.mxu0 0
      %203 = vmatpush1.bf16.xpose.msra.mxu0 0
      %204 = vmatprep.subr.bf16.mxu0 0
      %205 = vmatpush1.bf16.xpose.msra.mxu0 0
      %206 = vmatprep.subr.bf16.mxu0 0
      %207 = vmatpush1.bf16.xpose.msra.mxu0 0
      %208 = vmatprep.subr.bf16.mxu0 0
      %209 = vmatpush1.bf16.xpose.msra.mxu0 0
      %210 = vmatprep.subr.bf16.mxu0 0
      %211 = vmatpush1.bf16.xpose.msra.mxu0 0
      %212 = vmatprep.subr.bf16.mxu0 0
      %213 = vmatpush1.bf16.xpose.msra.mxu0 0
      %214 = vmatprep.subr.bf16.mxu0 0
      %215 = vmatpush1.bf16.xpose.msra.mxu0 0
      %216 = vmatprep.subr.bf16.mxu0 0
      %217 = vmatpush1.bf16.xpose.msra.mxu0 0
      %218 = vmatprep.subr.bf16.mxu0 0
      %219 = vmatpush1.bf16.xpose.msra.mxu0 0
      %220 = vmatprep.mubr.bf16.mxu0 0
      %221 = vmatmul.mubr.bf16.gmra.mrb[0].mxu0 %v183
      %v222 = vpop.f32.mrb[0].mxu0
      %v223 = vadd.f32 %v172, %v222
      %v224 = vpop.f32.mrb[0].mxu0
      %v225 = vpop.f32.mrb[0].mxu0
      %v226 = vpop.f32.mrb[0].mxu0
      %227 = vdwg.mxu0
      %vm228 = vcmask 129024
      %v229 = vsel %vm228, %v223, -inf
      %230 = vmax.xlane.f32.xlu0 %v229
      %v231 = vpop.xlane.xlu0 %230
      %v232 = vsub.f32 %v223, %v231
      %v233 = vmul.f32 %v232, 1.442695
      %v234 = vpow.pop %v233
      %v235 = vmul.f32 %v234, %v174
      %v236 = vsel %vm228, %v235, 0.0
      %237 = vadd.xlane.f32.xlu0 %v236
      %v238 = vpop.xlane.xlu0 %237
      %v239 = vmax.f32 %v238, 1e-30
      %v240 = vrcp.pop %v239
      %v241 = vmul.f32 %v235, %v240
      %v242 = vpack.c.bf16 %v241, %v241
      %244 = vrot.lane.b32.xlu0 %v180, 96
      %v245 = vpop.permute.xlu0 %244
      %vm247 = vcmask 130048
      %v249 = vsel %vm247, %v242, 0
      %251 = vmatprep.subr.bf16.mxu0 0
      %252 = vmatpush1.bf16.msra.mxu0 %v245
      %253 = vmatprep.subr.bf16.mxu0 0
      %254 = vmatpush1.bf16.msra.mxu0 0
      %255 = vmatprep.subr.bf16.mxu0 0
      %256 = vmatpush1.bf16.msra.mxu0 0
      %257 = vmatprep.subr.bf16.mxu0 0
      %258 = vmatpush1.bf16.msra.mxu0 0
      %259 = vmatprep.subr.bf16.mxu0 0
      %260 = vmatpush1.bf16.msra.mxu0 0
      %261 = vmatprep.subr.bf16.mxu0 0
      %262 = vmatpush1.bf16.msra.mxu0 0
      %263 = vmatprep.subr.bf16.mxu0 0
      %264 = vmatpush1.bf16.msra.mxu0 0
      %265 = vmatprep.subr.bf16.mxu0 0
      %266 = vmatpush1.bf16.msra.mxu0 0
      %267 = vmatprep.subr.bf16.mxu0 0
      %268 = vmatpush1.bf16.msra.mxu0 0
      %269 = vmatprep.subr.bf16.mxu0 0
      %270 = vmatpush1.bf16.msra.mxu0 0
      %271 = vmatprep.subr.bf16.mxu0 0
      %272 = vmatpush1.bf16.msra.mxu0 0
      %273 = vmatprep.subr.bf16.mxu0 0
      %274 = vmatpush1.bf16.msra.mxu0 0
      %275 = vmatprep.subr.bf16.mxu0 0
      %276 = vmatpush1.bf16.msra.mxu0 0
      %277 = vmatprep.subr.bf16.mxu0 0
      %278 = vmatpush1.bf16.msra.mxu0 0
      %279 = vmatprep.subr.bf16.mxu0 0
      %280 = vmatpush1.bf16.msra.mxu0 0
      %281 = vmatprep.subr.bf16.mxu0 0
      %282 = vmatpush1.bf16.msra.mxu0 0
      %283 = vmatprep.mubr.bf16.mxu0 0
      %284 = vmatmul.mubr.bf16.gmra.mrb[0].mxu0 %v249
      %v285 = vpop.f32.mrb[0].mxu0
      %v286 = vadd.f32 0.0, %v285
      %v287 = vpop.f32.mrb[0].mxu0
      %v288 = vpop.f32.mrb[0].mxu0
      %v289 = vpop.f32.mrb[0].mxu0
      %290 = vdwg.mxu0
      %292 = vrot.lane.b32.xlu0 %v179, 120
      %v293 = vpop.permute.xlu0 %292
      %294 = vrot.lane.b32.xlu0 %v180, 120
      %v295 = vpop.permute.xlu0 %294
      %v297 = vsel %vm181, %v293, 0
      %v300 = vsel %vm181, %v295, 0
      %302 = vmatprep.subr.bf16.mxu0 0
      %303 = vmatpush1.bf16.xpose.msra.mxu0 %v300
      %304 = vmatprep.subr.bf16.mxu0 0
      %305 = vmatpush1.bf16.xpose.msra.mxu0 0
      %306 = vmatprep.subr.bf16.mxu0 0
      %307 = vmatpush1.bf16.xpose.msra.mxu0 0
      %308 = vmatprep.subr.bf16.mxu0 0
      %309 = vmatpush1.bf16.xpose.msra.mxu0 0
      %310 = vmatprep.subr.bf16.mxu0 0
      %311 = vmatpush1.bf16.xpose.msra.mxu0 0
      %312 = vmatprep.subr.bf16.mxu0 0
      %313 = vmatpush1.bf16.xpose.msra.mxu0 0
      %314 = vmatprep.subr.bf16.mxu0 0
      %315 = vmatpush1.bf16.xpose.msra.mxu0 0
      %316 = vmatprep.subr.bf16.mxu0 0
      %317 = vmatpush1.bf16.xpose.msra.mxu0 0
      %318 = vmatprep.subr.bf16.mxu0 0
      %319 = vmatpush1.bf16.xpose.msra.mxu0 0
      %320 = vmatprep.subr.bf16.mxu0 0
      %321 = vmatpush1.bf16.xpose.msra.mxu0 0
      %322 = vmatprep.subr.bf16.mxu0 0
      %323 = vmatpush1.bf16.xpose.msra.mxu0 0
      %324 = vmatprep.subr.bf16.mxu0 0
      %325 = vmatpush1.bf16.xpose.msra.mxu0 0
      %326 = vmatprep.subr.bf16.mxu0 0
      %327 = vmatpush1.bf16.xpose.msra.mxu0 0
      %328 = vmatprep.subr.bf16.mxu0 0
      %329 = vmatpush1.bf16.xpose.msra.mxu0 0
      %330 = vmatprep.subr.bf16.mxu0 0
      %331 = vmatpush1.bf16.xpose.msra.mxu0 0
      %332 = vmatprep.subr.bf16.mxu0 0
      %333 = vmatpush1.bf16.xpose.msra.mxu0 0
      %334 = vmatprep.mubr.bf16.mxu0 0
      %335 = vmatmul.mubr.bf16.gmra.mrb[0].mxu0 %v297
      %v336 = vpop.f32.mrb[0].mxu0
      %v337 = vadd.f32 %v172, %v336
      %v338 = vpop.f32.mrb[0].mxu0
      %v339 = vpop.f32.mrb[0].mxu0
      %v340 = vpop.f32.mrb[0].mxu0
      %341 = vdwg.mxu0
      %v342 = vsel %vm228, %v337, -inf
      %343 = vmax.xlane.f32.xlu0 %v342
      %v344 = vpop.xlane.xlu0 %343
      %v345 = vsub.f32 %v337, %v344
      %v346 = vmul.f32 %v345, 1.442695
      %v347 = vpow.pop %v346
      %v348 = vmul.f32 %v347, %v174
      %v349 = vsel %vm228, %v348, 0.0
      %350 = vadd.xlane.f32.xlu0 %v349
      %v351 = vpop.xlane.xlu0 %350
      %v352 = vmax.f32 %v351, 1e-30
      %v353 = vrcp.pop %v352
      %v354 = vmul.f32 %v348, %v353
      %v355 = vpack.c.bf16 %v354, %v354
      %356 = vrot.lane.b32.xlu0 %v180, 88
      %v357 = vpop.permute.xlu0 %356
      %v360 = vsel %vm247, %v355, 0
      %362 = vmatprep.subr.bf16.mxu0 0
      %363 = vmatpush1.bf16.msra.mxu0 %v357
      %364 = vmatprep.subr.bf16.mxu0 0
      %365 = vmatpush1.bf16.msra.mxu0 0
      %366 = vmatprep.subr.bf16.mxu0 0
      %367 = vmatpush1.bf16.msra.mxu0 0
      %368 = vmatprep.subr.bf16.mxu0 0
      %369 = vmatpush1.bf16.msra.mxu0 0
      %370 = vmatprep.subr.bf16.mxu0 0
      %371 = vmatpush1.bf16.msra.mxu0 0
      %372 = vmatprep.subr.bf16.mxu0 0
      %373 = vmatpush1.bf16.msra.mxu0 0
      %374 = vmatprep.subr.bf16.mxu0 0
      %375 = vmatpush1.bf16.msra.mxu0 0
      %376 = vmatprep.subr.bf16.mxu0 0
      %377 = vmatpush1.bf16.msra.mxu0 0
      %378 = vmatprep.subr.bf16.mxu0 0
      %379 = vmatpush1.bf16.msra.mxu0 0
      %380 = vmatprep.subr.bf16.mxu0 0
      %381 = vmatpush1.bf16.msra.mxu0 0
      %382 = vmatprep.subr.bf16.mxu0 0
      %383 = vmatpush1.bf16.msra.mxu0 0
      %384 = vmatprep.subr.bf16.mxu0 0
      %385 = vmatpush1.bf16.msra.mxu0 0
      %386 = vmatprep.subr.bf16.mxu0 0
      %387 = vmatpush1.bf16.msra.mxu0 0
      %388 = vmatprep.subr.bf16.mxu0 0
      %389 = vmatpush1.bf16.msra.mxu0 0
      %390 = vmatprep.subr.bf16.mxu0 0
      %391 = vmatpush1.bf16.msra.mxu0 0
      %392 = vmatprep.subr.bf16.mxu0 0
      %393 = vmatpush1.bf16.msra.mxu0 0
      %394 = vmatprep.mubr.bf16.mxu0 0
      %395 = vmatmul.mubr.bf16.gmra.mrb[0].mxu0 %v360
      %v396 = vpop.f32.mrb[0].mxu0
      %v397 = vadd.f32 0.0, %v396
      %v398 = vpop.f32.mrb[0].mxu0
      %v399 = vpop.f32.mrb[0].mxu0
      %v400 = vpop.f32.mrb[0].mxu0
      %401 = vdwg.mxu0
      %402 = vrot.lane.b32.xlu0 %v179, 112
      %v403 = vpop.permute.xlu0 %402
      %404 = vrot.lane.b32.xlu0 %v180, 112
      %v405 = vpop.permute.xlu0 %404
      %v407 = vsel %vm181, %v403, 0
      %v410 = vsel %vm181, %v405, 0
      %412 = vmatprep.subr.bf16.mxu0 0
      %413 = vmatpush1.bf16.xpose.msra.mxu0 %v410
      %414 = vmatprep.subr.bf16.mxu0 0
      %415 = vmatpush1.bf16.xpose.msra.mxu0 0
      %416 = vmatprep.subr.bf16.mxu0 0
      %417 = vmatpush1.bf16.xpose.msra.mxu0 0
      %418 = vmatprep.subr.bf16.mxu0 0
      %419 = vmatpush1.bf16.xpose.msra.mxu0 0
      %420 = vmatprep.subr.bf16.mxu0 0
      %421 = vmatpush1.bf16.xpose.msra.mxu0 0
      %422 = vmatprep.subr.bf16.mxu0 0
      %423 = vmatpush1.bf16.xpose.msra.mxu0 0
      %424 = vmatprep.subr.bf16.mxu0 0
      %425 = vmatpush1.bf16.xpose.msra.mxu0 0
      %426 = vmatprep.subr.bf16.mxu0 0
      %427 = vmatpush1.bf16.xpose.msra.mxu0 0
      %428 = vmatprep.subr.bf16.mxu0 0
      %429 = vmatpush1.bf16.xpose.msra.mxu0 0
      %430 = vmatprep.subr.bf16.mxu0 0
      %431 = vmatpush1.bf16.xpose.msra.mxu0 0
      %432 = vmatprep.subr.bf16.mxu0 0
      %433 = vmatpush1.bf16.xpose.msra.mxu0 0
      %434 = vmatprep.subr.bf16.mxu0 0
      %435 = vmatpush1.bf16.xpose.msra.mxu0 0
      %436 = vmatprep.subr.bf16.mxu0 0
      %437 = vmatpush1.bf16.xpose.msra.mxu0 0
      %438 = vmatprep.subr.bf16.mxu0 0
      %439 = vmatpush1.bf16.xpose.msra.mxu0 0
      %440 = vmatprep.subr.bf16.mxu0 0
      %441 = vmatpush1.bf16.xpose.msra.mxu0 0
      %442 = vmatprep.subr.bf16.mxu0 0
      %443 = vmatpush1.bf16.xpose.msra.mxu0 0
      %444 = vmatprep.mubr.bf16.mxu0 0
      %445 = vmatmul.mubr.bf16.gmra.mrb[0].mxu0 %v407
      %v446 = vpop.f32.mrb[0].mxu0
      %v447 = vadd.f32 %v172, %v446
      %v448 = vpop.f32.mrb[0].mxu0
      %v449 = vpop.f32.mrb[0].mxu0
      %v450 = vpop.f32.mrb[0].mxu0
      %451 = vdwg.mxu0
      %v452 = vsel %vm228, %v447, -inf
      %453 = vmax.xlane.f32.xlu0 %v452
      %v454 = vpop.xlane.xlu0 %453
      %v455 = vsub.f32 %v447, %v454
      %v456 = vmul.f32 %v455, 1.442695
      %v457 = vpow.pop %v456
      %v458 = vmul.f32 %v457, %v174
      %v459 = vsel %vm228, %v458, 0.0
      %460 = vadd.xlane.f32.xlu0 %v459
      %v461 = vpop.xlane.xlu0 %460
      %v462 = vmax.f32 %v461, 1e-30
      %v463 = vrcp.pop %v462
      %v464 = vmul.f32 %v458, %v463
      %v465 = vpack.c.bf16 %v464, %v464
      %466 = vrot.lane.b32.xlu0 %v180, 80
      %v467 = vpop.permute.xlu0 %466
      %v470 = vsel %vm247, %v465, 0
      %472 = vmatprep.subr.bf16.mxu0 0
      %473 = vmatpush1.bf16.msra.mxu0 %v467
      %474 = vmatprep.subr.bf16.mxu0 0
      %475 = vmatpush1.bf16.msra.mxu0 0
      %476 = vmatprep.subr.bf16.mxu0 0
      %477 = vmatpush1.bf16.msra.mxu0 0
      %478 = vmatprep.subr.bf16.mxu0 0
      %479 = vmatpush1.bf16.msra.mxu0 0
      %480 = vmatprep.subr.bf16.mxu0 0
      %481 = vmatpush1.bf16.msra.mxu0 0
      %482 = vmatprep.subr.bf16.mxu0 0
      %483 = vmatpush1.bf16.msra.mxu0 0
      %484 = vmatprep.subr.bf16.mxu0 0
      %485 = vmatpush1.bf16.msra.mxu0 0
      %486 = vmatprep.subr.bf16.mxu0 0
      %487 = vmatpush1.bf16.msra.mxu0 0
      %488 = vmatprep.subr.bf16.mxu0 0
      %489 = vmatpush1.bf16.msra.mxu0 0
      %490 = vmatprep.subr.bf16.mxu0 0
      %491 = vmatpush1.bf16.msra.mxu0 0
      %492 = vmatprep.subr.bf16.mxu0 0
      %493 = vmatpush1.bf16.msra.mxu0 0
      %494 = vmatprep.subr.bf16.mxu0 0
      %495 = vmatpush1.bf16.msra.mxu0 0
      %496 = vmatprep.subr.bf16.mxu0 0
      %497 = vmatpush1.bf16.msra.mxu0 0
      %498 = vmatprep.subr.bf16.mxu0 0
      %499 = vmatpush1.bf16.msra.mxu0 0
      %500 = vmatprep.subr.bf16.mxu0 0
      %501 = vmatpush1.bf16.msra.mxu0 0
      %502 = vmatprep.subr.bf16.mxu0 0
      %503 = vmatpush1.bf16.msra.mxu0 0
      %504 = vmatprep.mubr.bf16.mxu0 0
      %505 = vmatmul.mubr.bf16.gmra.mrb[0].mxu0 %v470
      %v506 = vpop.f32.mrb[0].mxu0
      %v507 = vadd.f32 0.0, %v506
      %v508 = vpop.f32.mrb[0].mxu0
      %v509 = vpop.f32.mrb[0].mxu0
      %v510 = vpop.f32.mrb[0].mxu0
      %511 = vdwg.mxu0
      %512 = vrot.lane.b32.xlu0 %v179, 104
      %v513 = vpop.permute.xlu0 %512
      %514 = vrot.lane.b32.xlu0 %v180, 104
      %v515 = vpop.permute.xlu0 %514
      %v517 = vsel %vm181, %v513, 0
      %v520 = vsel %vm181, %v515, 0
      %522 = vmatprep.subr.bf16.mxu0 0
      %523 = vmatpush1.bf16.xpose.msra.mxu0 %v520
      %524 = vmatprep.subr.bf16.mxu0 0
      %525 = vmatpush1.bf16.xpose.msra.mxu0 0
      %526 = vmatprep.subr.bf16.mxu0 0
      %527 = vmatpush1.bf16.xpose.msra.mxu0 0
      %528 = vmatprep.subr.bf16.mxu0 0
      %529 = vmatpush1.bf16.xpose.msra.mxu0 0
      %530 = vmatprep.subr.bf16.mxu0 0
      %531 = vmatpush1.bf16.xpose.msra.mxu0 0
      %532 = vmatprep.subr.bf16.mxu0 0
      %533 = vmatpush1.bf16.xpose.msra.mxu0 0
      %534 = vmatprep.subr.bf16.mxu0 0
      %535 = vmatpush1.bf16.xpose.msra.mxu0 0
      %536 = vmatprep.subr.bf16.mxu0 0
      %537 = vmatpush1.bf16.xpose.msra.mxu0 0
      %538 = vmatprep.subr.bf16.mxu0 0
      %539 = vmatpush1.bf16.xpose.msra.mxu0 0
      %540 = vmatprep.subr.bf16.mxu0 0
      %541 = vmatpush1.bf16.xpose.msra.mxu0 0
      %542 = vmatprep.subr.bf16.mxu0 0
      %543 = vmatpush1.bf16.xpose.msra.mxu0 0
      %544 = vmatprep.subr.bf16.mxu0 0
      %545 = vmatpush1.bf16.xpose.msra.mxu0 0
      %546 = vmatprep.subr.bf16.mxu0 0
      %547 = vmatpush1.bf16.xpose.msra.mxu0 0
      %548 = vmatprep.subr.bf16.mxu0 0
      %549 = vmatpush1.bf16.xpose.msra.mxu0 0
      %550 = vmatprep.subr.bf16.mxu0 0
      %551 = vmatpush1.bf16.xpose.msra.mxu0 0
      %552 = vmatprep.subr.bf16.mxu0 0
      %553 = vmatpush1.bf16.xpose.msra.mxu0 0
      %554 = vmatprep.mubr.bf16.mxu0 0
      %555 = vmatmul.mubr.bf16.gmra.mrb[0].mxu0 %v517
      %v556 = vpop.f32.mrb[0].mxu0
      %v557 = vadd.f32 %v172, %v556
      %v558 = vpop.f32.mrb[0].mxu0
      %v559 = vpop.f32.mrb[0].mxu0
      %v560 = vpop.f32.mrb[0].mxu0
      %561 = vdwg.mxu0
      %v562 = vsel %vm228, %v557, -inf
      %563 = vmax.xlane.f32.xlu0 %v562
      %v564 = vpop.xlane.xlu0 %563
      %v565 = vsub.f32 %v557, %v564
      %v566 = vmul.f32 %v565, 1.442695
      %v567 = vpow.pop %v566
      %v568 = vmul.f32 %v567, %v174
      %v569 = vsel %vm228, %v568, 0.0
      %570 = vadd.xlane.f32.xlu0 %v569
      %v571 = vpop.xlane.xlu0 %570
      %v572 = vmax.f32 %v571, 1e-30
      %v573 = vrcp.pop %v572
      %v574 = vmul.f32 %v568, %v573
      %v575 = vpack.c.bf16 %v574, %v574
      %576 = vrot.lane.b32.xlu0 %v180, 72
      %v577 = vpop.permute.xlu0 %576
      %v580 = vsel %vm247, %v575, 0
      %582 = vmatprep.subr.bf16.mxu0 0
      %583 = vmatpush1.bf16.msra.mxu0 %v577
      %584 = vmatprep.subr.bf16.mxu0 0
      %585 = vmatpush1.bf16.msra.mxu0 0
      %586 = vmatprep.subr.bf16.mxu0 0
      %587 = vmatpush1.bf16.msra.mxu0 0
      %588 = vmatprep.subr.bf16.mxu0 0
      %589 = vmatpush1.bf16.msra.mxu0 0
      %590 = vmatprep.subr.bf16.mxu0 0
      %591 = vmatpush1.bf16.msra.mxu0 0
      %592 = vmatprep.subr.bf16.mxu0 0
      %593 = vmatpush1.bf16.msra.mxu0 0
      %594 = vmatprep.subr.bf16.mxu0 0
      %595 = vmatpush1.bf16.msra.mxu0 0
      %596 = vmatprep.subr.bf16.mxu0 0
      %597 = vmatpush1.bf16.msra.mxu0 0
      %598 = vmatprep.subr.bf16.mxu0 0
      %599 = vmatpush1.bf16.msra.mxu0 0
      %600 = vmatprep.subr.bf16.mxu0 0
      %601 = vmatpush1.bf16.msra.mxu0 0
      %602 = vmatprep.subr.bf16.mxu0 0
      %603 = vmatpush1.bf16.msra.mxu0 0
      %604 = vmatprep.subr.bf16.mxu0 0
      %605 = vmatpush1.bf16.msra.mxu0 0
      %606 = vmatprep.subr.bf16.mxu0 0
      %607 = vmatpush1.bf16.msra.mxu0 0
      %608 = vmatprep.subr.bf16.mxu0 0
      %609 = vmatpush1.bf16.msra.mxu0 0
      %610 = vmatprep.subr.bf16.mxu0 0
      %611 = vmatpush1.bf16.msra.mxu0 0
      %612 = vmatprep.subr.bf16.mxu0 0
      %613 = vmatpush1.bf16.msra.mxu0 0
      %614 = vmatprep.mubr.bf16.mxu0 0
      %615 = vmatmul.mubr.bf16.gmra.mrb[0].mxu0 %v580
      %v616 = vpop.f32.mrb[0].mxu0
      %v617 = vadd.f32 0.0, %v616
      %v618 = vpop.f32.mrb[0].mxu0
      %v619 = vpop.f32.mrb[0].mxu0
      %v620 = vpop.f32.mrb[0].mxu0
      %621 = vdwg.mxu0
      %623 = vrot.lane.b32.xlu0 %v397, 8
      %v624 = vpop.permute.xlu0 %623
      %627 = vrot.lane.b32.xlu0 %v507, 16
      %v628 = vpop.permute.xlu0 %627
      %631 = vrot.lane.b32.xlu0 %v617, 24
      %v632 = vpop.permute.xlu0 %631
      %v634 = vsel %vm181, %v286, %v624
      %v635 = vsel %vm247, %v634, %v628
      %vm636 = vcmask 195584
      %v637 = vsel %vm636, %v635, %v632
      %vm638 = vcmask 260096
      %639 = vst.msk [vmem:[%s165] sm:$0x7f] %vm638, %v637
      %p640 = scmp.lt.s32.totalorder %s20, 1
      %s641 = scalar_select %p640, %s20, 1
      %s642 = smul.addr %s641, 8
      %s643 = scalar_lea.vmem %s3, %s642
      // Predicated region
      $region29: #{e2e_forward.43} parent=27 // pred_check
        %p644 = pneg %p90
      $region30: #{e2e_forward.43} parent=27 // pred_check_branch
        %646 = sbr.rel (%p644) target = $region32
      $region31: #{e2e_forward.43} parent=27 // pred_region
        _
      $region32: #{e2e_forward.43} parent=27 // pred_fallthru
        _
    $region28: #{e2e_forward.43} parent=5 // pred_fallthru
      _
    %p647 = scmp.le.s32.totalorder 2, %s15
    // Predicated region
    $region33: #{e2e_forward.43} parent=5 // pred_check
      %p648 = pneg %p647
    $region34: #{e2e_forward.43} parent=5 // pred_check_branch
      %650 = sbr.rel (%p648) target = $region36
    $region35: #{e2e_forward.43} parent=5 // pred_region
      %s651 = ssub.s32 %s15, 2
      // Predicated region
      $region37: #{e2e_forward.43} parent=35 // pred_check
        %p652 = pneg %p96
      $region38: #{e2e_forward.43} parent=35 // pred_check_branch
        %654 = sbr.rel (%p652) target = $region40
      $region39: #{e2e_forward.43} parent=35 // pred_region
        %p655 = scmp.lt.s32.totalorder %s21, 1
        %s656 = scalar_select %p655, %s21, 1
        %s657 = smul.addr %s656, 8
        %s658 = scalar_lea.vmem %s3, %s657
      $region40: #{e2e_forward.43} parent=35 // pred_fallthru
        _
    $region36: #{e2e_forward.43} parent=5 // pred_fallthru
      _
  $region6: #{e2e_forward.43} parent=0 // loop_footer
    %s19 = sadd.s32 1, %s15
  $region7: #{e2e_forward.43} parent=0 // loop_footer_branch
    %14 = sbr.rel target = $region3
  $region8: #{e2e_forward.43} parent=0 // loop_exit
    _

// kernel: e2e_forward.54
$region0: #{e2e_forward.54}
  #allocation0 [shape = 'u32[]', space=smem, size = 0x4, offset = 0x4, fixed_abs, tag = 'smem constant byte address 0x4 - core index']
  #allocation1 [shape = 'u32[144,128]{1,0:T(1,128)}', space=vmem, size = 0x12000, scoped, tag = 'internal scratch']
  %s0 = inlined_call_operand.vmem [shape: f32[16,32], index: 0, kind: input, shape index: {}]
  %s1 = inlined_call_operand.vmem [shape: f32[1,32], index: 1, kind: input, shape index: {}]
  %s2 = inlined_call_operand.vmem [shape: f32[1,32], index: 2, kind: input, shape index: {}]
  %s3 = inlined_call_operand.vmem [shape: bf16[32,128], index: 3, kind: input, shape index: {}]
  %s4 = inlined_call_operand.vmem [shape: f32[1,128], index: 4, kind: input, shape index: {}]
  %s5 = inlined_call_operand.vmem [shape: f32[16,128], index: 5, kind: output, shape index: {}]
  %s6 = sld [smem:[#allocation0]]
  $region53: #{e2e_forward.54} parent=0
    _
  %s8 = ssub.s32 1, %s6
  %s9 = scalar_select 0, %s8, %s6
  loop: start=0, step=1, limit=4
  $region2: #{e2e_forward.54} parent=0 // loop_pre_header
    _
  $region3: #{e2e_forward.54} parent=0 // loop_header
    %s11 = sphi 0, %s15
    %p12 = scmp.ge.s32.totalorder %s11, 4
    %s18 = sphi 0, %s30
    %s19 = sphi 0, %s26
    %s20 = sphi 0, %s18
    %s21 = sphi 0, %s19
    %s22 = sphi 0, %s20
    %s23 = sphi 0, %s21
    %s33 = sphi 0, %s35
    %s36 = sphi 0, %s33
    %s37 = sphi 0, %s36
    %s53 = sphi 0, %s37
    %s57 = sphi 0, %s57
    %s59 = sphi 0, %s57
    %s60 = sphi 0, %s59
    %s74 = sphi 0, %s60
    %s78 = sphi 0, %s78
    %s80 = sphi 0, %s78
    %s81 = sphi 0, %s80
    %s95 = sphi 0, %s81
    %s101 = sphi 0, %s103
    %s104 = sphi 0, %s101
    %s105 = sphi 0, %s104
    %s121 = sphi 0, %s105
    %s127 = sphi 0, %s129
    %s130 = sphi 0, %s127
    %s131 = sphi 0, %s130
    %s147 = sphi 0, %s131
    %s155 = sphi 0, %s157
    %s158 = sphi 0, %s155
    %s159 = sphi 0, %s158
    %s175 = sphi 0, %s159
  $region4: #{e2e_forward.54} parent=0 // loop_header_branch
    %14 = sbr.rel (%p12) target = $region8
  $region5: #{e2e_forward.54} parent=0 // loop_body
    %s16 = ssub.s32 %s11, 1
    %s17 = ssub.s32 %s11, 2
    %s24 = sadd.s32 1, %s19
    %p25 = scmp.ge.s32.totalorder %s24, 1
    %s26 = scalar_select %p25, 0, %s24
    %s27 = sadd.s32 1, %s18
    %s28 = scalar_select %p25, %s27, %s18
    %p29 = scmp.ge.s32.totalorder %s28, 2
    %s30 = scalar_select %p29, 0, %s28
    %s31 = ssub.s32 %s18, %s30
    %p32 = scmp.eq.s32.totalorder %s31, 0
    %s34 = sadd.s32 %s33, 1
    %s35 = scalar_select %p32, %s33, %s34
    %p38 = pneg %p32
    %p39 = scmp.eq.s32.totalorder %s11, 1
    %p40 = por %p38, %p39
    %p41 = scmp.ne.s32.totalorder %s33, %s36
    %p42 = scmp.eq.s32.totalorder %s11, 0
    %p43 = por %p41, %p42
    %p44 = scmp.ne.s32.totalorder %s33, %s36
    %p45 = scmp.eq.s32.totalorder %s16, 1
    %p46 = por %p44, %p45
    %p47 = scmp.ne.s32.totalorder %s36, %s37
    %p48 = scmp.eq.s32.totalorder %s16, 0
    %p49 = por %p47, %p48
    %p50 = scmp.ne.s32.totalorder %s36, %s37
    %p51 = scmp.eq.s32.totalorder %s17, 1
    %p52 = por %p50, %p51
    %p54 = scmp.ne.s32.totalorder %s37, %s53
    %p55 = scmp.eq.s32.totalorder %s17, 0
    %p56 = por %p54, %p55
    %s58 = sadd.s32 %s57, 1
    %p61 = scmp.eq.s32.totalorder %s11, 1
    %p62 = scmp.ne.s32.totalorder %s57, %s59
    %p63 = scmp.eq.s32.totalorder %s11, 0
    %p64 = por %p62, %p63
    %p65 = scmp.ne.s32.totalorder %s57, %s59
    %p66 = scmp.eq.s32.totalorder %s16, 1
    %p67 = por %p65, %p66
    %p68 = scmp.ne.s32.totalorder %s59, %s60
    %p69 = scmp.eq.s32.totalorder %s16, 0
    %p70 = por %p68, %p69
    %p71 = scmp.ne.s32.totalorder %s59, %s60
    %p72 = scmp.eq.s32.totalorder %s17, 1
    %p73 = por %p71, %p72
    %p75 = scmp.ne.s32.totalorder %s60, %s74
    %p76 = scmp.eq.s32.totalorder %s17, 0
    %p77 = por %p75, %p76
    %s79 = sadd.s32 %s78, 1
    %p82 = scmp.eq.s32.totalorder %s11, 1
    %p83 = scmp.ne.s32.totalorder %s78, %s80
    %p84 = scmp.eq.s32.totalorder %s11, 0
    %p85 = por %p83, %p84
    %p86 = scmp.ne.s32.totalorder %s78, %s80
    %p87 = scmp.eq.s32.totalorder %s16, 1
    %p88 = por %p86, %p87
    %p89 = scmp.ne.s32.totalorder %s80, %s81
    %p90 = scmp.eq.s32.totalorder %s16, 0
    %p91 = por %p89, %p90
    %p92 = scmp.ne.s32.totalorder %s80, %s81
    %p93 = scmp.eq.s32.totalorder %s17, 1
    %p94 = por %p92, %p93
    %p96 = scmp.ne.s32.totalorder %s81, %s95
    %p97 = scmp.eq.s32.totalorder %s17, 0
    %p98 = por %p96, %p97
    %s99 = ssub.s32 %s19, %s26
    %p100 = scmp.eq.s32.totalorder %s99, 0
    %s102 = sadd.s32 %s101, 1
    %s103 = scalar_select %p100, %s101, %s102
    %p106 = pneg %p100
    %p107 = scmp.eq.s32.totalorder %s11, 1
    %p108 = por %p106, %p107
    %p109 = scmp.ne.s32.totalorder %s101, %s104
    %p110 = scmp.eq.s32.totalorder %s11, 0
    %p111 = por %p109, %p110
    %p112 = scmp.ne.s32.totalorder %s101, %s104
    %p113 = scmp.eq.s32.totalorder %s16, 1
    %p114 = por %p112, %p113
    %p115 = scmp.ne.s32.totalorder %s104, %s105
    %p116 = scmp.eq.s32.totalorder %s16, 0
    %p117 = por %p115, %p116
    %p118 = scmp.ne.s32.totalorder %s104, %s105
    %p119 = scmp.eq.s32.totalorder %s17, 1
    %p120 = por %p118, %p119
    %p122 = scmp.ne.s32.totalorder %s105, %s121
    %p123 = scmp.eq.s32.totalorder %s17, 0
    %p124 = por %p122, %p123
    %s125 = ssub.s32 %s19, %s26
    %p126 = scmp.eq.s32.totalorder %s125, 0
    %s128 = sadd.s32 %s127, 1
    %s129 = scalar_select %p126, %s127, %s128
    %p132 = pneg %p126
    %p133 = scmp.eq.s32.totalorder %s11, 1
    %p134 = por %p132, %p133
    %p135 = scmp.ne.s32.totalorder %s127, %s130
    %p136 = scmp.eq.s32.totalorder %s11, 0
    %p137 = por %p135, %p136
    %p138 = scmp.ne.s32.totalorder %s127, %s130
    %p139 = scmp.eq.s32.totalorder %s16, 1
    %p140 = por %p138, %p139
    %p141 = scmp.ne.s32.totalorder %s130, %s131
    %p142 = scmp.eq.s32.totalorder %s16, 0
    %p143 = por %p141, %p142
    %p144 = scmp.ne.s32.totalorder %s130, %s131
    %p145 = scmp.eq.s32.totalorder %s17, 1
    %p146 = por %p144, %p145
    %p148 = scmp.ne.s32.totalorder %s131, %s147
    %p149 = scmp.eq.s32.totalorder %s17, 0
    %p150 = por %p148, %p149
    %s151 = ssub.s32 %s18, %s30
    %s152 = ssub.s32 %s19, %s26
    %s153 = sor.u32 %s151, %s152
    %p154 = scmp.eq.s32.totalorder %s153, 0
    %s156 = sadd.s32 %s155, 1
    %s157 = scalar_select %p154, %s155, %s156
    %p160 = pneg %p154
    %p161 = scmp.eq.s32.totalorder %s11, 1
    %p162 = por %p160, %p161
    %p163 = scmp.ne.s32.totalorder %s155, %s158
    %p164 = scmp.eq.s32.totalorder %s11, 0
    %p165 = por %p163, %p164
    %p166 = scmp.ne.s32.totalorder %s155, %s158
    %p167 = scmp.eq.s32.totalorder %s16, 1
    %p168 = por %p166, %p167
    %p169 = scmp.ne.s32.totalorder %s158, %s159
    %p170 = scmp.eq.s32.totalorder %s16, 0
    %p171 = por %p169, %p170
    %p172 = scmp.ne.s32.totalorder %s158, %s159
    %p173 = scmp.eq.s32.totalorder %s17, 1
    %p174 = por %p172, %p173
    %p176 = scmp.ne.s32.totalorder %s159, %s175
    %p177 = scmp.eq.s32.totalorder %s17, 0
    %p178 = por %p176, %p177
    %p179 = scmp.le.s32.totalorder 1, %s11
    %p180 = scmp.lt.s32.totalorder %s11, 3
    %p181 = pnand %p179, %p180
    %p182 = pneg %p181
    // Predicated region
    $region9: #{e2e_forward.54} parent=5 // pred_check
      _
    $region10: #{e2e_forward.54} parent=5 // pred_check_branch
      %184 = sbr.rel (%p181) target = $region12
    $region11: #{e2e_forward.54} parent=5 // pred_region
      %s185 = ssub.s32 %s11, 1
      // Predicated region
      $region13: #{e2e_forward.54} parent=11 // pred_check
        %p186 = pneg %p70
      $region14: #{e2e_forward.54} parent=11 // pred_check_branch
        %188 = sbr.rel (%p186) target = $region16
      $region15: #{e2e_forward.54} parent=11 // pred_region
        _
      $region16: #{e2e_forward.54} parent=11 // pred_fallthru
        _
      // Predicated region
      $region17: #{e2e_forward.54} parent=11 // pred_check
        %p189 = pneg %p91
      $region18: #{e2e_forward.54} parent=11 // pred_check_branch
        %191 = sbr.rel (%p189) target = $region20
      $region19: #{e2e_forward.54} parent=11 // pred_region
        _
      $region20: #{e2e_forward.54} parent=11 // pred_fallthru
        _
      // Predicated region
      $region21: #{e2e_forward.54} parent=11 // pred_check
        %p192 = pneg %p117
      $region22: #{e2e_forward.54} parent=11 // pred_check_branch
        %194 = sbr.rel (%p192) target = $region24
      $region23: #{e2e_forward.54} parent=11 // pred_region
        %p195 = scmp.lt.s32.totalorder %s21, 0
        %s196 = scalar_select %p195, %s21, 0
        %s197 = smul.addr %s196, 4
        %s198 = scalar_lea.vmem %s3, %s197
      $region24: #{e2e_forward.54} parent=11 // pred_fallthru
        _
      // Predicated region
      $region25: #{e2e_forward.54} parent=11 // pred_check
        %p199 = pneg %p143
      $region26: #{e2e_forward.54} parent=11 // pred_check_branch
        %201 = sbr.rel (%p199) target = $region28
      $region27: #{e2e_forward.54} parent=11 // pred_region
        %p202 = scmp.lt.s32.totalorder %s21, 0
        %s203 = scalar_select %p202, %s21, 0
        %s204 = scalar_lea.vmem %s4, %s203
      $region28: #{e2e_forward.54} parent=11 // pred_fallthru
        _
    $region12: #{e2e_forward.54} parent=5 // pred_fallthru
      _
    %p205 = scmp.lt.s32.totalorder %s11, 2
    // Predicated region
    $region29: #{e2e_forward.54} parent=5 // pred_check
      %p206 = pneg %p205
    $region30: #{e2e_forward.54} parent=5 // pred_check_branch
      %208 = sbr.rel (%p206) target = $region32
    $region31: #{e2e_forward.54} parent=5 // pred_region
      // Predicated region
      $region33: #{e2e_forward.54} parent=31 // pred_check
        %p209 = pneg %p43
      $region34: #{e2e_forward.54} parent=31 // pred_check_branch
        %211 = sbr.rel (%p209) target = $region36
      $region35: #{e2e_forward.54} parent=31 // pred_region
        %p212 = scmp.lt.s32.totalorder %s18, 1
        %s213 = scalar_select %p212, %s18, 1
        %s214 = smul.addr %s213, 8
        %s215 = scalar_lea.vmem %s0, %s214
      $region36: #{e2e_forward.54} parent=31 // pred_fallthru
        _
    $region32: #{e2e_forward.54} parent=5 // pred_fallthru
      _
    %p216 = scmp.le.s32.totalorder 1, %s11
    %p217 = scmp.lt.s32.totalorder %s11, 3
    %p218 = pnand %p216, %p217
    %p219 = pneg %p218
    // Predicated region
    $region37: #{e2e_forward.54} parent=5 // pred_check
      _
    $region38: #{e2e_forward.54} parent=5 // pred_check_branch
      %221 = sbr.rel (%p218) target = $region40
    $region39: #{e2e_forward.54} parent=5 // pred_region
      %s222 = ssub.s32 %s11, 1
      %p223 = scmp.lt.s32.totalorder %s20, 1
      %s224 = scalar_select %p223, %s20, 1
      %s225 = smul.addr %s224, 8
      %s226 = scalar_lea.vmem %s0, %s225
      %p227 = pneg %p49
      %p228 = pneg %p46
      %p229 = pneg %p70
      %p230 = pneg %p67
      %p231 = pneg %p91
      %p232 = pneg %p88
      %p233 = scmp.lt.s32.totalorder %s21, 0
      %s234 = scalar_select %p233, %s21, 0
      %s235 = smul.addr %s234, 4
      %s236 = scalar_lea.vmem %s3, %s235
      %p237 = pneg %p117
      %p238 = pneg %p114
      %p239 = scmp.lt.s32.totalorder %s21, 0
      %s240 = scalar_select %p239, %s21, 0
      %s241 = scalar_lea.vmem %s4, %s240
      %p242 = pneg %p143
      %p243 = pneg %p140
      %p244 = pneg %p171
      %p245 = pneg %p168
      %p246 = scmp.lt.s32.totalorder %s20, 1
      %s247 = scalar_select %p246, %s20, 1
      %p248 = scmp.lt.s32.totalorder %s21, 0
      %s249 = scalar_select %p248, %s21, 0
      %s250 = sadd.s32 %s249, %s247
      %s251 = smul.addr %s250, 8
      %s252 = scalar_lea.vmem %s5, %s251
      %p253 = scmp.lt.s32.totalorder %s20, 1
      %s254 = scalar_select %p253, %s20, 1
      %s255 = smul.addr %s254, 8
      %s256 = scalar_lea.vmem %s0, %s255
      %p257 = scmp.lt.s32.totalorder %s21, 0
      %s258 = scalar_select %p257, %s21, 0
      %s259 = smul.addr %s258, 4
      %s260 = scalar_lea.vmem %s3, %s259
      %p261 = scmp.lt.s32.totalorder %s21, 0
      %s262 = scalar_select %p261, %s21, 0
      %s263 = scalar_lea.vmem %s4, %s262
      %p264 = scmp.lt.s32.totalorder %s20, 1
      %s265 = scalar_select %p264, %s20, 1
      %p266 = scmp.lt.s32.totalorder %s21, 0
      %s267 = scalar_select %p266, %s21, 0
      %s268 = sadd.s32 %s267, %s265
      %s269 = smul.addr %s268, 8
      %s270 = scalar_lea.vmem %s5, %s269
      %v272 = vld [vmem:[%s256] sm:$0xff]
      %vm273 = vcmask 261120
      %v274 = vsel %vm273, %v272, 0.0
      %275 = vadd.xlane.f32.xlu0 %v274
      %v276 = vpop.xlane.xlu0 %275
      %v277 = vrcp.pop 32.0
      %v278 = vmul.f32 %v276, %v277
      %v279 = vsub.f32 %v272, %v278
      %v280 = vmul.f32 %v279, %v279
      %v281 = vsel %vm273, %v280, 0.0
      %282 = vadd.xlane.f32.xlu0 %v281
      %v283 = vpop.xlane.xlu0 %282
      %v284 = vmul.f32 %v283, %v277
      %v285 = vadd.f32 %v284, 1e-12
      %v286 = vrsqrt.pop %v285
      %v287 = vmul.f32 %v279, %v286
      %v288 = vld [vmem:[%s1] sm:$0x1]
      %v290 = vlaneseq
      %v291 = vshrl.u32 %v290, 7
      %v292 = vsub.s32 0, %v291
      %v293 = vrot.slane %v288, %v292
      %v295 = vmul.f32 %v287, %v293
      %v296 = vld [vmem:[%s2] sm:$0x1]
      %v298 = vlaneseq
      %v299 = vshrl.u32 %v298, 7
      %v300 = vsub.s32 0, %v299
      %v301 = vrot.slane %v296, %v300
      %v303 = vadd.f32 %v295, %v301
      %v304 = vpack.c.bf16 %v303, %v303
      %v305 = vld [vmem:[%s260] sm:$0xf]
      %v306 = vld [vmem:[%s260 + $0x4] sm:$0xf]
      %v307 = vld [vmem:[%s260 + $0x8] sm:$0xf]
      %v308 = vld [vmem:[%s260 + $0xc] sm:$0xf]
      %v309 = vld [vmem:[%s263] sm:$0x1]
      %v311 = vlaneseq
      %v312 = vshrl.u32 %v311, 7
      %v313 = vsub.s32 0, %v312
      %v314 = vrot.slane %v309, %v313
      %v320 = vunpack.c.l.b16 %v305
      %v321 = vunpack.c.l.b16 %v306
      %v322 = vunpack.c.l.b16 %v307
      %v323 = vunpack.c.l.b16 %v308
      %v324 = vpack.c.b16 %v321, %v320
      %v325 = vpack.c.b16 %v323, %v322
      %v329 = vsel %vm273, %v304, 0
      %331 = vmatprep.subr.bf16.mxu0 0
      %332 = vmatpush1.bf16.msra.mxu0 %v324
      %333 = vmatprep.subr.bf16.mxu0 0
      %334 = vmatpush1.bf16.msra.mxu0 %v325
      %335 = vmatprep.subr.bf16.mxu0 0
      %336 = vmatpush1.bf16.msra.mxu0 0
      %337 = vmatprep.subr.bf16.mxu0 0
      %338 = vmatpush1.bf16.msra.mxu0 0
      %339 = vmatprep.subr.bf16.mxu0 0
      %340 = vmatpush1.bf16.msra.mxu0 0
      %341 = vmatprep.subr.bf16.mxu0 0
      %342 = vmatpush1.bf16.msra.mxu0 0
      %343 = vmatprep.subr.bf16.mxu0 0
      %344 = vmatpush1.bf16.msra.mxu0 0
      %345 = vmatprep.subr.bf16.mxu0 0
      %346 = vmatpush1.bf16.msra.mxu0 0
      %347 = vmatprep.subr.bf16.mxu0 0
      %348 = vmatpush1.bf16.msra.mxu0 0
      %349 = vmatprep.subr.bf16.mxu0 0
      %350 = vmatpush1.bf16.msra.mxu0 0
      %351 = vmatprep.subr.bf16.mxu0 0
      %352 = vmatpush1.bf16.msra.mxu0 0
      %353 = vmatprep.subr.bf16.mxu0 0
      %354 = vmatpush1.bf16.msra.mxu0 0
      %355 = vmatprep.subr.bf16.mxu0 0
      %356 = vmatpush1.bf16.msra.mxu0 0
      %357 = vmatprep.subr.bf16.mxu0 0
      %358 = vmatpush1.bf16.msra.mxu0 0
      %359 = vmatprep.subr.bf16.mxu0 0
      %360 = vmatpush1.bf16.msra.mxu0 0
      %361 = vmatprep.subr.bf16.mxu0 0
      %362 = vmatpush1.bf16.msra.mxu0 0
      %363 = vmatprep.mubr.bf16.mxu0 0
      %364 = vmatmul.mubr.bf16.gmra.mrb[0].mxu0 %v329
      %v365 = vpop.f32.mrb[0].mxu0
      %v366 = vadd.f32 %v314, %v365
      %v367 = vpop.f32.mrb[0].mxu0
      %v368 = vpop.f32.mrb[0].mxu0
      %v369 = vpop.f32.mrb[0].mxu0
      %370 = vdwg.mxu0
      %371 = vst [vmem:[%s270] sm:$0xff] %v366
      %p372 = scmp.lt.s32.totalorder %s20, 1
      %s373 = scalar_select %p372, %s20, 1
      %p374 = scmp.lt.s32.totalorder %s21, 0
      %s375 = scalar_select %p374, %s21, 0
      %s376 = sadd.s32 %s375, %s373
      %s377 = smul.addr %s376, 8
      %s378 = scalar_lea.vmem %s5, %s377
      // Predicated region
      $region41: #{e2e_forward.54} parent=39 // pred_check
        %p379 = pneg %p168
      $region42: #{e2e_forward.54} parent=39 // pred_check_branch
        %381 = sbr.rel (%p379) target = $region44
      $region43: #{e2e_forward.54} parent=39 // pred_region
        _
      $region44: #{e2e_forward.54} parent=39 // pred_fallthru
        _
    $region40: #{e2e_forward.54} parent=5 // pred_fallthru
      _
    %p382 = scmp.le.s32.totalorder 2, %s11
    // Predicated region
    $region45: #{e2e_forward.54} parent=5 // pred_check
      %p383 = pneg %p382
    $region46: #{e2e_forward.54} parent=5 // pred_check_branch
      %385 = sbr.rel (%p383) target = $region48
    $region47: #{e2e_forward.54} parent=5 // pred_region
      %s386 = ssub.s32 %s11, 2
      // Predicated region
      $region49: #{e2e_forward.54} parent=47 // pred_check
        %p387 = pneg %p174
      $region50: #{e2e_forward.54} parent=47 // pred_check_branch
        %389 = sbr.rel (%p387) target = $region52
      $region51: #{e2e_forward.54} parent=47 // pred_region
        %p390 = scmp.lt.s32.totalorder %s22, 1
        %s391 = scalar_select %p390, %s22, 1
        %p392 = scmp.lt.s32.totalorder %s23, 0
        %s393 = scalar_select %p392, %s23, 0
        %s394 = sadd.s32 %s393, %s391
        %s395 = smul.addr %s394, 8
        %s396 = scalar_lea.vmem %s5, %s395
      $region52: #{e2e_forward.54} parent=47 // pred_fallthru
        _
    $region48: #{e2e_forward.54} parent=5 // pred_fallthru
      _
  $region6: #{e2e_forward.54} parent=0 // loop_footer
    %s15 = sadd.s32 1, %s11
  $region7: #{e2e_forward.54} parent=0 // loop_footer_branch
    %10 = sbr.rel target = $region3
  $region8: #{e2e_forward.54} parent=0 // loop_exit
    _

// kernel: e2e_forward.45
$region0: #{e2e_forward.45}
  #allocation0 [shape = 'u32[]', space=smem, size = 0x4, offset = 0x4, fixed_abs, tag = 'smem constant byte address 0x4 - core index']
  #allocation1 [shape = 'u32[144,128]{1,0:T(1,128)}', space=vmem, size = 0x12000, scoped, tag = 'internal scratch']
  %s0 = inlined_call_operand.vmem [shape: f32[16,32], index: 0, kind: input, shape index: {}]
  %s1 = inlined_call_operand.vmem [shape: f32[1,32], index: 1, kind: input, shape index: {}]
  %s2 = inlined_call_operand.vmem [shape: f32[1,32], index: 2, kind: input, shape index: {}]
  %s3 = inlined_call_operand.vmem [shape: bf16[32,64], index: 3, kind: input, shape index: {}]
  %s4 = inlined_call_operand.vmem [shape: f32[1,64], index: 4, kind: input, shape index: {}]
  %s5 = inlined_call_operand.vmem [shape: bf16[64,32], index: 5, kind: input, shape index: {}]
  %s6 = inlined_call_operand.vmem [shape: f32[1,32], index: 6, kind: input, shape index: {}]
  %s7 = inlined_call_operand.vmem [shape: f32[16,32], index: 7, kind: output, shape index: {}]
  %s8 = sld [smem:[#allocation0]]
  $region61: #{e2e_forward.45} parent=0
    _
  %s10 = ssub.s32 1, %s8
  %s11 = scalar_select 0, %s10, %s8
  loop: start=0, step=1, limit=4
  $region2: #{e2e_forward.45} parent=0 // loop_pre_header
    _
  $region3: #{e2e_forward.45} parent=0 // loop_header
    %s13 = sphi 0, %s17
    %p14 = scmp.ge.s32.totalorder %s13, 4
    %s23 = sphi 0, %s25
    %s26 = sphi 0, %s23
    %s27 = sphi 0, %s26
    %s43 = sphi 0, %s27
    %s47 = sphi 0, %s47
    %s49 = sphi 0, %s47
    %s50 = sphi 0, %s49
    %s64 = sphi 0, %s50
    %s68 = sphi 0, %s68
    %s70 = sphi 0, %s68
    %s71 = sphi 0, %s70
    %s85 = sphi 0, %s71
    %s89 = sphi 0, %s89
    %s91 = sphi 0, %s89
    %s92 = sphi 0, %s91
    %s106 = sphi 0, %s92
    %s110 = sphi 0, %s110
    %s112 = sphi 0, %s110
    %s113 = sphi 0, %s112
    %s127 = sphi 0, %s113
    %s131 = sphi 0, %s131
    %s133 = sphi 0, %s131
    %s134 = sphi 0, %s133
    %s148 = sphi 0, %s134
    %s152 = sphi 0, %s152
    %s154 = sphi 0, %s152
    %s155 = sphi 0, %s154
    %s169 = sphi 0, %s155
    %s175 = sphi 0, %s177
    %s178 = sphi 0, %s175
    %s179 = sphi 0, %s178
    %s195 = sphi 0, %s179
  $region4: #{e2e_forward.45} parent=0 // loop_header_branch
    %16 = sbr.rel (%p14) target = $region8
  $region5: #{e2e_forward.45} parent=0 // loop_body
    %s18 = ssub.s32 %s13, 1
    %s19 = ssub.s32 %s13, 2
    %s20 = sadd.s32 %s13, 1
    %s21 = ssub.s32 %s13, %s20
    %p22 = scmp.eq.s32.totalorder %s21, 0
    %s24 = sadd.s32 %s23, 1
    %s25 = scalar_select %p22, %s23, %s24
    %p28 = pneg %p22
    %p29 = scmp.eq.s32.totalorder %s13, 1
    %p30 = por %p28, %p29
    %p31 = scmp.ne.s32.totalorder %s23, %s26
    %p32 = scmp.eq.s32.totalorder %s13, 0
    %p33 = por %p31, %p32
    %p34 = scmp.ne.s32.totalorder %s23, %s26
    %p35 = scmp.eq.s32.totalorder %s18, 1
    %p36 = por %p34, %p35
    %p37 = scmp.ne.s32.totalorder %s26, %s27
    %p38 = scmp.eq.s32.totalorder %s18, 0
    %p39 = por %p37, %p38
    %p40 = scmp.ne.s32.totalorder %s26, %s27
    %p41 = scmp.eq.s32.totalorder %s19, 1
    %p42 = por %p40, %p41
    %p44 = scmp.ne.s32.totalorder %s27, %s43
    %p45 = scmp.eq.s32.totalorder %s19, 0
    %p46 = por %p44, %p45
    %s48 = sadd.s32 %s47, 1
    %p51 = scmp.eq.s32.totalorder %s13, 1
    %p52 = scmp.ne.s32.totalorder %s47, %s49
    %p53 = scmp.eq.s32.totalorder %s13, 0
    %p54 = por %p52, %p53
    %p55 = scmp.ne.s32.totalorder %s47, %s49
    %p56 = scmp.eq.s32.totalorder %s18, 1
    %p57 = por %p55, %p56
    %p58 = scmp.ne.s32.totalorder %s49, %s50
    %p59 = scmp.eq.s32.totalorder %s18, 0
    %p60 = por %p58, %p59
    %p61 = scmp.ne.s32.totalorder %s49, %s50
    %p62 = scmp.eq.s32.totalorder %s19, 1
    %p63 = por %p61, %p62
    %p65 = scmp.ne.s32.totalorder %s50, %s64
    %p66 = scmp.eq.s32.totalorder %s19, 0
    %p67 = por %p65, %p66
    %s69 = sadd.s32 %s68, 1
    %p72 = scmp.eq.s32.totalorder %s13, 1
    %p73 = scmp.ne.s32.totalorder %s68, %s70
    %p74 = scmp.eq.s32.totalorder %s13, 0
    %p75 = por %p73, %p74
    %p76 = scmp.ne.s32.totalorder %s68, %s70
    %p77 = scmp.eq.s32.totalorder %s18, 1
    %p78 = por %p76, %p77
    %p79 = scmp.ne.s32.totalorder %s70, %s71
    %p80 = scmp.eq.s32.totalorder %s18, 0
    %p81 = por %p79, %p80
    %p82 = scmp.ne.s32.totalorder %s70, %s71
    %p83 = scmp.eq.s32.totalorder %s19, 1
    %p84 = por %p82, %p83
    %p86 = scmp.ne.s32.totalorder %s71, %s85
    %p87 = scmp.eq.s32.totalorder %s19, 0
    %p88 = por %p86, %p87
    %s90 = sadd.s32 %s89, 1
    %p93 = scmp.eq.s32.totalorder %s13, 1
    %p94 = scmp.ne.s32.totalorder %s89, %s91
    %p95 = scmp.eq.s32.totalorder %s13, 0
    %p96 = por %p94, %p95
    %p97 = scmp.ne.s32.totalorder %s89, %s91
    %p98 = scmp.eq.s32.totalorder %s18, 1
    %p99 = por %p97, %p98
    %p100 = scmp.ne.s32.totalorder %s91, %s92
    %p101 = scmp.eq.s32.totalorder %s18, 0
    %p102 = por %p100, %p101
    %p103 = scmp.ne.s32.totalorder %s91, %s92
    %p104 = scmp.eq.s32.totalorder %s19, 1
    %p105 = por %p103, %p104
    %p107 = scmp.ne.s32.totalorder %s92, %s106
    %p108 = scmp.eq.s32.totalorder %s19, 0
    %p109 = por %p107, %p108
    %s111 = sadd.s32 %s110, 1
    %p114 = scmp.eq.s32.totalorder %s13, 1
    %p115 = scmp.ne.s32.totalorder %s110, %s112
    %p116 = scmp.eq.s32.totalorder %s13, 0
    %p117 = por %p115, %p116
    %p118 = scmp.ne.s32.totalorder %s110, %s112
    %p119 = scmp.eq.s32.totalorder %s18, 1
    %p120 = por %p118, %p119
    %p121 = scmp.ne.s32.totalorder %s112, %s113
    %p122 = scmp.eq.s32.totalorder %s18, 0
    %p123 = por %p121, %p122
    %p124 = scmp.ne.s32.totalorder %s112, %s113
    %p125 = scmp.eq.s32.totalorder %s19, 1
    %p126 = por %p124, %p125
    %p128 = scmp.ne.s32.totalorder %s113, %s127
    %p129 = scmp.eq.s32.totalorder %s19, 0
    %p130 = por %p128, %p129
    %s132 = sadd.s32 %s131, 1
    %p135 = scmp.eq.s32.totalorder %s13, 1
    %p136 = scmp.ne.s32.totalorder %s131, %s133
    %p137 = scmp.eq.s32.totalorder %s13, 0
    %p138 = por %p136, %p137
    %p139 = scmp.ne.s32.totalorder %s131, %s133
    %p140 = scmp.eq.s32.totalorder %s18, 1
    %p141 = por %p139, %p140
    %p142 = scmp.ne.s32.totalorder %s133, %s134
    %p143 = scmp.eq.s32.totalorder %s18, 0
    %p144 = por %p142, %p143
    %p145 = scmp.ne.s32.totalorder %s133, %s134
    %p146 = scmp.eq.s32.totalorder %s19, 1
    %p147 = por %p145, %p146
    %p149 = scmp.ne.s32.totalorder %s134, %s148
    %p150 = scmp.eq.s32.totalorder %s19, 0
    %p151 = por %p149, %p150
    %s153 = sadd.s32 %s152, 1
    %p156 = scmp.eq.s32.totalorder %s13, 1
    %p157 = scmp.ne.s32.totalorder %s152, %s154
    %p158 = scmp.eq.s32.totalorder %s13, 0
    %p159 = por %p157, %p158
    %p160 = scmp.ne.s32.totalorder %s152, %s154
    %p161 = scmp.eq.s32.totalorder %s18, 1
    %p162 = por %p160, %p161
    %p163 = scmp.ne.s32.totalorder %s154, %s155
    %p164 = scmp.eq.s32.totalorder %s18, 0
    %p165 = por %p163, %p164
    %p166 = scmp.ne.s32.totalorder %s154, %s155
    %p167 = scmp.eq.s32.totalorder %s19, 1
    %p168 = por %p166, %p167
    %p170 = scmp.ne.s32.totalorder %s155, %s169
    %p171 = scmp.eq.s32.totalorder %s19, 0
    %p172 = por %p170, %p171
    %s173 = ssub.s32 %s13, %s20
    %p174 = scmp.eq.s32.totalorder %s173, 0
    %s176 = sadd.s32 %s175, 1
    %s177 = scalar_select %p174, %s175, %s176
    %p180 = pneg %p174
    %p181 = scmp.eq.s32.totalorder %s13, 1
    %p182 = por %p180, %p181
    %p183 = scmp.ne.s32.totalorder %s175, %s178
    %p184 = scmp.eq.s32.totalorder %s13, 0
    %p185 = por %p183, %p184
    %p186 = scmp.ne.s32.totalorder %s175, %s178
    %p187 = scmp.eq.s32.totalorder %s18, 1
    %p188 = por %p186, %p187
    %p189 = scmp.ne.s32.totalorder %s178, %s179
    %p190 = scmp.eq.s32.totalorder %s18, 0
    %p191 = por %p189, %p190
    %p192 = scmp.ne.s32.totalorder %s178, %s179
    %p193 = scmp.eq.s32.totalorder %s19, 1
    %p194 = por %p192, %p193
    %p196 = scmp.ne.s32.totalorder %s179, %s195
    %p197 = scmp.eq.s32.totalorder %s19, 0
    %p198 = por %p196, %p197
    %p199 = scmp.le.s32.totalorder 1, %s13
    %p200 = scmp.lt.s32.totalorder %s13, 3
    %p201 = pnand %p199, %p200
    %p202 = pneg %p201
    // Predicated region
    $region9: #{e2e_forward.45} parent=5 // pred_check
      _
    $region10: #{e2e_forward.45} parent=5 // pred_check_branch
      %204 = sbr.rel (%p201) target = $region12
    $region11: #{e2e_forward.45} parent=5 // pred_region
      %s205 = ssub.s32 %s13, 1
      // Predicated region
      $region13: #{e2e_forward.45} parent=11 // pred_check
        %p206 = pneg %p60
      $region14: #{e2e_forward.45} parent=11 // pred_check_branch
        %208 = sbr.rel (%p206) target = $region16
      $region15: #{e2e_forward.45} parent=11 // pred_region
        _
      $region16: #{e2e_forward.45} parent=11 // pred_fallthru
        _
      // Predicated region
      $region17: #{e2e_forward.45} parent=11 // pred_check
        %p209 = pneg %p81
      $region18: #{e2e_forward.45} parent=11 // pred_check_branch
        %211 = sbr.rel (%p209) target = $region20
      $region19: #{e2e_forward.45} parent=11 // pred_region
        _
      $region20: #{e2e_forward.45} parent=11 // pred_fallthru
        _
      // Predicated region
      $region21: #{e2e_forward.45} parent=11 // pred_check
        %p212 = pneg %p102
      $region22: #{e2e_forward.45} parent=11 // pred_check_branch
        %214 = sbr.rel (%p212) target = $region24
      $region23: #{e2e_forward.45} parent=11 // pred_region
        _
      $region24: #{e2e_forward.45} parent=11 // pred_fallthru
        _
      // Predicated region
      $region25: #{e2e_forward.45} parent=11 // pred_check
        %p215 = pneg %p123
      $region26: #{e2e_forward.45} parent=11 // pred_check_branch
        %217 = sbr.rel (%p215) target = $region28
      $region27: #{e2e_forward.45} parent=11 // pred_region
        _
      $region28: #{e2e_forward.45} parent=11 // pred_fallthru
        _
      // Predicated region
      $region29: #{e2e_forward.45} parent=11 // pred_check
        %p218 = pneg %p144
      $region30: #{e2e_forward.45} parent=11 // pred_check_branch
        %220 = sbr.rel (%p218) target = $region32
      $region31: #{e2e_forward.45} parent=11 // pred_region
        _
      $region32: #{e2e_forward.45} parent=11 // pred_fallthru
        _
      // Predicated region
      $region33: #{e2e_forward.45} parent=11 // pred_check
        %p221 = pneg %p165
      $region34: #{e2e_forward.45} parent=11 // pred_check_branch
        %223 = sbr.rel (%p221) target = $region36
      $region35: #{e2e_forward.45} parent=11 // pred_region
        _
      $region36: #{e2e_forward.45} parent=11 // pred_fallthru
        _
    $region12: #{e2e_forward.45} parent=5 // pred_fallthru
      _
    %p224 = scmp.lt.s32.totalorder %s13, 2
    // Predicated region
    $region37: #{e2e_forward.45} parent=5 // pred_check
      %p225 = pneg %p224
    $region38: #{e2e_forward.45} parent=5 // pred_check_branch
      %227 = sbr.rel (%p225) target = $region40
    $region39: #{e2e_forward.45} parent=5 // pred_region
      // Predicated region
      $region41: #{e2e_forward.45} parent=39 // pred_check
        %p228 = pneg %p33
      $region42: #{e2e_forward.45} parent=39 // pred_check_branch
        %230 = sbr.rel (%p228) target = $region44
      $region43: #{e2e_forward.45} parent=39 // pred_region
        %p231 = scmp.lt.s32.totalorder %s13, 1
        %s232 = scalar_select %p231, %s13, 1
        %s233 = smul.addr %s232, 8
        %s234 = scalar_lea.vmem %s0, %s233
      $region44: #{e2e_forward.45} parent=39 // pred_fallthru
        _
    $region40: #{e2e_forward.45} parent=5 // pred_fallthru
      _
    %p235 = scmp.le.s32.totalorder 1, %s13
    %p236 = scmp.lt.s32.totalorder %s13, 3
    %p237 = pnand %p235, %p236
    %p238 = pneg %p237
    // Predicated region
    $region45: #{e2e_forward.45} parent=5 // pred_check
      _
    $region46: #{e2e_forward.45} parent=5 // pred_check_branch
      %240 = sbr.rel (%p237) target = $region48
    $region47: #{e2e_forward.45} parent=5 // pred_region
      %s241 = ssub.s32 %s13, 1
      %p242 = scmp.lt.s32.totalorder %s18, 1
      %s243 = scalar_select %p242, %s18, 1
      %s244 = smul.addr %s243, 8
      %s245 = scalar_lea.vmem %s0, %s244
      %p246 = pneg %p39
      %p247 = pneg %p36
      %p248 = pneg %p60
      %p249 = pneg %p57
      %p250 = pneg %p81
      %p251 = pneg %p78
      %p252 = pneg %p102
      %p253 = pneg %p99
      %p254 = pneg %p123
      %p255 = pneg %p120
      %p256 = pneg %p144
      %p257 = pneg %p141
      %p258 = pneg %p165
      %p259 = pneg %p162
      %p260 = pneg %p191
      %p261 = pneg %p188
      %p262 = scmp.lt.s32.totalorder %s18, 1
      %s263 = scalar_select %p262, %s18, 1
      %s264 = smul.addr %s263, 8
      %s265 = scalar_lea.vmem %s7, %s264
      %p266 = scmp.lt.s32.totalorder %s18, 1
      %s267 = scalar_select %p266, %s18, 1
      %s268 = smul.addr %s267, 8
      %s269 = scalar_lea.vmem %s0, %s268
      %p270 = scmp.lt.s32.totalorder %s18, 1
      %s271 = scalar_select %p270, %s18, 1
      %s272 = smul.addr %s271, 8
      %s273 = scalar_lea.vmem %s7, %s272
      %v275 = vld [vmem:[%s269] sm:$0xff]
      %vm276 = vcmask 261120
      %v277 = vsel %vm276, %v275, 0.0
      %278 = vadd.xlane.f32.xlu0 %v277
      %v279 = vpop.xlane.xlu0 %278
      %v280 = vrcp.pop 32.0
      %v281 = vmul.f32 %v279, %v280
      %v282 = vsub.f32 %v275, %v281
      %v283 = vmul.f32 %v282, %v282
      %v284 = vsel %vm276, %v283, 0.0
      %285 = vadd.xlane.f32.xlu0 %v284
      %v286 = vpop.xlane.xlu0 %285
      %v287 = vmul.f32 %v286, %v280
      %v288 = vadd.f32 %v287, 1e-12
      %v289 = vrsqrt.pop %v288
      %v290 = vmul.f32 %v282, %v289
      %v291 = vld [vmem:[%s1] sm:$0x1]
      %v293 = vlaneseq
      %v294 = vshrl.u32 %v293, 7
      %v295 = vsub.s32 0, %v294
      %v296 = vrot.slane %v291, %v295
      %v298 = vmul.f32 %v290, %v296
      %v299 = vld [vmem:[%s2] sm:$0x1]
      %v301 = vlaneseq
      %v302 = vshrl.u32 %v301, 7
      %v303 = vsub.s32 0, %v302
      %v304 = vrot.slane %v299, %v303
      %v306 = vadd.f32 %v298, %v304
      %v307 = vpack.c.bf16 %v306, %v306
      %v308 = vld [vmem:[%s3] sm:$0xf]
      %v309 = vld [vmem:[%s3 + $0x4] sm:$0xf]
      %v310 = vld [vmem:[%s3 + $0x8] sm:$0xf]
      %v311 = vld [vmem:[%s3 + $0xc] sm:$0xf]
      %v312 = vld [vmem:[%s4] sm:$0x1]
      %v314 = vlaneseq
      %v315 = vshrl.u32 %v314, 7
      %v316 = vsub.s32 0, %v315
      %v317 = vrot.slane %v312, %v316
      %v323 = vunpack.c.l.b16 %v308
      %v324 = vunpack.c.l.b16 %v309
      %v325 = vunpack.c.l.b16 %v310
      %v326 = vunpack.c.l.b16 %v311
      %v327 = vpack.c.b16 %v324, %v323
      %v328 = vpack.c.b16 %v326, %v325
      %v332 = vsel %vm276, %v307, 0
      %334 = vmatprep.subr.bf16.mxu0 0
      %335 = vmatpush1.bf16.msra.mxu0 %v327
      %336 = vmatprep.subr.bf16.mxu0 0
      %337 = vmatpush1.bf16.msra.mxu0 %v328
      %338 = vmatprep.subr.bf16.mxu0 0
      %339 = vmatpush1.bf16.msra.mxu0 0
      %340 = vmatprep.subr.bf16.mxu0 0
      %341 = vmatpush1.bf16.msra.mxu0 0
      %342 = vmatprep.subr.bf16.mxu0 0
      %343 = vmatpush1.bf16.msra.mxu0 0
      %344 = vmatprep.subr.bf16.mxu0 0
      %345 = vmatpush1.bf16.msra.mxu0 0
      %346 = vmatprep.subr.bf16.mxu0 0
      %347 = vmatpush1.bf16.msra.mxu0 0
      %348 = vmatprep.subr.bf16.mxu0 0
      %349 = vmatpush1.bf16.msra.mxu0 0
      %350 = vmatprep.subr.bf16.mxu0 0
      %351 = vmatpush1.bf16.msra.mxu0 0
      %352 = vmatprep.subr.bf16.mxu0 0
      %353 = vmatpush1.bf16.msra.mxu0 0
      %354 = vmatprep.subr.bf16.mxu0 0
      %355 = vmatpush1.bf16.msra.mxu0 0
      %356 = vmatprep.subr.bf16.mxu0 0
      %357 = vmatpush1.bf16.msra.mxu0 0
      %358 = vmatprep.subr.bf16.mxu0 0
      %359 = vmatpush1.bf16.msra.mxu0 0
      %360 = vmatprep.subr.bf16.mxu0 0
      %361 = vmatpush1.bf16.msra.mxu0 0
      %362 = vmatprep.subr.bf16.mxu0 0
      %363 = vmatpush1.bf16.msra.mxu0 0
      %364 = vmatprep.subr.bf16.mxu0 0
      %365 = vmatpush1.bf16.msra.mxu0 0
      %366 = vmatprep.mubr.bf16.mxu0 0
      %367 = vmatmul.mubr.bf16.gmra.mrb[0].mxu0 %v332
      %v368 = vpop.f32.mrb[0].mxu0
      %v369 = vadd.f32 %v317, %v368
      %v370 = vpop.f32.mrb[0].mxu0
      %v371 = vpop.f32.mrb[0].mxu0
      %v372 = vpop.f32.mrb[0].mxu0
      %373 = vdwg.mxu0
      %v374 = vmax.f32 %v369, 0.0
      %v375 = vpack.c.bf16 %v374, %v374
      %v376 = vld [vmem:[%s5] sm:$0xf]
      %v377 = vld [vmem:[%s5 + $0x4] sm:$0xf]
      %v378 = vld [vmem:[%s5 + $0x8] sm:$0xf]
      %v379 = vld [vmem:[%s5 + $0xc] sm:$0xf]
      %v380 = vld [vmem:[%s5 + $0x10] sm:$0xf]
      %v381 = vld [vmem:[%s5 + $0x14] sm:$0xf]
      %v382 = vld [vmem:[%s5 + $0x18] sm:$0xf]
      %v383 = vld [vmem:[%s5 + $0x1c] sm:$0xf]
      %v392 = vunpack.c.l.b16 %v376
      %v393 = vunpack.c.l.b16 %v377
      %v394 = vunpack.c.l.b16 %v378
      %v395 = vunpack.c.l.b16 %v379
      %v396 = vunpack.c.l.b16 %v380
      %v397 = vunpack.c.l.b16 %v381
      %v398 = vunpack.c.l.b16 %v382
      %v399 = vunpack.c.l.b16 %v383
      %v400 = vpack.c.b16 %v393, %v392
      %v401 = vpack.c.b16 %v395, %v394
      %v402 = vpack.c.b16 %v397, %v396
      %v403 = vpack.c.b16 %v399, %v398
      %vm408 = vcmask 523264
      %v410 = vsel %vm408, %v375, 0
      %412 = vmatprep.subr.bf16.mxu0 0
      %413 = vmatpush1.bf16.msra.mxu0 %v400
      %414 = vmatprep.subr.bf16.mxu0 0
      %415 = vmatpush1.bf16.msra.mxu0 %v401
      %416 = vmatprep.subr.bf16.mxu0 0
      %417 = vmatpush1.bf16.msra.mxu0 %v402
      %418 = vmatprep.subr.bf16.mxu0 0
      %419 = vmatpush1.bf16.msra.mxu0 %v403
      %420 = vmatprep.subr.bf16.mxu0 0
      %421 = vmatpush1.bf16.msra.mxu0 0
      %422 = vmatprep.subr.bf16.mxu0 0
      %423 = vmatpush1.bf16.msra.mxu0 0
      %424 = vmatprep.subr.bf16.mxu0 0
      %425 = vmatpush1.bf16.msra.mxu0 0
      %426 = vmatprep.subr.bf16.mxu0 0
      %427 = vmatpush1.bf16.msra.mxu0 0
      %428 = vmatprep.subr.bf16.mxu0 0
      %429 = vmatpush1.bf16.msra.mxu0 0
      %430 = vmatprep.subr.bf16.mxu0 0
      %431 = vmatpush1.bf16.msra.mxu0 0
      %432 = vmatprep.subr.bf16.mxu0 0
      %433 = vmatpush1.bf16.msra.mxu0 0
      %434 = vmatprep.subr.bf16.mxu0 0
      %435 = vmatpush1.bf16.msra.mxu0 0
      %436 = vmatprep.subr.bf16.mxu0 0
      %437 = vmatpush1.bf16.msra.mxu0 0
      %438 = vmatprep.subr.bf16.mxu0 0
      %439 = vmatpush1.bf16.msra.mxu0 0
      %440 = vmatprep.subr.bf16.mxu0 0
      %441 = vmatpush1.bf16.msra.mxu0 0
      %442 = vmatprep.subr.bf16.mxu0 0
      %443 = vmatpush1.bf16.msra.mxu0 0
      %444 = vmatprep.mubr.bf16.mxu0 0
      %445 = vmatmul.mubr.bf16.gmra.mrb[0].mxu0 %v410
      %v446 = vpop.f32.mrb[0].mxu0
      %v447 = vadd.f32 0.0, %v446
      %v448 = vpop.f32.mrb[0].mxu0
      %v449 = vpop.f32.mrb[0].mxu0
      %v450 = vpop.f32.mrb[0].mxu0
      %451 = vdwg.mxu0
      %v452 = vadd.f32 %v275, %v447
      %v453 = vld [vmem:[%s6] sm:$0x1]
      %v455 = vlaneseq
      %v456 = vshrl.u32 %v455, 7
      %v457 = vsub.s32 0, %v456
      %v458 = vrot.slane %v453, %v457
      %v460 = vadd.f32 %v452, %v458
      %461 = vst.msk [vmem:[%s273] sm:$0xff] %vm276, %v460
      %p462 = scmp.lt.s32.totalorder %s18, 1
      %s463 = scalar_select %p462, %s18, 1
      %s464 = smul.addr %s463, 8
      %s465 = scalar_lea.vmem %s7, %s464
      // Predicated region
      $region49: #{e2e_forward.45} parent=47 // pred_check
        %p466 = pneg %p188
      $region50: #{e2e_forward.45} parent=47 // pred_check_branch
        %468 = sbr.rel (%p466) target = $region52
      $region51: #{e2e_forward.45} parent=47 // pred_region
        _
      $region52: #{e2e_forward.45} parent=47 // pred_fallthru
        _
    $region48: #{e2e_forward.45} parent=5 // pred_fallthru
      _
    %p469 = scmp.le.s32.totalorder 2, %s13
    // Predicated region
    $region53: #{e2e_forward.45} parent=5 // pred_check
      %p470 = pneg %p469
    $region54: #{e2e_forward.45} parent=5 // pred_check_branch
      %472 = sbr.rel (%p470) target = $region56
    $region55: #{e2e_forward.45} parent=5 // pred_region
      %s473 = ssub.s32 %s13, 2
      // Predicated region
      $region57: #{e2e_forward.45} parent=55 // pred_check
        %p474 = pneg %p194
      $region58: #{e2e_forward.45} parent=55 // pred_check_branch
        %476 = sbr.rel (%p474) target = $region60
      $region59: #{e2e_forward.45} parent=55 // pred_region
        %p477 = scmp.lt.s32.totalorder %s19, 1
        %s478 = scalar_select %p477, %s19, 1
        %s479 = smul.addr %s478, 8
        %s480 = scalar_lea.vmem %s7, %s479
      $region60: #{e2e_forward.45} parent=55 // pred_fallthru
        _
    $region56: #{e2e_forward.45} parent=5 // pred_fallthru
      _
  $region6: #{e2e_forward.45} parent=0 // loop_footer
    %s17 = sadd.s32 1, %s13
  $region7: #{e2e_forward.45} parent=0 // loop_footer_branch
    %12 = sbr.rel target = $region3
  $region8: #{e2e_forward.45} parent=0 // loop_exit
    _

// kernel: e2e_forward.55
$region0: #{e2e_forward.55}
  #allocation0 [shape = 'u32[]', space=smem, size = 0x4, offset = 0x4, fixed_abs, tag = 'smem constant byte address 0x4 - core index']
  #allocation1 [shape = 'u32[144,128]{1,0:T(1,128)}', space=vmem, size = 0x12000, scoped, tag = 'internal scratch']
  %s0 = inlined_call_operand.vmem [shape: f32[16,128], index: 0, kind: input, shape index: {}]
  %s1 = inlined_call_operand.vmem [shape: s32[16,1], index: 1, kind: input, shape index: {}]
  %s2 = inlined_call_operand.vmem [shape: f32[16,128], index: 2, kind: output, shape index: {}]
  %s3 = sld [smem:[#allocation0]]
  $region41: #{e2e_forward.55} parent=0
    _
  %s5 = ssub.s32 1, %s3
  %s6 = scalar_select 0, %s5, %s3
  loop: start=0, step=1, limit=4
  $region2: #{e2e_forward.55} parent=0 // loop_pre_header
    _
  $region3: #{e2e_forward.55} parent=0 // loop_header
    %s8 = sphi 0, %s12
    %p9 = scmp.ge.s32.totalorder %s8, 4
    %s18 = sphi 0, %s20
    %s21 = sphi 0, %s18
    %s22 = sphi 0, %s21
    %s38 = sphi 0, %s22
    %s44 = sphi 0, %s46
    %s47 = sphi 0, %s44
    %s48 = sphi 0, %s47
    %s64 = sphi 0, %s48
    %s70 = sphi 0, %s72
    %s73 = sphi 0, %s70
    %s74 = sphi 0, %s73
    %s90 = sphi 0, %s74
  $region4: #{e2e_forward.55} parent=0 // loop_header_branch
    %11 = sbr.rel (%p9) target = $region8
  $region5: #{e2e_forward.55} parent=0 // loop_body
    %s13 = ssub.s32 %s8, 1
    %s14 = ssub.s32 %s8, 2
    %s15 = sadd.s32 %s8, 1
    %s16 = ssub.s32 %s8, %s15
    %p17 = scmp.eq.s32.totalorder %s16, 0
    %s19 = sadd.s32 %s18, 1
    %s20 = scalar_select %p17, %s18, %s19
    %p23 = pneg %p17
    %p24 = scmp.eq.s32.totalorder %s8, 1
    %p25 = por %p23, %p24
    %p26 = scmp.ne.s32.totalorder %s18, %s21
    %p27 = scmp.eq.s32.totalorder %s8, 0
    %p28 = por %p26, %p27
    %p29 = scmp.ne.s32.totalorder %s18, %s21
    %p30 = scmp.eq.s32.totalorder %s13, 1
    %p31 = por %p29, %p30
    %p32 = scmp.ne.s32.totalorder %s21, %s22
    %p33 = scmp.eq.s32.totalorder %s13, 0
    %p34 = por %p32, %p33
    %p35 = scmp.ne.s32.totalorder %s21, %s22
    %p36 = scmp.eq.s32.totalorder %s14, 1
    %p37 = por %p35, %p36
    %p39 = scmp.ne.s32.totalorder %s22, %s38
    %p40 = scmp.eq.s32.totalorder %s14, 0
    %p41 = por %p39, %p40
    %s42 = ssub.s32 %s8, %s15
    %p43 = scmp.eq.s32.totalorder %s42, 0
    %s45 = sadd.s32 %s44, 1
    %s46 = scalar_select %p43, %s44, %s45
    %p49 = pneg %p43
    %p50 = scmp.eq.s32.totalorder %s8, 1
    %p51 = por %p49, %p50
    %p52 = scmp.ne.s32.totalorder %s44, %s47
    %p53 = scmp.eq.s32.totalorder %s8, 0
    %p54 = por %p52, %p53
    %p55 = scmp.ne.s32.totalorder %s44, %s47
    %p56 = scmp.eq.s32.totalorder %s13, 1
    %p57 = por %p55, %p56
    %p58 = scmp.ne.s32.totalorder %s47, %s48
    %p59 = scmp.eq.s32.totalorder %s13, 0
    %p60 = por %p58, %p59
    %p61 = scmp.ne.s32.totalorder %s47, %s48
    %p62 = scmp.eq.s32.totalorder %s14, 1
    %p63 = por %p61, %p62
    %p65 = scmp.ne.s32.totalorder %s48, %s64
    %p66 = scmp.eq.s32.totalorder %s14, 0
    %p67 = por %p65, %p66
    %s68 = ssub.s32 %s8, %s15
    %p69 = scmp.eq.s32.totalorder %s68, 0
    %s71 = sadd.s32 %s70, 1
    %s72 = scalar_select %p69, %s70, %s71
    %p75 = pneg %p69
    %p76 = scmp.eq.s32.totalorder %s8, 1
    %p77 = por %p75, %p76
    %p78 = scmp.ne.s32.totalorder %s70, %s73
    %p79 = scmp.eq.s32.totalorder %s8, 0
    %p80 = por %p78, %p79
    %p81 = scmp.ne.s32.totalorder %s70, %s73
    %p82 = scmp.eq.s32.totalorder %s13, 1
    %p83 = por %p81, %p82
    %p84 = scmp.ne.s32.totalorder %s73, %s74
    %p85 = scmp.eq.s32.totalorder %s13, 0
    %p86 = por %p84, %p85
    %p87 = scmp.ne.s32.totalorder %s73, %s74
    %p88 = scmp.eq.s32.totalorder %s14, 1
    %p89 = por %p87, %p88
    %p91 = scmp.ne.s32.totalorder %s74, %s90
    %p92 = scmp.eq.s32.totalorder %s14, 0
    %p93 = por %p91, %p92
    %p94 = scmp.le.s32.totalorder 1, %s8
    %p95 = scmp.lt.s32.totalorder %s8, 3
    %p96 = pnand %p94, %p95
    %p97 = pneg %p96
    // Predicated region
    $region9: #{e2e_forward.55} parent=5 // pred_check
      _
    $region10: #{e2e_forward.55} parent=5 // pred_check_branch
      %99 = sbr.rel (%p96) target = $region12
    $region11: #{e2e_forward.55} parent=5 // pred_region
      %s100 = ssub.s32 %s8, 1
    $region12: #{e2e_forward.55} parent=5 // pred_fallthru
      _
    %p101 = scmp.lt.s32.totalorder %s8, 2
    // Predicated region
    $region13: #{e2e_forward.55} parent=5 // pred_check
      %p102 = pneg %p101
    $region14: #{e2e_forward.55} parent=5 // pred_check_branch
      %104 = sbr.rel (%p102) target = $region16
    $region15: #{e2e_forward.55} parent=5 // pred_region
      // Predicated region
      $region17: #{e2e_forward.55} parent=15 // pred_check
        %p105 = pneg %p28
      $region18: #{e2e_forward.55} parent=15 // pred_check_branch
        %107 = sbr.rel (%p105) target = $region20
      $region19: #{e2e_forward.55} parent=15 // pred_region
        %p108 = scmp.lt.s32.totalorder %s8, 1
        %s109 = scalar_select %p108, %s8, 1
        %s110 = smul.addr %s109, 8
        %s111 = scalar_lea.vmem %s0, %s110
      $region20: #{e2e_forward.55} parent=15 // pred_fallthru
        _
      // Predicated region
      $region21: #{e2e_forward.55} parent=15 // pred_check
        %p112 = pneg %p54
      $region22: #{e2e_forward.55} parent=15 // pred_check_branch
        %114 = sbr.rel (%p112) target = $region24
      $region23: #{e2e_forward.55} parent=15 // pred_region
        %p115 = scmp.lt.s32.totalorder %s8, 1
        %s116 = scalar_select %p115, %s8, 1
        %s117 = smul.addr %s116, 8
        %s118 = scalar_lea.vmem %s1, %s117
      $region24: #{e2e_forward.55} parent=15 // pred_fallthru
        _
    $region16: #{e2e_forward.55} parent=5 // pred_fallthru
      _
    %p119 = scmp.le.s32.totalorder 1, %s8
    %p120 = scmp.lt.s32.totalorder %s8, 3
    %p121 = pnand %p119, %p120
    %p122 = pneg %p121
    // Predicated region
    $region25: #{e2e_forward.55} parent=5 // pred_check
      _
    $region26: #{e2e_forward.55} parent=5 // pred_check_branch
      %124 = sbr.rel (%p121) target = $region28
    $region27: #{e2e_forward.55} parent=5 // pred_region
      %s125 = ssub.s32 %s8, 1
      %p126 = scmp.lt.s32.totalorder %s13, 1
      %s127 = scalar_select %p126, %s13, 1
      %s128 = smul.addr %s127, 8
      %s129 = scalar_lea.vmem %s0, %s128
      %p130 = pneg %p34
      %p131 = pneg %p31
      %p132 = scmp.lt.s32.totalorder %s13, 1
      %s133 = scalar_select %p132, %s13, 1
      %s134 = smul.addr %s133, 8
      %s135 = scalar_lea.vmem %s1, %s134
      %p136 = pneg %p60
      %p137 = pneg %p57
      %p138 = pneg %p86
      %p139 = pneg %p83
      %p140 = scmp.lt.s32.totalorder %s13, 1
      %s141 = scalar_select %p140, %s13, 1
      %s142 = smul.addr %s141, 8
      %s143 = scalar_lea.vmem %s2, %s142
      %p144 = scmp.lt.s32.totalorder %s13, 1
      %s145 = scalar_select %p144, %s13, 1
      %s146 = smul.addr %s145, 8
      %s147 = scalar_lea.vmem %s0, %s146
      %p148 = scmp.lt.s32.totalorder %s13, 1
      %s149 = scalar_select %p148, %s13, 1
      %s150 = smul.addr %s149, 8
      %s151 = scalar_lea.vmem %s1, %s150
      %p152 = scmp.lt.s32.totalorder %s13, 1
      %s153 = scalar_select %p152, %s13, 1
      %s154 = smul.addr %s153, 8
      %s155 = scalar_lea.vmem %s2, %s154
      %v156 = vld [vmem:[%s147] sm:$0xff]
      %v157 = vld [vmem:[%s151] sm:$0xff]
      %v158 = vlaneseq
      %v159 = vand.u32 %v158, 127
      %vm160 = vcmp.lt.s32.totalorder %v159, 12
      %v161 = vsel %vm160, %v156, -1e+30
      %162 = vmax.xlane.f32.xlu0 %v161
      %v163 = vpop.xlane.xlu0 %162
      %v164 = vsub.f32 %v161, %v163
      %v165 = vmul.f32 %v164, 1.442695
      %v166 = vpow.pop %v165
      %167 = vadd.xlane.f32.xlu0 %v166
      %v168 = vpop.xlane.xlu0 %167
      %v169 = vlog2.pop %v168
      %v170 = vmul.f32 %v169, 0.6931472
      %v171 = vadd.f32 %v163, %v170
      %v172 = vsel %vm160, %v156, 0.0
      %173 = vadd.xlane.f32.xlu0 %v172
      %v174 = vpop.xlane.xlu0 %173
      %175 = vset.pattern.permute.xlu0 0
      %176 = vperm.xlu0 %175, %v157
      %v177 = vpop.permute.xlu0 %176
      %vm178 = vcmp.eq.s32.totalorder %v159, %v177
      %v179 = vsel %vm178, %v156, 0.0
      %180 = vadd.xlane.f32.xlu0 %v179
      %v181 = vpop.xlane.xlu0 %180
      %v182 = vsub.f32 %v181, %v171
      %v183 = vmul.f32 %v171, 12.0
      %v184 = vsub.f32 %v174, %v183
      %v185 = vmul.f32 %v182, -0.8909091
      %v186 = vadd.f32 %v185, -0.5648725
      %v187 = vmul.f32 %v184, 0.009090909
      %v188 = vsub.f32 %v186, %v187
      %vm189 = vcmp.eq.s32.totalorder %v157, 4294967295
      %v190 = vsel %vm189, 0.0, 1.0
      %v191 = vmul.f32 %v188, %v190
      %vm192 = vcmp.ge.f32.partialorder %v161, %v163
      %v193 = vsel %vm192, %v159, 128
      %v194 = vand.u32 %v193, 65535
      %v195 = vshra.s32 %v193, 16
      %v196 = vcvt.s32.f32 %v194
      %v197 = vcvt.s32.f32 %v195
      %198 = vmin.xlane.f32.xlu0 %v197
      %v199 = vpop.xlane.xlu0 %198
      %vm200 = vcmp.eq.f32.partialorder %v197, %v199
      %v201 = vsel %vm200, %v196, inf
      %202 = vmin.xlane.f32.xlu0 %v201
      %v203 = vpop.xlane.xlu0 %202
      %v204 = vcvt.f32.s32 %v203
      %v205 = vcvt.f32.s32 %v199
      %v206 = vshll.u32 %v205, 16
      %v207 = vadd.s32 %v206, %v204
      %vm208 = vcmp.eq.s32.totalorder %v207, %v157
      %vm209 = vmxor %vm189, 1
      %vm210 = vmand %vm208, %vm209
      %v211 = vsel %vm210, 1.0, 0.0
      %vm212 = vcmp.eq.s32.totalorder %v159, 0
      %214 = vset.pattern.permute.xlu0 0
      %215 = vperm.xlu0 %214, %v191
      %v216 = vpop.permute.xlu0 %215
      %v218 = vsel %vm212, %v216, 0.0
      %vm219 = vcmp.eq.s32.totalorder %v159, 1
      %221 = vset.pattern.permute.xlu0 0
      %222 = vperm.xlu0 %221, %v211
      %v223 = vpop.permute.xlu0 %222
      %v225 = vsel %vm219, %v223, 0.0
      %v226 = vadd.f32 %v218, %v225
      %vm227 = vcmp.eq.s32.totalorder %v159, 2
      %229 = vset.pattern.permute.xlu0 0
      %230 = vperm.xlu0 %229, %v190
      %v231 = vpop.permute.xlu0 %230
      %v233 = vsel %vm227, %v231, 0.0
      %v234 = vadd.f32 %v226, %v233
      %235 = vst [vmem:[%s155] sm:$0xff] %v234
      %p236 = scmp.lt.s32.totalorder %s13, 1
      %s237 = scalar_select %p236, %s13, 1
      %s238 = smul.addr %s237, 8
      %s239 = scalar_lea.vmem %s2, %s238
      // Predicated region
      $region29: #{e2e_forward.55} parent=27 // pred_check
        %p240 = pneg %p83
      $region30: #{e2e_forward.55} parent=27 // pred_check_branch
        %242 = sbr.rel (%p240) target = $region32
      $region31: #{e2e_forward.55} parent=27 // pred_region
        _
      $region32: #{e2e_forward.55} parent=27 // pred_fallthru
        _
    $region28: #{e2e_forward.55} parent=5 // pred_fallthru
      _
    %p243 = scmp.le.s32.totalorder 2, %s8
    // Predicated region
    $region33: #{e2e_forward.55} parent=5 // pred_check
      %p244 = pneg %p243
    $region34: #{e2e_forward.55} parent=5 // pred_check_branch
      %246 = sbr.rel (%p244) target = $region36
    $region35: #{e2e_forward.55} parent=5 // pred_region
      %s247 = ssub.s32 %s8, 2
      // Predicated region
      $region37: #{e2e_forward.55} parent=35 // pred_check
        %p248 = pneg %p89
      $region38: #{e2e_forward.55} parent=35 // pred_check_branch
        %250 = sbr.rel (%p248) target = $region40
      $region39: #{e2e_forward.55} parent=35 // pred_region
        %p251 = scmp.lt.s32.totalorder %s14, 1
        %s252 = scalar_select %p251, %s14, 1
        %s253 = smul.addr %s252, 8
        %s254 = scalar_lea.vmem %s2, %s253
      $region40: #{e2e_forward.55} parent=35 // pred_fallthru
        _
    $region36: #{e2e_forward.55} parent=5 // pred_fallthru
      _
  $region6: #{e2e_forward.55} parent=0 // loop_footer
    %s12 = sadd.s32 1, %s8
  $region7: #{e2e_forward.55} parent=0 // loop_footer_branch
    %7 = sbr.rel target = $region3
  $region8: #{e2e_forward.55} parent=0 // loop_exit
    _

</llo_original>
